<compile_context>
chip_gen: v7x
topology: tpu7x:2x2x1
jax: 0.10.0
libtpu: 0.0.40
codegen_flags: <defaults>
</compile_context>

<pallas_src>
import functools

import numpy as np
import jax
import jax.numpy as jnp
from jax.experimental import pallas as pl
from jax.experimental.pallas import tpu as pltpu

NEG_SLOPE = 0.01     # nn.LeakyReLU default
BN_EPS = 1e-5        # nn.BatchNorm2d default
MXU_BF16 = True      # cast MXU operands to bf16 (f32 accumulation); False = strict f32


def _leaky(v):
    return jnp.where(v >= 0, v, NEG_SLOPE * v)


# --------------------------- fused conv Pallas kernel -------------------------

def _fused_conv_kernel(*refs, phases, mout, pre_leaky, post_leaky, has_res):
    """One grid step == one batch item.

    refs = (x_ref, w_ref, b_ref, [res_ref], out_ref_0[, out_ref_1])
      x_ref  : (Mpad, Cin)   zero-padded input, spatially flattened (VMEM)
      w_ref  : (T, Cin, Cout) per-tap weight matrices (BN scale pre-folded)
      b_ref  : (1, Cout)      folded bias (f32)
      res_ref: (Mout, Cout)   optional fused residual (ResBlock skip, pre-flattened)
      out_p  : (Mout, Cout)   one flat output per phase (polyphase transposed conv)

    phases[p] = [(row_offset, weight_tap_index), ...]; the conv is a sum of
    shifted-window matmuls on the MXU, accumulated in f32.  Each phase produces
    one dense (Mout, Cout) store; padded-width garbage columns are sliced off by
    the host-side wrapper (they are a kw-1 wide strip of a tiny tensor).
    """
    x_ref, w_ref, b_ref = refs[0], refs[1], refs[2]
    idx = 3
    res_ref = None
    if has_res:
        res_ref = refs[idx]
        idx += 1
    out_refs = refs[idx:]

    bias = b_ref[...]                                   # (1, Cout) f32
    cout = bias.shape[1]

    x = x_ref[...]                                      # (Mpad, Cin) f32
    if pre_leaky:
        x = _leaky(x)                                   # applied ONCE, not per tap

    for p, taps in enumerate(phases):
        acc = jnp.zeros((mout, cout), jnp.float32)
        for (off, ti) in taps:                          # static tap offsets
            win = x[off:off + mout, :].astype(w_ref.dtype)
            acc = acc + jnp.dot(win, w_ref[ti],
                                preferred_element_type=jnp.float32)
        acc = acc + bias
        if post_leaky:
            acc = _leaky(acc)
        if has_res:
            acc = acc + res_ref[...]
        out_refs[p][...] = acc.astype(out_refs[p].dtype)


def _run_fused_conv(xp_flat, w_taps, bias, *, phases, mout, pre_leaky, post_leaky,
                    residual=None):
    """Launch the fused conv kernel; grid over batch, everything else VMEM-resident."""
    B, mpad, cin = xp_flat.shape
    T, _, cout = w_taps.shape
    w_taps = w_taps.astype(jnp.bfloat16 if MXU_BF16 else jnp.float32)
    bias2 = bias.reshape(1, cout).astype(jnp.float32)

    in_specs = [
        pl.BlockSpec((None, mpad, cin), lambda b: (b, 0, 0)),
        pl.BlockSpec((T, cin, cout), lambda b: (0, 0, 0)),
        pl.BlockSpec((1, cout), lambda b: (0, 0)),
    ]
    args = [xp_flat.astype(jnp.float32), w_taps, bias2]
    if residual is not None:
        assert len(phases) == 1
        in_specs.append(pl.BlockSpec((None, mout, cout), lambda b: (b, 0, 0)))
        args.append(residual.astype(jnp.float32))

    n_out = len(phases)
    out_shapes = tuple(jax.ShapeDtypeStruct((B, mout, cout), jnp.float32)
                       for _ in range(n_out))
    out_specs = tuple(pl.BlockSpec((None, mout, cout), lambda b: (b, 0, 0))
                      for _ in range(n_out))

    kernel = functools.partial(
        _fused_conv_kernel, phases=phases, mout=mout,
        pre_leaky=pre_leaky, post_leaky=post_leaky, has_res=residual is not None)

    single = n_out == 1
    # TODO(synk): for production-scale d, add a K/Cout-tiled grid axis and an explicit
    # vmem_limit_bytes so the full-weight block stays under v7x's 64 MiB VMEM.
    outs = pl.pallas_call(
        kernel,
        out_shape=out_shapes[0] if single else out_shapes,
        grid=(B,),
        in_specs=in_specs,
        out_specs=out_specs[0] if single else out_specs,
        compiler_params=pltpu.CompilerParams(dimension_semantics=("parallel",)),
    )(*args)
    return (outs,) if single else outs


# ------------------------------ conv wrappers ---------------------------------

def fused_conv2d(x, w, bias, padding, *, pre_leaky, post_leaky, residual=None):
    """Stride-1 nn.Conv2d (cross-correlation), fused with optional input LeakyReLU,
    folded BN + bias, output LeakyReLU and residual add.  x: NHWC; w: (kh,kw,Cin,Cout)."""
    B, H, W, Cin = x.shape
    kh, kw, _, Cout = w.shape
    ph, pw = padding
    Hp, Wp = H + 2 * ph, W + 2 * pw
    Ho, Wo = Hp - kh + 1, Wp - kw + 1
    mout = Ho * Wp                               # full padded-width output rows

    xp = jnp.pad(x, ((0, 0), (ph, ph), (pw, pw), (0, 0))).reshape(B, Hp * Wp, Cin)
    xp = jnp.pad(xp, ((0, 0), (0, kw - 1), (0, 0)))      # tail rows for last windows

    taps = [(dh * Wp + dw, dh * kw + dw) for dh in range(kh) for dw in range(kw)]
    w_taps = w.reshape(kh * kw, Cin, Cout)

    res_flat = None
    if residual is not None:                      # residual spatial dims == (Ho, Wo)
        res_flat = jnp.pad(residual, ((0, 0), (0, 0), (0, Wp - Wo), (0, 0))
                           ).reshape(B, mout, Cout)

    (out,) = _run_fused_conv(xp, w_taps, bias, phases=[taps], mout=mout,
                             pre_leaky=pre_leaky, post_leaky=post_leaky,
                             residual=res_flat)
    return out.reshape(B, Ho, Wp, Cout)[:, :, :Wo, :]


def fused_conv_transpose2d(x, w, bias, padding, *, post_leaky):
    """nn.ConvTranspose2d(kernel (kh,4), stride (1,2), padding (ph,1)) via polyphase
    decomposition: even/odd output columns = two 2-width-tap stride-1 convs computed
    in one kernel call (no zero-dilated input).  x: NHWC; w: (Cin,Cout,kh,kw)."""
    B, H, W, Cin = x.shape
    _, Cout, kh, kw = w.shape
    ph, pw = padding
    assert kw == 4 and pw == 1, "polyphase path assumes kernel width 4, stride 2, pad 1"
    php = kh - 1 - ph                           # equivalent correlation padding (height)
    assert php >= 0, "padding larger than kernel-1 is not supported"
    Hp, Wpd = H + 2 * php, W + 2
    Ho = Hp - kh + 1                            # == H + kh - 1 - 2*ph
    mout = Ho * Wpd

    xp = jnp.pad(x, ((0, 0), (php, php), (1, 1), (0, 0))).reshape(B, Hp * Wpd, Cin)
    xp = jnp.pad(xp, ((0, 0), (0, 2), (0, 0)))           # tail rows for last windows

    w_list, even_taps, odd_taps = [], [], []
    t = 0
    for dh in range(kh):                        # cross-correlation height offset
        for dwp in range(2):
            w_list.append(w[:, :, kh - 1 - dh, 3 - 2 * dwp])   # even-column taps
            even_taps.append((dh * Wpd + dwp, t)); t += 1
    for dh in range(kh):
        for dwp in range(2):
            w_list.append(w[:, :, kh - 1 - dh, 2 - 2 * dwp])   # odd-column taps
            odd_taps.append((dh * Wpd + dwp + 1, t)); t += 1
    w_taps = jnp.stack(w_list, axis=0)          # (4*kh, Cin, Cout)

    even, odd = _run_fused_conv(xp, w_taps, bias, phases=[even_taps, odd_taps],
                                mout=mout, pre_leaky=False, post_leaky=post_leaky)
    even = even.reshape(B, Ho, Wpd, Cout)[:, :, :W, :]
    odd = odd.reshape(B, Ho, Wpd, Cout)[:, :, :W, :]
    # interleave even/odd output columns: (B,Ho,W,2,C) -> (B,Ho,2W,C)
    return jnp.stack([even, odd], axis=3).reshape(B, Ho, 2 * W, Cout)


# --------------------- bilinear resize (align_corners=True) -------------------

def _matmul_kernel(a_ref, b_ref, o_ref):
    o_ref[...] = jnp.dot(a_ref[...], b_ref[...], preferred_element_type=jnp.float32)


def pallas_matmul(a, b):
    """(M,K)@(K,N) Pallas matmul with an adaptive row tile TM=min(128, ceil8(M))."""
    M, K = a.shape
    _, N = b.shape
    tm = min(128, ((M + 7) // 8) * 8)
    mp = ((M + tm - 1) // tm) * tm
    a_p = jnp.pad(a, ((0, mp - M), (0, 0))) if mp != M else a
    out = pl.pallas_call(
        _matmul_kernel,
        out_shape=jax.ShapeDtypeStruct((mp, N), jnp.float32),
        grid=(mp // tm,),
        in_specs=[pl.BlockSpec((tm, K), lambda i: (i, 0)),
                  pl.BlockSpec((K, N), lambda i: (0, 0))],
        out_specs=pl.BlockSpec((tm, N), lambda i: (i, 0)),
        compiler_params=pltpu.CompilerParams(dimension_semantics=("parallel",)),
    )(a_p.astype(jnp.float32), b.astype(jnp.float32))
    return out[:M]


def _interp_matrix(n_out, n_in):
    if n_in == 1 or n_out == 1:
        src = np.zeros((n_out,), dtype=np.float32)
    else:
        src = np.arange(n_out, dtype=np.float32) * ((n_in - 1) / (n_out - 1))
    lo = np.clip(np.floor(src).astype(np.int32), 0, max(n_in - 2, 0))
    frac = src - lo
    hi = np.clip(lo + 1, 0, n_in - 1)
    m = np.zeros((n_out, n_in), dtype=np.float32)
    m[np.arange(n_out), lo] += 1.0 - frac
    m[np.arange(n_out), hi] += frac
    return m


def bilinear_resize_nchw(x_nhwc, out_h, out_w):
    """F.interpolate(mode='bilinear', align_corners=True) as ONE lane-dense Pallas
    matmul: (B*C, H*W) @ (H*W, out_h*out_w) with kron(Mh, Mw).  Returns NCHW."""
    B, H, W, C = x_nhwc.shape
    m_full_t = jnp.asarray(np.kron(_interp_matrix(out_h, H),
                                   _interp_matrix(out_w, W)).T)   # (H*W, OH*OW)
    a = jnp.transpose(x_nhwc, (0, 3, 1, 2)).reshape(B * C, H * W)
    out = pallas_matmul(a, m_full_t)
    return out.reshape(B, C, out_h, out_w)


# ----------------------------------- model ------------------------------------

def _bn_affine(bn):
    scale = bn["gamma"] / jnp.sqrt(bn["var"] + BN_EPS)
    shift = bn["beta"] - bn["mean"] * scale
    return scale, shift


def init_params(key, d, num_channels, downsample_rate, n_resnet_blocks,
                frequency_indepence):
    kc = (1, 3) if frequency_indepence else (3, 3)   # ResBlock conv kernel
    kt = (1, 4) if frequency_indepence else (3, 4)   # ConvTranspose kernel

    def nrm(k, shape, s=0.05):
        return s * jax.random.normal(k, shape, jnp.float32)

    def bn_init(k, c):
        k1, k2, k3, k4 = jax.random.split(k, 4)
        return dict(gamma=1.0 + nrm(k1, (c,)), beta=nrm(k2, (c,)),
                    mean=nrm(k3, (c,)), var=1.0 + jnp.abs(nrm(k4, (c,))))

    keys = iter(jax.random.split(key, 256))
    n_dec = int(np.log2(downsample_rate)) - 1
    groups = []
    for _ in range(n_resnet_blocks):
        res = dict(
            w1=nrm(next(keys), (kc[0], kc[1], d, d)), b1=nrm(next(keys), (d,)),
            bn=bn_init(next(keys), d),
            w2=nrm(next(keys), (kc[0], kc[1], d, d)), b2=nrm(next(keys), (d,)),
        )
        decs = [dict(w=nrm(next(keys), (d, d, kt[0], kt[1])),
                     b=nrm(next(keys), (d,)),
                     bn=bn_init(next(keys), d)) for _ in range(n_dec)]
        groups.append(dict(res=res, decs=decs))
    return dict(
        groups=groups,
        ct1_w=nrm(next(keys), (d, num_channels, kt[0], kt[1])),
        ct1_b=nrm(next(keys), (num_channels,)),
        ct2_w=nrm(next(keys), (num_channels, num_channels, kt[0], kt[1])),
        ct2_b=nrm(next(keys), (num_channels,)),
    )


def vqvae_decoder_forward(x_nchw, params, *, upsample_size, frequency_indepence):
    """x_nchw: (B, d, H, W') encoder output -> (B, num_channels, H_up, W_up)."""
    pc = (0, 1) if frequency_indepence else (1, 1)   # Conv2d padding
    pt = (0, 1) if frequency_indepence else (1, 1)   # ConvTranspose2d padding
    x = jnp.transpose(x_nchw, (0, 2, 3, 1)).astype(jnp.float32)   # NCHW -> NHWC

    for g in params["groups"]:
        rb = g["res"]
        # ResBlock: LeakyReLU -> Conv1 -> BN -> LeakyReLU -> Conv2 -> Dropout -> +x
        s, b = _bn_affine(rb["bn"])
        w1 = rb["w1"] * s[None, None, None, :]       # fold BN scale into conv1 weight
        b1 = rb["b1"] * s + b                        # fold BN shift into conv1 bias
        h = fused_conv2d(x, w1, b1, pc, pre_leaky=True, post_leaky=True)
        # TODO(synk): nn.Dropout is identity at inference (no RNG mask applied).
        x = fused_conv2d(h, rb["w2"], rb["b2"], pc, pre_leaky=False,
                         post_leaky=False, residual=x)            # fused residual add
        for db in g["decs"]:                          # VQVAEDecBlock(s)
            s, b = _bn_affine(db["bn"])
            wt = db["w"] * s[None, :, None, None]     # fold BN into ConvTranspose
            bt = db["b"] * s + b
            x = fused_conv_transpose2d(x, wt, bt, pt, post_leaky=True)

    x = fused_conv_transpose2d(x, params["ct1_w"], params["ct1_b"], pt, post_leaky=False)
    x = fused_conv_transpose2d(x, params["ct2_w"], params["ct2_b"], pt, post_leaky=False)
    return bilinear_resize_nchw(x, upsample_size[0], upsample_size[1])  # NCHW out


if __name__ == "__main__":
    # Small config implied by the module: d hidden channels, downsample_rate=4
    # -> one ResBlock + one VQVAEDecBlock per group, then two ConvTranspose2d.
    d, num_channels = 32, 4
    downsample_rate, n_resnet_blocks = 4, 1
    frequency_indepence = False
    B, H, W_enc = 2, 4, 8
    upsample_size = (6, 48)           # registered (H, W) target for F.interpolate

    key = jax.random.PRNGKey(0)
    kx, kp = jax.random.split(key)
    x = jax.random.normal(kx, (B, d, H, W_enc), jnp.float32)   # (B, C=d, H, W')
    params = init_params(kp, d, num_channels, downsample_rate,
                         n_resnet_blocks, frequency_indepence)

    fwd = jax.jit(functools.partial(vqvae_decoder_forward,
                                    upsample_size=upsample_size,
                                    frequency_indepence=frequency_indepence))
    out = fwd(x, params)
    out = jax.block_until_ready(out)

    assert out.shape == (B, num_channels, upsample_size[0], upsample_size[1]), out.shape
    assert bool(jnp.all(jnp.isfinite(out)))
    print("KERNEL_OK")
</pallas_src>

<mosaic_0001>
module attributes {stable_mosaic.version = 11 : i64} {
  func.func @_fused_conv_kernel(%arg0: i32, %arg1: memref<1x62x32xf32, #tpu.memory_space<vmem>>, %arg2: memref<9x32x32xbf16, #tpu.memory_space<vmem>>, %arg3: memref<1x32xf32, #tpu.memory_space<vmem>>, %arg4: memref<1x40x32xf32, #tpu.memory_space<vmem>>) attributes {dimension_semantics = [#tpu.dimension_semantics<parallel>], iteration_bounds = array<i64: 2>, scalar_prefetch = 0 : i64, scratch_operands = 0 : i64, tpu.core_type = #tpu.core_type<tc>, window_params = [{transform_indices = @transform_0, window_bounds = array<i64: 1, 62, 32>}, {pipeline_mode = #tpu.pipeline_mode<synchronous>, transform_indices = @transform_1, window_bounds = array<i64: 9, 32, 32>}, {pipeline_mode = #tpu.pipeline_mode<synchronous>, transform_indices = @transform_2, window_bounds = array<i64: 1, 32>}, {transform_indices = @transform_3, window_bounds = array<i64: 1, 40, 32>}]} {
    %c0 = arith.constant 0 : index
    %c0_0 = arith.constant 0 : index
    %0 = vector.load %arg3[%c0, %c0_0] : memref<1x32xf32, #tpu.memory_space<vmem>>, vector<1x32xf32>
    %c0_1 = arith.constant 0 : index
    %c0_2 = arith.constant 0 : index
    %c0_3 = arith.constant 0 : index
    %1 = vector.load %arg1[%c0_1, %c0_2, %c0_3] : memref<1x62x32xf32, #tpu.memory_space<vmem>>, vector<1x62x32xf32>
    %2 = vector.shape_cast %1 : vector<1x62x32xf32> to vector<62x32xf32>
    %cst = arith.constant 0.000000e+00 : f32
    %3 = vector.broadcast %cst : f32 to vector<62x32xf32>
    %4 = arith.cmpf oge, %2, %3 : vector<62x32xf32>
    %cst_4 = arith.constant 0.00999999977 : f32
    %5 = vector.broadcast %cst_4 : f32 to vector<62x32xf32>
    %6 = arith.mulf %5, %2 : vector<62x32xf32>
    %7 = arith.select %4, %2, %6 : vector<62x32xi1>, vector<62x32xf32>
    %cst_5 = arith.constant 0.000000e+00 : f32
    %8 = vector.broadcast %cst_5 : f32 to vector<40x32xf32>
    %9 = vector.extract_strided_slice %7 {offsets = [0, 0], sizes = [40, 32], strides = [1, 1]} : vector<62x32xf32> to vector<40x32xf32>
    %10 = arith.truncf %9 : vector<40x32xf32> to vector<40x32xbf16>
    %c0_6 = arith.constant 0 : index
    %c0_7 = arith.constant 0 : index
    %c0_8 = arith.constant 0 : index
    %11 = vector.load %arg2[%c0_6, %c0_7, %c0_8] : memref<9x32x32xbf16, #tpu.memory_space<vmem>>, vector<1x32x32xbf16>
    %12 = vector.shape_cast %11 : vector<1x32x32xbf16> to vector<32x32xbf16>
    %cst_9 = arith.constant dense<0.000000e+00> : vector<40x32xf32>
    %13 = tpu.matmul %10, %12, %cst_9 {dimension_numbers = #tpu.dot_dimension_numbers<[1], [0], [0], [1], [0, 0, 1, 1], [], []>} : vector<40x32xbf16>, vector<32x32xbf16>, vector<40x32xf32> -> vector<40x32xf32>
    %14 = arith.addf %8, %13 : vector<40x32xf32>
    %15 = vector.extract_strided_slice %7 {offsets = [1, 0], sizes = [40, 32], strides = [1, 1]} : vector<62x32xf32> to vector<40x32xf32>
    %16 = arith.truncf %15 : vector<40x32xf32> to vector<40x32xbf16>
    %c1 = arith.constant 1 : index
    %c0_10 = arith.constant 0 : index
    %c0_11 = arith.constant 0 : index
    %17 = vector.load %arg2[%c1, %c0_10, %c0_11] : memref<9x32x32xbf16, #tpu.memory_space<vmem>>, vector<1x32x32xbf16>
    %18 = vector.shape_cast %17 : vector<1x32x32xbf16> to vector<32x32xbf16>
    %cst_12 = arith.constant dense<0.000000e+00> : vector<40x32xf32>
    %19 = tpu.matmul %16, %18, %cst_12 {dimension_numbers = #tpu.dot_dimension_numbers<[1], [0], [0], [1], [0, 0, 1, 1], [], []>} : vector<40x32xbf16>, vector<32x32xbf16>, vector<40x32xf32> -> vector<40x32xf32>
    %20 = arith.addf %14, %19 : vector<40x32xf32>
    %21 = vector.extract_strided_slice %7 {offsets = [2, 0], sizes = [40, 32], strides = [1, 1]} : vector<62x32xf32> to vector<40x32xf32>
    %22 = arith.truncf %21 : vector<40x32xf32> to vector<40x32xbf16>
    %c2 = arith.constant 2 : index
    %c0_13 = arith.constant 0 : index
    %c0_14 = arith.constant 0 : index
    %23 = vector.load %arg2[%c2, %c0_13, %c0_14] : memref<9x32x32xbf16, #tpu.memory_space<vmem>>, vector<1x32x32xbf16>
    %24 = vector.shape_cast %23 : vector<1x32x32xbf16> to vector<32x32xbf16>
    %cst_15 = arith.constant dense<0.000000e+00> : vector<40x32xf32>
    %25 = tpu.matmul %22, %24, %cst_15 {dimension_numbers = #tpu.dot_dimension_numbers<[1], [0], [0], [1], [0, 0, 1, 1], [], []>} : vector<40x32xbf16>, vector<32x32xbf16>, vector<40x32xf32> -> vector<40x32xf32>
    %26 = arith.addf %20, %25 : vector<40x32xf32>
    %27 = vector.extract_strided_slice %7 {offsets = [10, 0], sizes = [40, 32], strides = [1, 1]} : vector<62x32xf32> to vector<40x32xf32>
    %28 = arith.truncf %27 : vector<40x32xf32> to vector<40x32xbf16>
    %c3 = arith.constant 3 : index
    %c0_16 = arith.constant 0 : index
    %c0_17 = arith.constant 0 : index
    %29 = vector.load %arg2[%c3, %c0_16, %c0_17] : memref<9x32x32xbf16, #tpu.memory_space<vmem>>, vector<1x32x32xbf16>
    %30 = vector.shape_cast %29 : vector<1x32x32xbf16> to vector<32x32xbf16>
    %cst_18 = arith.constant dense<0.000000e+00> : vector<40x32xf32>
    %31 = tpu.matmul %28, %30, %cst_18 {dimension_numbers = #tpu.dot_dimension_numbers<[1], [0], [0], [1], [0, 0, 1, 1], [], []>} : vector<40x32xbf16>, vector<32x32xbf16>, vector<40x32xf32> -> vector<40x32xf32>
    %32 = arith.addf %26, %31 : vector<40x32xf32>
    %33 = vector.extract_strided_slice %7 {offsets = [11, 0], sizes = [40, 32], strides = [1, 1]} : vector<62x32xf32> to vector<40x32xf32>
    %34 = arith.truncf %33 : vector<40x32xf32> to vector<40x32xbf16>
    %c4 = arith.constant 4 : index
    %c0_19 = arith.constant 0 : index
    %c0_20 = arith.constant 0 : index
    %35 = vector.load %arg2[%c4, %c0_19, %c0_20] : memref<9x32x32xbf16, #tpu.memory_space<vmem>>, vector<1x32x32xbf16>
    %36 = vector.shape_cast %35 : vector<1x32x32xbf16> to vector<32x32xbf16>
    %cst_21 = arith.constant dense<0.000000e+00> : vector<40x32xf32>
    %37 = tpu.matmul %34, %36, %cst_21 {dimension_numbers = #tpu.dot_dimension_numbers<[1], [0], [0], [1], [0, 0, 1, 1], [], []>} : vector<40x32xbf16>, vector<32x32xbf16>, vector<40x32xf32> -> vector<40x32xf32>
    %38 = arith.addf %32, %37 : vector<40x32xf32>
    %39 = vector.extract_strided_slice %7 {offsets = [12, 0], sizes = [40, 32], strides = [1, 1]} : vector<62x32xf32> to vector<40x32xf32>
    %40 = arith.truncf %39 : vector<40x32xf32> to vector<40x32xbf16>
    %c5 = arith.constant 5 : index
    %c0_22 = arith.constant 0 : index
    %c0_23 = arith.constant 0 : index
    %41 = vector.load %arg2[%c5, %c0_22, %c0_23] : memref<9x32x32xbf16, #tpu.memory_space<vmem>>, vector<1x32x32xbf16>
    %42 = vector.shape_cast %41 : vector<1x32x32xbf16> to vector<32x32xbf16>
    %cst_24 = arith.constant dense<0.000000e+00> : vector<40x32xf32>
    %43 = tpu.matmul %40, %42, %cst_24 {dimension_numbers = #tpu.dot_dimension_numbers<[1], [0], [0], [1], [0, 0, 1, 1], [], []>} : vector<40x32xbf16>, vector<32x32xbf16>, vector<40x32xf32> -> vector<40x32xf32>
    %44 = arith.addf %38, %43 : vector<40x32xf32>
    %45 = vector.extract_strided_slice %7 {offsets = [20, 0], sizes = [40, 32], strides = [1, 1]} : vector<62x32xf32> to vector<40x32xf32>
    %46 = arith.truncf %45 : vector<40x32xf32> to vector<40x32xbf16>
    %c6 = arith.constant 6 : index
    %c0_25 = arith.constant 0 : index
    %c0_26 = arith.constant 0 : index
    %47 = vector.load %arg2[%c6, %c0_25, %c0_26] : memref<9x32x32xbf16, #tpu.memory_space<vmem>>, vector<1x32x32xbf16>
    %48 = vector.shape_cast %47 : vector<1x32x32xbf16> to vector<32x32xbf16>
    %cst_27 = arith.constant dense<0.000000e+00> : vector<40x32xf32>
    %49 = tpu.matmul %46, %48, %cst_27 {dimension_numbers = #tpu.dot_dimension_numbers<[1], [0], [0], [1], [0, 0, 1, 1], [], []>} : vector<40x32xbf16>, vector<32x32xbf16>, vector<40x32xf32> -> vector<40x32xf32>
    %50 = arith.addf %44, %49 : vector<40x32xf32>
    %51 = vector.extract_strided_slice %7 {offsets = [21, 0], sizes = [40, 32], strides = [1, 1]} : vector<62x32xf32> to vector<40x32xf32>
    %52 = arith.truncf %51 : vector<40x32xf32> to vector<40x32xbf16>
    %c7 = arith.constant 7 : index
    %c0_28 = arith.constant 0 : index
    %c0_29 = arith.constant 0 : index
    %53 = vector.load %arg2[%c7, %c0_28, %c0_29] : memref<9x32x32xbf16, #tpu.memory_space<vmem>>, vector<1x32x32xbf16>
    %54 = vector.shape_cast %53 : vector<1x32x32xbf16> to vector<32x32xbf16>
    %cst_30 = arith.constant dense<0.000000e+00> : vector<40x32xf32>
    %55 = tpu.matmul %52, %54, %cst_30 {dimension_numbers = #tpu.dot_dimension_numbers<[1], [0], [0], [1], [0, 0, 1, 1], [], []>} : vector<40x32xbf16>, vector<32x32xbf16>, vector<40x32xf32> -> vector<40x32xf32>
    %56 = arith.addf %50, %55 : vector<40x32xf32>
    %57 = vector.extract_strided_slice %7 {offsets = [22, 0], sizes = [40, 32], strides = [1, 1]} : vector<62x32xf32> to vector<40x32xf32>
    %58 = arith.truncf %57 : vector<40x32xf32> to vector<40x32xbf16>
    %c8 = arith.constant 8 : index
    %c0_31 = arith.constant 0 : index
    %c0_32 = arith.constant 0 : index
    %59 = vector.load %arg2[%c8, %c0_31, %c0_32] : memref<9x32x32xbf16, #tpu.memory_space<vmem>>, vector<1x32x32xbf16>
    %60 = vector.shape_cast %59 : vector<1x32x32xbf16> to vector<32x32xbf16>
    %cst_33 = arith.constant dense<0.000000e+00> : vector<40x32xf32>
    %61 = tpu.matmul %58, %60, %cst_33 {dimension_numbers = #tpu.dot_dimension_numbers<[1], [0], [0], [1], [0, 0, 1, 1], [], []>} : vector<40x32xbf16>, vector<32x32xbf16>, vector<40x32xf32> -> vector<40x32xf32>
    %62 = arith.addf %56, %61 : vector<40x32xf32>
    %63 = vector.broadcast %0 : vector<1x32xf32> to vector<40x32xf32>
    %64 = arith.addf %62, %63 : vector<40x32xf32>
    %cst_34 = arith.constant 0.000000e+00 : f32
    %65 = vector.broadcast %cst_34 : f32 to vector<40x32xf32>
    %66 = arith.cmpf oge, %64, %65 : vector<40x32xf32>
    %cst_35 = arith.constant 0.00999999977 : f32
    %67 = vector.broadcast %cst_35 : f32 to vector<40x32xf32>
    %68 = arith.mulf %67, %64 : vector<40x32xf32>
    %69 = arith.select %66, %64, %68 : vector<40x32xi1>, vector<40x32xf32>
    %c0_36 = arith.constant 0 : index
    %c0_37 = arith.constant 0 : index
    %c0_38 = arith.constant 0 : index
    %70 = vector.load %arg4[%c0_36, %c0_37, %c0_38] : memref<1x40x32xf32, #tpu.memory_space<vmem>>, vector<1x40x32xf32>
    %71 = vector.shape_cast %70 : vector<1x40x32xf32> to vector<40x32xf32>
    %72 = vector.shape_cast %69 : vector<40x32xf32> to vector<1x40x32xf32>
    tpu.vector_store %arg4[%c0_36, %c0_37, %c0_38], %72 {strides = array<i32>} : memref<1x40x32xf32, #tpu.memory_space<vmem>>, vector<1x40x32xf32>,
    return
  }
  func.func @transform_0(%arg0: i32) -> (i32, i32, i32) {
    %c0_i32 = arith.constant 0 : i32
    %c0_i32_0 = arith.constant 0 : i32
    %c0_i32_1 = arith.constant 0 : i32
    return %arg0, %c0_i32, %c0_i32_0 : i32, i32, i32
  }
  func.func @transform_1(%arg0: i32) -> (i32, i32, i32) {
    %c0_i32 = arith.constant 0 : i32
    %c0_i32_0 = arith.constant 0 : i32
    %c0_i32_1 = arith.constant 0 : i32
    %c0_i32_2 = arith.constant 0 : i32
    return %c0_i32, %c0_i32_0, %c0_i32_1 : i32, i32, i32
  }
  func.func @transform_2(%arg0: i32) -> (i32, i32) {
    %c0_i32 = arith.constant 0 : i32
    %c0_i32_0 = arith.constant 0 : i32
    %c0_i32_1 = arith.constant 0 : i32
    return %c0_i32, %c0_i32_0 : i32, i32
  }
  func.func @transform_3(%arg0: i32) -> (i32, i32, i32) {
    %c0_i32 = arith.constant 0 : i32
    %c0_i32_0 = arith.constant 0 : i32
    %c0_i32_1 = arith.constant 0 : i32
    return %arg0, %c0_i32, %c0_i32_0 : i32, i32, i32
  }
}

module attributes {stable_mosaic.version = 11 : i64} {
  func.func @_fused_conv_kernel(%arg0: i32, %arg1: memref<1x62x32xf32, #tpu.memory_space<vmem>>, %arg2: memref<9x32x32xbf16, #tpu.memory_space<vmem>>, %arg3: memref<1x32xf32, #tpu.memory_space<vmem>>, %arg4: memref<1x40x32xf32, #tpu.memory_space<vmem>>, %arg5: memref<1x40x32xf32, #tpu.memory_space<vmem>>) attributes {dimension_semantics = [#tpu.dimension_semantics<parallel>], iteration_bounds = array<i64: 2>, scalar_prefetch = 0 : i64, scratch_operands = 0 : i64, tpu.core_type = #tpu.core_type<tc>, window_params = [{transform_indices = @transform_0, window_bounds = array<i64: 1, 62, 32>}, {pipeline_mode = #tpu.pipeline_mode<synchronous>, transform_indices = @transform_1, window_bounds = array<i64: 9, 32, 32>}, {pipeline_mode = #tpu.pipeline_mode<synchronous>, transform_indices = @transform_2, window_bounds = array<i64: 1, 32>}, {transform_indices = @transform_3, window_bounds = array<i64: 1, 40, 32>}, {transform_indices = @transform_4, window_bounds = array<i64: 1, 40, 32>}]} {
    %c0 = arith.constant 0 : index
    %c0_0 = arith.constant 0 : index
    %0 = vector.load %arg3[%c0, %c0_0] : memref<1x32xf32, #tpu.memory_space<vmem>>, vector<1x32xf32>
    %c0_1 = arith.constant 0 : index
    %c0_2 = arith.constant 0 : index
    %c0_3 = arith.constant 0 : index
    %1 = vector.load %arg1[%c0_1, %c0_2, %c0_3] : memref<1x62x32xf32, #tpu.memory_space<vmem>>, vector<1x62x32xf32>
    %2 = vector.shape_cast %1 : vector<1x62x32xf32> to vector<62x32xf32>
    %cst = arith.constant 0.000000e+00 : f32
    %3 = vector.broadcast %cst : f32 to vector<40x32xf32>
    %4 = vector.extract_strided_slice %2 {offsets = [0, 0], sizes = [40, 32], strides = [1, 1]} : vector<62x32xf32> to vector<40x32xf32>
    %5 = arith.truncf %4 : vector<40x32xf32> to vector<40x32xbf16>
    %c0_4 = arith.constant 0 : index
    %c0_5 = arith.constant 0 : index
    %c0_6 = arith.constant 0 : index
    %6 = vector.load %arg2[%c0_4, %c0_5, %c0_6] : memref<9x32x32xbf16, #tpu.memory_space<vmem>>, vector<1x32x32xbf16>
    %7 = vector.shape_cast %6 : vector<1x32x32xbf16> to vector<32x32xbf16>
    %cst_7 = arith.constant dense<0.000000e+00> : vector<40x32xf32>
    %8 = tpu.matmul %5, %7, %cst_7 {dimension_numbers = #tpu.dot_dimension_numbers<[1], [0], [0], [1], [0, 0, 1, 1], [], []>} : vector<40x32xbf16>, vector<32x32xbf16>, vector<40x32xf32> -> vector<40x32xf32>
    %9 = arith.addf %3, %8 : vector<40x32xf32>
    %10 = vector.extract_strided_slice %2 {offsets = [1, 0], sizes = [40, 32], strides = [1, 1]} : vector<62x32xf32> to vector<40x32xf32>
    %11 = arith.truncf %10 : vector<40x32xf32> to vector<40x32xbf16>
    %c1 = arith.constant 1 : index
    %c0_8 = arith.constant 0 : index
    %c0_9 = arith.constant 0 : index
    %12 = vector.load %arg2[%c1, %c0_8, %c0_9] : memref<9x32x32xbf16, #tpu.memory_space<vmem>>, vector<1x32x32xbf16>
    %13 = vector.shape_cast %12 : vector<1x32x32xbf16> to vector<32x32xbf16>
    %cst_10 = arith.constant dense<0.000000e+00> : vector<40x32xf32>
    %14 = tpu.matmul %11, %13, %cst_10 {dimension_numbers = #tpu.dot_dimension_numbers<[1], [0], [0], [1], [0, 0, 1, 1], [], []>} : vector<40x32xbf16>, vector<32x32xbf16>, vector<40x32xf32> -> vector<40x32xf32>
    %15 = arith.addf %9, %14 : vector<40x32xf32>
    %16 = vector.extract_strided_slice %2 {offsets = [2, 0], sizes = [40, 32], strides = [1, 1]} : vector<62x32xf32> to vector<40x32xf32>
    %17 = arith.truncf %16 : vector<40x32xf32> to vector<40x32xbf16>
    %c2 = arith.constant 2 : index
    %c0_11 = arith.constant 0 : index
    %c0_12 = arith.constant 0 : index
    %18 = vector.load %arg2[%c2, %c0_11, %c0_12] : memref<9x32x32xbf16, #tpu.memory_space<vmem>>, vector<1x32x32xbf16>
    %19 = vector.shape_cast %18 : vector<1x32x32xbf16> to vector<32x32xbf16>
    %cst_13 = arith.constant dense<0.000000e+00> : vector<40x32xf32>
    %20 = tpu.matmul %17, %19, %cst_13 {dimension_numbers = #tpu.dot_dimension_numbers<[1], [0], [0], [1], [0, 0, 1, 1], [], []>} : vector<40x32xbf16>, vector<32x32xbf16>, vector<40x32xf32> -> vector<40x32xf32>
    %21 = arith.addf %15, %20 : vector<40x32xf32>
    %22 = vector.extract_strided_slice %2 {offsets = [10, 0], sizes = [40, 32], strides = [1, 1]} : vector<62x32xf32> to vector<40x32xf32>
    %23 = arith.truncf %22 : vector<40x32xf32> to vector<40x32xbf16>
    %c3 = arith.constant 3 : index
    %c0_14 = arith.constant 0 : index
    %c0_15 = arith.constant 0 : index
    %24 = vector.load %arg2[%c3, %c0_14, %c0_15] : memref<9x32x32xbf16, #tpu.memory_space<vmem>>, vector<1x32x32xbf16>
    %25 = vector.shape_cast %24 : vector<1x32x32xbf16> to vector<32x32xbf16>
    %cst_16 = arith.constant dense<0.000000e+00> : vector<40x32xf32>
    %26 = tpu.matmul %23, %25, %cst_16 {dimension_numbers = #tpu.dot_dimension_numbers<[1], [0], [0], [1], [0, 0, 1, 1], [], []>} : vector<40x32xbf16>, vector<32x32xbf16>, vector<40x32xf32> -> vector<40x32xf32>
    %27 = arith.addf %21, %26 : vector<40x32xf32>
    %28 = vector.extract_strided_slice %2 {offsets = [11, 0], sizes = [40, 32], strides = [1, 1]} : vector<62x32xf32> to vector<40x32xf32>
    %29 = arith.truncf %28 : vector<40x32xf32> to vector<40x32xbf16>
    %c4 = arith.constant 4 : index
    %c0_17 = arith.constant 0 : index
    %c0_18 = arith.constant 0 : index
    %30 = vector.load %arg2[%c4, %c0_17, %c0_18] : memref<9x32x32xbf16, #tpu.memory_space<vmem>>, vector<1x32x32xbf16>
    %31 = vector.shape_cast %30 : vector<1x32x32xbf16> to vector<32x32xbf16>
    %cst_19 = arith.constant dense<0.000000e+00> : vector<40x32xf32>
    %32 = tpu.matmul %29, %31, %cst_19 {dimension_numbers = #tpu.dot_dimension_numbers<[1], [0], [0], [1], [0, 0, 1, 1], [], []>} : vector<40x32xbf16>, vector<32x32xbf16>, vector<40x32xf32> -> vector<40x32xf32>
    %33 = arith.addf %27, %32 : vector<40x32xf32>
    %34 = vector.extract_strided_slice %2 {offsets = [12, 0], sizes = [40, 32], strides = [1, 1]} : vector<62x32xf32> to vector<40x32xf32>
    %35 = arith.truncf %34 : vector<40x32xf32> to vector<40x32xbf16>
    %c5 = arith.constant 5 : index
    %c0_20 = arith.constant 0 : index
    %c0_21 = arith.constant 0 : index
    %36 = vector.load %arg2[%c5, %c0_20, %c0_21] : memref<9x32x32xbf16, #tpu.memory_space<vmem>>, vector<1x32x32xbf16>
    %37 = vector.shape_cast %36 : vector<1x32x32xbf16> to vector<32x32xbf16>
    %cst_22 = arith.constant dense<0.000000e+00> : vector<40x32xf32>
    %38 = tpu.matmul %35, %37, %cst_22 {dimension_numbers = #tpu.dot_dimension_numbers<[1], [0], [0], [1], [0, 0, 1, 1], [], []>} : vector<40x32xbf16>, vector<32x32xbf16>, vector<40x32xf32> -> vector<40x32xf32>
    %39 = arith.addf %33, %38 : vector<40x32xf32>
    %40 = vector.extract_strided_slice %2 {offsets = [20, 0], sizes = [40, 32], strides = [1, 1]} : vector<62x32xf32> to vector<40x32xf32>
    %41 = arith.truncf %40 : vector<40x32xf32> to vector<40x32xbf16>
    %c6 = arith.constant 6 : index
    %c0_23 = arith.constant 0 : index
    %c0_24 = arith.constant 0 : index
    %42 = vector.load %arg2[%c6, %c0_23, %c0_24] : memref<9x32x32xbf16, #tpu.memory_space<vmem>>, vector<1x32x32xbf16>
    %43 = vector.shape_cast %42 : vector<1x32x32xbf16> to vector<32x32xbf16>
    %cst_25 = arith.constant dense<0.000000e+00> : vector<40x32xf32>
    %44 = tpu.matmul %41, %43, %cst_25 {dimension_numbers = #tpu.dot_dimension_numbers<[1], [0], [0], [1], [0, 0, 1, 1], [], []>} : vector<40x32xbf16>, vector<32x32xbf16>, vector<40x32xf32> -> vector<40x32xf32>
    %45 = arith.addf %39, %44 : vector<40x32xf32>
    %46 = vector.extract_strided_slice %2 {offsets = [21, 0], sizes = [40, 32], strides = [1, 1]} : vector<62x32xf32> to vector<40x32xf32>
    %47 = arith.truncf %46 : vector<40x32xf32> to vector<40x32xbf16>
    %c7 = arith.constant 7 : index
    %c0_26 = arith.constant 0 : index
    %c0_27 = arith.constant 0 : index
    %48 = vector.load %arg2[%c7, %c0_26, %c0_27] : memref<9x32x32xbf16, #tpu.memory_space<vmem>>, vector<1x32x32xbf16>
    %49 = vector.shape_cast %48 : vector<1x32x32xbf16> to vector<32x32xbf16>
    %cst_28 = arith.constant dense<0.000000e+00> : vector<40x32xf32>
    %50 = tpu.matmul %47, %49, %cst_28 {dimension_numbers = #tpu.dot_dimension_numbers<[1], [0], [0], [1], [0, 0, 1, 1], [], []>} : vector<40x32xbf16>, vector<32x32xbf16>, vector<40x32xf32> -> vector<40x32xf32>
    %51 = arith.addf %45, %50 : vector<40x32xf32>
    %52 = vector.extract_strided_slice %2 {offsets = [22, 0], sizes = [40, 32], strides = [1, 1]} : vector<62x32xf32> to vector<40x32xf32>
    %53 = arith.truncf %52 : vector<40x32xf32> to vector<40x32xbf16>
    %c8 = arith.constant 8 : index
    %c0_29 = arith.constant 0 : index
    %c0_30 = arith.constant 0 : index
    %54 = vector.load %arg2[%c8, %c0_29, %c0_30] : memref<9x32x32xbf16, #tpu.memory_space<vmem>>, vector<1x32x32xbf16>
    %55 = vector.shape_cast %54 : vector<1x32x32xbf16> to vector<32x32xbf16>
    %cst_31 = arith.constant dense<0.000000e+00> : vector<40x32xf32>
    %56 = tpu.matmul %53, %55, %cst_31 {dimension_numbers = #tpu.dot_dimension_numbers<[1], [0], [0], [1], [0, 0, 1, 1], [], []>} : vector<40x32xbf16>, vector<32x32xbf16>, vector<40x32xf32> -> vector<40x32xf32>
    %57 = arith.addf %51, %56 : vector<40x32xf32>
    %58 = vector.broadcast %0 : vector<1x32xf32> to vector<40x32xf32>
    %59 = arith.addf %57, %58 : vector<40x32xf32>
    %c0_32 = arith.constant 0 : index
    %c0_33 = arith.constant 0 : index
    %c0_34 = arith.constant 0 : index
    %60 = vector.load %arg4[%c0_32, %c0_33, %c0_34] : memref<1x40x32xf32, #tpu.memory_space<vmem>>, vector<1x40x32xf32>
    %61 = vector.shape_cast %60 : vector<1x40x32xf32> to vector<40x32xf32>
    %62 = arith.addf %59, %61 : vector<40x32xf32>
    %c0_35 = arith.constant 0 : index
    %c0_36 = arith.constant 0 : index
    %c0_37 = arith.constant 0 : index
    %63 = vector.load %arg5[%c0_35, %c0_36, %c0_37] : memref<1x40x32xf32, #tpu.memory_space<vmem>>, vector<1x40x32xf32>
    %64 = vector.shape_cast %63 : vector<1x40x32xf32> to vector<40x32xf32>
    %65 = vector.shape_cast %62 : vector<40x32xf32> to vector<1x40x32xf32>
    tpu.vector_store %arg5[%c0_35, %c0_36, %c0_37], %65 {strides = array<i32>} : memref<1x40x32xf32, #tpu.memory_space<vmem>>, vector<1x40x32xf32>,
    return
  }
  func.func @transform_0(%arg0: i32) -> (i32, i32, i32) {
    %c0_i32 = arith.constant 0 : i32
    %c0_i32_0 = arith.constant 0 : i32
    %c0_i32_1 = arith.constant 0 : i32
    return %arg0, %c0_i32, %c0_i32_0 : i32, i32, i32
  }
  func.func @transform_1(%arg0: i32) -> (i32, i32, i32) {
    %c0_i32 = arith.constant 0 : i32
    %c0_i32_0 = arith.constant 0 : i32
    %c0_i32_1 = arith.constant 0 : i32
    %c0_i32_2 = arith.constant 0 : i32
    return %c0_i32, %c0_i32_0, %c0_i32_1 : i32, i32, i32
  }
  func.func @transform_2(%arg0: i32) -> (i32, i32) {
    %c0_i32 = arith.constant 0 : i32
    %c0_i32_0 = arith.constant 0 : i32
    %c0_i32_1 = arith.constant 0 : i32
    return %c0_i32, %c0_i32_0 : i32, i32
  }
  func.func @transform_3(%arg0: i32) -> (i32, i32, i32) {
    %c0_i32 = arith.constant 0 : i32
    %c0_i32_0 = arith.constant 0 : i32
    %c0_i32_1 = arith.constant 0 : i32
    return %arg0, %c0_i32, %c0_i32_0 : i32, i32, i32
  }
  func.func @transform_4(%arg0: i32) -> (i32, i32, i32) {
    %c0_i32 = arith.constant 0 : i32
    %c0_i32_0 = arith.constant 0 : i32
    %c0_i32_1 = arith.constant 0 : i32
    return %arg0, %c0_i32, %c0_i32_0 : i32, i32, i32
  }
}

module attributes {stable_mosaic.version = 11 : i64} {
  func.func @_fused_conv_kernel(%arg0: i32, %arg1: memref<1x62x32xf32, #tpu.memory_space<vmem>>, %arg2: memref<12x32x32xbf16, #tpu.memory_space<vmem>>, %arg3: memref<1x32xf32, #tpu.memory_space<vmem>>, %arg4: memref<1x40x32xf32, #tpu.memory_space<vmem>>, %arg5: memref<1x40x32xf32, #tpu.memory_space<vmem>>) attributes {dimension_semantics = [#tpu.dimension_semantics<parallel>], iteration_bounds = array<i64: 2>, scalar_prefetch = 0 : i64, scratch_operands = 0 : i64, tpu.core_type = #tpu.core_type<tc>, window_params = [{transform_indices = @transform_0, window_bounds = array<i64: 1, 62, 32>}, {pipeline_mode = #tpu.pipeline_mode<synchronous>, transform_indices = @transform_1, window_bounds = array<i64: 12, 32, 32>}, {pipeline_mode = #tpu.pipeline_mode<synchronous>, transform_indices = @transform_2, window_bounds = array<i64: 1, 32>}, {transform_indices = @transform_3, window_bounds = array<i64: 1, 40, 32>}, {transform_indices = @transform_4, window_bounds = array<i64: 1, 40, 32>}]} {
    %c0 = arith.constant 0 : index
    %c0_0 = arith.constant 0 : index
    %0 = vector.load %arg3[%c0, %c0_0] : memref<1x32xf32, #tpu.memory_space<vmem>>, vector<1x32xf32>
    %c0_1 = arith.constant 0 : index
    %c0_2 = arith.constant 0 : index
    %c0_3 = arith.constant 0 : index
    %1 = vector.load %arg1[%c0_1, %c0_2, %c0_3] : memref<1x62x32xf32, #tpu.memory_space<vmem>>, vector<1x62x32xf32>
    %2 = vector.shape_cast %1 : vector<1x62x32xf32> to vector<62x32xf32>
    %cst = arith.constant 0.000000e+00 : f32
    %3 = vector.broadcast %cst : f32 to vector<40x32xf32>
    %4 = vector.extract_strided_slice %2 {offsets = [0, 0], sizes = [40, 32], strides = [1, 1]} : vector<62x32xf32> to vector<40x32xf32>
    %5 = arith.truncf %4 : vector<40x32xf32> to vector<40x32xbf16>
    %c0_4 = arith.constant 0 : index
    %c0_5 = arith.constant 0 : index
    %c0_6 = arith.constant 0 : index
    %6 = vector.load %arg2[%c0_4, %c0_5, %c0_6] : memref<12x32x32xbf16, #tpu.memory_space<vmem>>, vector<1x32x32xbf16>
    %7 = vector.shape_cast %6 : vector<1x32x32xbf16> to vector<32x32xbf16>
    %cst_7 = arith.constant dense<0.000000e+00> : vector<40x32xf32>
    %8 = tpu.matmul %5, %7, %cst_7 {dimension_numbers = #tpu.dot_dimension_numbers<[1], [0], [0], [1], [0, 0, 1, 1], [], []>} : vector<40x32xbf16>, vector<32x32xbf16>, vector<40x32xf32> -> vector<40x32xf32>
    %9 = arith.addf %3, %8 : vector<40x32xf32>
    %10 = vector.extract_strided_slice %2 {offsets = [1, 0], sizes = [40, 32], strides = [1, 1]} : vector<62x32xf32> to vector<40x32xf32>
    %11 = arith.truncf %10 : vector<40x32xf32> to vector<40x32xbf16>
    %c1 = arith.constant 1 : index
    %c0_8 = arith.constant 0 : index
    %c0_9 = arith.constant 0 : index
    %12 = vector.load %arg2[%c1, %c0_8, %c0_9] : memref<12x32x32xbf16, #tpu.memory_space<vmem>>, vector<1x32x32xbf16>
    %13 = vector.shape_cast %12 : vector<1x32x32xbf16> to vector<32x32xbf16>
    %cst_10 = arith.constant dense<0.000000e+00> : vector<40x32xf32>
    %14 = tpu.matmul %11, %13, %cst_10 {dimension_numbers = #tpu.dot_dimension_numbers<[1], [0], [0], [1], [0, 0, 1, 1], [], []>} : vector<40x32xbf16>, vector<32x32xbf16>, vector<40x32xf32> -> vector<40x32xf32>
    %15 = arith.addf %9, %14 : vector<40x32xf32>
    %16 = vector.extract_strided_slice %2 {offsets = [10, 0], sizes = [40, 32], strides = [1, 1]} : vector<62x32xf32> to vector<40x32xf32>
    %17 = arith.truncf %16 : vector<40x32xf32> to vector<40x32xbf16>
    %c2 = arith.constant 2 : index
    %c0_11 = arith.constant 0 : index
    %c0_12 = arith.constant 0 : index
    %18 = vector.load %arg2[%c2, %c0_11, %c0_12] : memref<12x32x32xbf16, #tpu.memory_space<vmem>>, vector<1x32x32xbf16>
    %19 = vector.shape_cast %18 : vector<1x32x32xbf16> to vector<32x32xbf16>
    %cst_13 = arith.constant dense<0.000000e+00> : vector<40x32xf32>
    %20 = tpu.matmul %17, %19, %cst_13 {dimension_numbers = #tpu.dot_dimension_numbers<[1], [0], [0], [1], [0, 0, 1, 1], [], []>} : vector<40x32xbf16>, vector<32x32xbf16>, vector<40x32xf32> -> vector<40x32xf32>
    %21 = arith.addf %15, %20 : vector<40x32xf32>
    %22 = vector.extract_strided_slice %2 {offsets = [11, 0], sizes = [40, 32], strides = [1, 1]} : vector<62x32xf32> to vector<40x32xf32>
    %23 = arith.truncf %22 : vector<40x32xf32> to vector<40x32xbf16>
    %c3 = arith.constant 3 : index
    %c0_14 = arith.constant 0 : index
    %c0_15 = arith.constant 0 : index
    %24 = vector.load %arg2[%c3, %c0_14, %c0_15] : memref<12x32x32xbf16, #tpu.memory_space<vmem>>, vector<1x32x32xbf16>
    %25 = vector.shape_cast %24 : vector<1x32x32xbf16> to vector<32x32xbf16>
    %cst_16 = arith.constant dense<0.000000e+00> : vector<40x32xf32>
    %26 = tpu.matmul %23, %25, %cst_16 {dimension_numbers = #tpu.dot_dimension_numbers<[1], [0], [0], [1], [0, 0, 1, 1], [], []>} : vector<40x32xbf16>, vector<32x32xbf16>, vector<40x32xf32> -> vector<40x32xf32>
    %27 = arith.addf %21, %26 : vector<40x32xf32>
    %28 = vector.extract_strided_slice %2 {offsets = [20, 0], sizes = [40, 32], strides = [1, 1]} : vector<62x32xf32> to vector<40x32xf32>
    %29 = arith.truncf %28 : vector<40x32xf32> to vector<40x32xbf16>
    %c4 = arith.constant 4 : index
    %c0_17 = arith.constant 0 : index
    %c0_18 = arith.constant 0 : index
    %30 = vector.load %arg2[%c4, %c0_17, %c0_18] : memref<12x32x32xbf16, #tpu.memory_space<vmem>>, vector<1x32x32xbf16>
    %31 = vector.shape_cast %30 : vector<1x32x32xbf16> to vector<32x32xbf16>
    %cst_19 = arith.constant dense<0.000000e+00> : vector<40x32xf32>
    %32 = tpu.matmul %29, %31, %cst_19 {dimension_numbers = #tpu.dot_dimension_numbers<[1], [0], [0], [1], [0, 0, 1, 1], [], []>} : vector<40x32xbf16>, vector<32x32xbf16>, vector<40x32xf32> -> vector<40x32xf32>
    %33 = arith.addf %27, %32 : vector<40x32xf32>
    %34 = vector.extract_strided_slice %2 {offsets = [21, 0], sizes = [40, 32], strides = [1, 1]} : vector<62x32xf32> to vector<40x32xf32>
    %35 = arith.truncf %34 : vector<40x32xf32> to vector<40x32xbf16>
    %c5 = arith.constant 5 : index
    %c0_20 = arith.constant 0 : index
    %c0_21 = arith.constant 0 : index
    %36 = vector.load %arg2[%c5, %c0_20, %c0_21] : memref<12x32x32xbf16, #tpu.memory_space<vmem>>, vector<1x32x32xbf16>
    %37 = vector.shape_cast %36 : vector<1x32x32xbf16> to vector<32x32xbf16>
    %cst_22 = arith.constant dense<0.000000e+00> : vector<40x32xf32>
    %38 = tpu.matmul %35, %37, %cst_22 {dimension_numbers = #tpu.dot_dimension_numbers<[1], [0], [0], [1], [0, 0, 1, 1], [], []>} : vector<40x32xbf16>, vector<32x32xbf16>, vector<40x32xf32> -> vector<40x32xf32>
    %39 = arith.addf %33, %38 : vector<40x32xf32>
    %40 = vector.broadcast %0 : vector<1x32xf32> to vector<40x32xf32>
    %41 = arith.addf %39, %40 : vector<40x32xf32>
    %cst_23 = arith.constant 0.000000e+00 : f32
    %42 = vector.broadcast %cst_23 : f32 to vector<40x32xf32>
    %43 = arith.cmpf oge, %41, %42 : vector<40x32xf32>
    %cst_24 = arith.constant 0.00999999977 : f32
    %44 = vector.broadcast %cst_24 : f32 to vector<40x32xf32>
    %45 = arith.mulf %44, %41 : vector<40x32xf32>
    %46 = arith.select %43, %41, %45 : vector<40x32xi1>, vector<40x32xf32>
    %c0_25 = arith.constant 0 : index
    %c0_26 = arith.constant 0 : index
    %c0_27 = arith.constant 0 : index
    %47 = vector.load %arg4[%c0_25, %c0_26, %c0_27] : memref<1x40x32xf32, #tpu.memory_space<vmem>>, vector<1x40x32xf32>
    %48 = vector.shape_cast %47 : vector<1x40x32xf32> to vector<40x32xf32>
    %49 = vector.shape_cast %46 : vector<40x32xf32> to vector<1x40x32xf32>
    tpu.vector_store %arg4[%c0_25, %c0_26, %c0_27], %49 {strides = array<i32>} : memref<1x40x32xf32, #tpu.memory_space<vmem>>, vector<1x40x32xf32>,
    %cst_28 = arith.constant 0.000000e+00 : f32
    %50 = vector.broadcast %cst_28 : f32 to vector<40x32xf32>
    %51 = vector.extract_strided_slice %2 {offsets = [1, 0], sizes = [40, 32], strides = [1, 1]} : vector<62x32xf32> to vector<40x32xf32>
    %52 = arith.truncf %51 : vector<40x32xf32> to vector<40x32xbf16>
    %c6 = arith.constant 6 : index
    %c0_29 = arith.constant 0 : index
    %c0_30 = arith.constant 0 : index
    %53 = vector.load %arg2[%c6, %c0_29, %c0_30] : memref<12x32x32xbf16, #tpu.memory_space<vmem>>, vector<1x32x32xbf16>
    %54 = vector.shape_cast %53 : vector<1x32x32xbf16> to vector<32x32xbf16>
    %cst_31 = arith.constant dense<0.000000e+00> : vector<40x32xf32>
    %55 = tpu.matmul %52, %54, %cst_31 {dimension_numbers = #tpu.dot_dimension_numbers<[1], [0], [0], [1], [0, 0, 1, 1], [], []>} : vector<40x32xbf16>, vector<32x32xbf16>, vector<40x32xf32> -> vector<40x32xf32>
    %56 = arith.addf %50, %55 : vector<40x32xf32>
    %57 = vector.extract_strided_slice %2 {offsets = [2, 0], sizes = [40, 32], strides = [1, 1]} : vector<62x32xf32> to vector<40x32xf32>
    %58 = arith.truncf %57 : vector<40x32xf32> to vector<40x32xbf16>
    %c7 = arith.constant 7 : index
    %c0_32 = arith.constant 0 : index
    %c0_33 = arith.constant 0 : index
    %59 = vector.load %arg2[%c7, %c0_32, %c0_33] : memref<12x32x32xbf16, #tpu.memory_space<vmem>>, vector<1x32x32xbf16>
    %60 = vector.shape_cast %59 : vector<1x32x32xbf16> to vector<32x32xbf16>
    %cst_34 = arith.constant dense<0.000000e+00> : vector<40x32xf32>
    %61 = tpu.matmul %58, %60, %cst_34 {dimension_numbers = #tpu.dot_dimension_numbers<[1], [0], [0], [1], [0, 0, 1, 1], [], []>} : vector<40x32xbf16>, vector<32x32xbf16>, vector<40x32xf32> -> vector<40x32xf32>
    %62 = arith.addf %56, %61 : vector<40x32xf32>
    %63 = vector.extract_strided_slice %2 {offsets = [11, 0], sizes = [40, 32], strides = [1, 1]} : vector<62x32xf32> to vector<40x32xf32>
    %64 = arith.truncf %63 : vector<40x32xf32> to vector<40x32xbf16>
    %c8 = arith.constant 8 : index
    %c0_35 = arith.constant 0 : index
    %c0_36 = arith.constant 0 : index
    %65 = vector.load %arg2[%c8, %c0_35, %c0_36] : memref<12x32x32xbf16, #tpu.memory_space<vmem>>, vector<1x32x32xbf16>
    %66 = vector.shape_cast %65 : vector<1x32x32xbf16> to vector<32x32xbf16>
    %cst_37 = arith.constant dense<0.000000e+00> : vector<40x32xf32>
    %67 = tpu.matmul %64, %66, %cst_37 {dimension_numbers = #tpu.dot_dimension_numbers<[1], [0], [0], [1], [0, 0, 1, 1], [], []>} : vector<40x32xbf16>, vector<32x32xbf16>, vector<40x32xf32> -> vector<40x32xf32>
    %68 = arith.addf %62, %67 : vector<40x32xf32>
    %69 = vector.extract_strided_slice %2 {offsets = [12, 0], sizes = [40, 32], strides = [1, 1]} : vector<62x32xf32> to vector<40x32xf32>
    %70 = arith.truncf %69 : vector<40x32xf32> to vector<40x32xbf16>
    %c9 = arith.constant 9 : index
    %c0_38 = arith.constant 0 : index
    %c0_39 = arith.constant 0 : index
    %71 = vector.load %arg2[%c9, %c0_38, %c0_39] : memref<12x32x32xbf16, #tpu.memory_space<vmem>>, vector<1x32x32xbf16>
    %72 = vector.shape_cast %71 : vector<1x32x32xbf16> to vector<32x32xbf16>
    %cst_40 = arith.constant dense<0.000000e+00> : vector<40x32xf32>
    %73 = tpu.matmul %70, %72, %cst_40 {dimension_numbers = #tpu.dot_dimension_numbers<[1], [0], [0], [1], [0, 0, 1, 1], [], []>} : vector<40x32xbf16>, vector<32x32xbf16>, vector<40x32xf32> -> vector<40x32xf32>
    %74 = arith.addf %68, %73 : vector<40x32xf32>
    %75 = vector.extract_strided_slice %2 {offsets = [21, 0], sizes = [40, 32], strides = [1, 1]} : vector<62x32xf32> to vector<40x32xf32>
    %76 = arith.truncf %75 : vector<40x32xf32> to vector<40x32xbf16>
    %c10 = arith.constant 10 : index
    %c0_41 = arith.constant 0 : index
    %c0_42 = arith.constant 0 : index
    %77 = vector.load %arg2[%c10, %c0_41, %c0_42] : memref<12x32x32xbf16, #tpu.memory_space<vmem>>, vector<1x32x32xbf16>
    %78 = vector.shape_cast %77 : vector<1x32x32xbf16> to vector<32x32xbf16>
    %cst_43 = arith.constant dense<0.000000e+00> : vector<40x32xf32>
    %79 = tpu.matmul %76, %78, %cst_43 {dimension_numbers = #tpu.dot_dimension_numbers<[1], [0], [0], [1], [0, 0, 1, 1], [], []>} : vector<40x32xbf16>, vector<32x32xbf16>, vector<40x32xf32> -> vector<40x32xf32>
    %80 = arith.addf %74, %79 : vector<40x32xf32>
    %81 = vector.extract_strided_slice %2 {offsets = [22, 0], sizes = [40, 32], strides = [1, 1]} : vector<62x32xf32> to vector<40x32xf32>
    %82 = arith.truncf %81 : vector<40x32xf32> to vector<40x32xbf16>
    %c11 = arith.constant 11 : index
    %c0_44 = arith.constant 0 : index
    %c0_45 = arith.constant 0 : index
    %83 = vector.load %arg2[%c11, %c0_44, %c0_45] : memref<12x32x32xbf16, #tpu.memory_space<vmem>>, vector<1x32x32xbf16>
    %84 = vector.shape_cast %83 : vector<1x32x32xbf16> to vector<32x32xbf16>
    %cst_46 = arith.constant dense<0.000000e+00> : vector<40x32xf32>
    %85 = tpu.matmul %82, %84, %cst_46 {dimension_numbers = #tpu.dot_dimension_numbers<[1], [0], [0], [1], [0, 0, 1, 1], [], []>} : vector<40x32xbf16>, vector<32x32xbf16>, vector<40x32xf32> -> vector<40x32xf32>
    %86 = arith.addf %80, %85 : vector<40x32xf32>
    %87 = vector.broadcast %0 : vector<1x32xf32> to vector<40x32xf32>
    %88 = arith.addf %86, %87 : vector<40x32xf32>
    %cst_47 = arith.constant 0.000000e+00 : f32
    %89 = vector.broadcast %cst_47 : f32 to vector<40x32xf32>
    %90 = arith.cmpf oge, %88, %89 : vector<40x32xf32>
    %cst_48 = arith.constant 0.00999999977 : f32
    %91 = vector.broadcast %cst_48 : f32 to vector<40x32xf32>
    %92 = arith.mulf %91, %88 : vector<40x32xf32>
    %93 = arith.select %90, %88, %92 : vector<40x32xi1>, vector<40x32xf32>
    %c0_49 = arith.constant 0 : index
    %c0_50 = arith.constant 0 : index
    %c0_51 = arith.constant 0 : index
    %94 = vector.load %arg5[%c0_49, %c0_50, %c0_51] : memref<1x40x32xf32, #tpu.memory_space<vmem>>, vector<1x40x32xf32>
    %95 = vector.shape_cast %94 : vector<1x40x32xf32> to vector<40x32xf32>
    %96 = vector.shape_cast %93 : vector<40x32xf32> to vector<1x40x32xf32>
    tpu.vector_store %arg5[%c0_49, %c0_50, %c0_51], %96 {strides = array<i32>} : memref<1x40x32xf32, #tpu.memory_space<vmem>>, vector<1x40x32xf32>,
    return
  }
  func.func @transform_0(%arg0: i32) -> (i32, i32, i32) {
    %c0_i32 = arith.constant 0 : i32
    %c0_i32_0 = arith.constant 0 : i32
    %c0_i32_1 = arith.constant 0 : i32
    return %arg0, %c0_i32, %c0_i32_0 : i32, i32, i32
  }
  func.func @transform_1(%arg0: i32) -> (i32, i32, i32) {
    %c0_i32 = arith.constant 0 : i32
    %c0_i32_0 = arith.constant 0 : i32
    %c0_i32_1 = arith.constant 0 : i32
    %c0_i32_2 = arith.constant 0 : i32
    return %c0_i32, %c0_i32_0, %c0_i32_1 : i32, i32, i32
  }
  func.func @transform_2(%arg0: i32) -> (i32, i32) {
    %c0_i32 = arith.constant 0 : i32
    %c0_i32_0 = arith.constant 0 : i32
    %c0_i32_1 = arith.constant 0 : i32
    return %c0_i32, %c0_i32_0 : i32, i32
  }
  func.func @transform_3(%arg0: i32) -> (i32, i32, i32) {
    %c0_i32 = arith.constant 0 : i32
    %c0_i32_0 = arith.constant 0 : i32
    %c0_i32_1 = arith.constant 0 : i32
    return %arg0, %c0_i32, %c0_i32_0 : i32, i32, i32
  }
  func.func @transform_4(%arg0: i32) -> (i32, i32, i32) {
    %c0_i32 = arith.constant 0 : i32
    %c0_i32_0 = arith.constant 0 : i32
    %c0_i32_1 = arith.constant 0 : i32
    return %arg0, %c0_i32, %c0_i32_0 : i32, i32, i32
  }
}

module attributes {stable_mosaic.version = 11 : i64} {
  func.func @_fused_conv_kernel(%arg0: i32, %arg1: memref<1x110x32xf32, #tpu.memory_space<vmem>>, %arg2: memref<12x32x4xbf16, #tpu.memory_space<vmem>>, %arg3: memref<1x4xf32, #tpu.memory_space<vmem>>, %arg4: memref<1x72x4xf32, #tpu.memory_space<vmem>>, %arg5: memref<1x72x4xf32, #tpu.memory_space<vmem>>) attributes {dimension_semantics = [#tpu.dimension_semantics<parallel>], iteration_bounds = array<i64: 2>, scalar_prefetch = 0 : i64, scratch_operands = 0 : i64, tpu.core_type = #tpu.core_type<tc>, window_params = [{transform_indices = @transform_0, window_bounds = array<i64: 1, 110, 32>}, {pipeline_mode = #tpu.pipeline_mode<synchronous>, transform_indices = @transform_1, window_bounds = array<i64: 12, 32, 4>}, {pipeline_mode = #tpu.pipeline_mode<synchronous>, transform_indices = @transform_2, window_bounds = array<i64: 1, 4>}, {transform_indices = @transform_3, window_bounds = array<i64: 1, 72, 4>}, {transform_indices = @transform_4, window_bounds = array<i64: 1, 72, 4>}]} {
    %c0 = arith.constant 0 : index
    %c0_0 = arith.constant 0 : index
    %0 = vector.load %arg3[%c0, %c0_0] : memref<1x4xf32, #tpu.memory_space<vmem>>, vector<1x4xf32>
    %c0_1 = arith.constant 0 : index
    %c0_2 = arith.constant 0 : index
    %c0_3 = arith.constant 0 : index
    %1 = vector.load %arg1[%c0_1, %c0_2, %c0_3] : memref<1x110x32xf32, #tpu.memory_space<vmem>>, vector<1x110x32xf32>
    %2 = vector.shape_cast %1 : vector<1x110x32xf32> to vector<110x32xf32>
    %cst = arith.constant 0.000000e+00 : f32
    %3 = vector.broadcast %cst : f32 to vector<72x4xf32>
    %4 = vector.extract_strided_slice %2 {offsets = [0, 0], sizes = [72, 32], strides = [1, 1]} : vector<110x32xf32> to vector<72x32xf32>
    %5 = arith.truncf %4 : vector<72x32xf32> to vector<72x32xbf16>
    %c0_4 = arith.constant 0 : index
    %c0_5 = arith.constant 0 : index
    %c0_6 = arith.constant 0 : index
    %6 = vector.load %arg2[%c0_4, %c0_5, %c0_6] : memref<12x32x4xbf16, #tpu.memory_space<vmem>>, vector<1x32x4xbf16>
    %7 = vector.shape_cast %6 : vector<1x32x4xbf16> to vector<32x4xbf16>
    %cst_7 = arith.constant dense<0.000000e+00> : vector<72x4xf32>
    %8 = tpu.matmul %5, %7, %cst_7 {dimension_numbers = #tpu.dot_dimension_numbers<[1], [0], [0], [1], [0, 0, 1, 1], [], []>} : vector<72x32xbf16>, vector<32x4xbf16>, vector<72x4xf32> -> vector<72x4xf32>
    %9 = arith.addf %3, %8 : vector<72x4xf32>
    %10 = vector.extract_strided_slice %2 {offsets = [1, 0], sizes = [72, 32], strides = [1, 1]} : vector<110x32xf32> to vector<72x32xf32>
    %11 = arith.truncf %10 : vector<72x32xf32> to vector<72x32xbf16>
    %c1 = arith.constant 1 : index
    %c0_8 = arith.constant 0 : index
    %c0_9 = arith.constant 0 : index
    %12 = vector.load %arg2[%c1, %c0_8, %c0_9] : memref<12x32x4xbf16, #tpu.memory_space<vmem>>, vector<1x32x4xbf16>
    %13 = vector.shape_cast %12 : vector<1x32x4xbf16> to vector<32x4xbf16>
    %cst_10 = arith.constant dense<0.000000e+00> : vector<72x4xf32>
    %14 = tpu.matmul %11, %13, %cst_10 {dimension_numbers = #tpu.dot_dimension_numbers<[1], [0], [0], [1], [0, 0, 1, 1], [], []>} : vector<72x32xbf16>, vector<32x4xbf16>, vector<72x4xf32> -> vector<72x4xf32>
    %15 = arith.addf %9, %14 : vector<72x4xf32>
    %16 = vector.extract_strided_slice %2 {offsets = [18, 0], sizes = [72, 32], strides = [1, 1]} : vector<110x32xf32> to vector<72x32xf32>
    %17 = arith.truncf %16 : vector<72x32xf32> to vector<72x32xbf16>
    %c2 = arith.constant 2 : index
    %c0_11 = arith.constant 0 : index
    %c0_12 = arith.constant 0 : index
    %18 = vector.load %arg2[%c2, %c0_11, %c0_12] : memref<12x32x4xbf16, #tpu.memory_space<vmem>>, vector<1x32x4xbf16>
    %19 = vector.shape_cast %18 : vector<1x32x4xbf16> to vector<32x4xbf16>
    %cst_13 = arith.constant dense<0.000000e+00> : vector<72x4xf32>
    %20 = tpu.matmul %17, %19, %cst_13 {dimension_numbers = #tpu.dot_dimension_numbers<[1], [0], [0], [1], [0, 0, 1, 1], [], []>} : vector<72x32xbf16>, vector<32x4xbf16>, vector<72x4xf32> -> vector<72x4xf32>
    %21 = arith.addf %15, %20 : vector<72x4xf32>
    %22 = vector.extract_strided_slice %2 {offsets = [19, 0], sizes = [72, 32], strides = [1, 1]} : vector<110x32xf32> to vector<72x32xf32>
    %23 = arith.truncf %22 : vector<72x32xf32> to vector<72x32xbf16>
    %c3 = arith.constant 3 : index
    %c0_14 = arith.constant 0 : index
    %c0_15 = arith.constant 0 : index
    %24 = vector.load %arg2[%c3, %c0_14, %c0_15] : memref<12x32x4xbf16, #tpu.memory_space<vmem>>, vector<1x32x4xbf16>
    %25 = vector.shape_cast %24 : vector<1x32x4xbf16> to vector<32x4xbf16>
    %cst_16 = arith.constant dense<0.000000e+00> : vector<72x4xf32>
    %26 = tpu.matmul %23, %25, %cst_16 {dimension_numbers = #tpu.dot_dimension_numbers<[1], [0], [0], [1], [0, 0, 1, 1], [], []>} : vector<72x32xbf16>, vector<32x4xbf16>, vector<72x4xf32> -> vector<72x4xf32>
    %27 = arith.addf %21, %26 : vector<72x4xf32>
    %28 = vector.extract_strided_slice %2 {offsets = [36, 0], sizes = [72, 32], strides = [1, 1]} : vector<110x32xf32> to vector<72x32xf32>
    %29 = arith.truncf %28 : vector<72x32xf32> to vector<72x32xbf16>
    %c4 = arith.constant 4 : index
    %c0_17 = arith.constant 0 : index
    %c0_18 = arith.constant 0 : index
    %30 = vector.load %arg2[%c4, %c0_17, %c0_18] : memref<12x32x4xbf16, #tpu.memory_space<vmem>>, vector<1x32x4xbf16>
    %31 = vector.shape_cast %30 : vector<1x32x4xbf16> to vector<32x4xbf16>
    %cst_19 = arith.constant dense<0.000000e+00> : vector<72x4xf32>
    %32 = tpu.matmul %29, %31, %cst_19 {dimension_numbers = #tpu.dot_dimension_numbers<[1], [0], [0], [1], [0, 0, 1, 1], [], []>} : vector<72x32xbf16>, vector<32x4xbf16>, vector<72x4xf32> -> vector<72x4xf32>
    %33 = arith.addf %27, %32 : vector<72x4xf32>
    %34 = vector.extract_strided_slice %2 {offsets = [37, 0], sizes = [72, 32], strides = [1, 1]} : vector<110x32xf32> to vector<72x32xf32>
    %35 = arith.truncf %34 : vector<72x32xf32> to vector<72x32xbf16>
    %c5 = arith.constant 5 : index
    %c0_20 = arith.constant 0 : index
    %c0_21 = arith.constant 0 : index
    %36 = vector.load %arg2[%c5, %c0_20, %c0_21] : memref<12x32x4xbf16, #tpu.memory_space<vmem>>, vector<1x32x4xbf16>
    %37 = vector.shape_cast %36 : vector<1x32x4xbf16> to vector<32x4xbf16>
    %cst_22 = arith.constant dense<0.000000e+00> : vector<72x4xf32>
    %38 = tpu.matmul %35, %37, %cst_22 {dimension_numbers = #tpu.dot_dimension_numbers<[1], [0], [0], [1], [0, 0, 1, 1], [], []>} : vector<72x32xbf16>, vector<32x4xbf16>, vector<72x4xf32> -> vector<72x4xf32>
    %39 = arith.addf %33, %38 : vector<72x4xf32>
    %40 = vector.broadcast %0 : vector<1x4xf32> to vector<72x4xf32>
    %41 = arith.addf %39, %40 : vector<72x4xf32>
    %c0_23 = arith.constant 0 : index
    %c0_24 = arith.constant 0 : index
    %c0_25 = arith.constant 0 : index
    %42 = vector.load %arg4[%c0_23, %c0_24, %c0_25] : memref<1x72x4xf32, #tpu.memory_space<vmem>>, vector<1x72x4xf32>
    %43 = vector.shape_cast %42 : vector<1x72x4xf32> to vector<72x4xf32>
    %44 = vector.shape_cast %41 : vector<72x4xf32> to vector<1x72x4xf32>
    tpu.vector_store %arg4[%c0_23, %c0_24, %c0_25], %44 {strides = array<i32>} : memref<1x72x4xf32, #tpu.memory_space<vmem>>, vector<1x72x4xf32>,
    %cst_26 = arith.constant 0.000000e+00 : f32
    %45 = vector.broadcast %cst_26 : f32 to vector<72x4xf32>
    %46 = vector.extract_strided_slice %2 {offsets = [1, 0], sizes = [72, 32], strides = [1, 1]} : vector<110x32xf32> to vector<72x32xf32>
    %47 = arith.truncf %46 : vector<72x32xf32> to vector<72x32xbf16>
    %c6 = arith.constant 6 : index
    %c0_27 = arith.constant 0 : index
    %c0_28 = arith.constant 0 : index
    %48 = vector.load %arg2[%c6, %c0_27, %c0_28] : memref<12x32x4xbf16, #tpu.memory_space<vmem>>, vector<1x32x4xbf16>
    %49 = vector.shape_cast %48 : vector<1x32x4xbf16> to vector<32x4xbf16>
    %cst_29 = arith.constant dense<0.000000e+00> : vector<72x4xf32>
    %50 = tpu.matmul %47, %49, %cst_29 {dimension_numbers = #tpu.dot_dimension_numbers<[1], [0], [0], [1], [0, 0, 1, 1], [], []>} : vector<72x32xbf16>, vector<32x4xbf16>, vector<72x4xf32> -> vector<72x4xf32>
    %51 = arith.addf %45, %50 : vector<72x4xf32>
    %52 = vector.extract_strided_slice %2 {offsets = [2, 0], sizes = [72, 32], strides = [1, 1]} : vector<110x32xf32> to vector<72x32xf32>
    %53 = arith.truncf %52 : vector<72x32xf32> to vector<72x32xbf16>
    %c7 = arith.constant 7 : index
    %c0_30 = arith.constant 0 : index
    %c0_31 = arith.constant 0 : index
    %54 = vector.load %arg2[%c7, %c0_30, %c0_31] : memref<12x32x4xbf16, #tpu.memory_space<vmem>>, vector<1x32x4xbf16>
    %55 = vector.shape_cast %54 : vector<1x32x4xbf16> to vector<32x4xbf16>
    %cst_32 = arith.constant dense<0.000000e+00> : vector<72x4xf32>
    %56 = tpu.matmul %53, %55, %cst_32 {dimension_numbers = #tpu.dot_dimension_numbers<[1], [0], [0], [1], [0, 0, 1, 1], [], []>} : vector<72x32xbf16>, vector<32x4xbf16>, vector<72x4xf32> -> vector<72x4xf32>
    %57 = arith.addf %51, %56 : vector<72x4xf32>
    %58 = vector.extract_strided_slice %2 {offsets = [19, 0], sizes = [72, 32], strides = [1, 1]} : vector<110x32xf32> to vector<72x32xf32>
    %59 = arith.truncf %58 : vector<72x32xf32> to vector<72x32xbf16>
    %c8 = arith.constant 8 : index
    %c0_33 = arith.constant 0 : index
    %c0_34 = arith.constant 0 : index
    %60 = vector.load %arg2[%c8, %c0_33, %c0_34] : memref<12x32x4xbf16, #tpu.memory_space<vmem>>, vector<1x32x4xbf16>
    %61 = vector.shape_cast %60 : vector<1x32x4xbf16> to vector<32x4xbf16>
    %cst_35 = arith.constant dense<0.000000e+00> : vector<72x4xf32>
    %62 = tpu.matmul %59, %61, %cst_35 {dimension_numbers = #tpu.dot_dimension_numbers<[1], [0], [0], [1], [0, 0, 1, 1], [], []>} : vector<72x32xbf16>, vector<32x4xbf16>, vector<72x4xf32> -> vector<72x4xf32>
    %63 = arith.addf %57, %62 : vector<72x4xf32>
    %64 = vector.extract_strided_slice %2 {offsets = [20, 0], sizes = [72, 32], strides = [1, 1]} : vector<110x32xf32> to vector<72x32xf32>
    %65 = arith.truncf %64 : vector<72x32xf32> to vector<72x32xbf16>
    %c9 = arith.constant 9 : index
    %c0_36 = arith.constant 0 : index
    %c0_37 = arith.constant 0 : index
    %66 = vector.load %arg2[%c9, %c0_36, %c0_37] : memref<12x32x4xbf16, #tpu.memory_space<vmem>>, vector<1x32x4xbf16>
    %67 = vector.shape_cast %66 : vector<1x32x4xbf16> to vector<32x4xbf16>
    %cst_38 = arith.constant dense<0.000000e+00> : vector<72x4xf32>
    %68 = tpu.matmul %65, %67, %cst_38 {dimension_numbers = #tpu.dot_dimension_numbers<[1], [0], [0], [1], [0, 0, 1, 1], [], []>} : vector<72x32xbf16>, vector<32x4xbf16>, vector<72x4xf32> -> vector<72x4xf32>
    %69 = arith.addf %63, %68 : vector<72x4xf32>
    %70 = vector.extract_strided_slice %2 {offsets = [37, 0], sizes = [72, 32], strides = [1, 1]} : vector<110x32xf32> to vector<72x32xf32>
    %71 = arith.truncf %70 : vector<72x32xf32> to vector<72x32xbf16>
    %c10 = arith.constant 10 : index
    %c0_39 = arith.constant 0 : index
    %c0_40 = arith.constant 0 : index
    %72 = vector.load %arg2[%c10, %c0_39, %c0_40] : memref<12x32x4xbf16, #tpu.memory_space<vmem>>, vector<1x32x4xbf16>
    %73 = vector.shape_cast %72 : vector<1x32x4xbf16> to vector<32x4xbf16>
    %cst_41 = arith.constant dense<0.000000e+00> : vector<72x4xf32>
    %74 = tpu.matmul %71, %73, %cst_41 {dimension_numbers = #tpu.dot_dimension_numbers<[1], [0], [0], [1], [0, 0, 1, 1], [], []>} : vector<72x32xbf16>, vector<32x4xbf16>, vector<72x4xf32> -> vector<72x4xf32>
    %75 = arith.addf %69, %74 : vector<72x4xf32>
    %76 = vector.extract_strided_slice %2 {offsets = [38, 0], sizes = [72, 32], strides = [1, 1]} : vector<110x32xf32> to vector<72x32xf32>
    %77 = arith.truncf %76 : vector<72x32xf32> to vector<72x32xbf16>
    %c11 = arith.constant 11 : index
    %c0_42 = arith.constant 0 : index
    %c0_43 = arith.constant 0 : index
    %78 = vector.load %arg2[%c11, %c0_42, %c0_43] : memref<12x32x4xbf16, #tpu.memory_space<vmem>>, vector<1x32x4xbf16>
    %79 = vector.shape_cast %78 : vector<1x32x4xbf16> to vector<32x4xbf16>
    %cst_44 = arith.constant dense<0.000000e+00> : vector<72x4xf32>
    %80 = tpu.matmul %77, %79, %cst_44 {dimension_numbers = #tpu.dot_dimension_numbers<[1], [0], [0], [1], [0, 0, 1, 1], [], []>} : vector<72x32xbf16>, vector<32x4xbf16>, vector<72x4xf32> -> vector<72x4xf32>
    %81 = arith.addf %75, %80 : vector<72x4xf32>
    %82 = vector.broadcast %0 : vector<1x4xf32> to vector<72x4xf32>
    %83 = arith.addf %81, %82 : vector<72x4xf32>
    %c0_45 = arith.constant 0 : index
    %c0_46 = arith.constant 0 : index
    %c0_47 = arith.constant 0 : index
    %84 = vector.load %arg5[%c0_45, %c0_46, %c0_47] : memref<1x72x4xf32, #tpu.memory_space<vmem>>, vector<1x72x4xf32>
    %85 = vector.shape_cast %84 : vector<1x72x4xf32> to vector<72x4xf32>
    %86 = vector.shape_cast %83 : vector<72x4xf32> to vector<1x72x4xf32>
    tpu.vector_store %arg5[%c0_45, %c0_46, %c0_47], %86 {strides = array<i32>} : memref<1x72x4xf32, #tpu.memory_space<vmem>>, vector<1x72x4xf32>,
    return
  }
  func.func @transform_0(%arg0: i32) -> (i32, i32, i32) {
    %c0_i32 = arith.constant 0 : i32
    %c0_i32_0 = arith.constant 0 : i32
    %c0_i32_1 = arith.constant 0 : i32
    return %arg0, %c0_i32, %c0_i32_0 : i32, i32, i32
  }
  func.func @transform_1(%arg0: i32) -> (i32, i32, i32) {
    %c0_i32 = arith.constant 0 : i32
    %c0_i32_0 = arith.constant 0 : i32
    %c0_i32_1 = arith.constant 0 : i32
    %c0_i32_2 = arith.constant 0 : i32
    return %c0_i32, %c0_i32_0, %c0_i32_1 : i32, i32, i32
  }
  func.func @transform_2(%arg0: i32) -> (i32, i32) {
    %c0_i32 = arith.constant 0 : i32
    %c0_i32_0 = arith.constant 0 : i32
    %c0_i32_1 = arith.constant 0 : i32
    return %c0_i32, %c0_i32_0 : i32, i32
  }
  func.func @transform_3(%arg0: i32) -> (i32, i32, i32) {
    %c0_i32 = arith.constant 0 : i32
    %c0_i32_0 = arith.constant 0 : i32
    %c0_i32_1 = arith.constant 0 : i32
    return %arg0, %c0_i32, %c0_i32_0 : i32, i32, i32
  }
  func.func @transform_4(%arg0: i32) -> (i32, i32, i32) {
    %c0_i32 = arith.constant 0 : i32
    %c0_i32_0 = arith.constant 0 : i32
    %c0_i32_1 = arith.constant 0 : i32
    return %arg0, %c0_i32, %c0_i32_0 : i32, i32, i32
  }
}

module attributes {stable_mosaic.version = 11 : i64} {
  func.func @_fused_conv_kernel(%arg0: i32, %arg1: memref<1x206x4xf32, #tpu.memory_space<vmem>>, %arg2: memref<12x4x4xbf16, #tpu.memory_space<vmem>>, %arg3: memref<1x4xf32, #tpu.memory_space<vmem>>, %arg4: memref<1x136x4xf32, #tpu.memory_space<vmem>>, %arg5: memref<1x136x4xf32, #tpu.memory_space<vmem>>) attributes {dimension_semantics = [#tpu.dimension_semantics<parallel>], iteration_bounds = array<i64: 2>, scalar_prefetch = 0 : i64, scratch_operands = 0 : i64, tpu.core_type = #tpu.core_type<tc>, window_params = [{transform_indices = @transform_0, window_bounds = array<i64: 1, 206, 4>}, {pipeline_mode = #tpu.pipeline_mode<synchronous>, transform_indices = @transform_1, window_bounds = array<i64: 12, 4, 4>}, {pipeline_mode = #tpu.pipeline_mode<synchronous>, transform_indices = @transform_2, window_bounds = array<i64: 1, 4>}, {transform_indices = @transform_3, window_bounds = array<i64: 1, 136, 4>}, {transform_indices = @transform_4, window_bounds = array<i64: 1, 136, 4>}]} {
    %c0 = arith.constant 0 : index
    %c0_0 = arith.constant 0 : index
    %0 = vector.load %arg3[%c0, %c0_0] : memref<1x4xf32, #tpu.memory_space<vmem>>, vector<1x4xf32>
    %c0_1 = arith.constant 0 : index
    %c0_2 = arith.constant 0 : index
    %c0_3 = arith.constant 0 : index
    %1 = vector.load %arg1[%c0_1, %c0_2, %c0_3] : memref<1x206x4xf32, #tpu.memory_space<vmem>>, vector<1x206x4xf32>
    %2 = vector.shape_cast %1 : vector<1x206x4xf32> to vector<206x4xf32>
    %cst = arith.constant 0.000000e+00 : f32
    %3 = vector.broadcast %cst : f32 to vector<136x4xf32>
    %4 = vector.extract_strided_slice %2 {offsets = [0, 0], sizes = [136, 4], strides = [1, 1]} : vector<206x4xf32> to vector<136x4xf32>
    %5 = arith.truncf %4 : vector<136x4xf32> to vector<136x4xbf16>
    %c0_4 = arith.constant 0 : index
    %c0_5 = arith.constant 0 : index
    %c0_6 = arith.constant 0 : index
    %6 = vector.load %arg2[%c0_4, %c0_5, %c0_6] : memref<12x4x4xbf16, #tpu.memory_space<vmem>>, vector<1x4x4xbf16>
    %7 = vector.shape_cast %6 : vector<1x4x4xbf16> to vector<4x4xbf16>
    %cst_7 = arith.constant dense<0.000000e+00> : vector<136x4xf32>
    %8 = tpu.matmul %5, %7, %cst_7 {dimension_numbers = #tpu.dot_dimension_numbers<[1], [0], [0], [1], [0, 0, 1, 1], [], []>} : vector<136x4xbf16>, vector<4x4xbf16>, vector<136x4xf32> -> vector<136x4xf32>
    %9 = arith.addf %3, %8 : vector<136x4xf32>
    %10 = vector.extract_strided_slice %2 {offsets = [1, 0], sizes = [136, 4], strides = [1, 1]} : vector<206x4xf32> to vector<136x4xf32>
    %11 = arith.truncf %10 : vector<136x4xf32> to vector<136x4xbf16>
    %c1 = arith.constant 1 : index
    %c0_8 = arith.constant 0 : index
    %c0_9 = arith.constant 0 : index
    %12 = vector.load %arg2[%c1, %c0_8, %c0_9] : memref<12x4x4xbf16, #tpu.memory_space<vmem>>, vector<1x4x4xbf16>
    %13 = vector.shape_cast %12 : vector<1x4x4xbf16> to vector<4x4xbf16>
    %cst_10 = arith.constant dense<0.000000e+00> : vector<136x4xf32>
    %14 = tpu.matmul %11, %13, %cst_10 {dimension_numbers = #tpu.dot_dimension_numbers<[1], [0], [0], [1], [0, 0, 1, 1], [], []>} : vector<136x4xbf16>, vector<4x4xbf16>, vector<136x4xf32> -> vector<136x4xf32>
    %15 = arith.addf %9, %14 : vector<136x4xf32>
    %16 = vector.extract_strided_slice %2 {offsets = [34, 0], sizes = [136, 4], strides = [1, 1]} : vector<206x4xf32> to vector<136x4xf32>
    %17 = arith.truncf %16 : vector<136x4xf32> to vector<136x4xbf16>
    %c2 = arith.constant 2 : index
    %c0_11 = arith.constant 0 : index
    %c0_12 = arith.constant 0 : index
    %18 = vector.load %arg2[%c2, %c0_11, %c0_12] : memref<12x4x4xbf16, #tpu.memory_space<vmem>>, vector<1x4x4xbf16>
    %19 = vector.shape_cast %18 : vector<1x4x4xbf16> to vector<4x4xbf16>
    %cst_13 = arith.constant dense<0.000000e+00> : vector<136x4xf32>
    %20 = tpu.matmul %17, %19, %cst_13 {dimension_numbers = #tpu.dot_dimension_numbers<[1], [0], [0], [1], [0, 0, 1, 1], [], []>} : vector<136x4xbf16>, vector<4x4xbf16>, vector<136x4xf32> -> vector<136x4xf32>
    %21 = arith.addf %15, %20 : vector<136x4xf32>
    %22 = vector.extract_strided_slice %2 {offsets = [35, 0], sizes = [136, 4], strides = [1, 1]} : vector<206x4xf32> to vector<136x4xf32>
    %23 = arith.truncf %22 : vector<136x4xf32> to vector<136x4xbf16>
    %c3 = arith.constant 3 : index
    %c0_14 = arith.constant 0 : index
    %c0_15 = arith.constant 0 : index
    %24 = vector.load %arg2[%c3, %c0_14, %c0_15] : memref<12x4x4xbf16, #tpu.memory_space<vmem>>, vector<1x4x4xbf16>
    %25 = vector.shape_cast %24 : vector<1x4x4xbf16> to vector<4x4xbf16>
    %cst_16 = arith.constant dense<0.000000e+00> : vector<136x4xf32>
    %26 = tpu.matmul %23, %25, %cst_16 {dimension_numbers = #tpu.dot_dimension_numbers<[1], [0], [0], [1], [0, 0, 1, 1], [], []>} : vector<136x4xbf16>, vector<4x4xbf16>, vector<136x4xf32> -> vector<136x4xf32>
    %27 = arith.addf %21, %26 : vector<136x4xf32>
    %28 = vector.extract_strided_slice %2 {offsets = [68, 0], sizes = [136, 4], strides = [1, 1]} : vector<206x4xf32> to vector<136x4xf32>
    %29 = arith.truncf %28 : vector<136x4xf32> to vector<136x4xbf16>
    %c4 = arith.constant 4 : index
    %c0_17 = arith.constant 0 : index
    %c0_18 = arith.constant 0 : index
    %30 = vector.load %arg2[%c4, %c0_17, %c0_18] : memref<12x4x4xbf16, #tpu.memory_space<vmem>>, vector<1x4x4xbf16>
    %31 = vector.shape_cast %30 : vector<1x4x4xbf16> to vector<4x4xbf16>
    %cst_19 = arith.constant dense<0.000000e+00> : vector<136x4xf32>
    %32 = tpu.matmul %29, %31, %cst_19 {dimension_numbers = #tpu.dot_dimension_numbers<[1], [0], [0], [1], [0, 0, 1, 1], [], []>} : vector<136x4xbf16>, vector<4x4xbf16>, vector<136x4xf32> -> vector<136x4xf32>
    %33 = arith.addf %27, %32 : vector<136x4xf32>
    %34 = vector.extract_strided_slice %2 {offsets = [69, 0], sizes = [136, 4], strides = [1, 1]} : vector<206x4xf32> to vector<136x4xf32>
    %35 = arith.truncf %34 : vector<136x4xf32> to vector<136x4xbf16>
    %c5 = arith.constant 5 : index
    %c0_20 = arith.constant 0 : index
    %c0_21 = arith.constant 0 : index
    %36 = vector.load %arg2[%c5, %c0_20, %c0_21] : memref<12x4x4xbf16, #tpu.memory_space<vmem>>, vector<1x4x4xbf16>
    %37 = vector.shape_cast %36 : vector<1x4x4xbf16> to vector<4x4xbf16>
    %cst_22 = arith.constant dense<0.000000e+00> : vector<136x4xf32>
    %38 = tpu.matmul %35, %37, %cst_22 {dimension_numbers = #tpu.dot_dimension_numbers<[1], [0], [0], [1], [0, 0, 1, 1], [], []>} : vector<136x4xbf16>, vector<4x4xbf16>, vector<136x4xf32> -> vector<136x4xf32>
    %39 = arith.addf %33, %38 : vector<136x4xf32>
    %40 = vector.broadcast %0 : vector<1x4xf32> to vector<136x4xf32>
    %41 = arith.addf %39, %40 : vector<136x4xf32>
    %c0_23 = arith.constant 0 : index
    %c0_24 = arith.constant 0 : index
    %c0_25 = arith.constant 0 : index
    %42 = vector.load %arg4[%c0_23, %c0_24, %c0_25] : memref<1x136x4xf32, #tpu.memory_space<vmem>>, vector<1x136x4xf32>
    %43 = vector.shape_cast %42 : vector<1x136x4xf32> to vector<136x4xf32>
    %44 = vector.shape_cast %41 : vector<136x4xf32> to vector<1x136x4xf32>
    tpu.vector_store %arg4[%c0_23, %c0_24, %c0_25], %44 {strides = array<i32>} : memref<1x136x4xf32, #tpu.memory_space<vmem>>, vector<1x136x4xf32>,
    %cst_26 = arith.constant 0.000000e+00 : f32
    %45 = vector.broadcast %cst_26 : f32 to vector<136x4xf32>
    %46 = vector.extract_strided_slice %2 {offsets = [1, 0], sizes = [136, 4], strides = [1, 1]} : vector<206x4xf32> to vector<136x4xf32>
    %47 = arith.truncf %46 : vector<136x4xf32> to vector<136x4xbf16>
    %c6 = arith.constant 6 : index
    %c0_27 = arith.constant 0 : index
    %c0_28 = arith.constant 0 : index
    %48 = vector.load %arg2[%c6, %c0_27, %c0_28] : memref<12x4x4xbf16, #tpu.memory_space<vmem>>, vector<1x4x4xbf16>
    %49 = vector.shape_cast %48 : vector<1x4x4xbf16> to vector<4x4xbf16>
    %cst_29 = arith.constant dense<0.000000e+00> : vector<136x4xf32>
    %50 = tpu.matmul %47, %49, %cst_29 {dimension_numbers = #tpu.dot_dimension_numbers<[1], [0], [0], [1], [0, 0, 1, 1], [], []>} : vector<136x4xbf16>, vector<4x4xbf16>, vector<136x4xf32> -> vector<136x4xf32>
    %51 = arith.addf %45, %50 : vector<136x4xf32>
    %52 = vector.extract_strided_slice %2 {offsets = [2, 0], sizes = [136, 4], strides = [1, 1]} : vector<206x4xf32> to vector<136x4xf32>
    %53 = arith.truncf %52 : vector<136x4xf32> to vector<136x4xbf16>
    %c7 = arith.constant 7 : index
    %c0_30 = arith.constant 0 : index
    %c0_31 = arith.constant 0 : index
    %54 = vector.load %arg2[%c7, %c0_30, %c0_31] : memref<12x4x4xbf16, #tpu.memory_space<vmem>>, vector<1x4x4xbf16>
    %55 = vector.shape_cast %54 : vector<1x4x4xbf16> to vector<4x4xbf16>
    %cst_32 = arith.constant dense<0.000000e+00> : vector<136x4xf32>
    %56 = tpu.matmul %53, %55, %cst_32 {dimension_numbers = #tpu.dot_dimension_numbers<[1], [0], [0], [1], [0, 0, 1, 1], [], []>} : vector<136x4xbf16>, vector<4x4xbf16>, vector<136x4xf32> -> vector<136x4xf32>
    %57 = arith.addf %51, %56 : vector<136x4xf32>
    %58 = vector.extract_strided_slice %2 {offsets = [35, 0], sizes = [136, 4], strides = [1, 1]} : vector<206x4xf32> to vector<136x4xf32>
    %59 = arith.truncf %58 : vector<136x4xf32> to vector<136x4xbf16>
    %c8 = arith.constant 8 : index
    %c0_33 = arith.constant 0 : index
    %c0_34 = arith.constant 0 : index
    %60 = vector.load %arg2[%c8, %c0_33, %c0_34] : memref<12x4x4xbf16, #tpu.memory_space<vmem>>, vector<1x4x4xbf16>
    %61 = vector.shape_cast %60 : vector<1x4x4xbf16> to vector<4x4xbf16>
    %cst_35 = arith.constant dense<0.000000e+00> : vector<136x4xf32>
    %62 = tpu.matmul %59, %61, %cst_35 {dimension_numbers = #tpu.dot_dimension_numbers<[1], [0], [0], [1], [0, 0, 1, 1], [], []>} : vector<136x4xbf16>, vector<4x4xbf16>, vector<136x4xf32> -> vector<136x4xf32>
    %63 = arith.addf %57, %62 : vector<136x4xf32>
    %64 = vector.extract_strided_slice %2 {offsets = [36, 0], sizes = [136, 4], strides = [1, 1]} : vector<206x4xf32> to vector<136x4xf32>
    %65 = arith.truncf %64 : vector<136x4xf32> to vector<136x4xbf16>
    %c9 = arith.constant 9 : index
    %c0_36 = arith.constant 0 : index
    %c0_37 = arith.constant 0 : index
    %66 = vector.load %arg2[%c9, %c0_36, %c0_37] : memref<12x4x4xbf16, #tpu.memory_space<vmem>>, vector<1x4x4xbf16>
    %67 = vector.shape_cast %66 : vector<1x4x4xbf16> to vector<4x4xbf16>
    %cst_38 = arith.constant dense<0.000000e+00> : vector<136x4xf32>
    %68 = tpu.matmul %65, %67, %cst_38 {dimension_numbers = #tpu.dot_dimension_numbers<[1], [0], [0], [1], [0, 0, 1, 1], [], []>} : vector<136x4xbf16>, vector<4x4xbf16>, vector<136x4xf32> -> vector<136x4xf32>
    %69 = arith.addf %63, %68 : vector<136x4xf32>
    %70 = vector.extract_strided_slice %2 {offsets = [69, 0], sizes = [136, 4], strides = [1, 1]} : vector<206x4xf32> to vector<136x4xf32>
    %71 = arith.truncf %70 : vector<136x4xf32> to vector<136x4xbf16>
    %c10 = arith.constant 10 : index
    %c0_39 = arith.constant 0 : index
    %c0_40 = arith.constant 0 : index
    %72 = vector.load %arg2[%c10, %c0_39, %c0_40] : memref<12x4x4xbf16, #tpu.memory_space<vmem>>, vector<1x4x4xbf16>
    %73 = vector.shape_cast %72 : vector<1x4x4xbf16> to vector<4x4xbf16>
    %cst_41 = arith.constant dense<0.000000e+00> : vector<136x4xf32>
    %74 = tpu.matmul %71, %73, %cst_41 {dimension_numbers = #tpu.dot_dimension_numbers<[1], [0], [0], [1], [0, 0, 1, 1], [], []>} : vector<136x4xbf16>, vector<4x4xbf16>, vector<136x4xf32> -> vector<136x4xf32>
    %75 = arith.addf %69, %74 : vector<136x4xf32>
    %76 = vector.extract_strided_slice %2 {offsets = [70, 0], sizes = [136, 4], strides = [1, 1]} : vector<206x4xf32> to vector<136x4xf32>
    %77 = arith.truncf %76 : vector<136x4xf32> to vector<136x4xbf16>
    %c11 = arith.constant 11 : index
    %c0_42 = arith.constant 0 : index
    %c0_43 = arith.constant 0 : index
    %78 = vector.load %arg2[%c11, %c0_42, %c0_43] : memref<12x4x4xbf16, #tpu.memory_space<vmem>>, vector<1x4x4xbf16>
    %79 = vector.shape_cast %78 : vector<1x4x4xbf16> to vector<4x4xbf16>
    %cst_44 = arith.constant dense<0.000000e+00> : vector<136x4xf32>
    %80 = tpu.matmul %77, %79, %cst_44 {dimension_numbers = #tpu.dot_dimension_numbers<[1], [0], [0], [1], [0, 0, 1, 1], [], []>} : vector<136x4xbf16>, vector<4x4xbf16>, vector<136x4xf32> -> vector<136x4xf32>
    %81 = arith.addf %75, %80 : vector<136x4xf32>
    %82 = vector.broadcast %0 : vector<1x4xf32> to vector<136x4xf32>
    %83 = arith.addf %81, %82 : vector<136x4xf32>
    %c0_45 = arith.constant 0 : index
    %c0_46 = arith.constant 0 : index
    %c0_47 = arith.constant 0 : index
    %84 = vector.load %arg5[%c0_45, %c0_46, %c0_47] : memref<1x136x4xf32, #tpu.memory_space<vmem>>, vector<1x136x4xf32>
    %85 = vector.shape_cast %84 : vector<1x136x4xf32> to vector<136x4xf32>
    %86 = vector.shape_cast %83 : vector<136x4xf32> to vector<1x136x4xf32>
    tpu.vector_store %arg5[%c0_45, %c0_46, %c0_47], %86 {strides = array<i32>} : memref<1x136x4xf32, #tpu.memory_space<vmem>>, vector<1x136x4xf32>,
    return
  }
  func.func @transform_0(%arg0: i32) -> (i32, i32, i32) {
    %c0_i32 = arith.constant 0 : i32
    %c0_i32_0 = arith.constant 0 : i32
    %c0_i32_1 = arith.constant 0 : i32
    return %arg0, %c0_i32, %c0_i32_0 : i32, i32, i32
  }
  func.func @transform_1(%arg0: i32) -> (i32, i32, i32) {
    %c0_i32 = arith.constant 0 : i32
    %c0_i32_0 = arith.constant 0 : i32
    %c0_i32_1 = arith.constant 0 : i32
    %c0_i32_2 = arith.constant 0 : i32
    return %c0_i32, %c0_i32_0, %c0_i32_1 : i32, i32, i32
  }
  func.func @transform_2(%arg0: i32) -> (i32, i32) {
    %c0_i32 = arith.constant 0 : i32
    %c0_i32_0 = arith.constant 0 : i32
    %c0_i32_1 = arith.constant 0 : i32
    return %c0_i32, %c0_i32_0 : i32, i32
  }
  func.func @transform_3(%arg0: i32) -> (i32, i32, i32) {
    %c0_i32 = arith.constant 0 : i32
    %c0_i32_0 = arith.constant 0 : i32
    %c0_i32_1 = arith.constant 0 : i32
    return %arg0, %c0_i32, %c0_i32_0 : i32, i32, i32
  }
  func.func @transform_4(%arg0: i32) -> (i32, i32, i32) {
    %c0_i32 = arith.constant 0 : i32
    %c0_i32_0 = arith.constant 0 : i32
    %c0_i32_1 = arith.constant 0 : i32
    return %arg0, %c0_i32, %c0_i32_0 : i32, i32, i32
  }
}

module attributes {stable_mosaic.version = 11 : i64} {
  func.func @_matmul_kernel(%arg0: i32, %arg1: memref<8x256xf32, #tpu.memory_space<vmem>>, %arg2: memref<256x288xf32, #tpu.memory_space<vmem>>, %arg3: memref<8x288xf32, #tpu.memory_space<vmem>>) attributes {dimension_semantics = [#tpu.dimension_semantics<parallel>], iteration_bounds = array<i64: 1>, scalar_prefetch = 0 : i64, scratch_operands = 0 : i64, tpu.core_type = #tpu.core_type<tc>, window_params = [{transform_indices = @transform_0, window_bounds = array<i64: 8, 256>}, {pipeline_mode = #tpu.pipeline_mode<synchronous>, transform_indices = @transform_1, window_bounds = array<i64: 256, 288>}, {transform_indices = @transform_2, window_bounds = array<i64: 8, 288>}]} {
    %c0 = arith.constant 0 : index
    %c0_0 = arith.constant 0 : index
    %0 = vector.load %arg1[%c0, %c0_0] : memref<8x256xf32, #tpu.memory_space<vmem>>, vector<8x256xf32>
    %c0_1 = arith.constant 0 : index
    %c0_2 = arith.constant 0 : index
    %1 = vector.load %arg2[%c0_1, %c0_2] : memref<256x288xf32, #tpu.memory_space<vmem>>, vector<256x288xf32>
    %cst = arith.constant dense<0.000000e+00> : vector<8x288xf32>
    %2 = tpu.matmul %0, %1, %cst {dimension_numbers = #tpu.dot_dimension_numbers<[1], [0], [0], [1], [0, 0, 1, 1], [], []>} : vector<8x256xf32>, vector<256x288xf32>, vector<8x288xf32> -> vector<8x288xf32>
    %c0_3 = arith.constant 0 : index
    %c0_4 = arith.constant 0 : index
    %3 = vector.load %arg3[%c0_3, %c0_4] : memref<8x288xf32, #tpu.memory_space<vmem>>, vector<8x288xf32>
    tpu.vector_store %arg3[%c0_3, %c0_4], %2 {strides = array<i32>} : memref<8x288xf32, #tpu.memory_space<vmem>>, vector<8x288xf32>,
    return
  }
  func.func @transform_0(%arg0: i32) -> (i32, i32) {
    %c0_i32 = arith.constant 0 : i32
    %c0_i32_0 = arith.constant 0 : i32
    return %arg0, %c0_i32 : i32, i32
  }
  func.func @transform_1(%arg0: i32) -> (i32, i32) {
    %c0_i32 = arith.constant 0 : i32
    %c0_i32_0 = arith.constant 0 : i32
    %c0_i32_1 = arith.constant 0 : i32
    return %c0_i32, %c0_i32_0 : i32, i32
  }
  func.func @transform_2(%arg0: i32) -> (i32, i32) {
    %c0_i32 = arith.constant 0 : i32
    %c0_i32_0 = arith.constant 0 : i32
    return %arg0, %c0_i32 : i32, i32
  }
}

</mosaic_0001>

<llo_original>
// kernel: vqvae_decoder_forward.7
$region0: #{vqvae_decoder_forward.7}
  #allocation0 [shape = 'u32[]', space=smem, size = 0x4, offset = 0x4, fixed_abs, tag = 'smem constant byte address 0x4 - core index']
  #allocation1 [shape = 'u32[144,128]{1,0:T(1,128)}', space=vmem, size = 0x12000, scoped, tag = 'internal scratch']
  %s0 = inlined_call_operand.vmem [shape: f32[2,62,32], index: 0, kind: input, shape index: {}]
  %s1 = inlined_call_operand.vmem [shape: bf16[9,32,32], index: 1, kind: input, shape index: {}]
  %s2 = inlined_call_operand.vmem [shape: f32[1,32], index: 2, kind: input, shape index: {}]
  %s3 = inlined_call_operand.vmem [shape: f32[2,40,32], index: 3, kind: input, shape index: {}]
  %s4 = inlined_call_operand.vmem [shape: f32[2,40,32], index: 4, kind: output, shape index: {}]
  %s5 = sld [smem:[#allocation0]]
  $region49: #{vqvae_decoder_forward.7} parent=0
    _
  %s7 = ssub.s32 1, %s5
  %s8 = scalar_select 0, %s7, %s5
  loop: start=0, step=1, limit=4
  $region2: #{vqvae_decoder_forward.7} parent=0 // loop_pre_header
    _
  $region3: #{vqvae_decoder_forward.7} parent=0 // loop_header
    %s10 = sphi 0, %s14
    %p11 = scmp.ge.s32.totalorder %s10, 4
    %s20 = sphi 0, %s22
    %s23 = sphi 0, %s20
    %s24 = sphi 0, %s23
    %s40 = sphi 0, %s24
    %s44 = sphi 0, %s44
    %s46 = sphi 0, %s44
    %s47 = sphi 0, %s46
    %s61 = sphi 0, %s47
    %s65 = sphi 0, %s65
    %s67 = sphi 0, %s65
    %s68 = sphi 0, %s67
    %s82 = sphi 0, %s68
    %s88 = sphi 0, %s90
    %s91 = sphi 0, %s88
    %s92 = sphi 0, %s91
    %s108 = sphi 0, %s92
    %s114 = sphi 0, %s116
    %s117 = sphi 0, %s114
    %s118 = sphi 0, %s117
    %s134 = sphi 0, %s118
  $region4: #{vqvae_decoder_forward.7} parent=0 // loop_header_branch
    %13 = sbr.rel (%p11) target = $region8
  $region5: #{vqvae_decoder_forward.7} parent=0 // loop_body
    %s15 = ssub.s32 %s10, 1
    %s16 = ssub.s32 %s10, 2
    %s17 = sadd.s32 %s10, 1
    %s18 = ssub.s32 %s10, %s17
    %p19 = scmp.eq.s32.totalorder %s18, 0
    %s21 = sadd.s32 %s20, 1
    %s22 = scalar_select %p19, %s20, %s21
    %p25 = pneg %p19
    %p26 = scmp.eq.s32.totalorder %s10, 1
    %p27 = por %p25, %p26
    %p28 = scmp.ne.s32.totalorder %s20, %s23
    %p29 = scmp.eq.s32.totalorder %s10, 0
    %p30 = por %p28, %p29
    %p31 = scmp.ne.s32.totalorder %s20, %s23
    %p32 = scmp.eq.s32.totalorder %s15, 1
    %p33 = por %p31, %p32
    %p34 = scmp.ne.s32.totalorder %s23, %s24
    %p35 = scmp.eq.s32.totalorder %s15, 0
    %p36 = por %p34, %p35
    %p37 = scmp.ne.s32.totalorder %s23, %s24
    %p38 = scmp.eq.s32.totalorder %s16, 1
    %p39 = por %p37, %p38
    %p41 = scmp.ne.s32.totalorder %s24, %s40
    %p42 = scmp.eq.s32.totalorder %s16, 0
    %p43 = por %p41, %p42
    %s45 = sadd.s32 %s44, 1
    %p48 = scmp.eq.s32.totalorder %s10, 1
    %p49 = scmp.ne.s32.totalorder %s44, %s46
    %p50 = scmp.eq.s32.totalorder %s10, 0
    %p51 = por %p49, %p50
    %p52 = scmp.ne.s32.totalorder %s44, %s46
    %p53 = scmp.eq.s32.totalorder %s15, 1
    %p54 = por %p52, %p53
    %p55 = scmp.ne.s32.totalorder %s46, %s47
    %p56 = scmp.eq.s32.totalorder %s15, 0
    %p57 = por %p55, %p56
    %p58 = scmp.ne.s32.totalorder %s46, %s47
    %p59 = scmp.eq.s32.totalorder %s16, 1
    %p60 = por %p58, %p59
    %p62 = scmp.ne.s32.totalorder %s47, %s61
    %p63 = scmp.eq.s32.totalorder %s16, 0
    %p64 = por %p62, %p63
    %s66 = sadd.s32 %s65, 1
    %p69 = scmp.eq.s32.totalorder %s10, 1
    %p70 = scmp.ne.s32.totalorder %s65, %s67
    %p71 = scmp.eq.s32.totalorder %s10, 0
    %p72 = por %p70, %p71
    %p73 = scmp.ne.s32.totalorder %s65, %s67
    %p74 = scmp.eq.s32.totalorder %s15, 1
    %p75 = por %p73, %p74
    %p76 = scmp.ne.s32.totalorder %s67, %s68
    %p77 = scmp.eq.s32.totalorder %s15, 0
    %p78 = por %p76, %p77
    %p79 = scmp.ne.s32.totalorder %s67, %s68
    %p80 = scmp.eq.s32.totalorder %s16, 1
    %p81 = por %p79, %p80
    %p83 = scmp.ne.s32.totalorder %s68, %s82
    %p84 = scmp.eq.s32.totalorder %s16, 0
    %p85 = por %p83, %p84
    %s86 = ssub.s32 %s10, %s17
    %p87 = scmp.eq.s32.totalorder %s86, 0
    %s89 = sadd.s32 %s88, 1
    %s90 = scalar_select %p87, %s88, %s89
    %p93 = pneg %p87
    %p94 = scmp.eq.s32.totalorder %s10, 1
    %p95 = por %p93, %p94
    %p96 = scmp.ne.s32.totalorder %s88, %s91
    %p97 = scmp.eq.s32.totalorder %s10, 0
    %p98 = por %p96, %p97
    %p99 = scmp.ne.s32.totalorder %s88, %s91
    %p100 = scmp.eq.s32.totalorder %s15, 1
    %p101 = por %p99, %p100
    %p102 = scmp.ne.s32.totalorder %s91, %s92
    %p103 = scmp.eq.s32.totalorder %s15, 0
    %p104 = por %p102, %p103
    %p105 = scmp.ne.s32.totalorder %s91, %s92
    %p106 = scmp.eq.s32.totalorder %s16, 1
    %p107 = por %p105, %p106
    %p109 = scmp.ne.s32.totalorder %s92, %s108
    %p110 = scmp.eq.s32.totalorder %s16, 0
    %p111 = por %p109, %p110
    %s112 = ssub.s32 %s10, %s17
    %p113 = scmp.eq.s32.totalorder %s112, 0
    %s115 = sadd.s32 %s114, 1
    %s116 = scalar_select %p113, %s114, %s115
    %p119 = pneg %p113
    %p120 = scmp.eq.s32.totalorder %s10, 1
    %p121 = por %p119, %p120
    %p122 = scmp.ne.s32.totalorder %s114, %s117
    %p123 = scmp.eq.s32.totalorder %s10, 0
    %p124 = por %p122, %p123
    %p125 = scmp.ne.s32.totalorder %s114, %s117
    %p126 = scmp.eq.s32.totalorder %s15, 1
    %p127 = por %p125, %p126
    %p128 = scmp.ne.s32.totalorder %s117, %s118
    %p129 = scmp.eq.s32.totalorder %s15, 0
    %p130 = por %p128, %p129
    %p131 = scmp.ne.s32.totalorder %s117, %s118
    %p132 = scmp.eq.s32.totalorder %s16, 1
    %p133 = por %p131, %p132
    %p135 = scmp.ne.s32.totalorder %s118, %s134
    %p136 = scmp.eq.s32.totalorder %s16, 0
    %p137 = por %p135, %p136
    %p138 = scmp.le.s32.totalorder 1, %s10
    %p139 = scmp.lt.s32.totalorder %s10, 3
    %p140 = pnand %p138, %p139
    %p141 = pneg %p140
    // Predicated region
    $region9: #{vqvae_decoder_forward.7} parent=5 // pred_check
      _
    $region10: #{vqvae_decoder_forward.7} parent=5 // pred_check_branch
      %143 = sbr.rel (%p140) target = $region12
    $region11: #{vqvae_decoder_forward.7} parent=5 // pred_region
      %s144 = ssub.s32 %s10, 1
      // Predicated region
      $region13: #{vqvae_decoder_forward.7} parent=11 // pred_check
        %p145 = pneg %p57
      $region14: #{vqvae_decoder_forward.7} parent=11 // pred_check_branch
        %147 = sbr.rel (%p145) target = $region16
      $region15: #{vqvae_decoder_forward.7} parent=11 // pred_region
        _
      $region16: #{vqvae_decoder_forward.7} parent=11 // pred_fallthru
        _
      // Predicated region
      $region17: #{vqvae_decoder_forward.7} parent=11 // pred_check
        %p148 = pneg %p78
      $region18: #{vqvae_decoder_forward.7} parent=11 // pred_check_branch
        %150 = sbr.rel (%p148) target = $region20
      $region19: #{vqvae_decoder_forward.7} parent=11 // pred_region
        _
      $region20: #{vqvae_decoder_forward.7} parent=11 // pred_fallthru
        _
    $region12: #{vqvae_decoder_forward.7} parent=5 // pred_fallthru
      _
    %p151 = scmp.lt.s32.totalorder %s10, 2
    // Predicated region
    $region21: #{vqvae_decoder_forward.7} parent=5 // pred_check
      %p152 = pneg %p151
    $region22: #{vqvae_decoder_forward.7} parent=5 // pred_check_branch
      %154 = sbr.rel (%p152) target = $region24
    $region23: #{vqvae_decoder_forward.7} parent=5 // pred_region
      // Predicated region
      $region25: #{vqvae_decoder_forward.7} parent=23 // pred_check
        %p155 = pneg %p30
      $region26: #{vqvae_decoder_forward.7} parent=23 // pred_check_branch
        %157 = sbr.rel (%p155) target = $region28
      $region27: #{vqvae_decoder_forward.7} parent=23 // pred_region
        %p158 = scmp.lt.s32.totalorder %s10, 1
        %s159 = scalar_select %p158, %s10, 1
        %s160 = smul.addr %s159, 8
        %s161 = smul.addr %s160, 8
        %s162 = scalar_lea.vmem %s0, %s161
      $region28: #{vqvae_decoder_forward.7} parent=23 // pred_fallthru
        _
      // Predicated region
      $region29: #{vqvae_decoder_forward.7} parent=23 // pred_check
        %p163 = pneg %p98
      $region30: #{vqvae_decoder_forward.7} parent=23 // pred_check_branch
        %165 = sbr.rel (%p163) target = $region32
      $region31: #{vqvae_decoder_forward.7} parent=23 // pred_region
        %p166 = scmp.lt.s32.totalorder %s10, 1
        %s167 = scalar_select %p166, %s10, 1
        %s168 = smul.addr %s167, 5
        %s169 = smul.addr %s168, 8
        %s170 = scalar_lea.vmem %s3, %s169
      $region32: #{vqvae_decoder_forward.7} parent=23 // pred_fallthru
        _
    $region24: #{vqvae_decoder_forward.7} parent=5 // pred_fallthru
      _
    %p171 = scmp.le.s32.totalorder 1, %s10
    %p172 = scmp.lt.s32.totalorder %s10, 3
    %p173 = pnand %p171, %p172
    %p174 = pneg %p173
    // Predicated region
    $region33: #{vqvae_decoder_forward.7} parent=5 // pred_check
      _
    $region34: #{vqvae_decoder_forward.7} parent=5 // pred_check_branch
      %176 = sbr.rel (%p173) target = $region36
    $region35: #{vqvae_decoder_forward.7} parent=5 // pred_region
      %s177 = ssub.s32 %s10, 1
      %p178 = scmp.lt.s32.totalorder %s15, 1
      %s179 = scalar_select %p178, %s15, 1
      %s180 = smul.addr %s179, 8
      %s181 = smul.addr %s180, 8
      %s182 = scalar_lea.vmem %s0, %s181
      %p183 = pneg %p36
      %p184 = pneg %p33
      %p185 = pneg %p57
      %p186 = pneg %p54
      %p187 = pneg %p78
      %p188 = pneg %p75
      %p189 = scmp.lt.s32.totalorder %s15, 1
      %s190 = scalar_select %p189, %s15, 1
      %s191 = smul.addr %s190, 5
      %s192 = smul.addr %s191, 8
      %s193 = scalar_lea.vmem %s3, %s192
      %p194 = pneg %p104
      %p195 = pneg %p101
      %p196 = pneg %p130
      %p197 = pneg %p127
      %p198 = scmp.lt.s32.totalorder %s15, 1
      %s199 = scalar_select %p198, %s15, 1
      %s200 = smul.addr %s199, 5
      %s201 = smul.addr %s200, 8
      %s202 = scalar_lea.vmem %s4, %s201
      %p203 = scmp.lt.s32.totalorder %s15, 1
      %s204 = scalar_select %p203, %s15, 1
      %s205 = smul.addr %s204, 8
      %s206 = smul.addr %s205, 8
      %s207 = scalar_lea.vmem %s0, %s206
      %p208 = scmp.lt.s32.totalorder %s15, 1
      %s209 = scalar_select %p208, %s15, 1
      %s210 = smul.addr %s209, 5
      %s211 = smul.addr %s210, 8
      %s212 = scalar_lea.vmem %s3, %s211
      %p213 = scmp.lt.s32.totalorder %s15, 1
      %s214 = scalar_select %p213, %s15, 1
      %s215 = smul.addr %s214, 5
      %s216 = smul.addr %s215, 8
      %s217 = scalar_lea.vmem %s4, %s216
      %v219 = vld [vmem:[%s2] sm:$0x1]
      %v220 = vld [vmem:[%s207] sm:$0xff]
      %v221 = vld [vmem:[%s207 + $0x8] sm:$0xff]
      %v222 = vld [vmem:[%s207 + $0x10] sm:$0xff]
      %v223 = vld [vmem:[%s207 + $0x18] sm:$0xff]
      %v224 = vld [vmem:[%s207 + $0x20] sm:$0xff]
      %v225 = vld [vmem:[%s207 + $0x28] sm:$0xff]
      %v226 = vld [vmem:[%s207 + $0x30] sm:$0xff]
      %v227 = vld [vmem:[%s207 + $0x38] sm:$0x3f]
      %v228 = vpack.c.bf16 %v221, %v220
      %v229 = vpack.c.bf16 %v223, %v222
      %v230 = vpack.c.bf16 %v224, %v224
      %v231 = vld [vmem:[%s1] sm:$0xf]
      %v232 = vld [vmem:[%s1 + $0x4] sm:$0xf]
      %v233 = vld [vmem:[%s1 + $0x8] sm:$0xf]
      %v234 = vld [vmem:[%s1 + $0xc] sm:$0xf]
      %v235 = vpack.c.bf16 %v225, %v224
      %s236 = scalar_lea.vmem %s1, 16
      %v237 = vld [vmem:[%s236] sm:$0xf]
      %v238 = vld [vmem:[%s236 + $0x4] sm:$0xf]
      %v239 = vld [vmem:[%s236 + $0x8] sm:$0xf]
      %v240 = vld [vmem:[%s236 + $0xc] sm:$0xf]
      %vm241 = vsmask.f32 7424
      %v243 = vshrl.u32 %v228, 16
      %v245 = vshll.u32 %v228, 16
      %v247 = vrot.slane %v245, 1
      %v248 = vor.u32 %v243, %v247
      %v250 = vshll.u32 %v229, 16
      %v252 = vrot.slane %v250, 1
      %v253 = vsel %vm241, %v248, %v252
      %v254 = vshrl.u32 %v229, 16
      %v256 = vor.u32 %v254, %v252
      %v258 = vshll.u32 %v235, 16
      %v260 = vrot.slane %v258, 1
      %v261 = vsel %vm241, %v256, %v260
      %v262 = vshrl.u32 %v235, 16
      %v264 = vor.u32 %v262, %v260
      %v269 = vunpack.c.l.b16 %v237
      %v270 = vunpack.c.l.b16 %v238
      %v271 = vunpack.c.l.b16 %v239
      %v272 = vunpack.c.l.b16 %v240
      %v273 = vpack.c.b16 %v270, %v269
      %v274 = vpack.c.b16 %v272, %v271
      %vm277 = vcmask 261120
      %v279 = vsel %vm277, %v253, 0
      %v282 = vsel %vm277, %v261, 0
      %v285 = vsel %vm277, %v264, 0
      %287 = vmatprep.subr.bf16.mxu0 0
      %288 = vmatpush1.bf16.msra.mxu0 %v273
      %289 = vmatprep.subr.bf16.mxu0 0
      %290 = vmatpush1.bf16.msra.mxu0 %v274
      %291 = vmatprep.subr.bf16.mxu0 0
      %292 = vmatpush1.bf16.msra.mxu0 0
      %293 = vmatprep.subr.bf16.mxu0 0
      %294 = vmatpush1.bf16.msra.mxu0 0
      %295 = vmatprep.subr.bf16.mxu0 0
      %296 = vmatpush1.bf16.msra.mxu0 0
      %297 = vmatprep.subr.bf16.mxu0 0
      %298 = vmatpush1.bf16.msra.mxu0 0
      %299 = vmatprep.subr.bf16.mxu0 0
      %300 = vmatpush1.bf16.msra.mxu0 0
      %301 = vmatprep.subr.bf16.mxu0 0
      %302 = vmatpush1.bf16.msra.mxu0 0
      %303 = vmatprep.subr.bf16.mxu0 0
      %304 = vmatpush1.bf16.msra.mxu0 0
      %305 = vmatprep.subr.bf16.mxu0 0
      %306 = vmatpush1.bf16.msra.mxu0 0
      %307 = vmatprep.subr.bf16.mxu0 0
      %308 = vmatpush1.bf16.msra.mxu0 0
      %309 = vmatprep.subr.bf16.mxu0 0
      %310 = vmatpush1.bf16.msra.mxu0 0
      %311 = vmatprep.subr.bf16.mxu0 0
      %312 = vmatpush1.bf16.msra.mxu0 0
      %313 = vmatprep.subr.bf16.mxu0 0
      %314 = vmatpush1.bf16.msra.mxu0 0
      %315 = vmatprep.subr.bf16.mxu0 0
      %316 = vmatpush1.bf16.msra.mxu0 0
      %317 = vmatprep.subr.bf16.mxu0 0
      %318 = vmatpush1.bf16.msra.mxu0 0
      %319 = vmatprep.mubr.bf16.mxu0 0
      %320 = vmatmul.mubr.bf16.gmra.mrb[0].mxu0 %v279
      %v321 = vpop.f32.mrb[0].mxu0
      %v322 = vadd.f32 0.0, %v321
      %v323 = vpop.f32.mrb[0].mxu0
      %v324 = vpop.f32.mrb[0].mxu0
      %v325 = vadd.f32 0.0, %v324
      %v326 = vpop.f32.mrb[0].mxu0
      %327 = vmatprep.mubr.bf16.mxu0 0
      %328 = vmatmul.mubr.bf16.gmra.mrb[0].mxu0 %v282
      %v329 = vpop.f32.mrb[0].mxu0
      %v330 = vadd.f32 0.0, %v329
      %v331 = vpop.f32.mrb[0].mxu0
      %v332 = vpop.f32.mrb[0].mxu0
      %v333 = vadd.f32 0.0, %v332
      %v334 = vpop.f32.mrb[0].mxu0
      %335 = vmatprep.mubr.bf16.mxu0 0
      %336 = vmatmul.mubr.bf16.gmra.mrb[0].mxu0 %v285
      %v337 = vpop.f32.mrb[0].mxu0
      %v338 = vadd.f32 0.0, %v337
      %v339 = vpop.f32.mrb[0].mxu0
      %v340 = vpop.f32.mrb[0].mxu0
      %v341 = vpop.f32.mrb[0].mxu0
      %342 = vdwg.mxu0
      %v347 = vunpack.c.l.b16 %v231
      %v348 = vunpack.c.l.b16 %v232
      %v349 = vunpack.c.l.b16 %v233
      %v350 = vunpack.c.l.b16 %v234
      %v351 = vpack.c.b16 %v348, %v347
      %v352 = vpack.c.b16 %v350, %v349
      %v355 = vsel %vm277, %v228, 0
      %v357 = vsel %vm277, %v229, 0
      %v360 = vsel %vm277, %v230, 0
      %362 = vmatprep.subr.bf16.mxu0 0
      %363 = vmatpush1.bf16.msra.mxu0 %v351
      %364 = vmatprep.subr.bf16.mxu0 0
      %365 = vmatpush1.bf16.msra.mxu0 %v352
      %366 = vmatprep.subr.bf16.mxu0 0
      %367 = vmatpush1.bf16.msra.mxu0 0
      %368 = vmatprep.subr.bf16.mxu0 0
      %369 = vmatpush1.bf16.msra.mxu0 0
      %370 = vmatprep.subr.bf16.mxu0 0
      %371 = vmatpush1.bf16.msra.mxu0 0
      %372 = vmatprep.subr.bf16.mxu0 0
      %373 = vmatpush1.bf16.msra.mxu0 0
      %374 = vmatprep.subr.bf16.mxu0 0
      %375 = vmatpush1.bf16.msra.mxu0 0
      %376 = vmatprep.subr.bf16.mxu0 0
      %377 = vmatpush1.bf16.msra.mxu0 0
      %378 = vmatprep.subr.bf16.mxu0 0
      %379 = vmatpush1.bf16.msra.mxu0 0
      %380 = vmatprep.subr.bf16.mxu0 0
      %381 = vmatpush1.bf16.msra.mxu0 0
      %382 = vmatprep.subr.bf16.mxu0 0
      %383 = vmatpush1.bf16.msra.mxu0 0
      %384 = vmatprep.subr.bf16.mxu0 0
      %385 = vmatpush1.bf16.msra.mxu0 0
      %386 = vmatprep.subr.bf16.mxu0 0
      %387 = vmatpush1.bf16.msra.mxu0 0
      %388 = vmatprep.subr.bf16.mxu0 0
      %389 = vmatpush1.bf16.msra.mxu0 0
      %390 = vmatprep.subr.bf16.mxu0 0
      %391 = vmatpush1.bf16.msra.mxu0 0
      %392 = vmatprep.subr.bf16.mxu0 0
      %393 = vmatpush1.bf16.msra.mxu0 0
      %394 = vmatprep.mubr.bf16.mxu0 0
      %395 = vmatmul.mubr.bf16.gmra.mrb[0].mxu0 %v355
      %v396 = vpop.f32.mrb[0].mxu0
      %v397 = vadd.f32 %v322, %v396
      %v398 = vpop.f32.mrb[0].mxu0
      %v399 = vpop.f32.mrb[0].mxu0
      %v400 = vadd.f32 %v325, %v399
      %v401 = vpop.f32.mrb[0].mxu0
      %402 = vmatprep.mubr.bf16.mxu0 0
      %403 = vmatmul.mubr.bf16.gmra.mrb[0].mxu0 %v357
      %v404 = vpop.f32.mrb[0].mxu0
      %v405 = vadd.f32 %v330, %v404
      %v406 = vpop.f32.mrb[0].mxu0
      %v407 = vpop.f32.mrb[0].mxu0
      %v408 = vadd.f32 %v333, %v407
      %v409 = vpop.f32.mrb[0].mxu0
      %410 = vmatprep.mubr.bf16.mxu0 0
      %411 = vmatmul.mubr.bf16.gmra.mrb[0].mxu0 %v360
      %v412 = vpop.f32.mrb[0].mxu0
      %v413 = vadd.f32 %v338, %v412
      %v414 = vpop.f32.mrb[0].mxu0
      %v415 = vpop.f32.mrb[0].mxu0
      %v416 = vpop.f32.mrb[0].mxu0
      %417 = vdwg.mxu0
      %s418 = scalar_lea.vmem %s1, 32
      %v419 = vld [vmem:[%s418] sm:$0xf]
      %v420 = vld [vmem:[%s418 + $0x4] sm:$0xf]
      %v421 = vld [vmem:[%s418 + $0x8] sm:$0xf]
      %v422 = vld [vmem:[%s418 + $0xc] sm:$0xf]
      %vm426 = vcmask 1046528
      %v427 = vrot.slane %v228, 1
      %v428 = vrot.slane %v229, 1
      %v429 = vsel %vm426, %v427, %v428
      %v430 = vrot.slane %v235, 1
      %v431 = vsel %vm426, %v428, %v430
      %v436 = vunpack.c.l.b16 %v419
      %v437 = vunpack.c.l.b16 %v420
      %v438 = vunpack.c.l.b16 %v421
      %v439 = vunpack.c.l.b16 %v422
      %v440 = vpack.c.b16 %v437, %v436
      %v441 = vpack.c.b16 %v439, %v438
      %v445 = vsel %vm277, %v429, 0
      %v448 = vsel %vm277, %v431, 0
      %v451 = vsel %vm277, %v430, 0
      %453 = vmatprep.subr.bf16.mxu0 0
      %454 = vmatpush1.bf16.msra.mxu0 %v440
      %455 = vmatprep.subr.bf16.mxu0 0
      %456 = vmatpush1.bf16.msra.mxu0 %v441
      %457 = vmatprep.subr.bf16.mxu0 0
      %458 = vmatpush1.bf16.msra.mxu0 0
      %459 = vmatprep.subr.bf16.mxu0 0
      %460 = vmatpush1.bf16.msra.mxu0 0
      %461 = vmatprep.subr.bf16.mxu0 0
      %462 = vmatpush1.bf16.msra.mxu0 0
      %463 = vmatprep.subr.bf16.mxu0 0
      %464 = vmatpush1.bf16.msra.mxu0 0
      %465 = vmatprep.subr.bf16.mxu0 0
      %466 = vmatpush1.bf16.msra.mxu0 0
      %467 = vmatprep.subr.bf16.mxu0 0
      %468 = vmatpush1.bf16.msra.mxu0 0
      %469 = vmatprep.subr.bf16.mxu0 0
      %470 = vmatpush1.bf16.msra.mxu0 0
      %471 = vmatprep.subr.bf16.mxu0 0
      %472 = vmatpush1.bf16.msra.mxu0 0
      %473 = vmatprep.subr.bf16.mxu0 0
      %474 = vmatpush1.bf16.msra.mxu0 0
      %475 = vmatprep.subr.bf16.mxu0 0
      %476 = vmatpush1.bf16.msra.mxu0 0
      %477 = vmatprep.subr.bf16.mxu0 0
      %478 = vmatpush1.bf16.msra.mxu0 0
      %479 = vmatprep.subr.bf16.mxu0 0
      %480 = vmatpush1.bf16.msra.mxu0 0
      %481 = vmatprep.subr.bf16.mxu0 0
      %482 = vmatpush1.bf16.msra.mxu0 0
      %483 = vmatprep.subr.bf16.mxu0 0
      %484 = vmatpush1.bf16.msra.mxu0 0
      %485 = vmatprep.mubr.bf16.mxu0 0
      %486 = vmatmul.mubr.bf16.gmra.mrb[0].mxu0 %v445
      %v487 = vpop.f32.mrb[0].mxu0
      %v488 = vadd.f32 0.0, %v487
      %v489 = vpop.f32.mrb[0].mxu0
      %v490 = vpop.f32.mrb[0].mxu0
      %v491 = vadd.f32 0.0, %v490
      %v492 = vpop.f32.mrb[0].mxu0
      %493 = vmatprep.mubr.bf16.mxu0 0
      %494 = vmatmul.mubr.bf16.gmra.mrb[0].mxu0 %v448
      %v495 = vpop.f32.mrb[0].mxu0
      %v496 = vadd.f32 0.0, %v495
      %v497 = vpop.f32.mrb[0].mxu0
      %v498 = vpop.f32.mrb[0].mxu0
      %v499 = vadd.f32 0.0, %v498
      %v500 = vpop.f32.mrb[0].mxu0
      %501 = vmatprep.mubr.bf16.mxu0 0
      %502 = vmatmul.mubr.bf16.gmra.mrb[0].mxu0 %v451
      %v503 = vpop.f32.mrb[0].mxu0
      %v504 = vadd.f32 0.0, %v503
      %v505 = vpop.f32.mrb[0].mxu0
      %v506 = vpop.f32.mrb[0].mxu0
      %v507 = vpop.f32.mrb[0].mxu0
      %508 = vdwg.mxu0
      %v509 = vadd.f32 %v397, %v488
      %v510 = vadd.f32 %v400, %v491
      %v511 = vadd.f32 %v405, %v496
      %v512 = vadd.f32 %v408, %v499
      %v513 = vadd.f32 %v413, %v504
      %v514 = vpack.c.bf16 %v222, %v221
      %v515 = vpack.c.bf16 %v224, %v223
      %v516 = vpack.c.bf16 %v226, %v225
      %s517 = scalar_lea.vmem %s1, 48
      %v518 = vld [vmem:[%s517] sm:$0xf]
      %v519 = vld [vmem:[%s517 + $0x4] sm:$0xf]
      %v520 = vld [vmem:[%s517 + $0x8] sm:$0xf]
      %v521 = vld [vmem:[%s517 + $0xc] sm:$0xf]
      %v525 = vrot.slane %v514, 1
      %v526 = vrot.slane %v515, 1
      %v527 = vsel %vm426, %v525, %v526
      %v528 = vrot.slane %v516, 1
      %v529 = vsel %vm426, %v526, %v528
      %v534 = vunpack.c.l.b16 %v518
      %v535 = vunpack.c.l.b16 %v519
      %v536 = vunpack.c.l.b16 %v520
      %v537 = vunpack.c.l.b16 %v521
      %v538 = vpack.c.b16 %v535, %v534
      %v539 = vpack.c.b16 %v537, %v536
      %v543 = vsel %vm277, %v527, 0
      %v546 = vsel %vm277, %v529, 0
      %v549 = vsel %vm277, %v528, 0
      %551 = vmatprep.subr.bf16.mxu0 0
      %552 = vmatpush1.bf16.msra.mxu0 %v538
      %553 = vmatprep.subr.bf16.mxu0 0
      %554 = vmatpush1.bf16.msra.mxu0 %v539
      %555 = vmatprep.subr.bf16.mxu0 0
      %556 = vmatpush1.bf16.msra.mxu0 0
      %557 = vmatprep.subr.bf16.mxu0 0
      %558 = vmatpush1.bf16.msra.mxu0 0
      %559 = vmatprep.subr.bf16.mxu0 0
      %560 = vmatpush1.bf16.msra.mxu0 0
      %561 = vmatprep.subr.bf16.mxu0 0
      %562 = vmatpush1.bf16.msra.mxu0 0
      %563 = vmatprep.subr.bf16.mxu0 0
      %564 = vmatpush1.bf16.msra.mxu0 0
      %565 = vmatprep.subr.bf16.mxu0 0
      %566 = vmatpush1.bf16.msra.mxu0 0
      %567 = vmatprep.subr.bf16.mxu0 0
      %568 = vmatpush1.bf16.msra.mxu0 0
      %569 = vmatprep.subr.bf16.mxu0 0
      %570 = vmatpush1.bf16.msra.mxu0 0
      %571 = vmatprep.subr.bf16.mxu0 0
      %572 = vmatpush1.bf16.msra.mxu0 0
      %573 = vmatprep.subr.bf16.mxu0 0
      %574 = vmatpush1.bf16.msra.mxu0 0
      %575 = vmatprep.subr.bf16.mxu0 0
      %576 = vmatpush1.bf16.msra.mxu0 0
      %577 = vmatprep.subr.bf16.mxu0 0
      %578 = vmatpush1.bf16.msra.mxu0 0
      %579 = vmatprep.subr.bf16.mxu0 0
      %580 = vmatpush1.bf16.msra.mxu0 0
      %581 = vmatprep.subr.bf16.mxu0 0
      %582 = vmatpush1.bf16.msra.mxu0 0
      %583 = vmatprep.mubr.bf16.mxu0 0
      %584 = vmatmul.mubr.bf16.gmra.mrb[0].mxu0 %v543
      %v585 = vpop.f32.mrb[0].mxu0
      %v586 = vadd.f32 0.0, %v585
      %v587 = vpop.f32.mrb[0].mxu0
      %v588 = vpop.f32.mrb[0].mxu0
      %v589 = vadd.f32 0.0, %v588
      %v590 = vpop.f32.mrb[0].mxu0
      %591 = vmatprep.mubr.bf16.mxu0 0
      %592 = vmatmul.mubr.bf16.gmra.mrb[0].mxu0 %v546
      %v593 = vpop.f32.mrb[0].mxu0
      %v594 = vadd.f32 0.0, %v593
      %v595 = vpop.f32.mrb[0].mxu0
      %v596 = vpop.f32.mrb[0].mxu0
      %v597 = vadd.f32 0.0, %v596
      %v598 = vpop.f32.mrb[0].mxu0
      %599 = vmatprep.mubr.bf16.mxu0 0
      %600 = vmatmul.mubr.bf16.gmra.mrb[0].mxu0 %v549
      %v601 = vpop.f32.mrb[0].mxu0
      %v602 = vadd.f32 0.0, %v601
      %v603 = vpop.f32.mrb[0].mxu0
      %v604 = vpop.f32.mrb[0].mxu0
      %v605 = vpop.f32.mrb[0].mxu0
      %606 = vdwg.mxu0
      %v607 = vadd.f32 %v509, %v586
      %v608 = vadd.f32 %v510, %v589
      %v609 = vadd.f32 %v511, %v594
      %v610 = vadd.f32 %v512, %v597
      %v611 = vadd.f32 %v513, %v602
      %s612 = scalar_lea.vmem %s1, 64
      %v613 = vld [vmem:[%s612] sm:$0xf]
      %v614 = vld [vmem:[%s612 + $0x4] sm:$0xf]
      %v615 = vld [vmem:[%s612 + $0x8] sm:$0xf]
      %v616 = vld [vmem:[%s612 + $0xc] sm:$0xf]
      %vm617 = vsmask.f32 6400
      %v619 = vshrl.u32 %v514, 16
      %v621 = vrot.slane %v619, 1
      %v622 = vshll.u32 %v514, 16
      %v624 = vrot.slane %v622, 2
      %v625 = vor.u32 %v621, %v624
      %v627 = vshrl.u32 %v515, 16
      %v629 = vrot.slane %v627, 1
      %v630 = vshll.u32 %v515, 16
      %v632 = vrot.slane %v630, 2
      %v633 = vor.u32 %v629, %v632
      %v634 = vsel %vm617, %v625, %v633
      %v636 = vshrl.u32 %v516, 16
      %v638 = vrot.slane %v636, 1
      %v639 = vshll.u32 %v516, 16
      %v641 = vrot.slane %v639, 2
      %v642 = vor.u32 %v638, %v641
      %v643 = vsel %vm617, %v633, %v642
      %v648 = vunpack.c.l.b16 %v613
      %v649 = vunpack.c.l.b16 %v614
      %v650 = vunpack.c.l.b16 %v615
      %v651 = vunpack.c.l.b16 %v616
      %v652 = vpack.c.b16 %v649, %v648
      %v653 = vpack.c.b16 %v651, %v650
      %v657 = vsel %vm277, %v634, 0
      %v660 = vsel %vm277, %v643, 0
      %v663 = vsel %vm277, %v642, 0
      %665 = vmatprep.subr.bf16.mxu0 0
      %666 = vmatpush1.bf16.msra.mxu0 %v652
      %667 = vmatprep.subr.bf16.mxu0 0
      %668 = vmatpush1.bf16.msra.mxu0 %v653
      %669 = vmatprep.subr.bf16.mxu0 0
      %670 = vmatpush1.bf16.msra.mxu0 0
      %671 = vmatprep.subr.bf16.mxu0 0
      %672 = vmatpush1.bf16.msra.mxu0 0
      %673 = vmatprep.subr.bf16.mxu0 0
      %674 = vmatpush1.bf16.msra.mxu0 0
      %675 = vmatprep.subr.bf16.mxu0 0
      %676 = vmatpush1.bf16.msra.mxu0 0
      %677 = vmatprep.subr.bf16.mxu0 0
      %678 = vmatpush1.bf16.msra.mxu0 0
      %679 = vmatprep.subr.bf16.mxu0 0
      %680 = vmatpush1.bf16.msra.mxu0 0
      %681 = vmatprep.subr.bf16.mxu0 0
      %682 = vmatpush1.bf16.msra.mxu0 0
      %683 = vmatprep.subr.bf16.mxu0 0
      %684 = vmatpush1.bf16.msra.mxu0 0
      %685 = vmatprep.subr.bf16.mxu0 0
      %686 = vmatpush1.bf16.msra.mxu0 0
      %687 = vmatprep.subr.bf16.mxu0 0
      %688 = vmatpush1.bf16.msra.mxu0 0
      %689 = vmatprep.subr.bf16.mxu0 0
      %690 = vmatpush1.bf16.msra.mxu0 0
      %691 = vmatprep.subr.bf16.mxu0 0
      %692 = vmatpush1.bf16.msra.mxu0 0
      %693 = vmatprep.subr.bf16.mxu0 0
      %694 = vmatpush1.bf16.msra.mxu0 0
      %695 = vmatprep.subr.bf16.mxu0 0
      %696 = vmatpush1.bf16.msra.mxu0 0
      %697 = vmatprep.mubr.bf16.mxu0 0
      %698 = vmatmul.mubr.bf16.gmra.mrb[0].mxu0 %v657
      %v699 = vpop.f32.mrb[0].mxu0
      %v700 = vadd.f32 0.0, %v699
      %v701 = vpop.f32.mrb[0].mxu0
      %v702 = vpop.f32.mrb[0].mxu0
      %v703 = vadd.f32 0.0, %v702
      %v704 = vpop.f32.mrb[0].mxu0
      %705 = vmatprep.mubr.bf16.mxu0 0
      %706 = vmatmul.mubr.bf16.gmra.mrb[0].mxu0 %v660
      %v707 = vpop.f32.mrb[0].mxu0
      %v708 = vadd.f32 0.0, %v707
      %v709 = vpop.f32.mrb[0].mxu0
      %v710 = vpop.f32.mrb[0].mxu0
      %v711 = vadd.f32 0.0, %v710
      %v712 = vpop.f32.mrb[0].mxu0
      %713 = vmatprep.mubr.bf16.mxu0 0
      %714 = vmatmul.mubr.bf16.gmra.mrb[0].mxu0 %v663
      %v715 = vpop.f32.mrb[0].mxu0
      %v716 = vadd.f32 0.0, %v715
      %v717 = vpop.f32.mrb[0].mxu0
      %v718 = vpop.f32.mrb[0].mxu0
      %v719 = vpop.f32.mrb[0].mxu0
      %720 = vdwg.mxu0
      %v721 = vadd.f32 %v607, %v700
      %v722 = vadd.f32 %v608, %v703
      %v723 = vadd.f32 %v609, %v708
      %v724 = vadd.f32 %v610, %v711
      %v725 = vadd.f32 %v611, %v716
      %s726 = scalar_lea.vmem %s1, 80
      %v727 = vld [vmem:[%s726] sm:$0xf]
      %v728 = vld [vmem:[%s726 + $0x4] sm:$0xf]
      %v729 = vld [vmem:[%s726 + $0x8] sm:$0xf]
      %v730 = vld [vmem:[%s726 + $0xc] sm:$0xf]
      %vm731 = vcmask 1045504
      %v732 = vrot.slane %v514, 2
      %v733 = vrot.slane %v515, 2
      %v734 = vsel %vm731, %v732, %v733
      %v735 = vrot.slane %v516, 2
      %v736 = vsel %vm731, %v733, %v735
      %v741 = vunpack.c.l.b16 %v727
      %v742 = vunpack.c.l.b16 %v728
      %v743 = vunpack.c.l.b16 %v729
      %v744 = vunpack.c.l.b16 %v730
      %v745 = vpack.c.b16 %v742, %v741
      %v746 = vpack.c.b16 %v744, %v743
      %v750 = vsel %vm277, %v734, 0
      %v753 = vsel %vm277, %v736, 0
      %v756 = vsel %vm277, %v735, 0
      %758 = vmatprep.subr.bf16.mxu0 0
      %759 = vmatpush1.bf16.msra.mxu0 %v745
      %760 = vmatprep.subr.bf16.mxu0 0
      %761 = vmatpush1.bf16.msra.mxu0 %v746
      %762 = vmatprep.subr.bf16.mxu0 0
      %763 = vmatpush1.bf16.msra.mxu0 0
      %764 = vmatprep.subr.bf16.mxu0 0
      %765 = vmatpush1.bf16.msra.mxu0 0
      %766 = vmatprep.subr.bf16.mxu0 0
      %767 = vmatpush1.bf16.msra.mxu0 0
      %768 = vmatprep.subr.bf16.mxu0 0
      %769 = vmatpush1.bf16.msra.mxu0 0
      %770 = vmatprep.subr.bf16.mxu0 0
      %771 = vmatpush1.bf16.msra.mxu0 0
      %772 = vmatprep.subr.bf16.mxu0 0
      %773 = vmatpush1.bf16.msra.mxu0 0
      %774 = vmatprep.subr.bf16.mxu0 0
      %775 = vmatpush1.bf16.msra.mxu0 0
      %776 = vmatprep.subr.bf16.mxu0 0
      %777 = vmatpush1.bf16.msra.mxu0 0
      %778 = vmatprep.subr.bf16.mxu0 0
      %779 = vmatpush1.bf16.msra.mxu0 0
      %780 = vmatprep.subr.bf16.mxu0 0
      %781 = vmatpush1.bf16.msra.mxu0 0
      %782 = vmatprep.subr.bf16.mxu0 0
      %783 = vmatpush1.bf16.msra.mxu0 0
      %784 = vmatprep.subr.bf16.mxu0 0
      %785 = vmatpush1.bf16.msra.mxu0 0
      %786 = vmatprep.subr.bf16.mxu0 0
      %787 = vmatpush1.bf16.msra.mxu0 0
      %788 = vmatprep.subr.bf16.mxu0 0
      %789 = vmatpush1.bf16.msra.mxu0 0
      %790 = vmatprep.mubr.bf16.mxu0 0
      %791 = vmatmul.mubr.bf16.gmra.mrb[0].mxu0 %v750
      %v792 = vpop.f32.mrb[0].mxu0
      %v793 = vadd.f32 0.0, %v792
      %v794 = vpop.f32.mrb[0].mxu0
      %v795 = vpop.f32.mrb[0].mxu0
      %v796 = vadd.f32 0.0, %v795
      %v797 = vpop.f32.mrb[0].mxu0
      %798 = vmatprep.mubr.bf16.mxu0 0
      %799 = vmatmul.mubr.bf16.gmra.mrb[0].mxu0 %v753
      %v800 = vpop.f32.mrb[0].mxu0
      %v801 = vadd.f32 0.0, %v800
      %v802 = vpop.f32.mrb[0].mxu0
      %v803 = vpop.f32.mrb[0].mxu0
      %v804 = vadd.f32 0.0, %v803
      %v805 = vpop.f32.mrb[0].mxu0
      %806 = vmatprep.mubr.bf16.mxu0 0
      %807 = vmatmul.mubr.bf16.gmra.mrb[0].mxu0 %v756
      %v808 = vpop.f32.mrb[0].mxu0
      %v809 = vadd.f32 0.0, %v808
      %v810 = vpop.f32.mrb[0].mxu0
      %v811 = vpop.f32.mrb[0].mxu0
      %v812 = vpop.f32.mrb[0].mxu0
      %813 = vdwg.mxu0
      %v814 = vadd.f32 %v721, %v793
      %v815 = vadd.f32 %v722, %v796
      %v816 = vadd.f32 %v723, %v801
      %v817 = vadd.f32 %v724, %v804
      %v818 = vadd.f32 %v725, %v809
      %v819 = vpack.c.bf16 %v227, %v226
      %s820 = scalar_lea.vmem %s1, 96
      %v821 = vld [vmem:[%s820] sm:$0xf]
      %v822 = vld [vmem:[%s820 + $0x4] sm:$0xf]
      %v823 = vld [vmem:[%s820 + $0x8] sm:$0xf]
      %v824 = vld [vmem:[%s820 + $0xc] sm:$0xf]
      %v826 = vrot.slane %v229, 2
      %v827 = vrot.slane %v235, 2
      %v828 = vsel %vm731, %v826, %v827
      %v829 = vrot.slane %v819, 2
      %v830 = vsel %vm731, %v827, %v829
      %v835 = vunpack.c.l.b16 %v821
      %v836 = vunpack.c.l.b16 %v822
      %v837 = vunpack.c.l.b16 %v823
      %v838 = vunpack.c.l.b16 %v824
      %v839 = vpack.c.b16 %v836, %v835
      %v840 = vpack.c.b16 %v838, %v837
      %v844 = vsel %vm277, %v828, 0
      %v847 = vsel %vm277, %v830, 0
      %v850 = vsel %vm277, %v829, 0
      %852 = vmatprep.subr.bf16.mxu0 0
      %853 = vmatpush1.bf16.msra.mxu0 %v839
      %854 = vmatprep.subr.bf16.mxu0 0
      %855 = vmatpush1.bf16.msra.mxu0 %v840
      %856 = vmatprep.subr.bf16.mxu0 0
      %857 = vmatpush1.bf16.msra.mxu0 0
      %858 = vmatprep.subr.bf16.mxu0 0
      %859 = vmatpush1.bf16.msra.mxu0 0
      %860 = vmatprep.subr.bf16.mxu0 0
      %861 = vmatpush1.bf16.msra.mxu0 0
      %862 = vmatprep.subr.bf16.mxu0 0
      %863 = vmatpush1.bf16.msra.mxu0 0
      %864 = vmatprep.subr.bf16.mxu0 0
      %865 = vmatpush1.bf16.msra.mxu0 0
      %866 = vmatprep.subr.bf16.mxu0 0
      %867 = vmatpush1.bf16.msra.mxu0 0
      %868 = vmatprep.subr.bf16.mxu0 0
      %869 = vmatpush1.bf16.msra.mxu0 0
      %870 = vmatprep.subr.bf16.mxu0 0
      %871 = vmatpush1.bf16.msra.mxu0 0
      %872 = vmatprep.subr.bf16.mxu0 0
      %873 = vmatpush1.bf16.msra.mxu0 0
      %874 = vmatprep.subr.bf16.mxu0 0
      %875 = vmatpush1.bf16.msra.mxu0 0
      %876 = vmatprep.subr.bf16.mxu0 0
      %877 = vmatpush1.bf16.msra.mxu0 0
      %878 = vmatprep.subr.bf16.mxu0 0
      %879 = vmatpush1.bf16.msra.mxu0 0
      %880 = vmatprep.subr.bf16.mxu0 0
      %881 = vmatpush1.bf16.msra.mxu0 0
      %882 = vmatprep.subr.bf16.mxu0 0
      %883 = vmatpush1.bf16.msra.mxu0 0
      %884 = vmatprep.mubr.bf16.mxu0 0
      %885 = vmatmul.mubr.bf16.gmra.mrb[0].mxu0 %v844
      %v886 = vpop.f32.mrb[0].mxu0
      %v887 = vadd.f32 0.0, %v886
      %v888 = vpop.f32.mrb[0].mxu0
      %v889 = vpop.f32.mrb[0].mxu0
      %v890 = vadd.f32 0.0, %v889
      %v891 = vpop.f32.mrb[0].mxu0
      %892 = vmatprep.mubr.bf16.mxu0 0
      %893 = vmatmul.mubr.bf16.gmra.mrb[0].mxu0 %v847
      %v894 = vpop.f32.mrb[0].mxu0
      %v895 = vadd.f32 0.0, %v894
      %v896 = vpop.f32.mrb[0].mxu0
      %v897 = vpop.f32.mrb[0].mxu0
      %v898 = vadd.f32 0.0, %v897
      %v899 = vpop.f32.mrb[0].mxu0
      %900 = vmatprep.mubr.bf16.mxu0 0
      %901 = vmatmul.mubr.bf16.gmra.mrb[0].mxu0 %v850
      %v902 = vpop.f32.mrb[0].mxu0
      %v903 = vadd.f32 0.0, %v902
      %v904 = vpop.f32.mrb[0].mxu0
      %v905 = vpop.f32.mrb[0].mxu0
      %v906 = vpop.f32.mrb[0].mxu0
      %907 = vdwg.mxu0
      %v908 = vadd.f32 %v814, %v887
      %v909 = vadd.f32 %v815, %v890
      %v910 = vadd.f32 %v816, %v895
      %v911 = vadd.f32 %v817, %v898
      %v912 = vadd.f32 %v818, %v903
      %s913 = scalar_lea.vmem %s1, 112
      %v914 = vld [vmem:[%s913] sm:$0xf]
      %v915 = vld [vmem:[%s913 + $0x4] sm:$0xf]
      %v916 = vld [vmem:[%s913 + $0x8] sm:$0xf]
      %v917 = vld [vmem:[%s913 + $0xc] sm:$0xf]
      %vm918 = vsmask.f32 5376
      %v919 = vrot.slane %v254, 2
      %v920 = vrot.slane %v250, 3
      %v921 = vor.u32 %v919, %v920
      %v922 = vrot.slane %v262, 2
      %v923 = vrot.slane %v258, 3
      %v924 = vor.u32 %v922, %v923
      %v925 = vsel %vm918, %v921, %v924
      %v927 = vshrl.u32 %v819, 16
      %v929 = vrot.slane %v927, 2
      %v930 = vshll.u32 %v819, 16
      %v932 = vrot.slane %v930, 3
      %v933 = vor.u32 %v929, %v932
      %v934 = vsel %vm918, %v924, %v933
      %v939 = vunpack.c.l.b16 %v914
      %v940 = vunpack.c.l.b16 %v915
      %v941 = vunpack.c.l.b16 %v916
      %v942 = vunpack.c.l.b16 %v917
      %v943 = vpack.c.b16 %v940, %v939
      %v944 = vpack.c.b16 %v942, %v941
      %v948 = vsel %vm277, %v925, 0
      %v951 = vsel %vm277, %v934, 0
      %v954 = vsel %vm277, %v933, 0
      %956 = vmatprep.subr.bf16.mxu0 0
      %957 = vmatpush1.bf16.msra.mxu0 %v943
      %958 = vmatprep.subr.bf16.mxu0 0
      %959 = vmatpush1.bf16.msra.mxu0 %v944
      %960 = vmatprep.subr.bf16.mxu0 0
      %961 = vmatpush1.bf16.msra.mxu0 0
      %962 = vmatprep.subr.bf16.mxu0 0
      %963 = vmatpush1.bf16.msra.mxu0 0
      %964 = vmatprep.subr.bf16.mxu0 0
      %965 = vmatpush1.bf16.msra.mxu0 0
      %966 = vmatprep.subr.bf16.mxu0 0
      %967 = vmatpush1.bf16.msra.mxu0 0
      %968 = vmatprep.subr.bf16.mxu0 0
      %969 = vmatpush1.bf16.msra.mxu0 0
      %970 = vmatprep.subr.bf16.mxu0 0
      %971 = vmatpush1.bf16.msra.mxu0 0
      %972 = vmatprep.subr.bf16.mxu0 0
      %973 = vmatpush1.bf16.msra.mxu0 0
      %974 = vmatprep.subr.bf16.mxu0 0
      %975 = vmatpush1.bf16.msra.mxu0 0
      %976 = vmatprep.subr.bf16.mxu0 0
      %977 = vmatpush1.bf16.msra.mxu0 0
      %978 = vmatprep.subr.bf16.mxu0 0
      %979 = vmatpush1.bf16.msra.mxu0 0
      %980 = vmatprep.subr.bf16.mxu0 0
      %981 = vmatpush1.bf16.msra.mxu0 0
      %982 = vmatprep.subr.bf16.mxu0 0
      %983 = vmatpush1.bf16.msra.mxu0 0
      %984 = vmatprep.subr.bf16.mxu0 0
      %985 = vmatpush1.bf16.msra.mxu0 0
      %986 = vmatprep.subr.bf16.mxu0 0
      %987 = vmatpush1.bf16.msra.mxu0 0
      %988 = vmatprep.mubr.bf16.mxu0 0
      %989 = vmatmul.mubr.bf16.gmra.mrb[0].mxu0 %v948
      %v990 = vpop.f32.mrb[0].mxu0
      %v991 = vadd.f32 0.0, %v990
      %v992 = vpop.f32.mrb[0].mxu0
      %v993 = vpop.f32.mrb[0].mxu0
      %v994 = vadd.f32 0.0, %v993
      %v995 = vpop.f32.mrb[0].mxu0
      %996 = vmatprep.mubr.bf16.mxu0 0
      %997 = vmatmul.mubr.bf16.gmra.mrb[0].mxu0 %v951
      %v998 = vpop.f32.mrb[0].mxu0
      %v999 = vadd.f32 0.0, %v998
      %v1000 = vpop.f32.mrb[0].mxu0
      %v1001 = vpop.f32.mrb[0].mxu0
      %v1002 = vadd.f32 0.0, %v1001
      %v1003 = vpop.f32.mrb[0].mxu0
      %1004 = vmatprep.mubr.bf16.mxu0 0
      %1005 = vmatmul.mubr.bf16.gmra.mrb[0].mxu0 %v954
      %v1006 = vpop.f32.mrb[0].mxu0
      %v1007 = vadd.f32 0.0, %v1006
      %v1008 = vpop.f32.mrb[0].mxu0
      %v1009 = vpop.f32.mrb[0].mxu0
      %v1010 = vpop.f32.mrb[0].mxu0
      %1011 = vdwg.mxu0
      %v1012 = vadd.f32 %v908, %v991
      %v1013 = vadd.f32 %v909, %v994
      %v1014 = vadd.f32 %v910, %v999
      %v1015 = vadd.f32 %v911, %v1002
      %v1016 = vadd.f32 %v912, %v1007
      %s1017 = scalar_lea.vmem %s1, 128
      %v1018 = vld [vmem:[%s1017] sm:$0xf]
      %v1019 = vld [vmem:[%s1017 + $0x4] sm:$0xf]
      %v1020 = vld [vmem:[%s1017 + $0x8] sm:$0xf]
      %v1021 = vld [vmem:[%s1017 + $0xc] sm:$0xf]
      %vm1022 = vcmask 1044480
      %v1023 = vrot.slane %v229, 3
      %v1024 = vrot.slane %v235, 3
      %v1025 = vsel %vm1022, %v1023, %v1024
      %v1026 = vrot.slane %v819, 3
      %v1027 = vsel %vm1022, %v1024, %v1026
      %v1032 = vunpack.c.l.b16 %v1018
      %v1033 = vunpack.c.l.b16 %v1019
      %v1034 = vunpack.c.l.b16 %v1020
      %v1035 = vunpack.c.l.b16 %v1021
      %v1036 = vpack.c.b16 %v1033, %v1032
      %v1037 = vpack.c.b16 %v1035, %v1034
      %v1041 = vsel %vm277, %v1025, 0
      %v1044 = vsel %vm277, %v1027, 0
      %v1047 = vsel %vm277, %v1026, 0
      %1049 = vmatprep.subr.bf16.mxu0 0
      %1050 = vmatpush1.bf16.msra.mxu0 %v1036
      %1051 = vmatprep.subr.bf16.mxu0 0
      %1052 = vmatpush1.bf16.msra.mxu0 %v1037
      %1053 = vmatprep.subr.bf16.mxu0 0
      %1054 = vmatpush1.bf16.msra.mxu0 0
      %1055 = vmatprep.subr.bf16.mxu0 0
      %1056 = vmatpush1.bf16.msra.mxu0 0
      %1057 = vmatprep.subr.bf16.mxu0 0
      %1058 = vmatpush1.bf16.msra.mxu0 0
      %1059 = vmatprep.subr.bf16.mxu0 0
      %1060 = vmatpush1.bf16.msra.mxu0 0
      %1061 = vmatprep.subr.bf16.mxu0 0
      %1062 = vmatpush1.bf16.msra.mxu0 0
      %1063 = vmatprep.subr.bf16.mxu0 0
      %1064 = vmatpush1.bf16.msra.mxu0 0
      %1065 = vmatprep.subr.bf16.mxu0 0
      %1066 = vmatpush1.bf16.msra.mxu0 0
      %1067 = vmatprep.subr.bf16.mxu0 0
      %1068 = vmatpush1.bf16.msra.mxu0 0
      %1069 = vmatprep.subr.bf16.mxu0 0
      %1070 = vmatpush1.bf16.msra.mxu0 0
      %1071 = vmatprep.subr.bf16.mxu0 0
      %1072 = vmatpush1.bf16.msra.mxu0 0
      %1073 = vmatprep.subr.bf16.mxu0 0
      %1074 = vmatpush1.bf16.msra.mxu0 0
      %1075 = vmatprep.subr.bf16.mxu0 0
      %1076 = vmatpush1.bf16.msra.mxu0 0
      %1077 = vmatprep.subr.bf16.mxu0 0
      %1078 = vmatpush1.bf16.msra.mxu0 0
      %1079 = vmatprep.subr.bf16.mxu0 0
      %1080 = vmatpush1.bf16.msra.mxu0 0
      %1081 = vmatprep.mubr.bf16.mxu0 0
      %1082 = vmatmul.mubr.bf16.gmra.mrb[0].mxu0 %v1041
      %v1083 = vpop.f32.mrb[0].mxu0
      %v1084 = vadd.f32 0.0, %v1083
      %v1085 = vpop.f32.mrb[0].mxu0
      %v1086 = vpop.f32.mrb[0].mxu0
      %v1087 = vadd.f32 0.0, %v1086
      %v1088 = vpop.f32.mrb[0].mxu0
      %1089 = vmatprep.mubr.bf16.mxu0 0
      %1090 = vmatmul.mubr.bf16.gmra.mrb[0].mxu0 %v1044
      %v1091 = vpop.f32.mrb[0].mxu0
      %v1092 = vadd.f32 0.0, %v1091
      %v1093 = vpop.f32.mrb[0].mxu0
      %v1094 = vpop.f32.mrb[0].mxu0
      %v1095 = vadd.f32 0.0, %v1094
      %v1096 = vpop.f32.mrb[0].mxu0
      %1097 = vmatprep.mubr.bf16.mxu0 0
      %1098 = vmatmul.mubr.bf16.gmra.mrb[0].mxu0 %v1047
      %v1099 = vpop.f32.mrb[0].mxu0
      %v1100 = vadd.f32 0.0, %v1099
      %v1101 = vpop.f32.mrb[0].mxu0
      %v1102 = vpop.f32.mrb[0].mxu0
      %v1103 = vpop.f32.mrb[0].mxu0
      %1104 = vdwg.mxu0
      %v1105 = vadd.f32 %v1012, %v1084
      %v1106 = vadd.f32 %v1013, %v1087
      %v1107 = vadd.f32 %v1014, %v1092
      %v1108 = vadd.f32 %v1015, %v1095
      %v1109 = vadd.f32 %v1016, %v1100
      %v1111 = vlaneseq
      %v1112 = vshrl.u32 %v1111, 7
      %v1113 = vsub.s32 0, %v1112
      %v1114 = vrot.slane %v219, %v1113
      %v1116 = vadd.f32 %v1105, %v1114
      %v1117 = vadd.f32 %v1106, %v1114
      %v1118 = vadd.f32 %v1107, %v1114
      %v1119 = vadd.f32 %v1108, %v1114
      %v1120 = vadd.f32 %v1109, %v1114
      %v1121 = vld [vmem:[%s212] sm:$0xff]
      %v1122 = vld [vmem:[%s212 + $0x8] sm:$0xff]
      %v1123 = vld [vmem:[%s212 + $0x10] sm:$0xff]
      %v1124 = vld [vmem:[%s212 + $0x18] sm:$0xff]
      %v1125 = vld [vmem:[%s212 + $0x20] sm:$0xff]
      %v1126 = vadd.f32 %v1116, %v1121
      %v1127 = vadd.f32 %v1117, %v1122
      %v1128 = vadd.f32 %v1118, %v1123
      %v1129 = vadd.f32 %v1119, %v1124
      %v1130 = vadd.f32 %v1120, %v1125
      %1131 = vst.msk [vmem:[%s217] sm:$0xff] %vm277, %v1126
      %1132 = vst.msk [vmem:[%s217 + $0x8] sm:$0xff] %vm277, %v1127
      %1133 = vst.msk [vmem:[%s217 + $0x10] sm:$0xff] %vm277, %v1128
      %1134 = vst.msk [vmem:[%s217 + $0x18] sm:$0xff] %vm277, %v1129
      %1135 = vst.msk [vmem:[%s217 + $0x20] sm:$0xff] %vm277, %v1130
      %p1136 = scmp.lt.s32.totalorder %s15, 1
      %s1137 = scalar_select %p1136, %s15, 1
      %s1138 = smul.addr %s1137, 5
      %s1139 = smul.addr %s1138, 8
      %s1140 = scalar_lea.vmem %s4, %s1139
      // Predicated region
      $region37: #{vqvae_decoder_forward.7} parent=35 // pred_check
        %p1141 = pneg %p127
      $region38: #{vqvae_decoder_forward.7} parent=35 // pred_check_branch
        %1143 = sbr.rel (%p1141) target = $region40
      $region39: #{vqvae_decoder_forward.7} parent=35 // pred_region
        _
      $region40: #{vqvae_decoder_forward.7} parent=35 // pred_fallthru
        _
    $region36: #{vqvae_decoder_forward.7} parent=5 // pred_fallthru
      _
    %p1144 = scmp.le.s32.totalorder 2, %s10
    // Predicated region
    $region41: #{vqvae_decoder_forward.7} parent=5 // pred_check
      %p1145 = pneg %p1144
    $region42: #{vqvae_decoder_forward.7} parent=5 // pred_check_branch
      %1147 = sbr.rel (%p1145) target = $region44
    $region43: #{vqvae_decoder_forward.7} parent=5 // pred_region
      %s1148 = ssub.s32 %s10, 2
      // Predicated region
      $region45: #{vqvae_decoder_forward.7} parent=43 // pred_check
        %p1149 = pneg %p133
      $region46: #{vqvae_decoder_forward.7} parent=43 // pred_check_branch
        %1151 = sbr.rel (%p1149) target = $region48
      $region47: #{vqvae_decoder_forward.7} parent=43 // pred_region
        %p1152 = scmp.lt.s32.totalorder %s16, 1
        %s1153 = scalar_select %p1152, %s16, 1
        %s1154 = smul.addr %s1153, 5
        %s1155 = smul.addr %s1154, 8
        %s1156 = scalar_lea.vmem %s4, %s1155
      $region48: #{vqvae_decoder_forward.7} parent=43 // pred_fallthru
        _
    $region44: #{vqvae_decoder_forward.7} parent=5 // pred_fallthru
      _
  $region6: #{vqvae_decoder_forward.7} parent=0 // loop_footer
    %s14 = sadd.s32 1, %s10
  $region7: #{vqvae_decoder_forward.7} parent=0 // loop_footer_branch
    %9 = sbr.rel target = $region3
  $region8: #{vqvae_decoder_forward.7} parent=0 // loop_exit
    _

// kernel: vqvae_decoder_forward.6
$region0: #{vqvae_decoder_forward.6}
  #allocation0 [shape = 'u32[]', space=smem, size = 0x4, offset = 0x4, fixed_abs, tag = 'smem constant byte address 0x4 - core index']
  #allocation1 [shape = 'u32[144,128]{1,0:T(1,128)}', space=vmem, size = 0x12000, scoped, tag = 'internal scratch']
  %s0 = inlined_call_operand.vmem [shape: f32[2,62,32], index: 0, kind: input, shape index: {}]
  %s1 = inlined_call_operand.vmem [shape: bf16[9,32,32], index: 1, kind: input, shape index: {}]
  %s2 = inlined_call_operand.vmem [shape: f32[1,32], index: 2, kind: input, shape index: {}]
  %s3 = inlined_call_operand.vmem [shape: f32[2,40,32], index: 3, kind: output, shape index: {}]
  %s4 = sld [smem:[#allocation0]]
  $region45: #{vqvae_decoder_forward.6} parent=0
    _
  %s6 = ssub.s32 1, %s4
  %s7 = scalar_select 0, %s6, %s4
  loop: start=0, step=1, limit=4
  $region2: #{vqvae_decoder_forward.6} parent=0 // loop_pre_header
    _
  $region3: #{vqvae_decoder_forward.6} parent=0 // loop_header
    %s9 = sphi 0, %s13
    %p10 = scmp.ge.s32.totalorder %s9, 4
    %s19 = sphi 0, %s21
    %s22 = sphi 0, %s19
    %s23 = sphi 0, %s22
    %s39 = sphi 0, %s23
    %s43 = sphi 0, %s43
    %s45 = sphi 0, %s43
    %s46 = sphi 0, %s45
    %s60 = sphi 0, %s46
    %s64 = sphi 0, %s64
    %s66 = sphi 0, %s64
    %s67 = sphi 0, %s66
    %s81 = sphi 0, %s67
    %s87 = sphi 0, %s89
    %s90 = sphi 0, %s87
    %s91 = sphi 0, %s90
    %s107 = sphi 0, %s91
  $region4: #{vqvae_decoder_forward.6} parent=0 // loop_header_branch
    %12 = sbr.rel (%p10) target = $region8
  $region5: #{vqvae_decoder_forward.6} parent=0 // loop_body
    %s14 = ssub.s32 %s9, 1
    %s15 = ssub.s32 %s9, 2
    %s16 = sadd.s32 %s9, 1
    %s17 = ssub.s32 %s9, %s16
    %p18 = scmp.eq.s32.totalorder %s17, 0
    %s20 = sadd.s32 %s19, 1
    %s21 = scalar_select %p18, %s19, %s20
    %p24 = pneg %p18
    %p25 = scmp.eq.s32.totalorder %s9, 1
    %p26 = por %p24, %p25
    %p27 = scmp.ne.s32.totalorder %s19, %s22
    %p28 = scmp.eq.s32.totalorder %s9, 0
    %p29 = por %p27, %p28
    %p30 = scmp.ne.s32.totalorder %s19, %s22
    %p31 = scmp.eq.s32.totalorder %s14, 1
    %p32 = por %p30, %p31
    %p33 = scmp.ne.s32.totalorder %s22, %s23
    %p34 = scmp.eq.s32.totalorder %s14, 0
    %p35 = por %p33, %p34
    %p36 = scmp.ne.s32.totalorder %s22, %s23
    %p37 = scmp.eq.s32.totalorder %s15, 1
    %p38 = por %p36, %p37
    %p40 = scmp.ne.s32.totalorder %s23, %s39
    %p41 = scmp.eq.s32.totalorder %s15, 0
    %p42 = por %p40, %p41
    %s44 = sadd.s32 %s43, 1
    %p47 = scmp.eq.s32.totalorder %s9, 1
    %p48 = scmp.ne.s32.totalorder %s43, %s45
    %p49 = scmp.eq.s32.totalorder %s9, 0
    %p50 = por %p48, %p49
    %p51 = scmp.ne.s32.totalorder %s43, %s45
    %p52 = scmp.eq.s32.totalorder %s14, 1
    %p53 = por %p51, %p52
    %p54 = scmp.ne.s32.totalorder %s45, %s46
    %p55 = scmp.eq.s32.totalorder %s14, 0
    %p56 = por %p54, %p55
    %p57 = scmp.ne.s32.totalorder %s45, %s46
    %p58 = scmp.eq.s32.totalorder %s15, 1
    %p59 = por %p57, %p58
    %p61 = scmp.ne.s32.totalorder %s46, %s60
    %p62 = scmp.eq.s32.totalorder %s15, 0
    %p63 = por %p61, %p62
    %s65 = sadd.s32 %s64, 1
    %p68 = scmp.eq.s32.totalorder %s9, 1
    %p69 = scmp.ne.s32.totalorder %s64, %s66
    %p70 = scmp.eq.s32.totalorder %s9, 0
    %p71 = por %p69, %p70
    %p72 = scmp.ne.s32.totalorder %s64, %s66
    %p73 = scmp.eq.s32.totalorder %s14, 1
    %p74 = por %p72, %p73
    %p75 = scmp.ne.s32.totalorder %s66, %s67
    %p76 = scmp.eq.s32.totalorder %s14, 0
    %p77 = por %p75, %p76
    %p78 = scmp.ne.s32.totalorder %s66, %s67
    %p79 = scmp.eq.s32.totalorder %s15, 1
    %p80 = por %p78, %p79
    %p82 = scmp.ne.s32.totalorder %s67, %s81
    %p83 = scmp.eq.s32.totalorder %s15, 0
    %p84 = por %p82, %p83
    %s85 = ssub.s32 %s9, %s16
    %p86 = scmp.eq.s32.totalorder %s85, 0
    %s88 = sadd.s32 %s87, 1
    %s89 = scalar_select %p86, %s87, %s88
    %p92 = pneg %p86
    %p93 = scmp.eq.s32.totalorder %s9, 1
    %p94 = por %p92, %p93
    %p95 = scmp.ne.s32.totalorder %s87, %s90
    %p96 = scmp.eq.s32.totalorder %s9, 0
    %p97 = por %p95, %p96
    %p98 = scmp.ne.s32.totalorder %s87, %s90
    %p99 = scmp.eq.s32.totalorder %s14, 1
    %p100 = por %p98, %p99
    %p101 = scmp.ne.s32.totalorder %s90, %s91
    %p102 = scmp.eq.s32.totalorder %s14, 0
    %p103 = por %p101, %p102
    %p104 = scmp.ne.s32.totalorder %s90, %s91
    %p105 = scmp.eq.s32.totalorder %s15, 1
    %p106 = por %p104, %p105
    %p108 = scmp.ne.s32.totalorder %s91, %s107
    %p109 = scmp.eq.s32.totalorder %s15, 0
    %p110 = por %p108, %p109
    %p111 = scmp.le.s32.totalorder 1, %s9
    %p112 = scmp.lt.s32.totalorder %s9, 3
    %p113 = pnand %p111, %p112
    %p114 = pneg %p113
    // Predicated region
    $region9: #{vqvae_decoder_forward.6} parent=5 // pred_check
      _
    $region10: #{vqvae_decoder_forward.6} parent=5 // pred_check_branch
      %116 = sbr.rel (%p113) target = $region12
    $region11: #{vqvae_decoder_forward.6} parent=5 // pred_region
      %s117 = ssub.s32 %s9, 1
      // Predicated region
      $region13: #{vqvae_decoder_forward.6} parent=11 // pred_check
        %p118 = pneg %p56
      $region14: #{vqvae_decoder_forward.6} parent=11 // pred_check_branch
        %120 = sbr.rel (%p118) target = $region16
      $region15: #{vqvae_decoder_forward.6} parent=11 // pred_region
        _
      $region16: #{vqvae_decoder_forward.6} parent=11 // pred_fallthru
        _
      // Predicated region
      $region17: #{vqvae_decoder_forward.6} parent=11 // pred_check
        %p121 = pneg %p77
      $region18: #{vqvae_decoder_forward.6} parent=11 // pred_check_branch
        %123 = sbr.rel (%p121) target = $region20
      $region19: #{vqvae_decoder_forward.6} parent=11 // pred_region
        _
      $region20: #{vqvae_decoder_forward.6} parent=11 // pred_fallthru
        _
    $region12: #{vqvae_decoder_forward.6} parent=5 // pred_fallthru
      _
    %p124 = scmp.lt.s32.totalorder %s9, 2
    // Predicated region
    $region21: #{vqvae_decoder_forward.6} parent=5 // pred_check
      %p125 = pneg %p124
    $region22: #{vqvae_decoder_forward.6} parent=5 // pred_check_branch
      %127 = sbr.rel (%p125) target = $region24
    $region23: #{vqvae_decoder_forward.6} parent=5 // pred_region
      // Predicated region
      $region25: #{vqvae_decoder_forward.6} parent=23 // pred_check
        %p128 = pneg %p29
      $region26: #{vqvae_decoder_forward.6} parent=23 // pred_check_branch
        %130 = sbr.rel (%p128) target = $region28
      $region27: #{vqvae_decoder_forward.6} parent=23 // pred_region
        %p131 = scmp.lt.s32.totalorder %s9, 1
        %s132 = scalar_select %p131, %s9, 1
        %s133 = smul.addr %s132, 8
        %s134 = smul.addr %s133, 8
        %s135 = scalar_lea.vmem %s0, %s134
      $region28: #{vqvae_decoder_forward.6} parent=23 // pred_fallthru
        _
    $region24: #{vqvae_decoder_forward.6} parent=5 // pred_fallthru
      _
    %p136 = scmp.le.s32.totalorder 1, %s9
    %p137 = scmp.lt.s32.totalorder %s9, 3
    %p138 = pnand %p136, %p137
    %p139 = pneg %p138
    // Predicated region
    $region29: #{vqvae_decoder_forward.6} parent=5 // pred_check
      _
    $region30: #{vqvae_decoder_forward.6} parent=5 // pred_check_branch
      %141 = sbr.rel (%p138) target = $region32
    $region31: #{vqvae_decoder_forward.6} parent=5 // pred_region
      %s142 = ssub.s32 %s9, 1
      %p143 = scmp.lt.s32.totalorder %s14, 1
      %s144 = scalar_select %p143, %s14, 1
      %s145 = smul.addr %s144, 8
      %s146 = smul.addr %s145, 8
      %s147 = scalar_lea.vmem %s0, %s146
      %p148 = pneg %p35
      %p149 = pneg %p32
      %p150 = pneg %p56
      %p151 = pneg %p53
      %p152 = pneg %p77
      %p153 = pneg %p74
      %p154 = pneg %p103
      %p155 = pneg %p100
      %p156 = scmp.lt.s32.totalorder %s14, 1
      %s157 = scalar_select %p156, %s14, 1
      %s158 = smul.addr %s157, 5
      %s159 = smul.addr %s158, 8
      %s160 = scalar_lea.vmem %s3, %s159
      %p161 = scmp.lt.s32.totalorder %s14, 1
      %s162 = scalar_select %p161, %s14, 1
      %s163 = smul.addr %s162, 8
      %s164 = smul.addr %s163, 8
      %s165 = scalar_lea.vmem %s0, %s164
      %p166 = scmp.lt.s32.totalorder %s14, 1
      %s167 = scalar_select %p166, %s14, 1
      %s168 = smul.addr %s167, 5
      %s169 = smul.addr %s168, 8
      %s170 = scalar_lea.vmem %s3, %s169
      %v172 = vld [vmem:[%s2] sm:$0x1]
      %v173 = vld [vmem:[%s165] sm:$0xff]
      %v174 = vld [vmem:[%s165 + $0x8] sm:$0xff]
      %v175 = vld [vmem:[%s165 + $0x10] sm:$0xff]
      %v176 = vld [vmem:[%s165 + $0x18] sm:$0xff]
      %v177 = vld [vmem:[%s165 + $0x20] sm:$0xff]
      %v178 = vld [vmem:[%s165 + $0x28] sm:$0xff]
      %v179 = vld [vmem:[%s165 + $0x30] sm:$0xff]
      %v180 = vld [vmem:[%s165 + $0x38] sm:$0x3f]
      %vm181 = vcmp.ge.f32.partialorder %v173, 0.0
      %vm182 = vcmp.ge.f32.partialorder %v174, 0.0
      %vm183 = vcmp.ge.f32.partialorder %v175, 0.0
      %vm184 = vcmp.ge.f32.partialorder %v176, 0.0
      %vm185 = vcmp.ge.f32.partialorder %v177, 0.0
      %vm186 = vcmp.ge.f32.partialorder %v178, 0.0
      %vm187 = vcmp.ge.f32.partialorder %v179, 0.0
      %vm188 = vcmp.ge.f32.partialorder %v180, 0.0
      %v189 = vmul.f32 %v173, 0.01
      %v190 = vmul.f32 %v174, 0.01
      %v191 = vmul.f32 %v175, 0.01
      %v192 = vmul.f32 %v176, 0.01
      %v193 = vmul.f32 %v177, 0.01
      %v194 = vmul.f32 %v178, 0.01
      %v195 = vmul.f32 %v179, 0.01
      %v196 = vmul.f32 %v180, 0.01
      %v197 = vsel %vm181, %v173, %v189
      %v198 = vsel %vm182, %v174, %v190
      %v199 = vsel %vm183, %v175, %v191
      %v200 = vsel %vm184, %v176, %v192
      %v201 = vsel %vm185, %v177, %v193
      %v202 = vsel %vm186, %v178, %v194
      %v203 = vsel %vm187, %v179, %v195
      %v204 = vsel %vm188, %v180, %v196
      %v205 = vpack.c.bf16 %v198, %v197
      %v206 = vpack.c.bf16 %v200, %v199
      %v207 = vpack.c.bf16 %v201, %v201
      %v208 = vld [vmem:[%s1] sm:$0xf]
      %v209 = vld [vmem:[%s1 + $0x4] sm:$0xf]
      %v210 = vld [vmem:[%s1 + $0x8] sm:$0xf]
      %v211 = vld [vmem:[%s1 + $0xc] sm:$0xf]
      %v212 = vpack.c.bf16 %v202, %v201
      %s213 = scalar_lea.vmem %s1, 16
      %v214 = vld [vmem:[%s213] sm:$0xf]
      %v215 = vld [vmem:[%s213 + $0x4] sm:$0xf]
      %v216 = vld [vmem:[%s213 + $0x8] sm:$0xf]
      %v217 = vld [vmem:[%s213 + $0xc] sm:$0xf]
      %vm218 = vsmask.f32 7424
      %v220 = vshrl.u32 %v205, 16
      %v222 = vshll.u32 %v205, 16
      %v224 = vrot.slane %v222, 1
      %v225 = vor.u32 %v220, %v224
      %v227 = vshll.u32 %v206, 16
      %v229 = vrot.slane %v227, 1
      %v230 = vsel %vm218, %v225, %v229
      %v231 = vshrl.u32 %v206, 16
      %v233 = vor.u32 %v231, %v229
      %v235 = vshll.u32 %v212, 16
      %v237 = vrot.slane %v235, 1
      %v238 = vsel %vm218, %v233, %v237
      %v239 = vshrl.u32 %v212, 16
      %v241 = vor.u32 %v239, %v237
      %v246 = vunpack.c.l.b16 %v214
      %v247 = vunpack.c.l.b16 %v215
      %v248 = vunpack.c.l.b16 %v216
      %v249 = vunpack.c.l.b16 %v217
      %v250 = vpack.c.b16 %v247, %v246
      %v251 = vpack.c.b16 %v249, %v248
      %vm254 = vcmask 261120
      %v256 = vsel %vm254, %v230, 0
      %v259 = vsel %vm254, %v238, 0
      %v262 = vsel %vm254, %v241, 0
      %264 = vmatprep.subr.bf16.mxu0 0
      %265 = vmatpush1.bf16.msra.mxu0 %v250
      %266 = vmatprep.subr.bf16.mxu0 0
      %267 = vmatpush1.bf16.msra.mxu0 %v251
      %268 = vmatprep.subr.bf16.mxu0 0
      %269 = vmatpush1.bf16.msra.mxu0 0
      %270 = vmatprep.subr.bf16.mxu0 0
      %271 = vmatpush1.bf16.msra.mxu0 0
      %272 = vmatprep.subr.bf16.mxu0 0
      %273 = vmatpush1.bf16.msra.mxu0 0
      %274 = vmatprep.subr.bf16.mxu0 0
      %275 = vmatpush1.bf16.msra.mxu0 0
      %276 = vmatprep.subr.bf16.mxu0 0
      %277 = vmatpush1.bf16.msra.mxu0 0
      %278 = vmatprep.subr.bf16.mxu0 0
      %279 = vmatpush1.bf16.msra.mxu0 0
      %280 = vmatprep.subr.bf16.mxu0 0
      %281 = vmatpush1.bf16.msra.mxu0 0
      %282 = vmatprep.subr.bf16.mxu0 0
      %283 = vmatpush1.bf16.msra.mxu0 0
      %284 = vmatprep.subr.bf16.mxu0 0
      %285 = vmatpush1.bf16.msra.mxu0 0
      %286 = vmatprep.subr.bf16.mxu0 0
      %287 = vmatpush1.bf16.msra.mxu0 0
      %288 = vmatprep.subr.bf16.mxu0 0
      %289 = vmatpush1.bf16.msra.mxu0 0
      %290 = vmatprep.subr.bf16.mxu0 0
      %291 = vmatpush1.bf16.msra.mxu0 0
      %292 = vmatprep.subr.bf16.mxu0 0
      %293 = vmatpush1.bf16.msra.mxu0 0
      %294 = vmatprep.subr.bf16.mxu0 0
      %295 = vmatpush1.bf16.msra.mxu0 0
      %296 = vmatprep.mubr.bf16.mxu0 0
      %297 = vmatmul.mubr.bf16.gmra.mrb[0].mxu0 %v256
      %v298 = vpop.f32.mrb[0].mxu0
      %v299 = vadd.f32 0.0, %v298
      %v300 = vpop.f32.mrb[0].mxu0
      %v301 = vpop.f32.mrb[0].mxu0
      %v302 = vadd.f32 0.0, %v301
      %v303 = vpop.f32.mrb[0].mxu0
      %304 = vmatprep.mubr.bf16.mxu0 0
      %305 = vmatmul.mubr.bf16.gmra.mrb[0].mxu0 %v259
      %v306 = vpop.f32.mrb[0].mxu0
      %v307 = vadd.f32 0.0, %v306
      %v308 = vpop.f32.mrb[0].mxu0
      %v309 = vpop.f32.mrb[0].mxu0
      %v310 = vadd.f32 0.0, %v309
      %v311 = vpop.f32.mrb[0].mxu0
      %312 = vmatprep.mubr.bf16.mxu0 0
      %313 = vmatmul.mubr.bf16.gmra.mrb[0].mxu0 %v262
      %v314 = vpop.f32.mrb[0].mxu0
      %v315 = vadd.f32 0.0, %v314
      %v316 = vpop.f32.mrb[0].mxu0
      %v317 = vpop.f32.mrb[0].mxu0
      %v318 = vpop.f32.mrb[0].mxu0
      %319 = vdwg.mxu0
      %v324 = vunpack.c.l.b16 %v208
      %v325 = vunpack.c.l.b16 %v209
      %v326 = vunpack.c.l.b16 %v210
      %v327 = vunpack.c.l.b16 %v211
      %v328 = vpack.c.b16 %v325, %v324
      %v329 = vpack.c.b16 %v327, %v326
      %v332 = vsel %vm254, %v205, 0
      %v334 = vsel %vm254, %v206, 0
      %v337 = vsel %vm254, %v207, 0
      %339 = vmatprep.subr.bf16.mxu0 0
      %340 = vmatpush1.bf16.msra.mxu0 %v328
      %341 = vmatprep.subr.bf16.mxu0 0
      %342 = vmatpush1.bf16.msra.mxu0 %v329
      %343 = vmatprep.subr.bf16.mxu0 0
      %344 = vmatpush1.bf16.msra.mxu0 0
      %345 = vmatprep.subr.bf16.mxu0 0
      %346 = vmatpush1.bf16.msra.mxu0 0
      %347 = vmatprep.subr.bf16.mxu0 0
      %348 = vmatpush1.bf16.msra.mxu0 0
      %349 = vmatprep.subr.bf16.mxu0 0
      %350 = vmatpush1.bf16.msra.mxu0 0
      %351 = vmatprep.subr.bf16.mxu0 0
      %352 = vmatpush1.bf16.msra.mxu0 0
      %353 = vmatprep.subr.bf16.mxu0 0
      %354 = vmatpush1.bf16.msra.mxu0 0
      %355 = vmatprep.subr.bf16.mxu0 0
      %356 = vmatpush1.bf16.msra.mxu0 0
      %357 = vmatprep.subr.bf16.mxu0 0
      %358 = vmatpush1.bf16.msra.mxu0 0
      %359 = vmatprep.subr.bf16.mxu0 0
      %360 = vmatpush1.bf16.msra.mxu0 0
      %361 = vmatprep.subr.bf16.mxu0 0
      %362 = vmatpush1.bf16.msra.mxu0 0
      %363 = vmatprep.subr.bf16.mxu0 0
      %364 = vmatpush1.bf16.msra.mxu0 0
      %365 = vmatprep.subr.bf16.mxu0 0
      %366 = vmatpush1.bf16.msra.mxu0 0
      %367 = vmatprep.subr.bf16.mxu0 0
      %368 = vmatpush1.bf16.msra.mxu0 0
      %369 = vmatprep.subr.bf16.mxu0 0
      %370 = vmatpush1.bf16.msra.mxu0 0
      %371 = vmatprep.mubr.bf16.mxu0 0
      %372 = vmatmul.mubr.bf16.gmra.mrb[0].mxu0 %v332
      %v373 = vpop.f32.mrb[0].mxu0
      %v374 = vadd.f32 %v299, %v373
      %v375 = vpop.f32.mrb[0].mxu0
      %v376 = vpop.f32.mrb[0].mxu0
      %v377 = vadd.f32 %v302, %v376
      %v378 = vpop.f32.mrb[0].mxu0
      %379 = vmatprep.mubr.bf16.mxu0 0
      %380 = vmatmul.mubr.bf16.gmra.mrb[0].mxu0 %v334
      %v381 = vpop.f32.mrb[0].mxu0
      %v382 = vadd.f32 %v307, %v381
      %v383 = vpop.f32.mrb[0].mxu0
      %v384 = vpop.f32.mrb[0].mxu0
      %v385 = vadd.f32 %v310, %v384
      %v386 = vpop.f32.mrb[0].mxu0
      %387 = vmatprep.mubr.bf16.mxu0 0
      %388 = vmatmul.mubr.bf16.gmra.mrb[0].mxu0 %v337
      %v389 = vpop.f32.mrb[0].mxu0
      %v390 = vadd.f32 %v315, %v389
      %v391 = vpop.f32.mrb[0].mxu0
      %v392 = vpop.f32.mrb[0].mxu0
      %v393 = vpop.f32.mrb[0].mxu0
      %394 = vdwg.mxu0
      %s395 = scalar_lea.vmem %s1, 32
      %v396 = vld [vmem:[%s395] sm:$0xf]
      %v397 = vld [vmem:[%s395 + $0x4] sm:$0xf]
      %v398 = vld [vmem:[%s395 + $0x8] sm:$0xf]
      %v399 = vld [vmem:[%s395 + $0xc] sm:$0xf]
      %vm403 = vcmask 1046528
      %v404 = vrot.slane %v205, 1
      %v405 = vrot.slane %v206, 1
      %v406 = vsel %vm403, %v404, %v405
      %v407 = vrot.slane %v212, 1
      %v408 = vsel %vm403, %v405, %v407
      %v413 = vunpack.c.l.b16 %v396
      %v414 = vunpack.c.l.b16 %v397
      %v415 = vunpack.c.l.b16 %v398
      %v416 = vunpack.c.l.b16 %v399
      %v417 = vpack.c.b16 %v414, %v413
      %v418 = vpack.c.b16 %v416, %v415
      %v422 = vsel %vm254, %v406, 0
      %v425 = vsel %vm254, %v408, 0
      %v428 = vsel %vm254, %v407, 0
      %430 = vmatprep.subr.bf16.mxu0 0
      %431 = vmatpush1.bf16.msra.mxu0 %v417
      %432 = vmatprep.subr.bf16.mxu0 0
      %433 = vmatpush1.bf16.msra.mxu0 %v418
      %434 = vmatprep.subr.bf16.mxu0 0
      %435 = vmatpush1.bf16.msra.mxu0 0
      %436 = vmatprep.subr.bf16.mxu0 0
      %437 = vmatpush1.bf16.msra.mxu0 0
      %438 = vmatprep.subr.bf16.mxu0 0
      %439 = vmatpush1.bf16.msra.mxu0 0
      %440 = vmatprep.subr.bf16.mxu0 0
      %441 = vmatpush1.bf16.msra.mxu0 0
      %442 = vmatprep.subr.bf16.mxu0 0
      %443 = vmatpush1.bf16.msra.mxu0 0
      %444 = vmatprep.subr.bf16.mxu0 0
      %445 = vmatpush1.bf16.msra.mxu0 0
      %446 = vmatprep.subr.bf16.mxu0 0
      %447 = vmatpush1.bf16.msra.mxu0 0
      %448 = vmatprep.subr.bf16.mxu0 0
      %449 = vmatpush1.bf16.msra.mxu0 0
      %450 = vmatprep.subr.bf16.mxu0 0
      %451 = vmatpush1.bf16.msra.mxu0 0
      %452 = vmatprep.subr.bf16.mxu0 0
      %453 = vmatpush1.bf16.msra.mxu0 0
      %454 = vmatprep.subr.bf16.mxu0 0
      %455 = vmatpush1.bf16.msra.mxu0 0
      %456 = vmatprep.subr.bf16.mxu0 0
      %457 = vmatpush1.bf16.msra.mxu0 0
      %458 = vmatprep.subr.bf16.mxu0 0
      %459 = vmatpush1.bf16.msra.mxu0 0
      %460 = vmatprep.subr.bf16.mxu0 0
      %461 = vmatpush1.bf16.msra.mxu0 0
      %462 = vmatprep.mubr.bf16.mxu0 0
      %463 = vmatmul.mubr.bf16.gmra.mrb[0].mxu0 %v422
      %v464 = vpop.f32.mrb[0].mxu0
      %v465 = vadd.f32 0.0, %v464
      %v466 = vpop.f32.mrb[0].mxu0
      %v467 = vpop.f32.mrb[0].mxu0
      %v468 = vadd.f32 0.0, %v467
      %v469 = vpop.f32.mrb[0].mxu0
      %470 = vmatprep.mubr.bf16.mxu0 0
      %471 = vmatmul.mubr.bf16.gmra.mrb[0].mxu0 %v425
      %v472 = vpop.f32.mrb[0].mxu0
      %v473 = vadd.f32 0.0, %v472
      %v474 = vpop.f32.mrb[0].mxu0
      %v475 = vpop.f32.mrb[0].mxu0
      %v476 = vadd.f32 0.0, %v475
      %v477 = vpop.f32.mrb[0].mxu0
      %478 = vmatprep.mubr.bf16.mxu0 0
      %479 = vmatmul.mubr.bf16.gmra.mrb[0].mxu0 %v428
      %v480 = vpop.f32.mrb[0].mxu0
      %v481 = vadd.f32 0.0, %v480
      %v482 = vpop.f32.mrb[0].mxu0
      %v483 = vpop.f32.mrb[0].mxu0
      %v484 = vpop.f32.mrb[0].mxu0
      %485 = vdwg.mxu0
      %v486 = vadd.f32 %v374, %v465
      %v487 = vadd.f32 %v377, %v468
      %v488 = vadd.f32 %v382, %v473
      %v489 = vadd.f32 %v385, %v476
      %v490 = vadd.f32 %v390, %v481
      %v491 = vpack.c.bf16 %v199, %v198
      %v492 = vpack.c.bf16 %v201, %v200
      %v493 = vpack.c.bf16 %v203, %v202
      %s494 = scalar_lea.vmem %s1, 48
      %v495 = vld [vmem:[%s494] sm:$0xf]
      %v496 = vld [vmem:[%s494 + $0x4] sm:$0xf]
      %v497 = vld [vmem:[%s494 + $0x8] sm:$0xf]
      %v498 = vld [vmem:[%s494 + $0xc] sm:$0xf]
      %v502 = vrot.slane %v491, 1
      %v503 = vrot.slane %v492, 1
      %v504 = vsel %vm403, %v502, %v503
      %v505 = vrot.slane %v493, 1
      %v506 = vsel %vm403, %v503, %v505
      %v511 = vunpack.c.l.b16 %v495
      %v512 = vunpack.c.l.b16 %v496
      %v513 = vunpack.c.l.b16 %v497
      %v514 = vunpack.c.l.b16 %v498
      %v515 = vpack.c.b16 %v512, %v511
      %v516 = vpack.c.b16 %v514, %v513
      %v520 = vsel %vm254, %v504, 0
      %v523 = vsel %vm254, %v506, 0
      %v526 = vsel %vm254, %v505, 0
      %528 = vmatprep.subr.bf16.mxu0 0
      %529 = vmatpush1.bf16.msra.mxu0 %v515
      %530 = vmatprep.subr.bf16.mxu0 0
      %531 = vmatpush1.bf16.msra.mxu0 %v516
      %532 = vmatprep.subr.bf16.mxu0 0
      %533 = vmatpush1.bf16.msra.mxu0 0
      %534 = vmatprep.subr.bf16.mxu0 0
      %535 = vmatpush1.bf16.msra.mxu0 0
      %536 = vmatprep.subr.bf16.mxu0 0
      %537 = vmatpush1.bf16.msra.mxu0 0
      %538 = vmatprep.subr.bf16.mxu0 0
      %539 = vmatpush1.bf16.msra.mxu0 0
      %540 = vmatprep.subr.bf16.mxu0 0
      %541 = vmatpush1.bf16.msra.mxu0 0
      %542 = vmatprep.subr.bf16.mxu0 0
      %543 = vmatpush1.bf16.msra.mxu0 0
      %544 = vmatprep.subr.bf16.mxu0 0
      %545 = vmatpush1.bf16.msra.mxu0 0
      %546 = vmatprep.subr.bf16.mxu0 0
      %547 = vmatpush1.bf16.msra.mxu0 0
      %548 = vmatprep.subr.bf16.mxu0 0
      %549 = vmatpush1.bf16.msra.mxu0 0
      %550 = vmatprep.subr.bf16.mxu0 0
      %551 = vmatpush1.bf16.msra.mxu0 0
      %552 = vmatprep.subr.bf16.mxu0 0
      %553 = vmatpush1.bf16.msra.mxu0 0
      %554 = vmatprep.subr.bf16.mxu0 0
      %555 = vmatpush1.bf16.msra.mxu0 0
      %556 = vmatprep.subr.bf16.mxu0 0
      %557 = vmatpush1.bf16.msra.mxu0 0
      %558 = vmatprep.subr.bf16.mxu0 0
      %559 = vmatpush1.bf16.msra.mxu0 0
      %560 = vmatprep.mubr.bf16.mxu0 0
      %561 = vmatmul.mubr.bf16.gmra.mrb[0].mxu0 %v520
      %v562 = vpop.f32.mrb[0].mxu0
      %v563 = vadd.f32 0.0, %v562
      %v564 = vpop.f32.mrb[0].mxu0
      %v565 = vpop.f32.mrb[0].mxu0
      %v566 = vadd.f32 0.0, %v565
      %v567 = vpop.f32.mrb[0].mxu0
      %568 = vmatprep.mubr.bf16.mxu0 0
      %569 = vmatmul.mubr.bf16.gmra.mrb[0].mxu0 %v523
      %v570 = vpop.f32.mrb[0].mxu0
      %v571 = vadd.f32 0.0, %v570
      %v572 = vpop.f32.mrb[0].mxu0
      %v573 = vpop.f32.mrb[0].mxu0
      %v574 = vadd.f32 0.0, %v573
      %v575 = vpop.f32.mrb[0].mxu0
      %576 = vmatprep.mubr.bf16.mxu0 0
      %577 = vmatmul.mubr.bf16.gmra.mrb[0].mxu0 %v526
      %v578 = vpop.f32.mrb[0].mxu0
      %v579 = vadd.f32 0.0, %v578
      %v580 = vpop.f32.mrb[0].mxu0
      %v581 = vpop.f32.mrb[0].mxu0
      %v582 = vpop.f32.mrb[0].mxu0
      %583 = vdwg.mxu0
      %v584 = vadd.f32 %v486, %v563
      %v585 = vadd.f32 %v487, %v566
      %v586 = vadd.f32 %v488, %v571
      %v587 = vadd.f32 %v489, %v574
      %v588 = vadd.f32 %v490, %v579
      %s589 = scalar_lea.vmem %s1, 64
      %v590 = vld [vmem:[%s589] sm:$0xf]
      %v591 = vld [vmem:[%s589 + $0x4] sm:$0xf]
      %v592 = vld [vmem:[%s589 + $0x8] sm:$0xf]
      %v593 = vld [vmem:[%s589 + $0xc] sm:$0xf]
      %vm594 = vsmask.f32 6400
      %v596 = vshrl.u32 %v491, 16
      %v598 = vrot.slane %v596, 1
      %v599 = vshll.u32 %v491, 16
      %v601 = vrot.slane %v599, 2
      %v602 = vor.u32 %v598, %v601
      %v604 = vshrl.u32 %v492, 16
      %v606 = vrot.slane %v604, 1
      %v607 = vshll.u32 %v492, 16
      %v609 = vrot.slane %v607, 2
      %v610 = vor.u32 %v606, %v609
      %v611 = vsel %vm594, %v602, %v610
      %v613 = vshrl.u32 %v493, 16
      %v615 = vrot.slane %v613, 1
      %v616 = vshll.u32 %v493, 16
      %v618 = vrot.slane %v616, 2
      %v619 = vor.u32 %v615, %v618
      %v620 = vsel %vm594, %v610, %v619
      %v625 = vunpack.c.l.b16 %v590
      %v626 = vunpack.c.l.b16 %v591
      %v627 = vunpack.c.l.b16 %v592
      %v628 = vunpack.c.l.b16 %v593
      %v629 = vpack.c.b16 %v626, %v625
      %v630 = vpack.c.b16 %v628, %v627
      %v634 = vsel %vm254, %v611, 0
      %v637 = vsel %vm254, %v620, 0
      %v640 = vsel %vm254, %v619, 0
      %642 = vmatprep.subr.bf16.mxu0 0
      %643 = vmatpush1.bf16.msra.mxu0 %v629
      %644 = vmatprep.subr.bf16.mxu0 0
      %645 = vmatpush1.bf16.msra.mxu0 %v630
      %646 = vmatprep.subr.bf16.mxu0 0
      %647 = vmatpush1.bf16.msra.mxu0 0
      %648 = vmatprep.subr.bf16.mxu0 0
      %649 = vmatpush1.bf16.msra.mxu0 0
      %650 = vmatprep.subr.bf16.mxu0 0
      %651 = vmatpush1.bf16.msra.mxu0 0
      %652 = vmatprep.subr.bf16.mxu0 0
      %653 = vmatpush1.bf16.msra.mxu0 0
      %654 = vmatprep.subr.bf16.mxu0 0
      %655 = vmatpush1.bf16.msra.mxu0 0
      %656 = vmatprep.subr.bf16.mxu0 0
      %657 = vmatpush1.bf16.msra.mxu0 0
      %658 = vmatprep.subr.bf16.mxu0 0
      %659 = vmatpush1.bf16.msra.mxu0 0
      %660 = vmatprep.subr.bf16.mxu0 0
      %661 = vmatpush1.bf16.msra.mxu0 0
      %662 = vmatprep.subr.bf16.mxu0 0
      %663 = vmatpush1.bf16.msra.mxu0 0
      %664 = vmatprep.subr.bf16.mxu0 0
      %665 = vmatpush1.bf16.msra.mxu0 0
      %666 = vmatprep.subr.bf16.mxu0 0
      %667 = vmatpush1.bf16.msra.mxu0 0
      %668 = vmatprep.subr.bf16.mxu0 0
      %669 = vmatpush1.bf16.msra.mxu0 0
      %670 = vmatprep.subr.bf16.mxu0 0
      %671 = vmatpush1.bf16.msra.mxu0 0
      %672 = vmatprep.subr.bf16.mxu0 0
      %673 = vmatpush1.bf16.msra.mxu0 0
      %674 = vmatprep.mubr.bf16.mxu0 0
      %675 = vmatmul.mubr.bf16.gmra.mrb[0].mxu0 %v634
      %v676 = vpop.f32.mrb[0].mxu0
      %v677 = vadd.f32 0.0, %v676
      %v678 = vpop.f32.mrb[0].mxu0
      %v679 = vpop.f32.mrb[0].mxu0
      %v680 = vadd.f32 0.0, %v679
      %v681 = vpop.f32.mrb[0].mxu0
      %682 = vmatprep.mubr.bf16.mxu0 0
      %683 = vmatmul.mubr.bf16.gmra.mrb[0].mxu0 %v637
      %v684 = vpop.f32.mrb[0].mxu0
      %v685 = vadd.f32 0.0, %v684
      %v686 = vpop.f32.mrb[0].mxu0
      %v687 = vpop.f32.mrb[0].mxu0
      %v688 = vadd.f32 0.0, %v687
      %v689 = vpop.f32.mrb[0].mxu0
      %690 = vmatprep.mubr.bf16.mxu0 0
      %691 = vmatmul.mubr.bf16.gmra.mrb[0].mxu0 %v640
      %v692 = vpop.f32.mrb[0].mxu0
      %v693 = vadd.f32 0.0, %v692
      %v694 = vpop.f32.mrb[0].mxu0
      %v695 = vpop.f32.mrb[0].mxu0
      %v696 = vpop.f32.mrb[0].mxu0
      %697 = vdwg.mxu0
      %v698 = vadd.f32 %v584, %v677
      %v699 = vadd.f32 %v585, %v680
      %v700 = vadd.f32 %v586, %v685
      %v701 = vadd.f32 %v587, %v688
      %v702 = vadd.f32 %v588, %v693
      %s703 = scalar_lea.vmem %s1, 80
      %v704 = vld [vmem:[%s703] sm:$0xf]
      %v705 = vld [vmem:[%s703 + $0x4] sm:$0xf]
      %v706 = vld [vmem:[%s703 + $0x8] sm:$0xf]
      %v707 = vld [vmem:[%s703 + $0xc] sm:$0xf]
      %vm708 = vcmask 1045504
      %v709 = vrot.slane %v491, 2
      %v710 = vrot.slane %v492, 2
      %v711 = vsel %vm708, %v709, %v710
      %v712 = vrot.slane %v493, 2
      %v713 = vsel %vm708, %v710, %v712
      %v718 = vunpack.c.l.b16 %v704
      %v719 = vunpack.c.l.b16 %v705
      %v720 = vunpack.c.l.b16 %v706
      %v721 = vunpack.c.l.b16 %v707
      %v722 = vpack.c.b16 %v719, %v718
      %v723 = vpack.c.b16 %v721, %v720
      %v727 = vsel %vm254, %v711, 0
      %v730 = vsel %vm254, %v713, 0
      %v733 = vsel %vm254, %v712, 0
      %735 = vmatprep.subr.bf16.mxu0 0
      %736 = vmatpush1.bf16.msra.mxu0 %v722
      %737 = vmatprep.subr.bf16.mxu0 0
      %738 = vmatpush1.bf16.msra.mxu0 %v723
      %739 = vmatprep.subr.bf16.mxu0 0
      %740 = vmatpush1.bf16.msra.mxu0 0
      %741 = vmatprep.subr.bf16.mxu0 0
      %742 = vmatpush1.bf16.msra.mxu0 0
      %743 = vmatprep.subr.bf16.mxu0 0
      %744 = vmatpush1.bf16.msra.mxu0 0
      %745 = vmatprep.subr.bf16.mxu0 0
      %746 = vmatpush1.bf16.msra.mxu0 0
      %747 = vmatprep.subr.bf16.mxu0 0
      %748 = vmatpush1.bf16.msra.mxu0 0
      %749 = vmatprep.subr.bf16.mxu0 0
      %750 = vmatpush1.bf16.msra.mxu0 0
      %751 = vmatprep.subr.bf16.mxu0 0
      %752 = vmatpush1.bf16.msra.mxu0 0
      %753 = vmatprep.subr.bf16.mxu0 0
      %754 = vmatpush1.bf16.msra.mxu0 0
      %755 = vmatprep.subr.bf16.mxu0 0
      %756 = vmatpush1.bf16.msra.mxu0 0
      %757 = vmatprep.subr.bf16.mxu0 0
      %758 = vmatpush1.bf16.msra.mxu0 0
      %759 = vmatprep.subr.bf16.mxu0 0
      %760 = vmatpush1.bf16.msra.mxu0 0
      %761 = vmatprep.subr.bf16.mxu0 0
      %762 = vmatpush1.bf16.msra.mxu0 0
      %763 = vmatprep.subr.bf16.mxu0 0
      %764 = vmatpush1.bf16.msra.mxu0 0
      %765 = vmatprep.subr.bf16.mxu0 0
      %766 = vmatpush1.bf16.msra.mxu0 0
      %767 = vmatprep.mubr.bf16.mxu0 0
      %768 = vmatmul.mubr.bf16.gmra.mrb[0].mxu0 %v727
      %v769 = vpop.f32.mrb[0].mxu0
      %v770 = vadd.f32 0.0, %v769
      %v771 = vpop.f32.mrb[0].mxu0
      %v772 = vpop.f32.mrb[0].mxu0
      %v773 = vadd.f32 0.0, %v772
      %v774 = vpop.f32.mrb[0].mxu0
      %775 = vmatprep.mubr.bf16.mxu0 0
      %776 = vmatmul.mubr.bf16.gmra.mrb[0].mxu0 %v730
      %v777 = vpop.f32.mrb[0].mxu0
      %v778 = vadd.f32 0.0, %v777
      %v779 = vpop.f32.mrb[0].mxu0
      %v780 = vpop.f32.mrb[0].mxu0
      %v781 = vadd.f32 0.0, %v780
      %v782 = vpop.f32.mrb[0].mxu0
      %783 = vmatprep.mubr.bf16.mxu0 0
      %784 = vmatmul.mubr.bf16.gmra.mrb[0].mxu0 %v733
      %v785 = vpop.f32.mrb[0].mxu0
      %v786 = vadd.f32 0.0, %v785
      %v787 = vpop.f32.mrb[0].mxu0
      %v788 = vpop.f32.mrb[0].mxu0
      %v789 = vpop.f32.mrb[0].mxu0
      %790 = vdwg.mxu0
      %v791 = vadd.f32 %v698, %v770
      %v792 = vadd.f32 %v699, %v773
      %v793 = vadd.f32 %v700, %v778
      %v794 = vadd.f32 %v701, %v781
      %v795 = vadd.f32 %v702, %v786
      %v796 = vpack.c.bf16 %v204, %v203
      %s797 = scalar_lea.vmem %s1, 96
      %v798 = vld [vmem:[%s797] sm:$0xf]
      %v799 = vld [vmem:[%s797 + $0x4] sm:$0xf]
      %v800 = vld [vmem:[%s797 + $0x8] sm:$0xf]
      %v801 = vld [vmem:[%s797 + $0xc] sm:$0xf]
      %v803 = vrot.slane %v206, 2
      %v804 = vrot.slane %v212, 2
      %v805 = vsel %vm708, %v803, %v804
      %v806 = vrot.slane %v796, 2
      %v807 = vsel %vm708, %v804, %v806
      %v812 = vunpack.c.l.b16 %v798
      %v813 = vunpack.c.l.b16 %v799
      %v814 = vunpack.c.l.b16 %v800
      %v815 = vunpack.c.l.b16 %v801
      %v816 = vpack.c.b16 %v813, %v812
      %v817 = vpack.c.b16 %v815, %v814
      %v821 = vsel %vm254, %v805, 0
      %v824 = vsel %vm254, %v807, 0
      %v827 = vsel %vm254, %v806, 0
      %829 = vmatprep.subr.bf16.mxu0 0
      %830 = vmatpush1.bf16.msra.mxu0 %v816
      %831 = vmatprep.subr.bf16.mxu0 0
      %832 = vmatpush1.bf16.msra.mxu0 %v817
      %833 = vmatprep.subr.bf16.mxu0 0
      %834 = vmatpush1.bf16.msra.mxu0 0
      %835 = vmatprep.subr.bf16.mxu0 0
      %836 = vmatpush1.bf16.msra.mxu0 0
      %837 = vmatprep.subr.bf16.mxu0 0
      %838 = vmatpush1.bf16.msra.mxu0 0
      %839 = vmatprep.subr.bf16.mxu0 0
      %840 = vmatpush1.bf16.msra.mxu0 0
      %841 = vmatprep.subr.bf16.mxu0 0
      %842 = vmatpush1.bf16.msra.mxu0 0
      %843 = vmatprep.subr.bf16.mxu0 0
      %844 = vmatpush1.bf16.msra.mxu0 0
      %845 = vmatprep.subr.bf16.mxu0 0
      %846 = vmatpush1.bf16.msra.mxu0 0
      %847 = vmatprep.subr.bf16.mxu0 0
      %848 = vmatpush1.bf16.msra.mxu0 0
      %849 = vmatprep.subr.bf16.mxu0 0
      %850 = vmatpush1.bf16.msra.mxu0 0
      %851 = vmatprep.subr.bf16.mxu0 0
      %852 = vmatpush1.bf16.msra.mxu0 0
      %853 = vmatprep.subr.bf16.mxu0 0
      %854 = vmatpush1.bf16.msra.mxu0 0
      %855 = vmatprep.subr.bf16.mxu0 0
      %856 = vmatpush1.bf16.msra.mxu0 0
      %857 = vmatprep.subr.bf16.mxu0 0
      %858 = vmatpush1.bf16.msra.mxu0 0
      %859 = vmatprep.subr.bf16.mxu0 0
      %860 = vmatpush1.bf16.msra.mxu0 0
      %861 = vmatprep.mubr.bf16.mxu0 0
      %862 = vmatmul.mubr.bf16.gmra.mrb[0].mxu0 %v821
      %v863 = vpop.f32.mrb[0].mxu0
      %v864 = vadd.f32 0.0, %v863
      %v865 = vpop.f32.mrb[0].mxu0
      %v866 = vpop.f32.mrb[0].mxu0
      %v867 = vadd.f32 0.0, %v866
      %v868 = vpop.f32.mrb[0].mxu0
      %869 = vmatprep.mubr.bf16.mxu0 0
      %870 = vmatmul.mubr.bf16.gmra.mrb[0].mxu0 %v824
      %v871 = vpop.f32.mrb[0].mxu0
      %v872 = vadd.f32 0.0, %v871
      %v873 = vpop.f32.mrb[0].mxu0
      %v874 = vpop.f32.mrb[0].mxu0
      %v875 = vadd.f32 0.0, %v874
      %v876 = vpop.f32.mrb[0].mxu0
      %877 = vmatprep.mubr.bf16.mxu0 0
      %878 = vmatmul.mubr.bf16.gmra.mrb[0].mxu0 %v827
      %v879 = vpop.f32.mrb[0].mxu0
      %v880 = vadd.f32 0.0, %v879
      %v881 = vpop.f32.mrb[0].mxu0
      %v882 = vpop.f32.mrb[0].mxu0
      %v883 = vpop.f32.mrb[0].mxu0
      %884 = vdwg.mxu0
      %v885 = vadd.f32 %v791, %v864
      %v886 = vadd.f32 %v792, %v867
      %v887 = vadd.f32 %v793, %v872
      %v888 = vadd.f32 %v794, %v875
      %v889 = vadd.f32 %v795, %v880
      %s890 = scalar_lea.vmem %s1, 112
      %v891 = vld [vmem:[%s890] sm:$0xf]
      %v892 = vld [vmem:[%s890 + $0x4] sm:$0xf]
      %v893 = vld [vmem:[%s890 + $0x8] sm:$0xf]
      %v894 = vld [vmem:[%s890 + $0xc] sm:$0xf]
      %vm895 = vsmask.f32 5376
      %v896 = vrot.slane %v231, 2
      %v897 = vrot.slane %v227, 3
      %v898 = vor.u32 %v896, %v897
      %v899 = vrot.slane %v239, 2
      %v900 = vrot.slane %v235, 3
      %v901 = vor.u32 %v899, %v900
      %v902 = vsel %vm895, %v898, %v901
      %v904 = vshrl.u32 %v796, 16
      %v906 = vrot.slane %v904, 2
      %v907 = vshll.u32 %v796, 16
      %v909 = vrot.slane %v907, 3
      %v910 = vor.u32 %v906, %v909
      %v911 = vsel %vm895, %v901, %v910
      %v916 = vunpack.c.l.b16 %v891
      %v917 = vunpack.c.l.b16 %v892
      %v918 = vunpack.c.l.b16 %v893
      %v919 = vunpack.c.l.b16 %v894
      %v920 = vpack.c.b16 %v917, %v916
      %v921 = vpack.c.b16 %v919, %v918
      %v925 = vsel %vm254, %v902, 0
      %v928 = vsel %vm254, %v911, 0
      %v931 = vsel %vm254, %v910, 0
      %933 = vmatprep.subr.bf16.mxu0 0
      %934 = vmatpush1.bf16.msra.mxu0 %v920
      %935 = vmatprep.subr.bf16.mxu0 0
      %936 = vmatpush1.bf16.msra.mxu0 %v921
      %937 = vmatprep.subr.bf16.mxu0 0
      %938 = vmatpush1.bf16.msra.mxu0 0
      %939 = vmatprep.subr.bf16.mxu0 0
      %940 = vmatpush1.bf16.msra.mxu0 0
      %941 = vmatprep.subr.bf16.mxu0 0
      %942 = vmatpush1.bf16.msra.mxu0 0
      %943 = vmatprep.subr.bf16.mxu0 0
      %944 = vmatpush1.bf16.msra.mxu0 0
      %945 = vmatprep.subr.bf16.mxu0 0
      %946 = vmatpush1.bf16.msra.mxu0 0
      %947 = vmatprep.subr.bf16.mxu0 0
      %948 = vmatpush1.bf16.msra.mxu0 0
      %949 = vmatprep.subr.bf16.mxu0 0
      %950 = vmatpush1.bf16.msra.mxu0 0
      %951 = vmatprep.subr.bf16.mxu0 0
      %952 = vmatpush1.bf16.msra.mxu0 0
      %953 = vmatprep.subr.bf16.mxu0 0
      %954 = vmatpush1.bf16.msra.mxu0 0
      %955 = vmatprep.subr.bf16.mxu0 0
      %956 = vmatpush1.bf16.msra.mxu0 0
      %957 = vmatprep.subr.bf16.mxu0 0
      %958 = vmatpush1.bf16.msra.mxu0 0
      %959 = vmatprep.subr.bf16.mxu0 0
      %960 = vmatpush1.bf16.msra.mxu0 0
      %961 = vmatprep.subr.bf16.mxu0 0
      %962 = vmatpush1.bf16.msra.mxu0 0
      %963 = vmatprep.subr.bf16.mxu0 0
      %964 = vmatpush1.bf16.msra.mxu0 0
      %965 = vmatprep.mubr.bf16.mxu0 0
      %966 = vmatmul.mubr.bf16.gmra.mrb[0].mxu0 %v925
      %v967 = vpop.f32.mrb[0].mxu0
      %v968 = vadd.f32 0.0, %v967
      %v969 = vpop.f32.mrb[0].mxu0
      %v970 = vpop.f32.mrb[0].mxu0
      %v971 = vadd.f32 0.0, %v970
      %v972 = vpop.f32.mrb[0].mxu0
      %973 = vmatprep.mubr.bf16.mxu0 0
      %974 = vmatmul.mubr.bf16.gmra.mrb[0].mxu0 %v928
      %v975 = vpop.f32.mrb[0].mxu0
      %v976 = vadd.f32 0.0, %v975
      %v977 = vpop.f32.mrb[0].mxu0
      %v978 = vpop.f32.mrb[0].mxu0
      %v979 = vadd.f32 0.0, %v978
      %v980 = vpop.f32.mrb[0].mxu0
      %981 = vmatprep.mubr.bf16.mxu0 0
      %982 = vmatmul.mubr.bf16.gmra.mrb[0].mxu0 %v931
      %v983 = vpop.f32.mrb[0].mxu0
      %v984 = vadd.f32 0.0, %v983
      %v985 = vpop.f32.mrb[0].mxu0
      %v986 = vpop.f32.mrb[0].mxu0
      %v987 = vpop.f32.mrb[0].mxu0
      %988 = vdwg.mxu0
      %v989 = vadd.f32 %v885, %v968
      %v990 = vadd.f32 %v886, %v971
      %v991 = vadd.f32 %v887, %v976
      %v992 = vadd.f32 %v888, %v979
      %v993 = vadd.f32 %v889, %v984
      %s994 = scalar_lea.vmem %s1, 128
      %v995 = vld [vmem:[%s994] sm:$0xf]
      %v996 = vld [vmem:[%s994 + $0x4] sm:$0xf]
      %v997 = vld [vmem:[%s994 + $0x8] sm:$0xf]
      %v998 = vld [vmem:[%s994 + $0xc] sm:$0xf]
      %vm999 = vcmask 1044480
      %v1000 = vrot.slane %v206, 3
      %v1001 = vrot.slane %v212, 3
      %v1002 = vsel %vm999, %v1000, %v1001
      %v1003 = vrot.slane %v796, 3
      %v1004 = vsel %vm999, %v1001, %v1003
      %v1009 = vunpack.c.l.b16 %v995
      %v1010 = vunpack.c.l.b16 %v996
      %v1011 = vunpack.c.l.b16 %v997
      %v1012 = vunpack.c.l.b16 %v998
      %v1013 = vpack.c.b16 %v1010, %v1009
      %v1014 = vpack.c.b16 %v1012, %v1011
      %v1018 = vsel %vm254, %v1002, 0
      %v1021 = vsel %vm254, %v1004, 0
      %v1024 = vsel %vm254, %v1003, 0
      %1026 = vmatprep.subr.bf16.mxu0 0
      %1027 = vmatpush1.bf16.msra.mxu0 %v1013
      %1028 = vmatprep.subr.bf16.mxu0 0
      %1029 = vmatpush1.bf16.msra.mxu0 %v1014
      %1030 = vmatprep.subr.bf16.mxu0 0
      %1031 = vmatpush1.bf16.msra.mxu0 0
      %1032 = vmatprep.subr.bf16.mxu0 0
      %1033 = vmatpush1.bf16.msra.mxu0 0
      %1034 = vmatprep.subr.bf16.mxu0 0
      %1035 = vmatpush1.bf16.msra.mxu0 0
      %1036 = vmatprep.subr.bf16.mxu0 0
      %1037 = vmatpush1.bf16.msra.mxu0 0
      %1038 = vmatprep.subr.bf16.mxu0 0
      %1039 = vmatpush1.bf16.msra.mxu0 0
      %1040 = vmatprep.subr.bf16.mxu0 0
      %1041 = vmatpush1.bf16.msra.mxu0 0
      %1042 = vmatprep.subr.bf16.mxu0 0
      %1043 = vmatpush1.bf16.msra.mxu0 0
      %1044 = vmatprep.subr.bf16.mxu0 0
      %1045 = vmatpush1.bf16.msra.mxu0 0
      %1046 = vmatprep.subr.bf16.mxu0 0
      %1047 = vmatpush1.bf16.msra.mxu0 0
      %1048 = vmatprep.subr.bf16.mxu0 0
      %1049 = vmatpush1.bf16.msra.mxu0 0
      %1050 = vmatprep.subr.bf16.mxu0 0
      %1051 = vmatpush1.bf16.msra.mxu0 0
      %1052 = vmatprep.subr.bf16.mxu0 0
      %1053 = vmatpush1.bf16.msra.mxu0 0
      %1054 = vmatprep.subr.bf16.mxu0 0
      %1055 = vmatpush1.bf16.msra.mxu0 0
      %1056 = vmatprep.subr.bf16.mxu0 0
      %1057 = vmatpush1.bf16.msra.mxu0 0
      %1058 = vmatprep.mubr.bf16.mxu0 0
      %1059 = vmatmul.mubr.bf16.gmra.mrb[0].mxu0 %v1018
      %v1060 = vpop.f32.mrb[0].mxu0
      %v1061 = vadd.f32 0.0, %v1060
      %v1062 = vpop.f32.mrb[0].mxu0
      %v1063 = vpop.f32.mrb[0].mxu0
      %v1064 = vadd.f32 0.0, %v1063
      %v1065 = vpop.f32.mrb[0].mxu0
      %1066 = vmatprep.mubr.bf16.mxu0 0
      %1067 = vmatmul.mubr.bf16.gmra.mrb[0].mxu0 %v1021
      %v1068 = vpop.f32.mrb[0].mxu0
      %v1069 = vadd.f32 0.0, %v1068
      %v1070 = vpop.f32.mrb[0].mxu0
      %v1071 = vpop.f32.mrb[0].mxu0
      %v1072 = vadd.f32 0.0, %v1071
      %v1073 = vpop.f32.mrb[0].mxu0
      %1074 = vmatprep.mubr.bf16.mxu0 0
      %1075 = vmatmul.mubr.bf16.gmra.mrb[0].mxu0 %v1024
      %v1076 = vpop.f32.mrb[0].mxu0
      %v1077 = vadd.f32 0.0, %v1076
      %v1078 = vpop.f32.mrb[0].mxu0
      %v1079 = vpop.f32.mrb[0].mxu0
      %v1080 = vpop.f32.mrb[0].mxu0
      %1081 = vdwg.mxu0
      %v1082 = vadd.f32 %v989, %v1061
      %v1083 = vadd.f32 %v990, %v1064
      %v1084 = vadd.f32 %v991, %v1069
      %v1085 = vadd.f32 %v992, %v1072
      %v1086 = vadd.f32 %v993, %v1077
      %v1088 = vlaneseq
      %v1089 = vshrl.u32 %v1088, 7
      %v1090 = vsub.s32 0, %v1089
      %v1091 = vrot.slane %v172, %v1090
      %v1093 = vadd.f32 %v1082, %v1091
      %v1094 = vadd.f32 %v1083, %v1091
      %v1095 = vadd.f32 %v1084, %v1091
      %v1096 = vadd.f32 %v1085, %v1091
      %v1097 = vadd.f32 %v1086, %v1091
      %vm1098 = vcmp.ge.f32.partialorder %v1093, 0.0
      %vm1099 = vcmp.ge.f32.partialorder %v1094, 0.0
      %vm1100 = vcmp.ge.f32.partialorder %v1095, 0.0
      %vm1101 = vcmp.ge.f32.partialorder %v1096, 0.0
      %vm1102 = vcmp.ge.f32.partialorder %v1097, 0.0
      %v1103 = vmul.f32 %v1093, 0.01
      %v1104 = vmul.f32 %v1094, 0.01
      %v1105 = vmul.f32 %v1095, 0.01
      %v1106 = vmul.f32 %v1096, 0.01
      %v1107 = vmul.f32 %v1097, 0.01
      %v1108 = vsel %vm1098, %v1093, %v1103
      %v1109 = vsel %vm1099, %v1094, %v1104
      %v1110 = vsel %vm1100, %v1095, %v1105
      %v1111 = vsel %vm1101, %v1096, %v1106
      %v1112 = vsel %vm1102, %v1097, %v1107
      %1113 = vst.msk [vmem:[%s170] sm:$0xff] %vm254, %v1108
      %1114 = vst.msk [vmem:[%s170 + $0x8] sm:$0xff] %vm254, %v1109
      %1115 = vst.msk [vmem:[%s170 + $0x10] sm:$0xff] %vm254, %v1110
      %1116 = vst.msk [vmem:[%s170 + $0x18] sm:$0xff] %vm254, %v1111
      %1117 = vst.msk [vmem:[%s170 + $0x20] sm:$0xff] %vm254, %v1112
      %p1118 = scmp.lt.s32.totalorder %s14, 1
      %s1119 = scalar_select %p1118, %s14, 1
      %s1120 = smul.addr %s1119, 5
      %s1121 = smul.addr %s1120, 8
      %s1122 = scalar_lea.vmem %s3, %s1121
      // Predicated region
      $region33: #{vqvae_decoder_forward.6} parent=31 // pred_check
        %p1123 = pneg %p100
      $region34: #{vqvae_decoder_forward.6} parent=31 // pred_check_branch
        %1125 = sbr.rel (%p1123) target = $region36
      $region35: #{vqvae_decoder_forward.6} parent=31 // pred_region
        _
      $region36: #{vqvae_decoder_forward.6} parent=31 // pred_fallthru
        _
    $region32: #{vqvae_decoder_forward.6} parent=5 // pred_fallthru
      _
    %p1126 = scmp.le.s32.totalorder 2, %s9
    // Predicated region
    $region37: #{vqvae_decoder_forward.6} parent=5 // pred_check
      %p1127 = pneg %p1126
    $region38: #{vqvae_decoder_forward.6} parent=5 // pred_check_branch
      %1129 = sbr.rel (%p1127) target = $region40
    $region39: #{vqvae_decoder_forward.6} parent=5 // pred_region
      %s1130 = ssub.s32 %s9, 2
      // Predicated region
      $region41: #{vqvae_decoder_forward.6} parent=39 // pred_check
        %p1131 = pneg %p106
      $region42: #{vqvae_decoder_forward.6} parent=39 // pred_check_branch
        %1133 = sbr.rel (%p1131) target = $region44
      $region43: #{vqvae_decoder_forward.6} parent=39 // pred_region
        %p1134 = scmp.lt.s32.totalorder %s15, 1
        %s1135 = scalar_select %p1134, %s15, 1
        %s1136 = smul.addr %s1135, 5
        %s1137 = smul.addr %s1136, 8
        %s1138 = scalar_lea.vmem %s3, %s1137
      $region44: #{vqvae_decoder_forward.6} parent=39 // pred_fallthru
        _
    $region40: #{vqvae_decoder_forward.6} parent=5 // pred_fallthru
      _
  $region6: #{vqvae_decoder_forward.6} parent=0 // loop_footer
    %s13 = sadd.s32 1, %s9
  $region7: #{vqvae_decoder_forward.6} parent=0 // loop_footer_branch
    %8 = sbr.rel target = $region3
  $region8: #{vqvae_decoder_forward.6} parent=0 // loop_exit
    _

// kernel: vqvae_decoder_forward.8
$region0: #{vqvae_decoder_forward.8}
  #allocation0 [shape = 'u32[]', space=smem, size = 0x4, offset = 0x4, fixed_abs, tag = 'smem constant byte address 0x4 - core index']
  #allocation1 [shape = 'u32[144,128]{1,0:T(1,128)}', space=vmem, size = 0x12000, scoped, tag = 'internal scratch']
  %s0 = inlined_call_operand.vmem [shape: f32[2,62,32], index: 0, kind: input, shape index: {}]
  %s1 = inlined_call_operand.vmem [shape: bf16[12,32,32], index: 1, kind: input, shape index: {}]
  %s2 = inlined_call_operand.vmem [shape: f32[1,32], index: 2, kind: input, shape index: {}]
  %s3 = inlined_call_operand.vmem [shape: f32[2,40,32], index: 3, kind: output, shape index: {0}]
  %s4 = inlined_call_operand.vmem [shape: f32[2,40,32], index: 4, kind: output, shape index: {1}]
  %5 = xla_tuple %s3, %s4
  %s6 = sld [smem:[#allocation0]]
  $region53: #{vqvae_decoder_forward.8} parent=0
    _
  %s8 = ssub.s32 1, %s6
  %s9 = scalar_select 0, %s8, %s6
  loop: start=0, step=1, limit=4
  $region2: #{vqvae_decoder_forward.8} parent=0 // loop_pre_header
    _
  $region3: #{vqvae_decoder_forward.8} parent=0 // loop_header
    %s11 = sphi 0, %s15
    %p12 = scmp.ge.s32.totalorder %s11, 4
    %s21 = sphi 0, %s23
    %s24 = sphi 0, %s21
    %s25 = sphi 0, %s24
    %s41 = sphi 0, %s25
    %s45 = sphi 0, %s45
    %s47 = sphi 0, %s45
    %s48 = sphi 0, %s47
    %s62 = sphi 0, %s48
    %s66 = sphi 0, %s66
    %s68 = sphi 0, %s66
    %s69 = sphi 0, %s68
    %s83 = sphi 0, %s69
    %s89 = sphi 0, %s91
    %s92 = sphi 0, %s89
    %s93 = sphi 0, %s92
    %s109 = sphi 0, %s93
    %s115 = sphi 0, %s117
    %s118 = sphi 0, %s115
    %s119 = sphi 0, %s118
    %s135 = sphi 0, %s119
  $region4: #{vqvae_decoder_forward.8} parent=0 // loop_header_branch
    %14 = sbr.rel (%p12) target = $region8
  $region5: #{vqvae_decoder_forward.8} parent=0 // loop_body
    %s16 = ssub.s32 %s11, 1
    %s17 = ssub.s32 %s11, 2
    %s18 = sadd.s32 %s11, 1
    %s19 = ssub.s32 %s11, %s18
    %p20 = scmp.eq.s32.totalorder %s19, 0
    %s22 = sadd.s32 %s21, 1
    %s23 = scalar_select %p20, %s21, %s22
    %p26 = pneg %p20
    %p27 = scmp.eq.s32.totalorder %s11, 1
    %p28 = por %p26, %p27
    %p29 = scmp.ne.s32.totalorder %s21, %s24
    %p30 = scmp.eq.s32.totalorder %s11, 0
    %p31 = por %p29, %p30
    %p32 = scmp.ne.s32.totalorder %s21, %s24
    %p33 = scmp.eq.s32.totalorder %s16, 1
    %p34 = por %p32, %p33
    %p35 = scmp.ne.s32.totalorder %s24, %s25
    %p36 = scmp.eq.s32.totalorder %s16, 0
    %p37 = por %p35, %p36
    %p38 = scmp.ne.s32.totalorder %s24, %s25
    %p39 = scmp.eq.s32.totalorder %s17, 1
    %p40 = por %p38, %p39
    %p42 = scmp.ne.s32.totalorder %s25, %s41
    %p43 = scmp.eq.s32.totalorder %s17, 0
    %p44 = por %p42, %p43
    %s46 = sadd.s32 %s45, 1
    %p49 = scmp.eq.s32.totalorder %s11, 1
    %p50 = scmp.ne.s32.totalorder %s45, %s47
    %p51 = scmp.eq.s32.totalorder %s11, 0
    %p52 = por %p50, %p51
    %p53 = scmp.ne.s32.totalorder %s45, %s47
    %p54 = scmp.eq.s32.totalorder %s16, 1
    %p55 = por %p53, %p54
    %p56 = scmp.ne.s32.totalorder %s47, %s48
    %p57 = scmp.eq.s32.totalorder %s16, 0
    %p58 = por %p56, %p57
    %p59 = scmp.ne.s32.totalorder %s47, %s48
    %p60 = scmp.eq.s32.totalorder %s17, 1
    %p61 = por %p59, %p60
    %p63 = scmp.ne.s32.totalorder %s48, %s62
    %p64 = scmp.eq.s32.totalorder %s17, 0
    %p65 = por %p63, %p64
    %s67 = sadd.s32 %s66, 1
    %p70 = scmp.eq.s32.totalorder %s11, 1
    %p71 = scmp.ne.s32.totalorder %s66, %s68
    %p72 = scmp.eq.s32.totalorder %s11, 0
    %p73 = por %p71, %p72
    %p74 = scmp.ne.s32.totalorder %s66, %s68
    %p75 = scmp.eq.s32.totalorder %s16, 1
    %p76 = por %p74, %p75
    %p77 = scmp.ne.s32.totalorder %s68, %s69
    %p78 = scmp.eq.s32.totalorder %s16, 0
    %p79 = por %p77, %p78
    %p80 = scmp.ne.s32.totalorder %s68, %s69
    %p81 = scmp.eq.s32.totalorder %s17, 1
    %p82 = por %p80, %p81
    %p84 = scmp.ne.s32.totalorder %s69, %s83
    %p85 = scmp.eq.s32.totalorder %s17, 0
    %p86 = por %p84, %p85
    %s87 = ssub.s32 %s11, %s18
    %p88 = scmp.eq.s32.totalorder %s87, 0
    %s90 = sadd.s32 %s89, 1
    %s91 = scalar_select %p88, %s89, %s90
    %p94 = pneg %p88
    %p95 = scmp.eq.s32.totalorder %s11, 1
    %p96 = por %p94, %p95
    %p97 = scmp.ne.s32.totalorder %s89, %s92
    %p98 = scmp.eq.s32.totalorder %s11, 0
    %p99 = por %p97, %p98
    %p100 = scmp.ne.s32.totalorder %s89, %s92
    %p101 = scmp.eq.s32.totalorder %s16, 1
    %p102 = por %p100, %p101
    %p103 = scmp.ne.s32.totalorder %s92, %s93
    %p104 = scmp.eq.s32.totalorder %s16, 0
    %p105 = por %p103, %p104
    %p106 = scmp.ne.s32.totalorder %s92, %s93
    %p107 = scmp.eq.s32.totalorder %s17, 1
    %p108 = por %p106, %p107
    %p110 = scmp.ne.s32.totalorder %s93, %s109
    %p111 = scmp.eq.s32.totalorder %s17, 0
    %p112 = por %p110, %p111
    %s113 = ssub.s32 %s11, %s18
    %p114 = scmp.eq.s32.totalorder %s113, 0
    %s116 = sadd.s32 %s115, 1
    %s117 = scalar_select %p114, %s115, %s116
    %p120 = pneg %p114
    %p121 = scmp.eq.s32.totalorder %s11, 1
    %p122 = por %p120, %p121
    %p123 = scmp.ne.s32.totalorder %s115, %s118
    %p124 = scmp.eq.s32.totalorder %s11, 0
    %p125 = por %p123, %p124
    %p126 = scmp.ne.s32.totalorder %s115, %s118
    %p127 = scmp.eq.s32.totalorder %s16, 1
    %p128 = por %p126, %p127
    %p129 = scmp.ne.s32.totalorder %s118, %s119
    %p130 = scmp.eq.s32.totalorder %s16, 0
    %p131 = por %p129, %p130
    %p132 = scmp.ne.s32.totalorder %s118, %s119
    %p133 = scmp.eq.s32.totalorder %s17, 1
    %p134 = por %p132, %p133
    %p136 = scmp.ne.s32.totalorder %s119, %s135
    %p137 = scmp.eq.s32.totalorder %s17, 0
    %p138 = por %p136, %p137
    %p139 = scmp.le.s32.totalorder 1, %s11
    %p140 = scmp.lt.s32.totalorder %s11, 3
    %p141 = pnand %p139, %p140
    %p142 = pneg %p141
    // Predicated region
    $region9: #{vqvae_decoder_forward.8} parent=5 // pred_check
      _
    $region10: #{vqvae_decoder_forward.8} parent=5 // pred_check_branch
      %144 = sbr.rel (%p141) target = $region12
    $region11: #{vqvae_decoder_forward.8} parent=5 // pred_region
      %s145 = ssub.s32 %s11, 1
      // Predicated region
      $region13: #{vqvae_decoder_forward.8} parent=11 // pred_check
        %p146 = pneg %p58
      $region14: #{vqvae_decoder_forward.8} parent=11 // pred_check_branch
        %148 = sbr.rel (%p146) target = $region16
      $region15: #{vqvae_decoder_forward.8} parent=11 // pred_region
        _
      $region16: #{vqvae_decoder_forward.8} parent=11 // pred_fallthru
        _
      // Predicated region
      $region17: #{vqvae_decoder_forward.8} parent=11 // pred_check
        %p149 = pneg %p79
      $region18: #{vqvae_decoder_forward.8} parent=11 // pred_check_branch
        %151 = sbr.rel (%p149) target = $region20
      $region19: #{vqvae_decoder_forward.8} parent=11 // pred_region
        _
      $region20: #{vqvae_decoder_forward.8} parent=11 // pred_fallthru
        _
    $region12: #{vqvae_decoder_forward.8} parent=5 // pred_fallthru
      _
    %p152 = scmp.lt.s32.totalorder %s11, 2
    // Predicated region
    $region21: #{vqvae_decoder_forward.8} parent=5 // pred_check
      %p153 = pneg %p152
    $region22: #{vqvae_decoder_forward.8} parent=5 // pred_check_branch
      %155 = sbr.rel (%p153) target = $region24
    $region23: #{vqvae_decoder_forward.8} parent=5 // pred_region
      // Predicated region
      $region25: #{vqvae_decoder_forward.8} parent=23 // pred_check
        %p156 = pneg %p31
      $region26: #{vqvae_decoder_forward.8} parent=23 // pred_check_branch
        %158 = sbr.rel (%p156) target = $region28
      $region27: #{vqvae_decoder_forward.8} parent=23 // pred_region
        %p159 = scmp.lt.s32.totalorder %s11, 1
        %s160 = scalar_select %p159, %s11, 1
        %s161 = smul.addr %s160, 8
        %s162 = smul.addr %s161, 8
        %s163 = scalar_lea.vmem %s0, %s162
      $region28: #{vqvae_decoder_forward.8} parent=23 // pred_fallthru
        _
    $region24: #{vqvae_decoder_forward.8} parent=5 // pred_fallthru
      _
    %p164 = scmp.le.s32.totalorder 1, %s11
    %p165 = scmp.lt.s32.totalorder %s11, 3
    %p166 = pnand %p164, %p165
    %p167 = pneg %p166
    // Predicated region
    $region29: #{vqvae_decoder_forward.8} parent=5 // pred_check
      _
    $region30: #{vqvae_decoder_forward.8} parent=5 // pred_check_branch
      %169 = sbr.rel (%p166) target = $region32
    $region31: #{vqvae_decoder_forward.8} parent=5 // pred_region
      %s170 = ssub.s32 %s11, 1
      %p171 = scmp.lt.s32.totalorder %s16, 1
      %s172 = scalar_select %p171, %s16, 1
      %s173 = smul.addr %s172, 8
      %s174 = smul.addr %s173, 8
      %s175 = scalar_lea.vmem %s0, %s174
      %p176 = pneg %p37
      %p177 = pneg %p34
      %p178 = pneg %p58
      %p179 = pneg %p55
      %p180 = pneg %p79
      %p181 = pneg %p76
      %p182 = pneg %p105
      %p183 = pneg %p102
      %p184 = scmp.lt.s32.totalorder %s16, 1
      %s185 = scalar_select %p184, %s16, 1
      %s186 = smul.addr %s185, 5
      %s187 = smul.addr %s186, 8
      %s188 = scalar_lea.vmem %s3, %s187
      %p189 = pneg %p131
      %p190 = pneg %p128
      %p191 = scmp.lt.s32.totalorder %s16, 1
      %s192 = scalar_select %p191, %s16, 1
      %s193 = smul.addr %s192, 5
      %s194 = smul.addr %s193, 8
      %s195 = scalar_lea.vmem %s4, %s194
      %p196 = scmp.lt.s32.totalorder %s16, 1
      %s197 = scalar_select %p196, %s16, 1
      %s198 = smul.addr %s197, 8
      %s199 = smul.addr %s198, 8
      %s200 = scalar_lea.vmem %s0, %s199
      %p201 = scmp.lt.s32.totalorder %s16, 1
      %s202 = scalar_select %p201, %s16, 1
      %s203 = smul.addr %s202, 5
      %s204 = smul.addr %s203, 8
      %s205 = scalar_lea.vmem %s3, %s204
      %p206 = scmp.lt.s32.totalorder %s16, 1
      %s207 = scalar_select %p206, %s16, 1
      %s208 = smul.addr %s207, 5
      %s209 = smul.addr %s208, 8
      %s210 = scalar_lea.vmem %s4, %s209
      %v212 = vld [vmem:[%s2] sm:$0x1]
      %v213 = vld [vmem:[%s200] sm:$0xff]
      %v214 = vld [vmem:[%s200 + $0x8] sm:$0xff]
      %v215 = vld [vmem:[%s200 + $0x10] sm:$0xff]
      %v216 = vld [vmem:[%s200 + $0x18] sm:$0xff]
      %v217 = vld [vmem:[%s200 + $0x20] sm:$0xff]
      %v218 = vld [vmem:[%s200 + $0x28] sm:$0xff]
      %v219 = vld [vmem:[%s200 + $0x30] sm:$0xff]
      %v220 = vld [vmem:[%s200 + $0x38] sm:$0x3f]
      %v221 = vpack.c.bf16 %v214, %v213
      %v222 = vpack.c.bf16 %v216, %v215
      %v223 = vpack.c.bf16 %v217, %v217
      %v224 = vld [vmem:[%s1] sm:$0xf]
      %v225 = vld [vmem:[%s1 + $0x4] sm:$0xf]
      %v226 = vld [vmem:[%s1 + $0x8] sm:$0xf]
      %v227 = vld [vmem:[%s1 + $0xc] sm:$0xf]
      %v228 = vpack.c.bf16 %v218, %v217
      %s229 = scalar_lea.vmem %s1, 16
      %v230 = vld [vmem:[%s229] sm:$0xf]
      %v231 = vld [vmem:[%s229 + $0x4] sm:$0xf]
      %v232 = vld [vmem:[%s229 + $0x8] sm:$0xf]
      %v233 = vld [vmem:[%s229 + $0xc] sm:$0xf]
      %vm234 = vsmask.f32 7424
      %v236 = vshrl.u32 %v221, 16
      %v238 = vshll.u32 %v221, 16
      %v240 = vrot.slane %v238, 1
      %v241 = vor.u32 %v236, %v240
      %v243 = vshll.u32 %v222, 16
      %v245 = vrot.slane %v243, 1
      %v246 = vsel %vm234, %v241, %v245
      %v247 = vshrl.u32 %v222, 16
      %v249 = vor.u32 %v247, %v245
      %v251 = vshll.u32 %v228, 16
      %v253 = vrot.slane %v251, 1
      %v254 = vsel %vm234, %v249, %v253
      %v255 = vshrl.u32 %v228, 16
      %v257 = vor.u32 %v255, %v253
      %v262 = vunpack.c.l.b16 %v230
      %v263 = vunpack.c.l.b16 %v231
      %v264 = vunpack.c.l.b16 %v232
      %v265 = vunpack.c.l.b16 %v233
      %v266 = vpack.c.b16 %v263, %v262
      %v267 = vpack.c.b16 %v265, %v264
      %vm270 = vcmask 261120
      %v272 = vsel %vm270, %v246, 0
      %v275 = vsel %vm270, %v254, 0
      %v278 = vsel %vm270, %v257, 0
      %280 = vmatprep.subr.bf16.mxu0 0
      %281 = vmatpush1.bf16.msra.mxu0 %v266
      %282 = vmatprep.subr.bf16.mxu0 0
      %283 = vmatpush1.bf16.msra.mxu0 %v267
      %284 = vmatprep.subr.bf16.mxu0 0
      %285 = vmatpush1.bf16.msra.mxu0 0
      %286 = vmatprep.subr.bf16.mxu0 0
      %287 = vmatpush1.bf16.msra.mxu0 0
      %288 = vmatprep.subr.bf16.mxu0 0
      %289 = vmatpush1.bf16.msra.mxu0 0
      %290 = vmatprep.subr.bf16.mxu0 0
      %291 = vmatpush1.bf16.msra.mxu0 0
      %292 = vmatprep.subr.bf16.mxu0 0
      %293 = vmatpush1.bf16.msra.mxu0 0
      %294 = vmatprep.subr.bf16.mxu0 0
      %295 = vmatpush1.bf16.msra.mxu0 0
      %296 = vmatprep.subr.bf16.mxu0 0
      %297 = vmatpush1.bf16.msra.mxu0 0
      %298 = vmatprep.subr.bf16.mxu0 0
      %299 = vmatpush1.bf16.msra.mxu0 0
      %300 = vmatprep.subr.bf16.mxu0 0
      %301 = vmatpush1.bf16.msra.mxu0 0
      %302 = vmatprep.subr.bf16.mxu0 0
      %303 = vmatpush1.bf16.msra.mxu0 0
      %304 = vmatprep.subr.bf16.mxu0 0
      %305 = vmatpush1.bf16.msra.mxu0 0
      %306 = vmatprep.subr.bf16.mxu0 0
      %307 = vmatpush1.bf16.msra.mxu0 0
      %308 = vmatprep.subr.bf16.mxu0 0
      %309 = vmatpush1.bf16.msra.mxu0 0
      %310 = vmatprep.subr.bf16.mxu0 0
      %311 = vmatpush1.bf16.msra.mxu0 0
      %312 = vmatprep.mubr.bf16.mxu0 0
      %313 = vmatmul.mubr.bf16.gmra.mrb[0].mxu0 %v272
      %v314 = vpop.f32.mrb[0].mxu0
      %v315 = vadd.f32 0.0, %v314
      %v316 = vpop.f32.mrb[0].mxu0
      %v317 = vpop.f32.mrb[0].mxu0
      %v318 = vadd.f32 0.0, %v317
      %v319 = vpop.f32.mrb[0].mxu0
      %320 = vmatprep.mubr.bf16.mxu0 0
      %321 = vmatmul.mubr.bf16.gmra.mrb[0].mxu0 %v275
      %v322 = vpop.f32.mrb[0].mxu0
      %v323 = vadd.f32 0.0, %v322
      %v324 = vpop.f32.mrb[0].mxu0
      %v325 = vpop.f32.mrb[0].mxu0
      %v326 = vadd.f32 0.0, %v325
      %v327 = vpop.f32.mrb[0].mxu0
      %328 = vmatprep.mubr.bf16.mxu0 0
      %329 = vmatmul.mubr.bf16.gmra.mrb[0].mxu0 %v278
      %v330 = vpop.f32.mrb[0].mxu0
      %v331 = vadd.f32 0.0, %v330
      %v332 = vpop.f32.mrb[0].mxu0
      %v333 = vpop.f32.mrb[0].mxu0
      %v334 = vpop.f32.mrb[0].mxu0
      %335 = vdwg.mxu0
      %v340 = vunpack.c.l.b16 %v224
      %v341 = vunpack.c.l.b16 %v225
      %v342 = vunpack.c.l.b16 %v226
      %v343 = vunpack.c.l.b16 %v227
      %v344 = vpack.c.b16 %v341, %v340
      %v345 = vpack.c.b16 %v343, %v342
      %v348 = vsel %vm270, %v221, 0
      %v350 = vsel %vm270, %v222, 0
      %v353 = vsel %vm270, %v223, 0
      %355 = vmatprep.subr.bf16.mxu0 0
      %356 = vmatpush1.bf16.msra.mxu0 %v344
      %357 = vmatprep.subr.bf16.mxu0 0
      %358 = vmatpush1.bf16.msra.mxu0 %v345
      %359 = vmatprep.subr.bf16.mxu0 0
      %360 = vmatpush1.bf16.msra.mxu0 0
      %361 = vmatprep.subr.bf16.mxu0 0
      %362 = vmatpush1.bf16.msra.mxu0 0
      %363 = vmatprep.subr.bf16.mxu0 0
      %364 = vmatpush1.bf16.msra.mxu0 0
      %365 = vmatprep.subr.bf16.mxu0 0
      %366 = vmatpush1.bf16.msra.mxu0 0
      %367 = vmatprep.subr.bf16.mxu0 0
      %368 = vmatpush1.bf16.msra.mxu0 0
      %369 = vmatprep.subr.bf16.mxu0 0
      %370 = vmatpush1.bf16.msra.mxu0 0
      %371 = vmatprep.subr.bf16.mxu0 0
      %372 = vmatpush1.bf16.msra.mxu0 0
      %373 = vmatprep.subr.bf16.mxu0 0
      %374 = vmatpush1.bf16.msra.mxu0 0
      %375 = vmatprep.subr.bf16.mxu0 0
      %376 = vmatpush1.bf16.msra.mxu0 0
      %377 = vmatprep.subr.bf16.mxu0 0
      %378 = vmatpush1.bf16.msra.mxu0 0
      %379 = vmatprep.subr.bf16.mxu0 0
      %380 = vmatpush1.bf16.msra.mxu0 0
      %381 = vmatprep.subr.bf16.mxu0 0
      %382 = vmatpush1.bf16.msra.mxu0 0
      %383 = vmatprep.subr.bf16.mxu0 0
      %384 = vmatpush1.bf16.msra.mxu0 0
      %385 = vmatprep.subr.bf16.mxu0 0
      %386 = vmatpush1.bf16.msra.mxu0 0
      %387 = vmatprep.mubr.bf16.mxu0 0
      %388 = vmatmul.mubr.bf16.gmra.mrb[0].mxu0 %v348
      %v389 = vpop.f32.mrb[0].mxu0
      %v390 = vadd.f32 %v315, %v389
      %v391 = vpop.f32.mrb[0].mxu0
      %v392 = vpop.f32.mrb[0].mxu0
      %v393 = vadd.f32 %v318, %v392
      %v394 = vpop.f32.mrb[0].mxu0
      %395 = vmatprep.mubr.bf16.mxu0 0
      %396 = vmatmul.mubr.bf16.gmra.mrb[0].mxu0 %v350
      %v397 = vpop.f32.mrb[0].mxu0
      %v398 = vadd.f32 %v323, %v397
      %v399 = vpop.f32.mrb[0].mxu0
      %v400 = vpop.f32.mrb[0].mxu0
      %v401 = vadd.f32 %v326, %v400
      %v402 = vpop.f32.mrb[0].mxu0
      %403 = vmatprep.mubr.bf16.mxu0 0
      %404 = vmatmul.mubr.bf16.gmra.mrb[0].mxu0 %v353
      %v405 = vpop.f32.mrb[0].mxu0
      %v406 = vadd.f32 %v331, %v405
      %v407 = vpop.f32.mrb[0].mxu0
      %v408 = vpop.f32.mrb[0].mxu0
      %v409 = vpop.f32.mrb[0].mxu0
      %410 = vdwg.mxu0
      %v411 = vpack.c.bf16 %v215, %v214
      %v412 = vpack.c.bf16 %v217, %v216
      %v413 = vpack.c.bf16 %v219, %v218
      %s414 = scalar_lea.vmem %s1, 32
      %v415 = vld [vmem:[%s414] sm:$0xf]
      %v416 = vld [vmem:[%s414 + $0x4] sm:$0xf]
      %v417 = vld [vmem:[%s414 + $0x8] sm:$0xf]
      %v418 = vld [vmem:[%s414 + $0xc] sm:$0xf]
      %vm422 = vcmask 1046528
      %v423 = vrot.slane %v411, 1
      %v424 = vrot.slane %v412, 1
      %v425 = vsel %vm422, %v423, %v424
      %v426 = vrot.slane %v413, 1
      %v427 = vsel %vm422, %v424, %v426
      %v432 = vunpack.c.l.b16 %v415
      %v433 = vunpack.c.l.b16 %v416
      %v434 = vunpack.c.l.b16 %v417
      %v435 = vunpack.c.l.b16 %v418
      %v436 = vpack.c.b16 %v433, %v432
      %v437 = vpack.c.b16 %v435, %v434
      %v441 = vsel %vm270, %v425, 0
      %v444 = vsel %vm270, %v427, 0
      %v447 = vsel %vm270, %v426, 0
      %449 = vmatprep.subr.bf16.mxu0 0
      %450 = vmatpush1.bf16.msra.mxu0 %v436
      %451 = vmatprep.subr.bf16.mxu0 0
      %452 = vmatpush1.bf16.msra.mxu0 %v437
      %453 = vmatprep.subr.bf16.mxu0 0
      %454 = vmatpush1.bf16.msra.mxu0 0
      %455 = vmatprep.subr.bf16.mxu0 0
      %456 = vmatpush1.bf16.msra.mxu0 0
      %457 = vmatprep.subr.bf16.mxu0 0
      %458 = vmatpush1.bf16.msra.mxu0 0
      %459 = vmatprep.subr.bf16.mxu0 0
      %460 = vmatpush1.bf16.msra.mxu0 0
      %461 = vmatprep.subr.bf16.mxu0 0
      %462 = vmatpush1.bf16.msra.mxu0 0
      %463 = vmatprep.subr.bf16.mxu0 0
      %464 = vmatpush1.bf16.msra.mxu0 0
      %465 = vmatprep.subr.bf16.mxu0 0
      %466 = vmatpush1.bf16.msra.mxu0 0
      %467 = vmatprep.subr.bf16.mxu0 0
      %468 = vmatpush1.bf16.msra.mxu0 0
      %469 = vmatprep.subr.bf16.mxu0 0
      %470 = vmatpush1.bf16.msra.mxu0 0
      %471 = vmatprep.subr.bf16.mxu0 0
      %472 = vmatpush1.bf16.msra.mxu0 0
      %473 = vmatprep.subr.bf16.mxu0 0
      %474 = vmatpush1.bf16.msra.mxu0 0
      %475 = vmatprep.subr.bf16.mxu0 0
      %476 = vmatpush1.bf16.msra.mxu0 0
      %477 = vmatprep.subr.bf16.mxu0 0
      %478 = vmatpush1.bf16.msra.mxu0 0
      %479 = vmatprep.subr.bf16.mxu0 0
      %480 = vmatpush1.bf16.msra.mxu0 0
      %481 = vmatprep.mubr.bf16.mxu0 0
      %482 = vmatmul.mubr.bf16.gmra.mrb[0].mxu0 %v441
      %v483 = vpop.f32.mrb[0].mxu0
      %v484 = vadd.f32 0.0, %v483
      %v485 = vpop.f32.mrb[0].mxu0
      %v486 = vpop.f32.mrb[0].mxu0
      %v487 = vadd.f32 0.0, %v486
      %v488 = vpop.f32.mrb[0].mxu0
      %489 = vmatprep.mubr.bf16.mxu0 0
      %490 = vmatmul.mubr.bf16.gmra.mrb[0].mxu0 %v444
      %v491 = vpop.f32.mrb[0].mxu0
      %v492 = vadd.f32 0.0, %v491
      %v493 = vpop.f32.mrb[0].mxu0
      %v494 = vpop.f32.mrb[0].mxu0
      %v495 = vadd.f32 0.0, %v494
      %v496 = vpop.f32.mrb[0].mxu0
      %497 = vmatprep.mubr.bf16.mxu0 0
      %498 = vmatmul.mubr.bf16.gmra.mrb[0].mxu0 %v447
      %v499 = vpop.f32.mrb[0].mxu0
      %v500 = vadd.f32 0.0, %v499
      %v501 = vpop.f32.mrb[0].mxu0
      %v502 = vpop.f32.mrb[0].mxu0
      %v503 = vpop.f32.mrb[0].mxu0
      %504 = vdwg.mxu0
      %v505 = vadd.f32 %v390, %v484
      %v506 = vadd.f32 %v393, %v487
      %v507 = vadd.f32 %v398, %v492
      %v508 = vadd.f32 %v401, %v495
      %v509 = vadd.f32 %v406, %v500
      %s510 = scalar_lea.vmem %s1, 48
      %v511 = vld [vmem:[%s510] sm:$0xf]
      %v512 = vld [vmem:[%s510 + $0x4] sm:$0xf]
      %v513 = vld [vmem:[%s510 + $0x8] sm:$0xf]
      %v514 = vld [vmem:[%s510 + $0xc] sm:$0xf]
      %vm515 = vsmask.f32 6400
      %v517 = vshrl.u32 %v411, 16
      %v519 = vrot.slane %v517, 1
      %v520 = vshll.u32 %v411, 16
      %v522 = vrot.slane %v520, 2
      %v523 = vor.u32 %v519, %v522
      %v525 = vshrl.u32 %v412, 16
      %v527 = vrot.slane %v525, 1
      %v528 = vshll.u32 %v412, 16
      %v530 = vrot.slane %v528, 2
      %v531 = vor.u32 %v527, %v530
      %v532 = vsel %vm515, %v523, %v531
      %v534 = vshrl.u32 %v413, 16
      %v536 = vrot.slane %v534, 1
      %v537 = vshll.u32 %v413, 16
      %v539 = vrot.slane %v537, 2
      %v540 = vor.u32 %v536, %v539
      %v541 = vsel %vm515, %v531, %v540
      %v546 = vunpack.c.l.b16 %v511
      %v547 = vunpack.c.l.b16 %v512
      %v548 = vunpack.c.l.b16 %v513
      %v549 = vunpack.c.l.b16 %v514
      %v550 = vpack.c.b16 %v547, %v546
      %v551 = vpack.c.b16 %v549, %v548
      %v555 = vsel %vm270, %v532, 0
      %v558 = vsel %vm270, %v541, 0
      %v561 = vsel %vm270, %v540, 0
      %563 = vmatprep.subr.bf16.mxu0 0
      %564 = vmatpush1.bf16.msra.mxu0 %v550
      %565 = vmatprep.subr.bf16.mxu0 0
      %566 = vmatpush1.bf16.msra.mxu0 %v551
      %567 = vmatprep.subr.bf16.mxu0 0
      %568 = vmatpush1.bf16.msra.mxu0 0
      %569 = vmatprep.subr.bf16.mxu0 0
      %570 = vmatpush1.bf16.msra.mxu0 0
      %571 = vmatprep.subr.bf16.mxu0 0
      %572 = vmatpush1.bf16.msra.mxu0 0
      %573 = vmatprep.subr.bf16.mxu0 0
      %574 = vmatpush1.bf16.msra.mxu0 0
      %575 = vmatprep.subr.bf16.mxu0 0
      %576 = vmatpush1.bf16.msra.mxu0 0
      %577 = vmatprep.subr.bf16.mxu0 0
      %578 = vmatpush1.bf16.msra.mxu0 0
      %579 = vmatprep.subr.bf16.mxu0 0
      %580 = vmatpush1.bf16.msra.mxu0 0
      %581 = vmatprep.subr.bf16.mxu0 0
      %582 = vmatpush1.bf16.msra.mxu0 0
      %583 = vmatprep.subr.bf16.mxu0 0
      %584 = vmatpush1.bf16.msra.mxu0 0
      %585 = vmatprep.subr.bf16.mxu0 0
      %586 = vmatpush1.bf16.msra.mxu0 0
      %587 = vmatprep.subr.bf16.mxu0 0
      %588 = vmatpush1.bf16.msra.mxu0 0
      %589 = vmatprep.subr.bf16.mxu0 0
      %590 = vmatpush1.bf16.msra.mxu0 0
      %591 = vmatprep.subr.bf16.mxu0 0
      %592 = vmatpush1.bf16.msra.mxu0 0
      %593 = vmatprep.subr.bf16.mxu0 0
      %594 = vmatpush1.bf16.msra.mxu0 0
      %595 = vmatprep.mubr.bf16.mxu0 0
      %596 = vmatmul.mubr.bf16.gmra.mrb[0].mxu0 %v555
      %v597 = vpop.f32.mrb[0].mxu0
      %v598 = vadd.f32 0.0, %v597
      %v599 = vpop.f32.mrb[0].mxu0
      %v600 = vpop.f32.mrb[0].mxu0
      %v601 = vadd.f32 0.0, %v600
      %v602 = vpop.f32.mrb[0].mxu0
      %603 = vmatprep.mubr.bf16.mxu0 0
      %604 = vmatmul.mubr.bf16.gmra.mrb[0].mxu0 %v558
      %v605 = vpop.f32.mrb[0].mxu0
      %v606 = vadd.f32 0.0, %v605
      %v607 = vpop.f32.mrb[0].mxu0
      %v608 = vpop.f32.mrb[0].mxu0
      %v609 = vadd.f32 0.0, %v608
      %v610 = vpop.f32.mrb[0].mxu0
      %611 = vmatprep.mubr.bf16.mxu0 0
      %612 = vmatmul.mubr.bf16.gmra.mrb[0].mxu0 %v561
      %v613 = vpop.f32.mrb[0].mxu0
      %v614 = vadd.f32 0.0, %v613
      %v615 = vpop.f32.mrb[0].mxu0
      %v616 = vpop.f32.mrb[0].mxu0
      %v617 = vpop.f32.mrb[0].mxu0
      %618 = vdwg.mxu0
      %v619 = vadd.f32 %v505, %v598
      %v620 = vadd.f32 %v506, %v601
      %v621 = vadd.f32 %v507, %v606
      %v622 = vadd.f32 %v508, %v609
      %v623 = vadd.f32 %v509, %v614
      %v624 = vpack.c.bf16 %v220, %v219
      %s625 = scalar_lea.vmem %s1, 64
      %v626 = vld [vmem:[%s625] sm:$0xf]
      %v627 = vld [vmem:[%s625 + $0x4] sm:$0xf]
      %v628 = vld [vmem:[%s625 + $0x8] sm:$0xf]
      %v629 = vld [vmem:[%s625 + $0xc] sm:$0xf]
      %vm633 = vcmask 1045504
      %v634 = vrot.slane %v222, 2
      %v635 = vrot.slane %v228, 2
      %v636 = vsel %vm633, %v634, %v635
      %v637 = vrot.slane %v624, 2
      %v638 = vsel %vm633, %v635, %v637
      %v643 = vunpack.c.l.b16 %v626
      %v644 = vunpack.c.l.b16 %v627
      %v645 = vunpack.c.l.b16 %v628
      %v646 = vunpack.c.l.b16 %v629
      %v647 = vpack.c.b16 %v644, %v643
      %v648 = vpack.c.b16 %v646, %v645
      %v652 = vsel %vm270, %v636, 0
      %v655 = vsel %vm270, %v638, 0
      %v658 = vsel %vm270, %v637, 0
      %660 = vmatprep.subr.bf16.mxu0 0
      %661 = vmatpush1.bf16.msra.mxu0 %v647
      %662 = vmatprep.subr.bf16.mxu0 0
      %663 = vmatpush1.bf16.msra.mxu0 %v648
      %664 = vmatprep.subr.bf16.mxu0 0
      %665 = vmatpush1.bf16.msra.mxu0 0
      %666 = vmatprep.subr.bf16.mxu0 0
      %667 = vmatpush1.bf16.msra.mxu0 0
      %668 = vmatprep.subr.bf16.mxu0 0
      %669 = vmatpush1.bf16.msra.mxu0 0
      %670 = vmatprep.subr.bf16.mxu0 0
      %671 = vmatpush1.bf16.msra.mxu0 0
      %672 = vmatprep.subr.bf16.mxu0 0
      %673 = vmatpush1.bf16.msra.mxu0 0
      %674 = vmatprep.subr.bf16.mxu0 0
      %675 = vmatpush1.bf16.msra.mxu0 0
      %676 = vmatprep.subr.bf16.mxu0 0
      %677 = vmatpush1.bf16.msra.mxu0 0
      %678 = vmatprep.subr.bf16.mxu0 0
      %679 = vmatpush1.bf16.msra.mxu0 0
      %680 = vmatprep.subr.bf16.mxu0 0
      %681 = vmatpush1.bf16.msra.mxu0 0
      %682 = vmatprep.subr.bf16.mxu0 0
      %683 = vmatpush1.bf16.msra.mxu0 0
      %684 = vmatprep.subr.bf16.mxu0 0
      %685 = vmatpush1.bf16.msra.mxu0 0
      %686 = vmatprep.subr.bf16.mxu0 0
      %687 = vmatpush1.bf16.msra.mxu0 0
      %688 = vmatprep.subr.bf16.mxu0 0
      %689 = vmatpush1.bf16.msra.mxu0 0
      %690 = vmatprep.subr.bf16.mxu0 0
      %691 = vmatpush1.bf16.msra.mxu0 0
      %692 = vmatprep.mubr.bf16.mxu0 0
      %693 = vmatmul.mubr.bf16.gmra.mrb[0].mxu0 %v652
      %v694 = vpop.f32.mrb[0].mxu0
      %v695 = vadd.f32 0.0, %v694
      %v696 = vpop.f32.mrb[0].mxu0
      %v697 = vpop.f32.mrb[0].mxu0
      %v698 = vadd.f32 0.0, %v697
      %v699 = vpop.f32.mrb[0].mxu0
      %700 = vmatprep.mubr.bf16.mxu0 0
      %701 = vmatmul.mubr.bf16.gmra.mrb[0].mxu0 %v655
      %v702 = vpop.f32.mrb[0].mxu0
      %v703 = vadd.f32 0.0, %v702
      %v704 = vpop.f32.mrb[0].mxu0
      %v705 = vpop.f32.mrb[0].mxu0
      %v706 = vadd.f32 0.0, %v705
      %v707 = vpop.f32.mrb[0].mxu0
      %708 = vmatprep.mubr.bf16.mxu0 0
      %709 = vmatmul.mubr.bf16.gmra.mrb[0].mxu0 %v658
      %v710 = vpop.f32.mrb[0].mxu0
      %v711 = vadd.f32 0.0, %v710
      %v712 = vpop.f32.mrb[0].mxu0
      %v713 = vpop.f32.mrb[0].mxu0
      %v714 = vpop.f32.mrb[0].mxu0
      %715 = vdwg.mxu0
      %v716 = vadd.f32 %v619, %v695
      %v717 = vadd.f32 %v620, %v698
      %v718 = vadd.f32 %v621, %v703
      %v719 = vadd.f32 %v622, %v706
      %v720 = vadd.f32 %v623, %v711
      %s721 = scalar_lea.vmem %s1, 80
      %v722 = vld [vmem:[%s721] sm:$0xf]
      %v723 = vld [vmem:[%s721 + $0x4] sm:$0xf]
      %v724 = vld [vmem:[%s721 + $0x8] sm:$0xf]
      %v725 = vld [vmem:[%s721 + $0xc] sm:$0xf]
      %vm726 = vsmask.f32 5376
      %v727 = vrot.slane %v247, 2
      %v728 = vrot.slane %v243, 3
      %v729 = vor.u32 %v727, %v728
      %v730 = vrot.slane %v255, 2
      %v731 = vrot.slane %v251, 3
      %v732 = vor.u32 %v730, %v731
      %v733 = vsel %vm726, %v729, %v732
      %v735 = vshrl.u32 %v624, 16
      %v737 = vrot.slane %v735, 2
      %v738 = vshll.u32 %v624, 16
      %v740 = vrot.slane %v738, 3
      %v741 = vor.u32 %v737, %v740
      %v742 = vsel %vm726, %v732, %v741
      %v747 = vunpack.c.l.b16 %v722
      %v748 = vunpack.c.l.b16 %v723
      %v749 = vunpack.c.l.b16 %v724
      %v750 = vunpack.c.l.b16 %v725
      %v751 = vpack.c.b16 %v748, %v747
      %v752 = vpack.c.b16 %v750, %v749
      %v756 = vsel %vm270, %v733, 0
      %v759 = vsel %vm270, %v742, 0
      %v762 = vsel %vm270, %v741, 0
      %764 = vmatprep.subr.bf16.mxu0 0
      %765 = vmatpush1.bf16.msra.mxu0 %v751
      %766 = vmatprep.subr.bf16.mxu0 0
      %767 = vmatpush1.bf16.msra.mxu0 %v752
      %768 = vmatprep.subr.bf16.mxu0 0
      %769 = vmatpush1.bf16.msra.mxu0 0
      %770 = vmatprep.subr.bf16.mxu0 0
      %771 = vmatpush1.bf16.msra.mxu0 0
      %772 = vmatprep.subr.bf16.mxu0 0
      %773 = vmatpush1.bf16.msra.mxu0 0
      %774 = vmatprep.subr.bf16.mxu0 0
      %775 = vmatpush1.bf16.msra.mxu0 0
      %776 = vmatprep.subr.bf16.mxu0 0
      %777 = vmatpush1.bf16.msra.mxu0 0
      %778 = vmatprep.subr.bf16.mxu0 0
      %779 = vmatpush1.bf16.msra.mxu0 0
      %780 = vmatprep.subr.bf16.mxu0 0
      %781 = vmatpush1.bf16.msra.mxu0 0
      %782 = vmatprep.subr.bf16.mxu0 0
      %783 = vmatpush1.bf16.msra.mxu0 0
      %784 = vmatprep.subr.bf16.mxu0 0
      %785 = vmatpush1.bf16.msra.mxu0 0
      %786 = vmatprep.subr.bf16.mxu0 0
      %787 = vmatpush1.bf16.msra.mxu0 0
      %788 = vmatprep.subr.bf16.mxu0 0
      %789 = vmatpush1.bf16.msra.mxu0 0
      %790 = vmatprep.subr.bf16.mxu0 0
      %791 = vmatpush1.bf16.msra.mxu0 0
      %792 = vmatprep.subr.bf16.mxu0 0
      %793 = vmatpush1.bf16.msra.mxu0 0
      %794 = vmatprep.subr.bf16.mxu0 0
      %795 = vmatpush1.bf16.msra.mxu0 0
      %796 = vmatprep.mubr.bf16.mxu0 0
      %797 = vmatmul.mubr.bf16.gmra.mrb[0].mxu0 %v756
      %v798 = vpop.f32.mrb[0].mxu0
      %v799 = vadd.f32 0.0, %v798
      %v800 = vpop.f32.mrb[0].mxu0
      %v801 = vpop.f32.mrb[0].mxu0
      %v802 = vadd.f32 0.0, %v801
      %v803 = vpop.f32.mrb[0].mxu0
      %804 = vmatprep.mubr.bf16.mxu0 0
      %805 = vmatmul.mubr.bf16.gmra.mrb[0].mxu0 %v759
      %v806 = vpop.f32.mrb[0].mxu0
      %v807 = vadd.f32 0.0, %v806
      %v808 = vpop.f32.mrb[0].mxu0
      %v809 = vpop.f32.mrb[0].mxu0
      %v810 = vadd.f32 0.0, %v809
      %v811 = vpop.f32.mrb[0].mxu0
      %812 = vmatprep.mubr.bf16.mxu0 0
      %813 = vmatmul.mubr.bf16.gmra.mrb[0].mxu0 %v762
      %v814 = vpop.f32.mrb[0].mxu0
      %v815 = vadd.f32 0.0, %v814
      %v816 = vpop.f32.mrb[0].mxu0
      %v817 = vpop.f32.mrb[0].mxu0
      %v818 = vpop.f32.mrb[0].mxu0
      %819 = vdwg.mxu0
      %v820 = vadd.f32 %v716, %v799
      %v821 = vadd.f32 %v717, %v802
      %v822 = vadd.f32 %v718, %v807
      %v823 = vadd.f32 %v719, %v810
      %v824 = vadd.f32 %v720, %v815
      %v826 = vlaneseq
      %v827 = vshrl.u32 %v826, 7
      %v828 = vsub.s32 0, %v827
      %v829 = vrot.slane %v212, %v828
      %v831 = vadd.f32 %v820, %v829
      %v832 = vadd.f32 %v821, %v829
      %v833 = vadd.f32 %v822, %v829
      %v834 = vadd.f32 %v823, %v829
      %v835 = vadd.f32 %v824, %v829
      %vm836 = vcmp.ge.f32.partialorder %v831, 0.0
      %vm837 = vcmp.ge.f32.partialorder %v832, 0.0
      %vm838 = vcmp.ge.f32.partialorder %v833, 0.0
      %vm839 = vcmp.ge.f32.partialorder %v834, 0.0
      %vm840 = vcmp.ge.f32.partialorder %v835, 0.0
      %v841 = vmul.f32 %v831, 0.01
      %v842 = vmul.f32 %v832, 0.01
      %v843 = vmul.f32 %v833, 0.01
      %v844 = vmul.f32 %v834, 0.01
      %v845 = vmul.f32 %v835, 0.01
      %v846 = vsel %vm836, %v831, %v841
      %v847 = vsel %vm837, %v832, %v842
      %v848 = vsel %vm838, %v833, %v843
      %v849 = vsel %vm839, %v834, %v844
      %v850 = vsel %vm840, %v835, %v845
      %851 = vst.msk [vmem:[%s205] sm:$0xff] %vm270, %v846
      %852 = vst.msk [vmem:[%s205 + $0x8] sm:$0xff] %vm270, %v847
      %853 = vst.msk [vmem:[%s205 + $0x10] sm:$0xff] %vm270, %v848
      %854 = vst.msk [vmem:[%s205 + $0x18] sm:$0xff] %vm270, %v849
      %855 = vst.msk [vmem:[%s205 + $0x20] sm:$0xff] %vm270, %v850
      %s856 = scalar_lea.vmem %s1, 96
      %v857 = vld [vmem:[%s856] sm:$0xf]
      %v858 = vld [vmem:[%s856 + $0x4] sm:$0xf]
      %v859 = vld [vmem:[%s856 + $0x8] sm:$0xf]
      %v860 = vld [vmem:[%s856 + $0xc] sm:$0xf]
      %s861 = scalar_lea.vmem %s1, 112
      %v862 = vld [vmem:[%s861] sm:$0xf]
      %v863 = vld [vmem:[%s861 + $0x4] sm:$0xf]
      %v864 = vld [vmem:[%s861 + $0x8] sm:$0xf]
      %v865 = vld [vmem:[%s861 + $0xc] sm:$0xf]
      %v867 = vrot.slane %v221, 1
      %v868 = vrot.slane %v222, 1
      %v869 = vsel %vm422, %v867, %v868
      %v870 = vrot.slane %v228, 1
      %v871 = vsel %vm422, %v868, %v870
      %v876 = vunpack.c.l.b16 %v862
      %v877 = vunpack.c.l.b16 %v863
      %v878 = vunpack.c.l.b16 %v864
      %v879 = vunpack.c.l.b16 %v865
      %v880 = vpack.c.b16 %v877, %v876
      %v881 = vpack.c.b16 %v879, %v878
      %v885 = vsel %vm270, %v869, 0
      %v888 = vsel %vm270, %v871, 0
      %v891 = vsel %vm270, %v870, 0
      %893 = vmatprep.subr.bf16.mxu0 0
      %894 = vmatpush1.bf16.msra.mxu0 %v880
      %895 = vmatprep.subr.bf16.mxu0 0
      %896 = vmatpush1.bf16.msra.mxu0 %v881
      %897 = vmatprep.subr.bf16.mxu0 0
      %898 = vmatpush1.bf16.msra.mxu0 0
      %899 = vmatprep.subr.bf16.mxu0 0
      %900 = vmatpush1.bf16.msra.mxu0 0
      %901 = vmatprep.subr.bf16.mxu0 0
      %902 = vmatpush1.bf16.msra.mxu0 0
      %903 = vmatprep.subr.bf16.mxu0 0
      %904 = vmatpush1.bf16.msra.mxu0 0
      %905 = vmatprep.subr.bf16.mxu0 0
      %906 = vmatpush1.bf16.msra.mxu0 0
      %907 = vmatprep.subr.bf16.mxu0 0
      %908 = vmatpush1.bf16.msra.mxu0 0
      %909 = vmatprep.subr.bf16.mxu0 0
      %910 = vmatpush1.bf16.msra.mxu0 0
      %911 = vmatprep.subr.bf16.mxu0 0
      %912 = vmatpush1.bf16.msra.mxu0 0
      %913 = vmatprep.subr.bf16.mxu0 0
      %914 = vmatpush1.bf16.msra.mxu0 0
      %915 = vmatprep.subr.bf16.mxu0 0
      %916 = vmatpush1.bf16.msra.mxu0 0
      %917 = vmatprep.subr.bf16.mxu0 0
      %918 = vmatpush1.bf16.msra.mxu0 0
      %919 = vmatprep.subr.bf16.mxu0 0
      %920 = vmatpush1.bf16.msra.mxu0 0
      %921 = vmatprep.subr.bf16.mxu0 0
      %922 = vmatpush1.bf16.msra.mxu0 0
      %923 = vmatprep.subr.bf16.mxu0 0
      %924 = vmatpush1.bf16.msra.mxu0 0
      %925 = vmatprep.mubr.bf16.mxu0 0
      %926 = vmatmul.mubr.bf16.gmra.mrb[0].mxu0 %v885
      %v927 = vpop.f32.mrb[0].mxu0
      %v928 = vadd.f32 0.0, %v927
      %v929 = vpop.f32.mrb[0].mxu0
      %v930 = vpop.f32.mrb[0].mxu0
      %v931 = vadd.f32 0.0, %v930
      %v932 = vpop.f32.mrb[0].mxu0
      %933 = vmatprep.mubr.bf16.mxu0 0
      %934 = vmatmul.mubr.bf16.gmra.mrb[0].mxu0 %v888
      %v935 = vpop.f32.mrb[0].mxu0
      %v936 = vadd.f32 0.0, %v935
      %v937 = vpop.f32.mrb[0].mxu0
      %v938 = vpop.f32.mrb[0].mxu0
      %v939 = vadd.f32 0.0, %v938
      %v940 = vpop.f32.mrb[0].mxu0
      %941 = vmatprep.mubr.bf16.mxu0 0
      %942 = vmatmul.mubr.bf16.gmra.mrb[0].mxu0 %v891
      %v943 = vpop.f32.mrb[0].mxu0
      %v944 = vadd.f32 0.0, %v943
      %v945 = vpop.f32.mrb[0].mxu0
      %v946 = vpop.f32.mrb[0].mxu0
      %v947 = vpop.f32.mrb[0].mxu0
      %948 = vdwg.mxu0
      %v953 = vunpack.c.l.b16 %v857
      %v954 = vunpack.c.l.b16 %v858
      %v955 = vunpack.c.l.b16 %v859
      %v956 = vunpack.c.l.b16 %v860
      %v957 = vpack.c.b16 %v954, %v953
      %v958 = vpack.c.b16 %v956, %v955
      %961 = vmatprep.subr.bf16.mxu0 0
      %962 = vmatpush1.bf16.msra.mxu0 %v957
      %963 = vmatprep.subr.bf16.mxu0 0
      %964 = vmatpush1.bf16.msra.mxu0 %v958
      %965 = vmatprep.subr.bf16.mxu0 0
      %966 = vmatpush1.bf16.msra.mxu0 0
      %967 = vmatprep.subr.bf16.mxu0 0
      %968 = vmatpush1.bf16.msra.mxu0 0
      %969 = vmatprep.subr.bf16.mxu0 0
      %970 = vmatpush1.bf16.msra.mxu0 0
      %971 = vmatprep.subr.bf16.mxu0 0
      %972 = vmatpush1.bf16.msra.mxu0 0
      %973 = vmatprep.subr.bf16.mxu0 0
      %974 = vmatpush1.bf16.msra.mxu0 0
      %975 = vmatprep.subr.bf16.mxu0 0
      %976 = vmatpush1.bf16.msra.mxu0 0
      %977 = vmatprep.subr.bf16.mxu0 0
      %978 = vmatpush1.bf16.msra.mxu0 0
      %979 = vmatprep.subr.bf16.mxu0 0
      %980 = vmatpush1.bf16.msra.mxu0 0
      %981 = vmatprep.subr.bf16.mxu0 0
      %982 = vmatpush1.bf16.msra.mxu0 0
      %983 = vmatprep.subr.bf16.mxu0 0
      %984 = vmatpush1.bf16.msra.mxu0 0
      %985 = vmatprep.subr.bf16.mxu0 0
      %986 = vmatpush1.bf16.msra.mxu0 0
      %987 = vmatprep.subr.bf16.mxu0 0
      %988 = vmatpush1.bf16.msra.mxu0 0
      %989 = vmatprep.subr.bf16.mxu0 0
      %990 = vmatpush1.bf16.msra.mxu0 0
      %991 = vmatprep.subr.bf16.mxu0 0
      %992 = vmatpush1.bf16.msra.mxu0 0
      %993 = vmatprep.mubr.bf16.mxu0 0
      %994 = vmatmul.mubr.bf16.gmra.mrb[0].mxu0 %v272
      %v995 = vpop.f32.mrb[0].mxu0
      %v996 = vadd.f32 %v928, %v995
      %v997 = vpop.f32.mrb[0].mxu0
      %v998 = vpop.f32.mrb[0].mxu0
      %v999 = vadd.f32 %v931, %v998
      %v1000 = vpop.f32.mrb[0].mxu0
      %1001 = vmatprep.mubr.bf16.mxu0 0
      %1002 = vmatmul.mubr.bf16.gmra.mrb[0].mxu0 %v275
      %v1003 = vpop.f32.mrb[0].mxu0
      %v1004 = vadd.f32 %v936, %v1003
      %v1005 = vpop.f32.mrb[0].mxu0
      %v1006 = vpop.f32.mrb[0].mxu0
      %v1007 = vadd.f32 %v939, %v1006
      %v1008 = vpop.f32.mrb[0].mxu0
      %1009 = vmatprep.mubr.bf16.mxu0 0
      %1010 = vmatmul.mubr.bf16.gmra.mrb[0].mxu0 %v278
      %v1011 = vpop.f32.mrb[0].mxu0
      %v1012 = vadd.f32 %v944, %v1011
      %v1013 = vpop.f32.mrb[0].mxu0
      %v1014 = vpop.f32.mrb[0].mxu0
      %v1015 = vpop.f32.mrb[0].mxu0
      %1016 = vdwg.mxu0
      %s1017 = scalar_lea.vmem %s1, 128
      %v1018 = vld [vmem:[%s1017] sm:$0xf]
      %v1019 = vld [vmem:[%s1017 + $0x4] sm:$0xf]
      %v1020 = vld [vmem:[%s1017 + $0x8] sm:$0xf]
      %v1021 = vld [vmem:[%s1017 + $0xc] sm:$0xf]
      %v1026 = vunpack.c.l.b16 %v1018
      %v1027 = vunpack.c.l.b16 %v1019
      %v1028 = vunpack.c.l.b16 %v1020
      %v1029 = vunpack.c.l.b16 %v1021
      %v1030 = vpack.c.b16 %v1027, %v1026
      %v1031 = vpack.c.b16 %v1029, %v1028
      %1034 = vmatprep.subr.bf16.mxu0 0
      %1035 = vmatpush1.bf16.msra.mxu0 %v1030
      %1036 = vmatprep.subr.bf16.mxu0 0
      %1037 = vmatpush1.bf16.msra.mxu0 %v1031
      %1038 = vmatprep.subr.bf16.mxu0 0
      %1039 = vmatpush1.bf16.msra.mxu0 0
      %1040 = vmatprep.subr.bf16.mxu0 0
      %1041 = vmatpush1.bf16.msra.mxu0 0
      %1042 = vmatprep.subr.bf16.mxu0 0
      %1043 = vmatpush1.bf16.msra.mxu0 0
      %1044 = vmatprep.subr.bf16.mxu0 0
      %1045 = vmatpush1.bf16.msra.mxu0 0
      %1046 = vmatprep.subr.bf16.mxu0 0
      %1047 = vmatpush1.bf16.msra.mxu0 0
      %1048 = vmatprep.subr.bf16.mxu0 0
      %1049 = vmatpush1.bf16.msra.mxu0 0
      %1050 = vmatprep.subr.bf16.mxu0 0
      %1051 = vmatpush1.bf16.msra.mxu0 0
      %1052 = vmatprep.subr.bf16.mxu0 0
      %1053 = vmatpush1.bf16.msra.mxu0 0
      %1054 = vmatprep.subr.bf16.mxu0 0
      %1055 = vmatpush1.bf16.msra.mxu0 0
      %1056 = vmatprep.subr.bf16.mxu0 0
      %1057 = vmatpush1.bf16.msra.mxu0 0
      %1058 = vmatprep.subr.bf16.mxu0 0
      %1059 = vmatpush1.bf16.msra.mxu0 0
      %1060 = vmatprep.subr.bf16.mxu0 0
      %1061 = vmatpush1.bf16.msra.mxu0 0
      %1062 = vmatprep.subr.bf16.mxu0 0
      %1063 = vmatpush1.bf16.msra.mxu0 0
      %1064 = vmatprep.subr.bf16.mxu0 0
      %1065 = vmatpush1.bf16.msra.mxu0 0
      %1066 = vmatprep.mubr.bf16.mxu0 0
      %1067 = vmatmul.mubr.bf16.gmra.mrb[0].mxu0 %v555
      %v1068 = vpop.f32.mrb[0].mxu0
      %v1069 = vadd.f32 0.0, %v1068
      %v1070 = vpop.f32.mrb[0].mxu0
      %v1071 = vpop.f32.mrb[0].mxu0
      %v1072 = vadd.f32 0.0, %v1071
      %v1073 = vpop.f32.mrb[0].mxu0
      %1074 = vmatprep.mubr.bf16.mxu0 0
      %1075 = vmatmul.mubr.bf16.gmra.mrb[0].mxu0 %v558
      %v1076 = vpop.f32.mrb[0].mxu0
      %v1077 = vadd.f32 0.0, %v1076
      %v1078 = vpop.f32.mrb[0].mxu0
      %v1079 = vpop.f32.mrb[0].mxu0
      %v1080 = vadd.f32 0.0, %v1079
      %v1081 = vpop.f32.mrb[0].mxu0
      %1082 = vmatprep.mubr.bf16.mxu0 0
      %1083 = vmatmul.mubr.bf16.gmra.mrb[0].mxu0 %v561
      %v1084 = vpop.f32.mrb[0].mxu0
      %v1085 = vadd.f32 0.0, %v1084
      %v1086 = vpop.f32.mrb[0].mxu0
      %v1087 = vpop.f32.mrb[0].mxu0
      %v1088 = vpop.f32.mrb[0].mxu0
      %1089 = vdwg.mxu0
      %v1090 = vadd.f32 %v996, %v1069
      %v1091 = vadd.f32 %v999, %v1072
      %v1092 = vadd.f32 %v1004, %v1077
      %v1093 = vadd.f32 %v1007, %v1080
      %v1094 = vadd.f32 %v1012, %v1085
      %s1095 = scalar_lea.vmem %s1, 144
      %v1096 = vld [vmem:[%s1095] sm:$0xf]
      %v1097 = vld [vmem:[%s1095 + $0x4] sm:$0xf]
      %v1098 = vld [vmem:[%s1095 + $0x8] sm:$0xf]
      %v1099 = vld [vmem:[%s1095 + $0xc] sm:$0xf]
      %v1100 = vrot.slane %v411, 2
      %v1101 = vrot.slane %v412, 2
      %v1102 = vsel %vm633, %v1100, %v1101
      %v1103 = vrot.slane %v413, 2
      %v1104 = vsel %vm633, %v1101, %v1103
      %v1109 = vunpack.c.l.b16 %v1096
      %v1110 = vunpack.c.l.b16 %v1097
      %v1111 = vunpack.c.l.b16 %v1098
      %v1112 = vunpack.c.l.b16 %v1099
      %v1113 = vpack.c.b16 %v1110, %v1109
      %v1114 = vpack.c.b16 %v1112, %v1111
      %v1118 = vsel %vm270, %v1102, 0
      %v1121 = vsel %vm270, %v1104, 0
      %v1124 = vsel %vm270, %v1103, 0
      %1126 = vmatprep.subr.bf16.mxu0 0
      %1127 = vmatpush1.bf16.msra.mxu0 %v1113
      %1128 = vmatprep.subr.bf16.mxu0 0
      %1129 = vmatpush1.bf16.msra.mxu0 %v1114
      %1130 = vmatprep.subr.bf16.mxu0 0
      %1131 = vmatpush1.bf16.msra.mxu0 0
      %1132 = vmatprep.subr.bf16.mxu0 0
      %1133 = vmatpush1.bf16.msra.mxu0 0
      %1134 = vmatprep.subr.bf16.mxu0 0
      %1135 = vmatpush1.bf16.msra.mxu0 0
      %1136 = vmatprep.subr.bf16.mxu0 0
      %1137 = vmatpush1.bf16.msra.mxu0 0
      %1138 = vmatprep.subr.bf16.mxu0 0
      %1139 = vmatpush1.bf16.msra.mxu0 0
      %1140 = vmatprep.subr.bf16.mxu0 0
      %1141 = vmatpush1.bf16.msra.mxu0 0
      %1142 = vmatprep.subr.bf16.mxu0 0
      %1143 = vmatpush1.bf16.msra.mxu0 0
      %1144 = vmatprep.subr.bf16.mxu0 0
      %1145 = vmatpush1.bf16.msra.mxu0 0
      %1146 = vmatprep.subr.bf16.mxu0 0
      %1147 = vmatpush1.bf16.msra.mxu0 0
      %1148 = vmatprep.subr.bf16.mxu0 0
      %1149 = vmatpush1.bf16.msra.mxu0 0
      %1150 = vmatprep.subr.bf16.mxu0 0
      %1151 = vmatpush1.bf16.msra.mxu0 0
      %1152 = vmatprep.subr.bf16.mxu0 0
      %1153 = vmatpush1.bf16.msra.mxu0 0
      %1154 = vmatprep.subr.bf16.mxu0 0
      %1155 = vmatpush1.bf16.msra.mxu0 0
      %1156 = vmatprep.subr.bf16.mxu0 0
      %1157 = vmatpush1.bf16.msra.mxu0 0
      %1158 = vmatprep.mubr.bf16.mxu0 0
      %1159 = vmatmul.mubr.bf16.gmra.mrb[0].mxu0 %v1118
      %v1160 = vpop.f32.mrb[0].mxu0
      %v1161 = vadd.f32 0.0, %v1160
      %v1162 = vpop.f32.mrb[0].mxu0
      %v1163 = vpop.f32.mrb[0].mxu0
      %v1164 = vadd.f32 0.0, %v1163
      %v1165 = vpop.f32.mrb[0].mxu0
      %1166 = vmatprep.mubr.bf16.mxu0 0
      %1167 = vmatmul.mubr.bf16.gmra.mrb[0].mxu0 %v1121
      %v1168 = vpop.f32.mrb[0].mxu0
      %v1169 = vadd.f32 0.0, %v1168
      %v1170 = vpop.f32.mrb[0].mxu0
      %v1171 = vpop.f32.mrb[0].mxu0
      %v1172 = vadd.f32 0.0, %v1171
      %v1173 = vpop.f32.mrb[0].mxu0
      %1174 = vmatprep.mubr.bf16.mxu0 0
      %1175 = vmatmul.mubr.bf16.gmra.mrb[0].mxu0 %v1124
      %v1176 = vpop.f32.mrb[0].mxu0
      %v1177 = vadd.f32 0.0, %v1176
      %v1178 = vpop.f32.mrb[0].mxu0
      %v1179 = vpop.f32.mrb[0].mxu0
      %v1180 = vpop.f32.mrb[0].mxu0
      %1181 = vdwg.mxu0
      %v1182 = vadd.f32 %v1090, %v1161
      %v1183 = vadd.f32 %v1091, %v1164
      %v1184 = vadd.f32 %v1092, %v1169
      %v1185 = vadd.f32 %v1093, %v1172
      %v1186 = vadd.f32 %v1094, %v1177
      %s1187 = scalar_lea.vmem %s1, 160
      %v1188 = vld [vmem:[%s1187] sm:$0xf]
      %v1189 = vld [vmem:[%s1187 + $0x4] sm:$0xf]
      %v1190 = vld [vmem:[%s1187 + $0x8] sm:$0xf]
      %v1191 = vld [vmem:[%s1187 + $0xc] sm:$0xf]
      %v1196 = vunpack.c.l.b16 %v1188
      %v1197 = vunpack.c.l.b16 %v1189
      %v1198 = vunpack.c.l.b16 %v1190
      %v1199 = vunpack.c.l.b16 %v1191
      %v1200 = vpack.c.b16 %v1197, %v1196
      %v1201 = vpack.c.b16 %v1199, %v1198
      %1204 = vmatprep.subr.bf16.mxu0 0
      %1205 = vmatpush1.bf16.msra.mxu0 %v1200
      %1206 = vmatprep.subr.bf16.mxu0 0
      %1207 = vmatpush1.bf16.msra.mxu0 %v1201
      %1208 = vmatprep.subr.bf16.mxu0 0
      %1209 = vmatpush1.bf16.msra.mxu0 0
      %1210 = vmatprep.subr.bf16.mxu0 0
      %1211 = vmatpush1.bf16.msra.mxu0 0
      %1212 = vmatprep.subr.bf16.mxu0 0
      %1213 = vmatpush1.bf16.msra.mxu0 0
      %1214 = vmatprep.subr.bf16.mxu0 0
      %1215 = vmatpush1.bf16.msra.mxu0 0
      %1216 = vmatprep.subr.bf16.mxu0 0
      %1217 = vmatpush1.bf16.msra.mxu0 0
      %1218 = vmatprep.subr.bf16.mxu0 0
      %1219 = vmatpush1.bf16.msra.mxu0 0
      %1220 = vmatprep.subr.bf16.mxu0 0
      %1221 = vmatpush1.bf16.msra.mxu0 0
      %1222 = vmatprep.subr.bf16.mxu0 0
      %1223 = vmatpush1.bf16.msra.mxu0 0
      %1224 = vmatprep.subr.bf16.mxu0 0
      %1225 = vmatpush1.bf16.msra.mxu0 0
      %1226 = vmatprep.subr.bf16.mxu0 0
      %1227 = vmatpush1.bf16.msra.mxu0 0
      %1228 = vmatprep.subr.bf16.mxu0 0
      %1229 = vmatpush1.bf16.msra.mxu0 0
      %1230 = vmatprep.subr.bf16.mxu0 0
      %1231 = vmatpush1.bf16.msra.mxu0 0
      %1232 = vmatprep.subr.bf16.mxu0 0
      %1233 = vmatpush1.bf16.msra.mxu0 0
      %1234 = vmatprep.subr.bf16.mxu0 0
      %1235 = vmatpush1.bf16.msra.mxu0 0
      %1236 = vmatprep.mubr.bf16.mxu0 0
      %1237 = vmatmul.mubr.bf16.gmra.mrb[0].mxu0 %v756
      %v1238 = vpop.f32.mrb[0].mxu0
      %v1239 = vadd.f32 0.0, %v1238
      %v1240 = vpop.f32.mrb[0].mxu0
      %v1241 = vpop.f32.mrb[0].mxu0
      %v1242 = vadd.f32 0.0, %v1241
      %v1243 = vpop.f32.mrb[0].mxu0
      %1244 = vmatprep.mubr.bf16.mxu0 0
      %1245 = vmatmul.mubr.bf16.gmra.mrb[0].mxu0 %v759
      %v1246 = vpop.f32.mrb[0].mxu0
      %v1247 = vadd.f32 0.0, %v1246
      %v1248 = vpop.f32.mrb[0].mxu0
      %v1249 = vpop.f32.mrb[0].mxu0
      %v1250 = vadd.f32 0.0, %v1249
      %v1251 = vpop.f32.mrb[0].mxu0
      %1252 = vmatprep.mubr.bf16.mxu0 0
      %1253 = vmatmul.mubr.bf16.gmra.mrb[0].mxu0 %v762
      %v1254 = vpop.f32.mrb[0].mxu0
      %v1255 = vadd.f32 0.0, %v1254
      %v1256 = vpop.f32.mrb[0].mxu0
      %v1257 = vpop.f32.mrb[0].mxu0
      %v1258 = vpop.f32.mrb[0].mxu0
      %1259 = vdwg.mxu0
      %v1260 = vadd.f32 %v1182, %v1239
      %v1261 = vadd.f32 %v1183, %v1242
      %v1262 = vadd.f32 %v1184, %v1247
      %v1263 = vadd.f32 %v1185, %v1250
      %v1264 = vadd.f32 %v1186, %v1255
      %s1265 = scalar_lea.vmem %s1, 176
      %v1266 = vld [vmem:[%s1265] sm:$0xf]
      %v1267 = vld [vmem:[%s1265 + $0x4] sm:$0xf]
      %v1268 = vld [vmem:[%s1265 + $0x8] sm:$0xf]
      %v1269 = vld [vmem:[%s1265 + $0xc] sm:$0xf]
      %vm1270 = vcmask 1044480
      %v1271 = vrot.slane %v222, 3
      %v1272 = vrot.slane %v228, 3
      %v1273 = vsel %vm1270, %v1271, %v1272
      %v1274 = vrot.slane %v624, 3
      %v1275 = vsel %vm1270, %v1272, %v1274
      %v1280 = vunpack.c.l.b16 %v1266
      %v1281 = vunpack.c.l.b16 %v1267
      %v1282 = vunpack.c.l.b16 %v1268
      %v1283 = vunpack.c.l.b16 %v1269
      %v1284 = vpack.c.b16 %v1281, %v1280
      %v1285 = vpack.c.b16 %v1283, %v1282
      %v1289 = vsel %vm270, %v1273, 0
      %v1292 = vsel %vm270, %v1275, 0
      %v1295 = vsel %vm270, %v1274, 0
      %1297 = vmatprep.subr.bf16.mxu0 0
      %1298 = vmatpush1.bf16.msra.mxu0 %v1284
      %1299 = vmatprep.subr.bf16.mxu0 0
      %1300 = vmatpush1.bf16.msra.mxu0 %v1285
      %1301 = vmatprep.subr.bf16.mxu0 0
      %1302 = vmatpush1.bf16.msra.mxu0 0
      %1303 = vmatprep.subr.bf16.mxu0 0
      %1304 = vmatpush1.bf16.msra.mxu0 0
      %1305 = vmatprep.subr.bf16.mxu0 0
      %1306 = vmatpush1.bf16.msra.mxu0 0
      %1307 = vmatprep.subr.bf16.mxu0 0
      %1308 = vmatpush1.bf16.msra.mxu0 0
      %1309 = vmatprep.subr.bf16.mxu0 0
      %1310 = vmatpush1.bf16.msra.mxu0 0
      %1311 = vmatprep.subr.bf16.mxu0 0
      %1312 = vmatpush1.bf16.msra.mxu0 0
      %1313 = vmatprep.subr.bf16.mxu0 0
      %1314 = vmatpush1.bf16.msra.mxu0 0
      %1315 = vmatprep.subr.bf16.mxu0 0
      %1316 = vmatpush1.bf16.msra.mxu0 0
      %1317 = vmatprep.subr.bf16.mxu0 0
      %1318 = vmatpush1.bf16.msra.mxu0 0
      %1319 = vmatprep.subr.bf16.mxu0 0
      %1320 = vmatpush1.bf16.msra.mxu0 0
      %1321 = vmatprep.subr.bf16.mxu0 0
      %1322 = vmatpush1.bf16.msra.mxu0 0
      %1323 = vmatprep.subr.bf16.mxu0 0
      %1324 = vmatpush1.bf16.msra.mxu0 0
      %1325 = vmatprep.subr.bf16.mxu0 0
      %1326 = vmatpush1.bf16.msra.mxu0 0
      %1327 = vmatprep.subr.bf16.mxu0 0
      %1328 = vmatpush1.bf16.msra.mxu0 0
      %1329 = vmatprep.mubr.bf16.mxu0 0
      %1330 = vmatmul.mubr.bf16.gmra.mrb[0].mxu0 %v1289
      %v1331 = vpop.f32.mrb[0].mxu0
      %v1332 = vadd.f32 0.0, %v1331
      %v1333 = vpop.f32.mrb[0].mxu0
      %v1334 = vpop.f32.mrb[0].mxu0
      %v1335 = vadd.f32 0.0, %v1334
      %v1336 = vpop.f32.mrb[0].mxu0
      %1337 = vmatprep.mubr.bf16.mxu0 0
      %1338 = vmatmul.mubr.bf16.gmra.mrb[0].mxu0 %v1292
      %v1339 = vpop.f32.mrb[0].mxu0
      %v1340 = vadd.f32 0.0, %v1339
      %v1341 = vpop.f32.mrb[0].mxu0
      %v1342 = vpop.f32.mrb[0].mxu0
      %v1343 = vadd.f32 0.0, %v1342
      %v1344 = vpop.f32.mrb[0].mxu0
      %1345 = vmatprep.mubr.bf16.mxu0 0
      %1346 = vmatmul.mubr.bf16.gmra.mrb[0].mxu0 %v1295
      %v1347 = vpop.f32.mrb[0].mxu0
      %v1348 = vadd.f32 0.0, %v1347
      %v1349 = vpop.f32.mrb[0].mxu0
      %v1350 = vpop.f32.mrb[0].mxu0
      %v1351 = vpop.f32.mrb[0].mxu0
      %1352 = vdwg.mxu0
      %v1353 = vadd.f32 %v1260, %v1332
      %v1354 = vadd.f32 %v1261, %v1335
      %v1355 = vadd.f32 %v1262, %v1340
      %v1356 = vadd.f32 %v1263, %v1343
      %v1357 = vadd.f32 %v1264, %v1348
      %v1358 = vadd.f32 %v1353, %v829
      %v1359 = vadd.f32 %v1354, %v829
      %v1360 = vadd.f32 %v1355, %v829
      %v1361 = vadd.f32 %v1356, %v829
      %v1362 = vadd.f32 %v1357, %v829
      %vm1363 = vcmp.ge.f32.partialorder %v1358, 0.0
      %vm1364 = vcmp.ge.f32.partialorder %v1359, 0.0
      %vm1365 = vcmp.ge.f32.partialorder %v1360, 0.0
      %vm1366 = vcmp.ge.f32.partialorder %v1361, 0.0
      %vm1367 = vcmp.ge.f32.partialorder %v1362, 0.0
      %v1368 = vmul.f32 %v1358, 0.01
      %v1369 = vmul.f32 %v1359, 0.01
      %v1370 = vmul.f32 %v1360, 0.01
      %v1371 = vmul.f32 %v1361, 0.01
      %v1372 = vmul.f32 %v1362, 0.01
      %v1373 = vsel %vm1363, %v1358, %v1368
      %v1374 = vsel %vm1364, %v1359, %v1369
      %v1375 = vsel %vm1365, %v1360, %v1370
      %v1376 = vsel %vm1366, %v1361, %v1371
      %v1377 = vsel %vm1367, %v1362, %v1372
      %1378 = vst.msk [vmem:[%s210] sm:$0xff] %vm270, %v1373
      %1379 = vst.msk [vmem:[%s210 + $0x8] sm:$0xff] %vm270, %v1374
      %1380 = vst.msk [vmem:[%s210 + $0x10] sm:$0xff] %vm270, %v1375
      %1381 = vst.msk [vmem:[%s210 + $0x18] sm:$0xff] %vm270, %v1376
      %1382 = vst.msk [vmem:[%s210 + $0x20] sm:$0xff] %vm270, %v1377
      %p1383 = scmp.lt.s32.totalorder %s16, 1
      %s1384 = scalar_select %p1383, %s16, 1
      %s1385 = smul.addr %s1384, 5
      %s1386 = smul.addr %s1385, 8
      %s1387 = scalar_lea.vmem %s3, %s1386
      %p1388 = scmp.lt.s32.totalorder %s16, 1
      %s1389 = scalar_select %p1388, %s16, 1
      %s1390 = smul.addr %s1389, 5
      %s1391 = smul.addr %s1390, 8
      %s1392 = scalar_lea.vmem %s4, %s1391
      // Predicated region
      $region33: #{vqvae_decoder_forward.8} parent=31 // pred_check
        %p1393 = pneg %p102
      $region34: #{vqvae_decoder_forward.8} parent=31 // pred_check_branch
        %1395 = sbr.rel (%p1393) target = $region36
      $region35: #{vqvae_decoder_forward.8} parent=31 // pred_region
        _
      $region36: #{vqvae_decoder_forward.8} parent=31 // pred_fallthru
        _
      // Predicated region
      $region37: #{vqvae_decoder_forward.8} parent=31 // pred_check
        %p1396 = pneg %p128
      $region38: #{vqvae_decoder_forward.8} parent=31 // pred_check_branch
        %1398 = sbr.rel (%p1396) target = $region40
      $region39: #{vqvae_decoder_forward.8} parent=31 // pred_region
        _
      $region40: #{vqvae_decoder_forward.8} parent=31 // pred_fallthru
        _
    $region32: #{vqvae_decoder_forward.8} parent=5 // pred_fallthru
      _
    %p1399 = scmp.le.s32.totalorder 2, %s11
    // Predicated region
    $region41: #{vqvae_decoder_forward.8} parent=5 // pred_check
      %p1400 = pneg %p1399
    $region42: #{vqvae_decoder_forward.8} parent=5 // pred_check_branch
      %1402 = sbr.rel (%p1400) target = $region44
    $region43: #{vqvae_decoder_forward.8} parent=5 // pred_region
      %s1403 = ssub.s32 %s11, 2
      // Predicated region
      $region45: #{vqvae_decoder_forward.8} parent=43 // pred_check
        %p1404 = pneg %p108
      $region46: #{vqvae_decoder_forward.8} parent=43 // pred_check_branch
        %1406 = sbr.rel (%p1404) target = $region48
      $region47: #{vqvae_decoder_forward.8} parent=43 // pred_region
        %p1407 = scmp.lt.s32.totalorder %s17, 1
        %s1408 = scalar_select %p1407, %s17, 1
        %s1409 = smul.addr %s1408, 5
        %s1410 = smul.addr %s1409, 8
        %s1411 = scalar_lea.vmem %s3, %s1410
      $region48: #{vqvae_decoder_forward.8} parent=43 // pred_fallthru
        _
      // Predicated region
      $region49: #{vqvae_decoder_forward.8} parent=43 // pred_check
        %p1412 = pneg %p134
      $region50: #{vqvae_decoder_forward.8} parent=43 // pred_check_branch
        %1414 = sbr.rel (%p1412) target = $region52
      $region51: #{vqvae_decoder_forward.8} parent=43 // pred_region
        %p1415 = scmp.lt.s32.totalorder %s17, 1
        %s1416 = scalar_select %p1415, %s17, 1
        %s1417 = smul.addr %s1416, 5
        %s1418 = smul.addr %s1417, 8
        %s1419 = scalar_lea.vmem %s4, %s1418
      $region52: #{vqvae_decoder_forward.8} parent=43 // pred_fallthru
        _
    $region44: #{vqvae_decoder_forward.8} parent=5 // pred_fallthru
      _
  $region6: #{vqvae_decoder_forward.8} parent=0 // loop_footer
    %s15 = sadd.s32 1, %s11
  $region7: #{vqvae_decoder_forward.8} parent=0 // loop_footer_branch
    %10 = sbr.rel target = $region3
  $region8: #{vqvae_decoder_forward.8} parent=0 // loop_exit
    _

// kernel: vqvae_decoder_forward.9
$region0: #{vqvae_decoder_forward.9}
  #allocation0 [shape = 'u32[]', space=smem, size = 0x4, offset = 0x4, fixed_abs, tag = 'smem constant byte address 0x4 - core index']
  #allocation1 [shape = 'u32[144,128]{1,0:T(1,128)}', space=vmem, size = 0x12000, scoped, tag = 'internal scratch']
  %s0 = inlined_call_operand.vmem [shape: f32[2,110,32], index: 0, kind: input, shape index: {}]
  %s1 = inlined_call_operand.vmem [shape: bf16[12,32,4], index: 1, kind: input, shape index: {}]
  %s2 = inlined_call_operand.vmem [shape: f32[1,4], index: 2, kind: input, shape index: {}]
  %s3 = inlined_call_operand.vmem [shape: f32[2,72,4], index: 3, kind: output, shape index: {0}]
  %s4 = inlined_call_operand.vmem [shape: f32[2,72,4], index: 4, kind: output, shape index: {1}]
  %5 = xla_tuple %s3, %s4
  %s6 = sld [smem:[#allocation0]]
  $region53: #{vqvae_decoder_forward.9} parent=0
    _
  %s8 = ssub.s32 1, %s6
  %s9 = scalar_select 0, %s8, %s6
  loop: start=0, step=1, limit=4
  $region2: #{vqvae_decoder_forward.9} parent=0 // loop_pre_header
    _
  $region3: #{vqvae_decoder_forward.9} parent=0 // loop_header
    %s11 = sphi 0, %s15
    %p12 = scmp.ge.s32.totalorder %s11, 4
    %s21 = sphi 0, %s23
    %s24 = sphi 0, %s21
    %s25 = sphi 0, %s24
    %s41 = sphi 0, %s25
    %s45 = sphi 0, %s45
    %s47 = sphi 0, %s45
    %s48 = sphi 0, %s47
    %s62 = sphi 0, %s48
    %s66 = sphi 0, %s66
    %s68 = sphi 0, %s66
    %s69 = sphi 0, %s68
    %s83 = sphi 0, %s69
    %s89 = sphi 0, %s91
    %s92 = sphi 0, %s89
    %s93 = sphi 0, %s92
    %s109 = sphi 0, %s93
    %s115 = sphi 0, %s117
    %s118 = sphi 0, %s115
    %s119 = sphi 0, %s118
    %s135 = sphi 0, %s119
  $region4: #{vqvae_decoder_forward.9} parent=0 // loop_header_branch
    %14 = sbr.rel (%p12) target = $region8
  $region5: #{vqvae_decoder_forward.9} parent=0 // loop_body
    %s16 = ssub.s32 %s11, 1
    %s17 = ssub.s32 %s11, 2
    %s18 = sadd.s32 %s11, 1
    %s19 = ssub.s32 %s11, %s18
    %p20 = scmp.eq.s32.totalorder %s19, 0
    %s22 = sadd.s32 %s21, 1
    %s23 = scalar_select %p20, %s21, %s22
    %p26 = pneg %p20
    %p27 = scmp.eq.s32.totalorder %s11, 1
    %p28 = por %p26, %p27
    %p29 = scmp.ne.s32.totalorder %s21, %s24
    %p30 = scmp.eq.s32.totalorder %s11, 0
    %p31 = por %p29, %p30
    %p32 = scmp.ne.s32.totalorder %s21, %s24
    %p33 = scmp.eq.s32.totalorder %s16, 1
    %p34 = por %p32, %p33
    %p35 = scmp.ne.s32.totalorder %s24, %s25
    %p36 = scmp.eq.s32.totalorder %s16, 0
    %p37 = por %p35, %p36
    %p38 = scmp.ne.s32.totalorder %s24, %s25
    %p39 = scmp.eq.s32.totalorder %s17, 1
    %p40 = por %p38, %p39
    %p42 = scmp.ne.s32.totalorder %s25, %s41
    %p43 = scmp.eq.s32.totalorder %s17, 0
    %p44 = por %p42, %p43
    %s46 = sadd.s32 %s45, 1
    %p49 = scmp.eq.s32.totalorder %s11, 1
    %p50 = scmp.ne.s32.totalorder %s45, %s47
    %p51 = scmp.eq.s32.totalorder %s11, 0
    %p52 = por %p50, %p51
    %p53 = scmp.ne.s32.totalorder %s45, %s47
    %p54 = scmp.eq.s32.totalorder %s16, 1
    %p55 = por %p53, %p54
    %p56 = scmp.ne.s32.totalorder %s47, %s48
    %p57 = scmp.eq.s32.totalorder %s16, 0
    %p58 = por %p56, %p57
    %p59 = scmp.ne.s32.totalorder %s47, %s48
    %p60 = scmp.eq.s32.totalorder %s17, 1
    %p61 = por %p59, %p60
    %p63 = scmp.ne.s32.totalorder %s48, %s62
    %p64 = scmp.eq.s32.totalorder %s17, 0
    %p65 = por %p63, %p64
    %s67 = sadd.s32 %s66, 1
    %p70 = scmp.eq.s32.totalorder %s11, 1
    %p71 = scmp.ne.s32.totalorder %s66, %s68
    %p72 = scmp.eq.s32.totalorder %s11, 0
    %p73 = por %p71, %p72
    %p74 = scmp.ne.s32.totalorder %s66, %s68
    %p75 = scmp.eq.s32.totalorder %s16, 1
    %p76 = por %p74, %p75
    %p77 = scmp.ne.s32.totalorder %s68, %s69
    %p78 = scmp.eq.s32.totalorder %s16, 0
    %p79 = por %p77, %p78
    %p80 = scmp.ne.s32.totalorder %s68, %s69
    %p81 = scmp.eq.s32.totalorder %s17, 1
    %p82 = por %p80, %p81
    %p84 = scmp.ne.s32.totalorder %s69, %s83
    %p85 = scmp.eq.s32.totalorder %s17, 0
    %p86 = por %p84, %p85
    %s87 = ssub.s32 %s11, %s18
    %p88 = scmp.eq.s32.totalorder %s87, 0
    %s90 = sadd.s32 %s89, 1
    %s91 = scalar_select %p88, %s89, %s90
    %p94 = pneg %p88
    %p95 = scmp.eq.s32.totalorder %s11, 1
    %p96 = por %p94, %p95
    %p97 = scmp.ne.s32.totalorder %s89, %s92
    %p98 = scmp.eq.s32.totalorder %s11, 0
    %p99 = por %p97, %p98
    %p100 = scmp.ne.s32.totalorder %s89, %s92
    %p101 = scmp.eq.s32.totalorder %s16, 1
    %p102 = por %p100, %p101
    %p103 = scmp.ne.s32.totalorder %s92, %s93
    %p104 = scmp.eq.s32.totalorder %s16, 0
    %p105 = por %p103, %p104
    %p106 = scmp.ne.s32.totalorder %s92, %s93
    %p107 = scmp.eq.s32.totalorder %s17, 1
    %p108 = por %p106, %p107
    %p110 = scmp.ne.s32.totalorder %s93, %s109
    %p111 = scmp.eq.s32.totalorder %s17, 0
    %p112 = por %p110, %p111
    %s113 = ssub.s32 %s11, %s18
    %p114 = scmp.eq.s32.totalorder %s113, 0
    %s116 = sadd.s32 %s115, 1
    %s117 = scalar_select %p114, %s115, %s116
    %p120 = pneg %p114
    %p121 = scmp.eq.s32.totalorder %s11, 1
    %p122 = por %p120, %p121
    %p123 = scmp.ne.s32.totalorder %s115, %s118
    %p124 = scmp.eq.s32.totalorder %s11, 0
    %p125 = por %p123, %p124
    %p126 = scmp.ne.s32.totalorder %s115, %s118
    %p127 = scmp.eq.s32.totalorder %s16, 1
    %p128 = por %p126, %p127
    %p129 = scmp.ne.s32.totalorder %s118, %s119
    %p130 = scmp.eq.s32.totalorder %s16, 0
    %p131 = por %p129, %p130
    %p132 = scmp.ne.s32.totalorder %s118, %s119
    %p133 = scmp.eq.s32.totalorder %s17, 1
    %p134 = por %p132, %p133
    %p136 = scmp.ne.s32.totalorder %s119, %s135
    %p137 = scmp.eq.s32.totalorder %s17, 0
    %p138 = por %p136, %p137
    %p139 = scmp.le.s32.totalorder 1, %s11
    %p140 = scmp.lt.s32.totalorder %s11, 3
    %p141 = pnand %p139, %p140
    %p142 = pneg %p141
    // Predicated region
    $region9: #{vqvae_decoder_forward.9} parent=5 // pred_check
      _
    $region10: #{vqvae_decoder_forward.9} parent=5 // pred_check_branch
      %144 = sbr.rel (%p141) target = $region12
    $region11: #{vqvae_decoder_forward.9} parent=5 // pred_region
      %s145 = ssub.s32 %s11, 1
      // Predicated region
      $region13: #{vqvae_decoder_forward.9} parent=11 // pred_check
        %p146 = pneg %p58
      $region14: #{vqvae_decoder_forward.9} parent=11 // pred_check_branch
        %148 = sbr.rel (%p146) target = $region16
      $region15: #{vqvae_decoder_forward.9} parent=11 // pred_region
        _
      $region16: #{vqvae_decoder_forward.9} parent=11 // pred_fallthru
        _
      // Predicated region
      $region17: #{vqvae_decoder_forward.9} parent=11 // pred_check
        %p149 = pneg %p79
      $region18: #{vqvae_decoder_forward.9} parent=11 // pred_check_branch
        %151 = sbr.rel (%p149) target = $region20
      $region19: #{vqvae_decoder_forward.9} parent=11 // pred_region
        _
      $region20: #{vqvae_decoder_forward.9} parent=11 // pred_fallthru
        _
    $region12: #{vqvae_decoder_forward.9} parent=5 // pred_fallthru
      _
    %p152 = scmp.lt.s32.totalorder %s11, 2
    // Predicated region
    $region21: #{vqvae_decoder_forward.9} parent=5 // pred_check
      %p153 = pneg %p152
    $region22: #{vqvae_decoder_forward.9} parent=5 // pred_check_branch
      %155 = sbr.rel (%p153) target = $region24
    $region23: #{vqvae_decoder_forward.9} parent=5 // pred_region
      // Predicated region
      $region25: #{vqvae_decoder_forward.9} parent=23 // pred_check
        %p156 = pneg %p31
      $region26: #{vqvae_decoder_forward.9} parent=23 // pred_check_branch
        %158 = sbr.rel (%p156) target = $region28
      $region27: #{vqvae_decoder_forward.9} parent=23 // pred_region
        %p159 = scmp.lt.s32.totalorder %s11, 1
        %s160 = scalar_select %p159, %s11, 1
        %s161 = smul.addr %s160, 14
        %s162 = smul.addr %s161, 8
        %s163 = scalar_lea.vmem %s0, %s162
      $region28: #{vqvae_decoder_forward.9} parent=23 // pred_fallthru
        _
    $region24: #{vqvae_decoder_forward.9} parent=5 // pred_fallthru
      _
    %p164 = scmp.le.s32.totalorder 1, %s11
    %p165 = scmp.lt.s32.totalorder %s11, 3
    %p166 = pnand %p164, %p165
    %p167 = pneg %p166
    // Predicated region
    $region29: #{vqvae_decoder_forward.9} parent=5 // pred_check
      _
    $region30: #{vqvae_decoder_forward.9} parent=5 // pred_check_branch
      %169 = sbr.rel (%p166) target = $region32
    $region31: #{vqvae_decoder_forward.9} parent=5 // pred_region
      %s170 = ssub.s32 %s11, 1
      %p171 = scmp.lt.s32.totalorder %s16, 1
      %s172 = scalar_select %p171, %s16, 1
      %s173 = smul.addr %s172, 14
      %s174 = smul.addr %s173, 8
      %s175 = scalar_lea.vmem %s0, %s174
      %p176 = pneg %p37
      %p177 = pneg %p34
      %p178 = pneg %p58
      %p179 = pneg %p55
      %p180 = pneg %p79
      %p181 = pneg %p76
      %p182 = pneg %p105
      %p183 = pneg %p102
      %p184 = scmp.lt.s32.totalorder %s16, 1
      %s185 = scalar_select %p184, %s16, 1
      %s186 = smul.addr %s185, 9
      %s187 = smul.addr %s186, 8
      %s188 = scalar_lea.vmem %s3, %s187
      %p189 = pneg %p131
      %p190 = pneg %p128
      %p191 = scmp.lt.s32.totalorder %s16, 1
      %s192 = scalar_select %p191, %s16, 1
      %s193 = smul.addr %s192, 9
      %s194 = smul.addr %s193, 8
      %s195 = scalar_lea.vmem %s4, %s194
      %p196 = scmp.lt.s32.totalorder %s16, 1
      %s197 = scalar_select %p196, %s16, 1
      %s198 = smul.addr %s197, 14
      %s199 = smul.addr %s198, 8
      %s200 = scalar_lea.vmem %s0, %s199
      %p201 = scmp.lt.s32.totalorder %s16, 1
      %s202 = scalar_select %p201, %s16, 1
      %s203 = smul.addr %s202, 9
      %s204 = smul.addr %s203, 8
      %s205 = scalar_lea.vmem %s3, %s204
      %p206 = scmp.lt.s32.totalorder %s16, 1
      %s207 = scalar_select %p206, %s16, 1
      %s208 = smul.addr %s207, 9
      %s209 = smul.addr %s208, 8
      %s210 = scalar_lea.vmem %s4, %s209
      %v212 = vld [vmem:[%s2] sm:$0x1]
      %v213 = vld [vmem:[%s200] sm:$0xff]
      %v214 = vld [vmem:[%s200 + $0x8] sm:$0xff]
      %v215 = vld [vmem:[%s200 + $0x10] sm:$0xff]
      %v216 = vld [vmem:[%s200 + $0x18] sm:$0xff]
      %v217 = vld [vmem:[%s200 + $0x20] sm:$0xff]
      %v218 = vld [vmem:[%s200 + $0x28] sm:$0xff]
      %v219 = vld [vmem:[%s200 + $0x30] sm:$0xff]
      %v220 = vld [vmem:[%s200 + $0x38] sm:$0xff]
      %v221 = vld [vmem:[%s200 + $0x40] sm:$0xff]
      %v222 = vld [vmem:[%s200 + $0x48] sm:$0xff]
      %v223 = vld [vmem:[%s200 + $0x50] sm:$0xff]
      %v224 = vld [vmem:[%s200 + $0x58] sm:$0xff]
      %v225 = vld [vmem:[%s200 + $0x60] sm:$0xff]
      %v226 = vld [vmem:[%s200 + $0x68] sm:$0x3f]
      %v227 = vpack.c.bf16 %v214, %v213
      %v228 = vpack.c.bf16 %v216, %v215
      %v229 = vpack.c.bf16 %v218, %v217
      %v230 = vpack.c.bf16 %v220, %v219
      %v231 = vpack.c.bf16 %v221, %v221
      %v232 = vld [vmem:[%s1] sm:$0xf]
      %v233 = vld [vmem:[%s1 + $0x4] sm:$0xf]
      %v234 = vld [vmem:[%s1 + $0x8] sm:$0xf]
      %v235 = vld [vmem:[%s1 + $0xc] sm:$0xf]
      %v236 = vpack.c.bf16 %v222, %v221
      %s237 = scalar_lea.vmem %s1, 16
      %v238 = vld [vmem:[%s237] sm:$0xf]
      %v239 = vld [vmem:[%s237 + $0x4] sm:$0xf]
      %v240 = vld [vmem:[%s237 + $0x8] sm:$0xf]
      %v241 = vld [vmem:[%s237 + $0xc] sm:$0xf]
      %vm242 = vsmask.f32 7424
      %v244 = vshrl.u32 %v227, 16
      %v246 = vshll.u32 %v227, 16
      %v248 = vrot.slane %v246, 1
      %v249 = vor.u32 %v244, %v248
      %v251 = vshll.u32 %v228, 16
      %v253 = vrot.slane %v251, 1
      %v254 = vsel %vm242, %v249, %v253
      %v255 = vshrl.u32 %v228, 16
      %v257 = vor.u32 %v255, %v253
      %v259 = vshll.u32 %v229, 16
      %v261 = vrot.slane %v259, 1
      %v262 = vsel %vm242, %v257, %v261
      %v263 = vshrl.u32 %v229, 16
      %v265 = vor.u32 %v263, %v261
      %v267 = vshll.u32 %v230, 16
      %v269 = vrot.slane %v267, 1
      %v270 = vsel %vm242, %v265, %v269
      %v271 = vshrl.u32 %v230, 16
      %v273 = vor.u32 %v271, %v269
      %v275 = vshll.u32 %v236, 16
      %v277 = vrot.slane %v275, 1
      %v278 = vsel %vm242, %v273, %v277
      %v279 = vshrl.u32 %v236, 16
      %v281 = vor.u32 %v279, %v277
      %v286 = vunpack.c.l.b16 %v238
      %v287 = vunpack.c.l.b16 %v239
      %v288 = vunpack.c.l.b16 %v240
      %v289 = vunpack.c.l.b16 %v241
      %v290 = vpack.c.b16 %v287, %v286
      %v291 = vpack.c.b16 %v289, %v288
      %vm294 = vcmask 261120
      %v296 = vsel %vm294, %v254, 0
      %v299 = vsel %vm294, %v262, 0
      %v302 = vsel %vm294, %v270, 0
      %v305 = vsel %vm294, %v278, 0
      %v308 = vsel %vm294, %v281, 0
      %310 = vmatprep.subr.bf16.mxu0 0
      %311 = vmatpush1.bf16.msra.mxu0 %v290
      %312 = vmatprep.subr.bf16.mxu0 0
      %313 = vmatpush1.bf16.msra.mxu0 %v291
      %314 = vmatprep.subr.bf16.mxu0 0
      %315 = vmatpush1.bf16.msra.mxu0 0
      %316 = vmatprep.subr.bf16.mxu0 0
      %317 = vmatpush1.bf16.msra.mxu0 0
      %318 = vmatprep.subr.bf16.mxu0 0
      %319 = vmatpush1.bf16.msra.mxu0 0
      %320 = vmatprep.subr.bf16.mxu0 0
      %321 = vmatpush1.bf16.msra.mxu0 0
      %322 = vmatprep.subr.bf16.mxu0 0
      %323 = vmatpush1.bf16.msra.mxu0 0
      %324 = vmatprep.subr.bf16.mxu0 0
      %325 = vmatpush1.bf16.msra.mxu0 0
      %326 = vmatprep.subr.bf16.mxu0 0
      %327 = vmatpush1.bf16.msra.mxu0 0
      %328 = vmatprep.subr.bf16.mxu0 0
      %329 = vmatpush1.bf16.msra.mxu0 0
      %330 = vmatprep.subr.bf16.mxu0 0
      %331 = vmatpush1.bf16.msra.mxu0 0
      %332 = vmatprep.subr.bf16.mxu0 0
      %333 = vmatpush1.bf16.msra.mxu0 0
      %334 = vmatprep.subr.bf16.mxu0 0
      %335 = vmatpush1.bf16.msra.mxu0 0
      %336 = vmatprep.subr.bf16.mxu0 0
      %337 = vmatpush1.bf16.msra.mxu0 0
      %338 = vmatprep.subr.bf16.mxu0 0
      %339 = vmatpush1.bf16.msra.mxu0 0
      %340 = vmatprep.subr.bf16.mxu0 0
      %341 = vmatpush1.bf16.msra.mxu0 0
      %342 = vmatprep.mubr.bf16.mxu0 0
      %343 = vmatmul.mubr.bf16.gmra.mrb[0].mxu0 %v296
      %v344 = vpop.f32.mrb[0].mxu0
      %v345 = vadd.f32 0.0, %v344
      %v346 = vpop.f32.mrb[0].mxu0
      %v347 = vpop.f32.mrb[0].mxu0
      %v348 = vadd.f32 0.0, %v347
      %v349 = vpop.f32.mrb[0].mxu0
      %350 = vmatprep.mubr.bf16.mxu0 0
      %351 = vmatmul.mubr.bf16.gmra.mrb[0].mxu0 %v299
      %v352 = vpop.f32.mrb[0].mxu0
      %v353 = vadd.f32 0.0, %v352
      %v354 = vpop.f32.mrb[0].mxu0
      %v355 = vpop.f32.mrb[0].mxu0
      %v356 = vadd.f32 0.0, %v355
      %v357 = vpop.f32.mrb[0].mxu0
      %358 = vmatprep.mubr.bf16.mxu0 0
      %359 = vmatmul.mubr.bf16.gmra.mrb[0].mxu0 %v302
      %v360 = vpop.f32.mrb[0].mxu0
      %v361 = vadd.f32 0.0, %v360
      %v362 = vpop.f32.mrb[0].mxu0
      %v363 = vpop.f32.mrb[0].mxu0
      %v364 = vadd.f32 0.0, %v363
      %v365 = vpop.f32.mrb[0].mxu0
      %366 = vmatprep.mubr.bf16.mxu0 0
      %367 = vmatmul.mubr.bf16.gmra.mrb[0].mxu0 %v305
      %v368 = vpop.f32.mrb[0].mxu0
      %v369 = vadd.f32 0.0, %v368
      %v370 = vpop.f32.mrb[0].mxu0
      %v371 = vpop.f32.mrb[0].mxu0
      %v372 = vadd.f32 0.0, %v371
      %v373 = vpop.f32.mrb[0].mxu0
      %374 = vmatprep.mubr.bf16.mxu0 0
      %375 = vmatmul.mubr.bf16.gmra.mrb[0].mxu0 %v308
      %v376 = vpop.f32.mrb[0].mxu0
      %v377 = vadd.f32 0.0, %v376
      %v378 = vpop.f32.mrb[0].mxu0
      %v379 = vpop.f32.mrb[0].mxu0
      %v380 = vpop.f32.mrb[0].mxu0
      %381 = vdwg.mxu0
      %v386 = vunpack.c.l.b16 %v232
      %v387 = vunpack.c.l.b16 %v233
      %v388 = vunpack.c.l.b16 %v234
      %v389 = vunpack.c.l.b16 %v235
      %v390 = vpack.c.b16 %v387, %v386
      %v391 = vpack.c.b16 %v389, %v388
      %v394 = vsel %vm294, %v227, 0
      %v396 = vsel %vm294, %v228, 0
      %v398 = vsel %vm294, %v229, 0
      %v400 = vsel %vm294, %v230, 0
      %v403 = vsel %vm294, %v231, 0
      %405 = vmatprep.subr.bf16.mxu0 0
      %406 = vmatpush1.bf16.msra.mxu0 %v390
      %407 = vmatprep.subr.bf16.mxu0 0
      %408 = vmatpush1.bf16.msra.mxu0 %v391
      %409 = vmatprep.subr.bf16.mxu0 0
      %410 = vmatpush1.bf16.msra.mxu0 0
      %411 = vmatprep.subr.bf16.mxu0 0
      %412 = vmatpush1.bf16.msra.mxu0 0
      %413 = vmatprep.subr.bf16.mxu0 0
      %414 = vmatpush1.bf16.msra.mxu0 0
      %415 = vmatprep.subr.bf16.mxu0 0
      %416 = vmatpush1.bf16.msra.mxu0 0
      %417 = vmatprep.subr.bf16.mxu0 0
      %418 = vmatpush1.bf16.msra.mxu0 0
      %419 = vmatprep.subr.bf16.mxu0 0
      %420 = vmatpush1.bf16.msra.mxu0 0
      %421 = vmatprep.subr.bf16.mxu0 0
      %422 = vmatpush1.bf16.msra.mxu0 0
      %423 = vmatprep.subr.bf16.mxu0 0
      %424 = vmatpush1.bf16.msra.mxu0 0
      %425 = vmatprep.subr.bf16.mxu0 0
      %426 = vmatpush1.bf16.msra.mxu0 0
      %427 = vmatprep.subr.bf16.mxu0 0
      %428 = vmatpush1.bf16.msra.mxu0 0
      %429 = vmatprep.subr.bf16.mxu0 0
      %430 = vmatpush1.bf16.msra.mxu0 0
      %431 = vmatprep.subr.bf16.mxu0 0
      %432 = vmatpush1.bf16.msra.mxu0 0
      %433 = vmatprep.subr.bf16.mxu0 0
      %434 = vmatpush1.bf16.msra.mxu0 0
      %435 = vmatprep.subr.bf16.mxu0 0
      %436 = vmatpush1.bf16.msra.mxu0 0
      %437 = vmatprep.mubr.bf16.mxu0 0
      %438 = vmatmul.mubr.bf16.gmra.mrb[0].mxu0 %v394
      %v439 = vpop.f32.mrb[0].mxu0
      %v440 = vadd.f32 %v345, %v439
      %v441 = vpop.f32.mrb[0].mxu0
      %v442 = vpop.f32.mrb[0].mxu0
      %v443 = vadd.f32 %v348, %v442
      %v444 = vpop.f32.mrb[0].mxu0
      %445 = vmatprep.mubr.bf16.mxu0 0
      %446 = vmatmul.mubr.bf16.gmra.mrb[0].mxu0 %v396
      %v447 = vpop.f32.mrb[0].mxu0
      %v448 = vadd.f32 %v353, %v447
      %v449 = vpop.f32.mrb[0].mxu0
      %v450 = vpop.f32.mrb[0].mxu0
      %v451 = vadd.f32 %v356, %v450
      %v452 = vpop.f32.mrb[0].mxu0
      %453 = vmatprep.mubr.bf16.mxu0 0
      %454 = vmatmul.mubr.bf16.gmra.mrb[0].mxu0 %v398
      %v455 = vpop.f32.mrb[0].mxu0
      %v456 = vadd.f32 %v361, %v455
      %v457 = vpop.f32.mrb[0].mxu0
      %v458 = vpop.f32.mrb[0].mxu0
      %v459 = vadd.f32 %v364, %v458
      %v460 = vpop.f32.mrb[0].mxu0
      %461 = vmatprep.mubr.bf16.mxu0 0
      %462 = vmatmul.mubr.bf16.gmra.mrb[0].mxu0 %v400
      %v463 = vpop.f32.mrb[0].mxu0
      %v464 = vadd.f32 %v369, %v463
      %v465 = vpop.f32.mrb[0].mxu0
      %v466 = vpop.f32.mrb[0].mxu0
      %v467 = vadd.f32 %v372, %v466
      %v468 = vpop.f32.mrb[0].mxu0
      %469 = vmatprep.mubr.bf16.mxu0 0
      %470 = vmatmul.mubr.bf16.gmra.mrb[0].mxu0 %v403
      %v471 = vpop.f32.mrb[0].mxu0
      %v472 = vadd.f32 %v377, %v471
      %v473 = vpop.f32.mrb[0].mxu0
      %v474 = vpop.f32.mrb[0].mxu0
      %v475 = vpop.f32.mrb[0].mxu0
      %476 = vdwg.mxu0
      %v477 = vpack.c.bf16 %v224, %v223
      %s478 = scalar_lea.vmem %s1, 32
      %v479 = vld [vmem:[%s478] sm:$0xf]
      %v480 = vld [vmem:[%s478 + $0x4] sm:$0xf]
      %v481 = vld [vmem:[%s478 + $0x8] sm:$0xf]
      %v482 = vld [vmem:[%s478 + $0xc] sm:$0xf]
      %vm488 = vcmask 1046528
      %v489 = vrot.slane %v228, 1
      %v490 = vrot.slane %v229, 1
      %v491 = vsel %vm488, %v489, %v490
      %v492 = vrot.slane %v230, 1
      %v493 = vsel %vm488, %v490, %v492
      %v494 = vrot.slane %v236, 1
      %v495 = vsel %vm488, %v492, %v494
      %v496 = vrot.slane %v477, 1
      %v497 = vsel %vm488, %v494, %v496
      %v502 = vunpack.c.l.b16 %v479
      %v503 = vunpack.c.l.b16 %v480
      %v504 = vunpack.c.l.b16 %v481
      %v505 = vunpack.c.l.b16 %v482
      %v506 = vpack.c.b16 %v503, %v502
      %v507 = vpack.c.b16 %v505, %v504
      %v511 = vsel %vm294, %v491, 0
      %v514 = vsel %vm294, %v493, 0
      %v517 = vsel %vm294, %v495, 0
      %v520 = vsel %vm294, %v497, 0
      %v523 = vsel %vm294, %v496, 0
      %525 = vmatprep.subr.bf16.mxu0 0
      %526 = vmatpush1.bf16.msra.mxu0 %v506
      %527 = vmatprep.subr.bf16.mxu0 0
      %528 = vmatpush1.bf16.msra.mxu0 %v507
      %529 = vmatprep.subr.bf16.mxu0 0
      %530 = vmatpush1.bf16.msra.mxu0 0
      %531 = vmatprep.subr.bf16.mxu0 0
      %532 = vmatpush1.bf16.msra.mxu0 0
      %533 = vmatprep.subr.bf16.mxu0 0
      %534 = vmatpush1.bf16.msra.mxu0 0
      %535 = vmatprep.subr.bf16.mxu0 0
      %536 = vmatpush1.bf16.msra.mxu0 0
      %537 = vmatprep.subr.bf16.mxu0 0
      %538 = vmatpush1.bf16.msra.mxu0 0
      %539 = vmatprep.subr.bf16.mxu0 0
      %540 = vmatpush1.bf16.msra.mxu0 0
      %541 = vmatprep.subr.bf16.mxu0 0
      %542 = vmatpush1.bf16.msra.mxu0 0
      %543 = vmatprep.subr.bf16.mxu0 0
      %544 = vmatpush1.bf16.msra.mxu0 0
      %545 = vmatprep.subr.bf16.mxu0 0
      %546 = vmatpush1.bf16.msra.mxu0 0
      %547 = vmatprep.subr.bf16.mxu0 0
      %548 = vmatpush1.bf16.msra.mxu0 0
      %549 = vmatprep.subr.bf16.mxu0 0
      %550 = vmatpush1.bf16.msra.mxu0 0
      %551 = vmatprep.subr.bf16.mxu0 0
      %552 = vmatpush1.bf16.msra.mxu0 0
      %553 = vmatprep.subr.bf16.mxu0 0
      %554 = vmatpush1.bf16.msra.mxu0 0
      %555 = vmatprep.subr.bf16.mxu0 0
      %556 = vmatpush1.bf16.msra.mxu0 0
      %557 = vmatprep.mubr.bf16.mxu0 0
      %558 = vmatmul.mubr.bf16.gmra.mrb[0].mxu0 %v511
      %v559 = vpop.f32.mrb[0].mxu0
      %v560 = vadd.f32 0.0, %v559
      %v561 = vpop.f32.mrb[0].mxu0
      %v562 = vpop.f32.mrb[0].mxu0
      %v563 = vadd.f32 0.0, %v562
      %v564 = vpop.f32.mrb[0].mxu0
      %565 = vmatprep.mubr.bf16.mxu0 0
      %566 = vmatmul.mubr.bf16.gmra.mrb[0].mxu0 %v514
      %v567 = vpop.f32.mrb[0].mxu0
      %v568 = vadd.f32 0.0, %v567
      %v569 = vpop.f32.mrb[0].mxu0
      %v570 = vpop.f32.mrb[0].mxu0
      %v571 = vadd.f32 0.0, %v570
      %v572 = vpop.f32.mrb[0].mxu0
      %573 = vmatprep.mubr.bf16.mxu0 0
      %574 = vmatmul.mubr.bf16.gmra.mrb[0].mxu0 %v517
      %v575 = vpop.f32.mrb[0].mxu0
      %v576 = vadd.f32 0.0, %v575
      %v577 = vpop.f32.mrb[0].mxu0
      %v578 = vpop.f32.mrb[0].mxu0
      %v579 = vadd.f32 0.0, %v578
      %v580 = vpop.f32.mrb[0].mxu0
      %581 = vmatprep.mubr.bf16.mxu0 0
      %582 = vmatmul.mubr.bf16.gmra.mrb[0].mxu0 %v520
      %v583 = vpop.f32.mrb[0].mxu0
      %v584 = vadd.f32 0.0, %v583
      %v585 = vpop.f32.mrb[0].mxu0
      %v586 = vpop.f32.mrb[0].mxu0
      %v587 = vadd.f32 0.0, %v586
      %v588 = vpop.f32.mrb[0].mxu0
      %589 = vmatprep.mubr.bf16.mxu0 0
      %590 = vmatmul.mubr.bf16.gmra.mrb[0].mxu0 %v523
      %v591 = vpop.f32.mrb[0].mxu0
      %v592 = vadd.f32 0.0, %v591
      %v593 = vpop.f32.mrb[0].mxu0
      %v594 = vpop.f32.mrb[0].mxu0
      %v595 = vpop.f32.mrb[0].mxu0
      %596 = vdwg.mxu0
      %v597 = vadd.f32 %v440, %v560
      %v598 = vadd.f32 %v443, %v563
      %v599 = vadd.f32 %v448, %v568
      %v600 = vadd.f32 %v451, %v571
      %v601 = vadd.f32 %v456, %v576
      %v602 = vadd.f32 %v459, %v579
      %v603 = vadd.f32 %v464, %v584
      %v604 = vadd.f32 %v467, %v587
      %v605 = vadd.f32 %v472, %v592
      %s606 = scalar_lea.vmem %s1, 48
      %v607 = vld [vmem:[%s606] sm:$0xf]
      %v608 = vld [vmem:[%s606 + $0x4] sm:$0xf]
      %v609 = vld [vmem:[%s606 + $0x8] sm:$0xf]
      %v610 = vld [vmem:[%s606 + $0xc] sm:$0xf]
      %vm611 = vsmask.f32 6400
      %v612 = vrot.slane %v255, 1
      %v613 = vrot.slane %v251, 2
      %v614 = vor.u32 %v612, %v613
      %v615 = vrot.slane %v263, 1
      %v616 = vrot.slane %v259, 2
      %v617 = vor.u32 %v615, %v616
      %v618 = vsel %vm611, %v614, %v617
      %v619 = vrot.slane %v271, 1
      %v620 = vrot.slane %v267, 2
      %v621 = vor.u32 %v619, %v620
      %v622 = vsel %vm611, %v617, %v621
      %v623 = vrot.slane %v279, 1
      %v624 = vrot.slane %v275, 2
      %v625 = vor.u32 %v623, %v624
      %v626 = vsel %vm611, %v621, %v625
      %v628 = vshrl.u32 %v477, 16
      %v630 = vrot.slane %v628, 1
      %v631 = vshll.u32 %v477, 16
      %v633 = vrot.slane %v631, 2
      %v634 = vor.u32 %v630, %v633
      %v635 = vsel %vm611, %v625, %v634
      %v640 = vunpack.c.l.b16 %v607
      %v641 = vunpack.c.l.b16 %v608
      %v642 = vunpack.c.l.b16 %v609
      %v643 = vunpack.c.l.b16 %v610
      %v644 = vpack.c.b16 %v641, %v640
      %v645 = vpack.c.b16 %v643, %v642
      %v649 = vsel %vm294, %v618, 0
      %v652 = vsel %vm294, %v622, 0
      %v655 = vsel %vm294, %v626, 0
      %v658 = vsel %vm294, %v635, 0
      %v661 = vsel %vm294, %v634, 0
      %663 = vmatprep.subr.bf16.mxu0 0
      %664 = vmatpush1.bf16.msra.mxu0 %v644
      %665 = vmatprep.subr.bf16.mxu0 0
      %666 = vmatpush1.bf16.msra.mxu0 %v645
      %667 = vmatprep.subr.bf16.mxu0 0
      %668 = vmatpush1.bf16.msra.mxu0 0
      %669 = vmatprep.subr.bf16.mxu0 0
      %670 = vmatpush1.bf16.msra.mxu0 0
      %671 = vmatprep.subr.bf16.mxu0 0
      %672 = vmatpush1.bf16.msra.mxu0 0
      %673 = vmatprep.subr.bf16.mxu0 0
      %674 = vmatpush1.bf16.msra.mxu0 0
      %675 = vmatprep.subr.bf16.mxu0 0
      %676 = vmatpush1.bf16.msra.mxu0 0
      %677 = vmatprep.subr.bf16.mxu0 0
      %678 = vmatpush1.bf16.msra.mxu0 0
      %679 = vmatprep.subr.bf16.mxu0 0
      %680 = vmatpush1.bf16.msra.mxu0 0
      %681 = vmatprep.subr.bf16.mxu0 0
      %682 = vmatpush1.bf16.msra.mxu0 0
      %683 = vmatprep.subr.bf16.mxu0 0
      %684 = vmatpush1.bf16.msra.mxu0 0
      %685 = vmatprep.subr.bf16.mxu0 0
      %686 = vmatpush1.bf16.msra.mxu0 0
      %687 = vmatprep.subr.bf16.mxu0 0
      %688 = vmatpush1.bf16.msra.mxu0 0
      %689 = vmatprep.subr.bf16.mxu0 0
      %690 = vmatpush1.bf16.msra.mxu0 0
      %691 = vmatprep.subr.bf16.mxu0 0
      %692 = vmatpush1.bf16.msra.mxu0 0
      %693 = vmatprep.subr.bf16.mxu0 0
      %694 = vmatpush1.bf16.msra.mxu0 0
      %695 = vmatprep.mubr.bf16.mxu0 0
      %696 = vmatmul.mubr.bf16.gmra.mrb[0].mxu0 %v649
      %v697 = vpop.f32.mrb[0].mxu0
      %v698 = vadd.f32 0.0, %v697
      %v699 = vpop.f32.mrb[0].mxu0
      %v700 = vpop.f32.mrb[0].mxu0
      %v701 = vadd.f32 0.0, %v700
      %v702 = vpop.f32.mrb[0].mxu0
      %703 = vmatprep.mubr.bf16.mxu0 0
      %704 = vmatmul.mubr.bf16.gmra.mrb[0].mxu0 %v652
      %v705 = vpop.f32.mrb[0].mxu0
      %v706 = vadd.f32 0.0, %v705
      %v707 = vpop.f32.mrb[0].mxu0
      %v708 = vpop.f32.mrb[0].mxu0
      %v709 = vadd.f32 0.0, %v708
      %v710 = vpop.f32.mrb[0].mxu0
      %711 = vmatprep.mubr.bf16.mxu0 0
      %712 = vmatmul.mubr.bf16.gmra.mrb[0].mxu0 %v655
      %v713 = vpop.f32.mrb[0].mxu0
      %v714 = vadd.f32 0.0, %v713
      %v715 = vpop.f32.mrb[0].mxu0
      %v716 = vpop.f32.mrb[0].mxu0
      %v717 = vadd.f32 0.0, %v716
      %v718 = vpop.f32.mrb[0].mxu0
      %719 = vmatprep.mubr.bf16.mxu0 0
      %720 = vmatmul.mubr.bf16.gmra.mrb[0].mxu0 %v658
      %v721 = vpop.f32.mrb[0].mxu0
      %v722 = vadd.f32 0.0, %v721
      %v723 = vpop.f32.mrb[0].mxu0
      %v724 = vpop.f32.mrb[0].mxu0
      %v725 = vadd.f32 0.0, %v724
      %v726 = vpop.f32.mrb[0].mxu0
      %727 = vmatprep.mubr.bf16.mxu0 0
      %728 = vmatmul.mubr.bf16.gmra.mrb[0].mxu0 %v661
      %v729 = vpop.f32.mrb[0].mxu0
      %v730 = vadd.f32 0.0, %v729
      %v731 = vpop.f32.mrb[0].mxu0
      %v732 = vpop.f32.mrb[0].mxu0
      %v733 = vpop.f32.mrb[0].mxu0
      %734 = vdwg.mxu0
      %v735 = vadd.f32 %v597, %v698
      %v736 = vadd.f32 %v598, %v701
      %v737 = vadd.f32 %v599, %v706
      %v738 = vadd.f32 %v600, %v709
      %v739 = vadd.f32 %v601, %v714
      %v740 = vadd.f32 %v602, %v717
      %v741 = vadd.f32 %v603, %v722
      %v742 = vadd.f32 %v604, %v725
      %v743 = vadd.f32 %v605, %v730
      %v744 = vpack.c.bf16 %v226, %v225
      %s745 = scalar_lea.vmem %s1, 64
      %v746 = vld [vmem:[%s745] sm:$0xf]
      %v747 = vld [vmem:[%s745 + $0x4] sm:$0xf]
      %v748 = vld [vmem:[%s745 + $0x8] sm:$0xf]
      %v749 = vld [vmem:[%s745 + $0xc] sm:$0xf]
      %vm751 = vcmask 1045504
      %v752 = vrot.slane %v229, 2
      %v753 = vrot.slane %v230, 2
      %v754 = vsel %vm751, %v752, %v753
      %v755 = vrot.slane %v236, 2
      %v756 = vsel %vm751, %v753, %v755
      %v757 = vrot.slane %v477, 2
      %v758 = vsel %vm751, %v755, %v757
      %v759 = vrot.slane %v744, 2
      %v760 = vsel %vm751, %v757, %v759
      %v765 = vunpack.c.l.b16 %v746
      %v766 = vunpack.c.l.b16 %v747
      %v767 = vunpack.c.l.b16 %v748
      %v768 = vunpack.c.l.b16 %v749
      %v769 = vpack.c.b16 %v766, %v765
      %v770 = vpack.c.b16 %v768, %v767
      %v774 = vsel %vm294, %v754, 0
      %v777 = vsel %vm294, %v756, 0
      %v780 = vsel %vm294, %v758, 0
      %v783 = vsel %vm294, %v760, 0
      %v786 = vsel %vm294, %v759, 0
      %788 = vmatprep.subr.bf16.mxu0 0
      %789 = vmatpush1.bf16.msra.mxu0 %v769
      %790 = vmatprep.subr.bf16.mxu0 0
      %791 = vmatpush1.bf16.msra.mxu0 %v770
      %792 = vmatprep.subr.bf16.mxu0 0
      %793 = vmatpush1.bf16.msra.mxu0 0
      %794 = vmatprep.subr.bf16.mxu0 0
      %795 = vmatpush1.bf16.msra.mxu0 0
      %796 = vmatprep.subr.bf16.mxu0 0
      %797 = vmatpush1.bf16.msra.mxu0 0
      %798 = vmatprep.subr.bf16.mxu0 0
      %799 = vmatpush1.bf16.msra.mxu0 0
      %800 = vmatprep.subr.bf16.mxu0 0
      %801 = vmatpush1.bf16.msra.mxu0 0
      %802 = vmatprep.subr.bf16.mxu0 0
      %803 = vmatpush1.bf16.msra.mxu0 0
      %804 = vmatprep.subr.bf16.mxu0 0
      %805 = vmatpush1.bf16.msra.mxu0 0
      %806 = vmatprep.subr.bf16.mxu0 0
      %807 = vmatpush1.bf16.msra.mxu0 0
      %808 = vmatprep.subr.bf16.mxu0 0
      %809 = vmatpush1.bf16.msra.mxu0 0
      %810 = vmatprep.subr.bf16.mxu0 0
      %811 = vmatpush1.bf16.msra.mxu0 0
      %812 = vmatprep.subr.bf16.mxu0 0
      %813 = vmatpush1.bf16.msra.mxu0 0
      %814 = vmatprep.subr.bf16.mxu0 0
      %815 = vmatpush1.bf16.msra.mxu0 0
      %816 = vmatprep.subr.bf16.mxu0 0
      %817 = vmatpush1.bf16.msra.mxu0 0
      %818 = vmatprep.subr.bf16.mxu0 0
      %819 = vmatpush1.bf16.msra.mxu0 0
      %820 = vmatprep.mubr.bf16.mxu0 0
      %821 = vmatmul.mubr.bf16.gmra.mrb[0].mxu0 %v774
      %v822 = vpop.f32.mrb[0].mxu0
      %v823 = vadd.f32 0.0, %v822
      %v824 = vpop.f32.mrb[0].mxu0
      %v825 = vpop.f32.mrb[0].mxu0
      %v826 = vadd.f32 0.0, %v825
      %v827 = vpop.f32.mrb[0].mxu0
      %828 = vmatprep.mubr.bf16.mxu0 0
      %829 = vmatmul.mubr.bf16.gmra.mrb[0].mxu0 %v777
      %v830 = vpop.f32.mrb[0].mxu0
      %v831 = vadd.f32 0.0, %v830
      %v832 = vpop.f32.mrb[0].mxu0
      %v833 = vpop.f32.mrb[0].mxu0
      %v834 = vadd.f32 0.0, %v833
      %v835 = vpop.f32.mrb[0].mxu0
      %836 = vmatprep.mubr.bf16.mxu0 0
      %837 = vmatmul.mubr.bf16.gmra.mrb[0].mxu0 %v780
      %v838 = vpop.f32.mrb[0].mxu0
      %v839 = vadd.f32 0.0, %v838
      %v840 = vpop.f32.mrb[0].mxu0
      %v841 = vpop.f32.mrb[0].mxu0
      %v842 = vadd.f32 0.0, %v841
      %v843 = vpop.f32.mrb[0].mxu0
      %844 = vmatprep.mubr.bf16.mxu0 0
      %845 = vmatmul.mubr.bf16.gmra.mrb[0].mxu0 %v783
      %v846 = vpop.f32.mrb[0].mxu0
      %v847 = vadd.f32 0.0, %v846
      %v848 = vpop.f32.mrb[0].mxu0
      %v849 = vpop.f32.mrb[0].mxu0
      %v850 = vadd.f32 0.0, %v849
      %v851 = vpop.f32.mrb[0].mxu0
      %852 = vmatprep.mubr.bf16.mxu0 0
      %853 = vmatmul.mubr.bf16.gmra.mrb[0].mxu0 %v786
      %v854 = vpop.f32.mrb[0].mxu0
      %v855 = vadd.f32 0.0, %v854
      %v856 = vpop.f32.mrb[0].mxu0
      %v857 = vpop.f32.mrb[0].mxu0
      %v858 = vpop.f32.mrb[0].mxu0
      %859 = vdwg.mxu0
      %v860 = vadd.f32 %v735, %v823
      %v861 = vadd.f32 %v736, %v826
      %v862 = vadd.f32 %v737, %v831
      %v863 = vadd.f32 %v738, %v834
      %v864 = vadd.f32 %v739, %v839
      %v865 = vadd.f32 %v740, %v842
      %v866 = vadd.f32 %v741, %v847
      %v867 = vadd.f32 %v742, %v850
      %v868 = vadd.f32 %v743, %v855
      %s869 = scalar_lea.vmem %s1, 80
      %v870 = vld [vmem:[%s869] sm:$0xf]
      %v871 = vld [vmem:[%s869 + $0x4] sm:$0xf]
      %v872 = vld [vmem:[%s869 + $0x8] sm:$0xf]
      %v873 = vld [vmem:[%s869 + $0xc] sm:$0xf]
      %vm874 = vsmask.f32 5376
      %v875 = vrot.slane %v263, 2
      %v876 = vrot.slane %v259, 3
      %v877 = vor.u32 %v875, %v876
      %v878 = vrot.slane %v271, 2
      %v879 = vrot.slane %v267, 3
      %v880 = vor.u32 %v878, %v879
      %v881 = vsel %vm874, %v877, %v880
      %v882 = vrot.slane %v279, 2
      %v883 = vrot.slane %v275, 3
      %v884 = vor.u32 %v882, %v883
      %v885 = vsel %vm874, %v880, %v884
      %v886 = vrot.slane %v628, 2
      %v887 = vrot.slane %v631, 3
      %v888 = vor.u32 %v886, %v887
      %v889 = vsel %vm874, %v884, %v888
      %v891 = vshrl.u32 %v744, 16
      %v893 = vrot.slane %v891, 2
      %v894 = vshll.u32 %v744, 16
      %v896 = vrot.slane %v894, 3
      %v897 = vor.u32 %v893, %v896
      %v898 = vsel %vm874, %v888, %v897
      %v903 = vunpack.c.l.b16 %v870
      %v904 = vunpack.c.l.b16 %v871
      %v905 = vunpack.c.l.b16 %v872
      %v906 = vunpack.c.l.b16 %v873
      %v907 = vpack.c.b16 %v904, %v903
      %v908 = vpack.c.b16 %v906, %v905
      %v912 = vsel %vm294, %v881, 0
      %v915 = vsel %vm294, %v885, 0
      %v918 = vsel %vm294, %v889, 0
      %v921 = vsel %vm294, %v898, 0
      %v924 = vsel %vm294, %v897, 0
      %926 = vmatprep.subr.bf16.mxu0 0
      %927 = vmatpush1.bf16.msra.mxu0 %v907
      %928 = vmatprep.subr.bf16.mxu0 0
      %929 = vmatpush1.bf16.msra.mxu0 %v908
      %930 = vmatprep.subr.bf16.mxu0 0
      %931 = vmatpush1.bf16.msra.mxu0 0
      %932 = vmatprep.subr.bf16.mxu0 0
      %933 = vmatpush1.bf16.msra.mxu0 0
      %934 = vmatprep.subr.bf16.mxu0 0
      %935 = vmatpush1.bf16.msra.mxu0 0
      %936 = vmatprep.subr.bf16.mxu0 0
      %937 = vmatpush1.bf16.msra.mxu0 0
      %938 = vmatprep.subr.bf16.mxu0 0
      %939 = vmatpush1.bf16.msra.mxu0 0
      %940 = vmatprep.subr.bf16.mxu0 0
      %941 = vmatpush1.bf16.msra.mxu0 0
      %942 = vmatprep.subr.bf16.mxu0 0
      %943 = vmatpush1.bf16.msra.mxu0 0
      %944 = vmatprep.subr.bf16.mxu0 0
      %945 = vmatpush1.bf16.msra.mxu0 0
      %946 = vmatprep.subr.bf16.mxu0 0
      %947 = vmatpush1.bf16.msra.mxu0 0
      %948 = vmatprep.subr.bf16.mxu0 0
      %949 = vmatpush1.bf16.msra.mxu0 0
      %950 = vmatprep.subr.bf16.mxu0 0
      %951 = vmatpush1.bf16.msra.mxu0 0
      %952 = vmatprep.subr.bf16.mxu0 0
      %953 = vmatpush1.bf16.msra.mxu0 0
      %954 = vmatprep.subr.bf16.mxu0 0
      %955 = vmatpush1.bf16.msra.mxu0 0
      %956 = vmatprep.subr.bf16.mxu0 0
      %957 = vmatpush1.bf16.msra.mxu0 0
      %958 = vmatprep.mubr.bf16.mxu0 0
      %959 = vmatmul.mubr.bf16.gmra.mrb[0].mxu0 %v912
      %v960 = vpop.f32.mrb[0].mxu0
      %v961 = vadd.f32 0.0, %v960
      %v962 = vpop.f32.mrb[0].mxu0
      %v963 = vpop.f32.mrb[0].mxu0
      %v964 = vadd.f32 0.0, %v963
      %v965 = vpop.f32.mrb[0].mxu0
      %966 = vmatprep.mubr.bf16.mxu0 0
      %967 = vmatmul.mubr.bf16.gmra.mrb[0].mxu0 %v915
      %v968 = vpop.f32.mrb[0].mxu0
      %v969 = vadd.f32 0.0, %v968
      %v970 = vpop.f32.mrb[0].mxu0
      %v971 = vpop.f32.mrb[0].mxu0
      %v972 = vadd.f32 0.0, %v971
      %v973 = vpop.f32.mrb[0].mxu0
      %974 = vmatprep.mubr.bf16.mxu0 0
      %975 = vmatmul.mubr.bf16.gmra.mrb[0].mxu0 %v918
      %v976 = vpop.f32.mrb[0].mxu0
      %v977 = vadd.f32 0.0, %v976
      %v978 = vpop.f32.mrb[0].mxu0
      %v979 = vpop.f32.mrb[0].mxu0
      %v980 = vadd.f32 0.0, %v979
      %v981 = vpop.f32.mrb[0].mxu0
      %982 = vmatprep.mubr.bf16.mxu0 0
      %983 = vmatmul.mubr.bf16.gmra.mrb[0].mxu0 %v921
      %v984 = vpop.f32.mrb[0].mxu0
      %v985 = vadd.f32 0.0, %v984
      %v986 = vpop.f32.mrb[0].mxu0
      %v987 = vpop.f32.mrb[0].mxu0
      %v988 = vadd.f32 0.0, %v987
      %v989 = vpop.f32.mrb[0].mxu0
      %990 = vmatprep.mubr.bf16.mxu0 0
      %991 = vmatmul.mubr.bf16.gmra.mrb[0].mxu0 %v924
      %v992 = vpop.f32.mrb[0].mxu0
      %v993 = vadd.f32 0.0, %v992
      %v994 = vpop.f32.mrb[0].mxu0
      %v995 = vpop.f32.mrb[0].mxu0
      %v996 = vpop.f32.mrb[0].mxu0
      %997 = vdwg.mxu0
      %v998 = vadd.f32 %v860, %v961
      %v999 = vadd.f32 %v861, %v964
      %v1000 = vadd.f32 %v862, %v969
      %v1001 = vadd.f32 %v863, %v972
      %v1002 = vadd.f32 %v864, %v977
      %v1003 = vadd.f32 %v865, %v980
      %v1004 = vadd.f32 %v866, %v985
      %v1005 = vadd.f32 %v867, %v988
      %v1006 = vadd.f32 %v868, %v993
      %v1008 = vlaneseq
      %v1009 = vshrl.u32 %v1008, 7
      %v1010 = vsub.s32 0, %v1009
      %v1011 = vrot.slane %v212, %v1010
      %v1013 = vadd.f32 %v998, %v1011
      %v1014 = vadd.f32 %v999, %v1011
      %v1015 = vadd.f32 %v1000, %v1011
      %v1016 = vadd.f32 %v1001, %v1011
      %v1017 = vadd.f32 %v1002, %v1011
      %v1018 = vadd.f32 %v1003, %v1011
      %v1019 = vadd.f32 %v1004, %v1011
      %v1020 = vadd.f32 %v1005, %v1011
      %v1021 = vadd.f32 %v1006, %v1011
      %vm1022 = vcmask 31744
      %1023 = vst.msk [vmem:[%s205] sm:$0xff] %vm1022, %v1013
      %1024 = vst.msk [vmem:[%s205 + $0x8] sm:$0xff] %vm1022, %v1014
      %1025 = vst.msk [vmem:[%s205 + $0x10] sm:$0xff] %vm1022, %v1015
      %1026 = vst.msk [vmem:[%s205 + $0x18] sm:$0xff] %vm1022, %v1016
      %1027 = vst.msk [vmem:[%s205 + $0x20] sm:$0xff] %vm1022, %v1017
      %1028 = vst.msk [vmem:[%s205 + $0x28] sm:$0xff] %vm1022, %v1018
      %1029 = vst.msk [vmem:[%s205 + $0x30] sm:$0xff] %vm1022, %v1019
      %1030 = vst.msk [vmem:[%s205 + $0x38] sm:$0xff] %vm1022, %v1020
      %1031 = vst.msk [vmem:[%s205 + $0x40] sm:$0xff] %vm1022, %v1021
      %s1032 = scalar_lea.vmem %s1, 96
      %v1033 = vld [vmem:[%s1032] sm:$0xf]
      %v1034 = vld [vmem:[%s1032 + $0x4] sm:$0xf]
      %v1035 = vld [vmem:[%s1032 + $0x8] sm:$0xf]
      %v1036 = vld [vmem:[%s1032 + $0xc] sm:$0xf]
      %s1037 = scalar_lea.vmem %s1, 112
      %v1038 = vld [vmem:[%s1037] sm:$0xf]
      %v1039 = vld [vmem:[%s1037 + $0x4] sm:$0xf]
      %v1040 = vld [vmem:[%s1037 + $0x8] sm:$0xf]
      %v1041 = vld [vmem:[%s1037 + $0xc] sm:$0xf]
      %v1043 = vrot.slane %v227, 1
      %v1044 = vsel %vm488, %v1043, %v489
      %v1049 = vunpack.c.l.b16 %v1038
      %v1050 = vunpack.c.l.b16 %v1039
      %v1051 = vunpack.c.l.b16 %v1040
      %v1052 = vunpack.c.l.b16 %v1041
      %v1053 = vpack.c.b16 %v1050, %v1049
      %v1054 = vpack.c.b16 %v1052, %v1051
      %v1058 = vsel %vm294, %v1044, 0
      %v1061 = vsel %vm294, %v494, 0
      %1063 = vmatprep.subr.bf16.mxu0 0
      %1064 = vmatpush1.bf16.msra.mxu0 %v1053
      %1065 = vmatprep.subr.bf16.mxu0 0
      %1066 = vmatpush1.bf16.msra.mxu0 %v1054
      %1067 = vmatprep.subr.bf16.mxu0 0
      %1068 = vmatpush1.bf16.msra.mxu0 0
      %1069 = vmatprep.subr.bf16.mxu0 0
      %1070 = vmatpush1.bf16.msra.mxu0 0
      %1071 = vmatprep.subr.bf16.mxu0 0
      %1072 = vmatpush1.bf16.msra.mxu0 0
      %1073 = vmatprep.subr.bf16.mxu0 0
      %1074 = vmatpush1.bf16.msra.mxu0 0
      %1075 = vmatprep.subr.bf16.mxu0 0
      %1076 = vmatpush1.bf16.msra.mxu0 0
      %1077 = vmatprep.subr.bf16.mxu0 0
      %1078 = vmatpush1.bf16.msra.mxu0 0
      %1079 = vmatprep.subr.bf16.mxu0 0
      %1080 = vmatpush1.bf16.msra.mxu0 0
      %1081 = vmatprep.subr.bf16.mxu0 0
      %1082 = vmatpush1.bf16.msra.mxu0 0
      %1083 = vmatprep.subr.bf16.mxu0 0
      %1084 = vmatpush1.bf16.msra.mxu0 0
      %1085 = vmatprep.subr.bf16.mxu0 0
      %1086 = vmatpush1.bf16.msra.mxu0 0
      %1087 = vmatprep.subr.bf16.mxu0 0
      %1088 = vmatpush1.bf16.msra.mxu0 0
      %1089 = vmatprep.subr.bf16.mxu0 0
      %1090 = vmatpush1.bf16.msra.mxu0 0
      %1091 = vmatprep.subr.bf16.mxu0 0
      %1092 = vmatpush1.bf16.msra.mxu0 0
      %1093 = vmatprep.subr.bf16.mxu0 0
      %1094 = vmatpush1.bf16.msra.mxu0 0
      %1095 = vmatprep.mubr.bf16.mxu0 0
      %1096 = vmatmul.mubr.bf16.gmra.mrb[0].mxu0 %v1058
      %v1097 = vpop.f32.mrb[0].mxu0
      %v1098 = vadd.f32 0.0, %v1097
      %v1099 = vpop.f32.mrb[0].mxu0
      %v1100 = vpop.f32.mrb[0].mxu0
      %v1101 = vadd.f32 0.0, %v1100
      %v1102 = vpop.f32.mrb[0].mxu0
      %1103 = vmatprep.mubr.bf16.mxu0 0
      %1104 = vmatmul.mubr.bf16.gmra.mrb[0].mxu0 %v511
      %v1105 = vpop.f32.mrb[0].mxu0
      %v1106 = vadd.f32 0.0, %v1105
      %v1107 = vpop.f32.mrb[0].mxu0
      %v1108 = vpop.f32.mrb[0].mxu0
      %v1109 = vadd.f32 0.0, %v1108
      %v1110 = vpop.f32.mrb[0].mxu0
      %1111 = vmatprep.mubr.bf16.mxu0 0
      %1112 = vmatmul.mubr.bf16.gmra.mrb[0].mxu0 %v514
      %v1113 = vpop.f32.mrb[0].mxu0
      %v1114 = vadd.f32 0.0, %v1113
      %v1115 = vpop.f32.mrb[0].mxu0
      %v1116 = vpop.f32.mrb[0].mxu0
      %v1117 = vadd.f32 0.0, %v1116
      %v1118 = vpop.f32.mrb[0].mxu0
      %1119 = vmatprep.mubr.bf16.mxu0 0
      %1120 = vmatmul.mubr.bf16.gmra.mrb[0].mxu0 %v517
      %v1121 = vpop.f32.mrb[0].mxu0
      %v1122 = vadd.f32 0.0, %v1121
      %v1123 = vpop.f32.mrb[0].mxu0
      %v1124 = vpop.f32.mrb[0].mxu0
      %v1125 = vadd.f32 0.0, %v1124
      %v1126 = vpop.f32.mrb[0].mxu0
      %1127 = vmatprep.mubr.bf16.mxu0 0
      %1128 = vmatmul.mubr.bf16.gmra.mrb[0].mxu0 %v1061
      %v1129 = vpop.f32.mrb[0].mxu0
      %v1130 = vadd.f32 0.0, %v1129
      %v1131 = vpop.f32.mrb[0].mxu0
      %v1132 = vpop.f32.mrb[0].mxu0
      %v1133 = vpop.f32.mrb[0].mxu0
      %1134 = vdwg.mxu0
      %v1139 = vunpack.c.l.b16 %v1033
      %v1140 = vunpack.c.l.b16 %v1034
      %v1141 = vunpack.c.l.b16 %v1035
      %v1142 = vunpack.c.l.b16 %v1036
      %v1143 = vpack.c.b16 %v1140, %v1139
      %v1144 = vpack.c.b16 %v1142, %v1141
      %1147 = vmatprep.subr.bf16.mxu0 0
      %1148 = vmatpush1.bf16.msra.mxu0 %v1143
      %1149 = vmatprep.subr.bf16.mxu0 0
      %1150 = vmatpush1.bf16.msra.mxu0 %v1144
      %1151 = vmatprep.subr.bf16.mxu0 0
      %1152 = vmatpush1.bf16.msra.mxu0 0
      %1153 = vmatprep.subr.bf16.mxu0 0
      %1154 = vmatpush1.bf16.msra.mxu0 0
      %1155 = vmatprep.subr.bf16.mxu0 0
      %1156 = vmatpush1.bf16.msra.mxu0 0
      %1157 = vmatprep.subr.bf16.mxu0 0
      %1158 = vmatpush1.bf16.msra.mxu0 0
      %1159 = vmatprep.subr.bf16.mxu0 0
      %1160 = vmatpush1.bf16.msra.mxu0 0
      %1161 = vmatprep.subr.bf16.mxu0 0
      %1162 = vmatpush1.bf16.msra.mxu0 0
      %1163 = vmatprep.subr.bf16.mxu0 0
      %1164 = vmatpush1.bf16.msra.mxu0 0
      %1165 = vmatprep.subr.bf16.mxu0 0
      %1166 = vmatpush1.bf16.msra.mxu0 0
      %1167 = vmatprep.subr.bf16.mxu0 0
      %1168 = vmatpush1.bf16.msra.mxu0 0
      %1169 = vmatprep.subr.bf16.mxu0 0
      %1170 = vmatpush1.bf16.msra.mxu0 0
      %1171 = vmatprep.subr.bf16.mxu0 0
      %1172 = vmatpush1.bf16.msra.mxu0 0
      %1173 = vmatprep.subr.bf16.mxu0 0
      %1174 = vmatpush1.bf16.msra.mxu0 0
      %1175 = vmatprep.subr.bf16.mxu0 0
      %1176 = vmatpush1.bf16.msra.mxu0 0
      %1177 = vmatprep.subr.bf16.mxu0 0
      %1178 = vmatpush1.bf16.msra.mxu0 0
      %1179 = vmatprep.mubr.bf16.mxu0 0
      %1180 = vmatmul.mubr.bf16.gmra.mrb[0].mxu0 %v296
      %v1181 = vpop.f32.mrb[0].mxu0
      %v1182 = vadd.f32 %v1098, %v1181
      %v1183 = vpop.f32.mrb[0].mxu0
      %v1184 = vpop.f32.mrb[0].mxu0
      %v1185 = vadd.f32 %v1101, %v1184
      %v1186 = vpop.f32.mrb[0].mxu0
      %1187 = vmatprep.mubr.bf16.mxu0 0
      %1188 = vmatmul.mubr.bf16.gmra.mrb[0].mxu0 %v299
      %v1189 = vpop.f32.mrb[0].mxu0
      %v1190 = vadd.f32 %v1106, %v1189
      %v1191 = vpop.f32.mrb[0].mxu0
      %v1192 = vpop.f32.mrb[0].mxu0
      %v1193 = vadd.f32 %v1109, %v1192
      %v1194 = vpop.f32.mrb[0].mxu0
      %1195 = vmatprep.mubr.bf16.mxu0 0
      %1196 = vmatmul.mubr.bf16.gmra.mrb[0].mxu0 %v302
      %v1197 = vpop.f32.mrb[0].mxu0
      %v1198 = vadd.f32 %v1114, %v1197
      %v1199 = vpop.f32.mrb[0].mxu0
      %v1200 = vpop.f32.mrb[0].mxu0
      %v1201 = vadd.f32 %v1117, %v1200
      %v1202 = vpop.f32.mrb[0].mxu0
      %1203 = vmatprep.mubr.bf16.mxu0 0
      %1204 = vmatmul.mubr.bf16.gmra.mrb[0].mxu0 %v305
      %v1205 = vpop.f32.mrb[0].mxu0
      %v1206 = vadd.f32 %v1122, %v1205
      %v1207 = vpop.f32.mrb[0].mxu0
      %v1208 = vpop.f32.mrb[0].mxu0
      %v1209 = vadd.f32 %v1125, %v1208
      %v1210 = vpop.f32.mrb[0].mxu0
      %1211 = vmatprep.mubr.bf16.mxu0 0
      %1212 = vmatmul.mubr.bf16.gmra.mrb[0].mxu0 %v308
      %v1213 = vpop.f32.mrb[0].mxu0
      %v1214 = vadd.f32 %v1130, %v1213
      %v1215 = vpop.f32.mrb[0].mxu0
      %v1216 = vpop.f32.mrb[0].mxu0
      %v1217 = vpop.f32.mrb[0].mxu0
      %1218 = vdwg.mxu0
      %s1219 = scalar_lea.vmem %s1, 128
      %v1220 = vld [vmem:[%s1219] sm:$0xf]
      %v1221 = vld [vmem:[%s1219 + $0x4] sm:$0xf]
      %v1222 = vld [vmem:[%s1219 + $0x8] sm:$0xf]
      %v1223 = vld [vmem:[%s1219 + $0xc] sm:$0xf]
      %v1228 = vunpack.c.l.b16 %v1220
      %v1229 = vunpack.c.l.b16 %v1221
      %v1230 = vunpack.c.l.b16 %v1222
      %v1231 = vunpack.c.l.b16 %v1223
      %v1232 = vpack.c.b16 %v1229, %v1228
      %v1233 = vpack.c.b16 %v1231, %v1230
      %1236 = vmatprep.subr.bf16.mxu0 0
      %1237 = vmatpush1.bf16.msra.mxu0 %v1232
      %1238 = vmatprep.subr.bf16.mxu0 0
      %1239 = vmatpush1.bf16.msra.mxu0 %v1233
      %1240 = vmatprep.subr.bf16.mxu0 0
      %1241 = vmatpush1.bf16.msra.mxu0 0
      %1242 = vmatprep.subr.bf16.mxu0 0
      %1243 = vmatpush1.bf16.msra.mxu0 0
      %1244 = vmatprep.subr.bf16.mxu0 0
      %1245 = vmatpush1.bf16.msra.mxu0 0
      %1246 = vmatprep.subr.bf16.mxu0 0
      %1247 = vmatpush1.bf16.msra.mxu0 0
      %1248 = vmatprep.subr.bf16.mxu0 0
      %1249 = vmatpush1.bf16.msra.mxu0 0
      %1250 = vmatprep.subr.bf16.mxu0 0
      %1251 = vmatpush1.bf16.msra.mxu0 0
      %1252 = vmatprep.subr.bf16.mxu0 0
      %1253 = vmatpush1.bf16.msra.mxu0 0
      %1254 = vmatprep.subr.bf16.mxu0 0
      %1255 = vmatpush1.bf16.msra.mxu0 0
      %1256 = vmatprep.subr.bf16.mxu0 0
      %1257 = vmatpush1.bf16.msra.mxu0 0
      %1258 = vmatprep.subr.bf16.mxu0 0
      %1259 = vmatpush1.bf16.msra.mxu0 0
      %1260 = vmatprep.subr.bf16.mxu0 0
      %1261 = vmatpush1.bf16.msra.mxu0 0
      %1262 = vmatprep.subr.bf16.mxu0 0
      %1263 = vmatpush1.bf16.msra.mxu0 0
      %1264 = vmatprep.subr.bf16.mxu0 0
      %1265 = vmatpush1.bf16.msra.mxu0 0
      %1266 = vmatprep.subr.bf16.mxu0 0
      %1267 = vmatpush1.bf16.msra.mxu0 0
      %1268 = vmatprep.mubr.bf16.mxu0 0
      %1269 = vmatmul.mubr.bf16.gmra.mrb[0].mxu0 %v649
      %v1270 = vpop.f32.mrb[0].mxu0
      %v1271 = vadd.f32 0.0, %v1270
      %v1272 = vpop.f32.mrb[0].mxu0
      %v1273 = vpop.f32.mrb[0].mxu0
      %v1274 = vadd.f32 0.0, %v1273
      %v1275 = vpop.f32.mrb[0].mxu0
      %1276 = vmatprep.mubr.bf16.mxu0 0
      %1277 = vmatmul.mubr.bf16.gmra.mrb[0].mxu0 %v652
      %v1278 = vpop.f32.mrb[0].mxu0
      %v1279 = vadd.f32 0.0, %v1278
      %v1280 = vpop.f32.mrb[0].mxu0
      %v1281 = vpop.f32.mrb[0].mxu0
      %v1282 = vadd.f32 0.0, %v1281
      %v1283 = vpop.f32.mrb[0].mxu0
      %1284 = vmatprep.mubr.bf16.mxu0 0
      %1285 = vmatmul.mubr.bf16.gmra.mrb[0].mxu0 %v655
      %v1286 = vpop.f32.mrb[0].mxu0
      %v1287 = vadd.f32 0.0, %v1286
      %v1288 = vpop.f32.mrb[0].mxu0
      %v1289 = vpop.f32.mrb[0].mxu0
      %v1290 = vadd.f32 0.0, %v1289
      %v1291 = vpop.f32.mrb[0].mxu0
      %1292 = vmatprep.mubr.bf16.mxu0 0
      %1293 = vmatmul.mubr.bf16.gmra.mrb[0].mxu0 %v658
      %v1294 = vpop.f32.mrb[0].mxu0
      %v1295 = vadd.f32 0.0, %v1294
      %v1296 = vpop.f32.mrb[0].mxu0
      %v1297 = vpop.f32.mrb[0].mxu0
      %v1298 = vadd.f32 0.0, %v1297
      %v1299 = vpop.f32.mrb[0].mxu0
      %1300 = vmatprep.mubr.bf16.mxu0 0
      %1301 = vmatmul.mubr.bf16.gmra.mrb[0].mxu0 %v661
      %v1302 = vpop.f32.mrb[0].mxu0
      %v1303 = vadd.f32 0.0, %v1302
      %v1304 = vpop.f32.mrb[0].mxu0
      %v1305 = vpop.f32.mrb[0].mxu0
      %v1306 = vpop.f32.mrb[0].mxu0
      %1307 = vdwg.mxu0
      %v1308 = vadd.f32 %v1182, %v1271
      %v1309 = vadd.f32 %v1185, %v1274
      %v1310 = vadd.f32 %v1190, %v1279
      %v1311 = vadd.f32 %v1193, %v1282
      %v1312 = vadd.f32 %v1198, %v1287
      %v1313 = vadd.f32 %v1201, %v1290
      %v1314 = vadd.f32 %v1206, %v1295
      %v1315 = vadd.f32 %v1209, %v1298
      %v1316 = vadd.f32 %v1214, %v1303
      %s1317 = scalar_lea.vmem %s1, 144
      %v1318 = vld [vmem:[%s1317] sm:$0xf]
      %v1319 = vld [vmem:[%s1317 + $0x4] sm:$0xf]
      %v1320 = vld [vmem:[%s1317 + $0x8] sm:$0xf]
      %v1321 = vld [vmem:[%s1317 + $0xc] sm:$0xf]
      %v1322 = vrot.slane %v228, 2
      %v1323 = vsel %vm751, %v1322, %v752
      %v1328 = vunpack.c.l.b16 %v1318
      %v1329 = vunpack.c.l.b16 %v1319
      %v1330 = vunpack.c.l.b16 %v1320
      %v1331 = vunpack.c.l.b16 %v1321
      %v1332 = vpack.c.b16 %v1329, %v1328
      %v1333 = vpack.c.b16 %v1331, %v1330
      %v1337 = vsel %vm294, %v1323, 0
      %v1340 = vsel %vm294, %v757, 0
      %1342 = vmatprep.subr.bf16.mxu0 0
      %1343 = vmatpush1.bf16.msra.mxu0 %v1332
      %1344 = vmatprep.subr.bf16.mxu0 0
      %1345 = vmatpush1.bf16.msra.mxu0 %v1333
      %1346 = vmatprep.subr.bf16.mxu0 0
      %1347 = vmatpush1.bf16.msra.mxu0 0
      %1348 = vmatprep.subr.bf16.mxu0 0
      %1349 = vmatpush1.bf16.msra.mxu0 0
      %1350 = vmatprep.subr.bf16.mxu0 0
      %1351 = vmatpush1.bf16.msra.mxu0 0
      %1352 = vmatprep.subr.bf16.mxu0 0
      %1353 = vmatpush1.bf16.msra.mxu0 0
      %1354 = vmatprep.subr.bf16.mxu0 0
      %1355 = vmatpush1.bf16.msra.mxu0 0
      %1356 = vmatprep.subr.bf16.mxu0 0
      %1357 = vmatpush1.bf16.msra.mxu0 0
      %1358 = vmatprep.subr.bf16.mxu0 0
      %1359 = vmatpush1.bf16.msra.mxu0 0
      %1360 = vmatprep.subr.bf16.mxu0 0
      %1361 = vmatpush1.bf16.msra.mxu0 0
      %1362 = vmatprep.subr.bf16.mxu0 0
      %1363 = vmatpush1.bf16.msra.mxu0 0
      %1364 = vmatprep.subr.bf16.mxu0 0
      %1365 = vmatpush1.bf16.msra.mxu0 0
      %1366 = vmatprep.subr.bf16.mxu0 0
      %1367 = vmatpush1.bf16.msra.mxu0 0
      %1368 = vmatprep.subr.bf16.mxu0 0
      %1369 = vmatpush1.bf16.msra.mxu0 0
      %1370 = vmatprep.subr.bf16.mxu0 0
      %1371 = vmatpush1.bf16.msra.mxu0 0
      %1372 = vmatprep.subr.bf16.mxu0 0
      %1373 = vmatpush1.bf16.msra.mxu0 0
      %1374 = vmatprep.mubr.bf16.mxu0 0
      %1375 = vmatmul.mubr.bf16.gmra.mrb[0].mxu0 %v1337
      %v1376 = vpop.f32.mrb[0].mxu0
      %v1377 = vadd.f32 0.0, %v1376
      %v1378 = vpop.f32.mrb[0].mxu0
      %v1379 = vpop.f32.mrb[0].mxu0
      %v1380 = vadd.f32 0.0, %v1379
      %v1381 = vpop.f32.mrb[0].mxu0
      %1382 = vmatprep.mubr.bf16.mxu0 0
      %1383 = vmatmul.mubr.bf16.gmra.mrb[0].mxu0 %v774
      %v1384 = vpop.f32.mrb[0].mxu0
      %v1385 = vadd.f32 0.0, %v1384
      %v1386 = vpop.f32.mrb[0].mxu0
      %v1387 = vpop.f32.mrb[0].mxu0
      %v1388 = vadd.f32 0.0, %v1387
      %v1389 = vpop.f32.mrb[0].mxu0
      %1390 = vmatprep.mubr.bf16.mxu0 0
      %1391 = vmatmul.mubr.bf16.gmra.mrb[0].mxu0 %v777
      %v1392 = vpop.f32.mrb[0].mxu0
      %v1393 = vadd.f32 0.0, %v1392
      %v1394 = vpop.f32.mrb[0].mxu0
      %v1395 = vpop.f32.mrb[0].mxu0
      %v1396 = vadd.f32 0.0, %v1395
      %v1397 = vpop.f32.mrb[0].mxu0
      %1398 = vmatprep.mubr.bf16.mxu0 0
      %1399 = vmatmul.mubr.bf16.gmra.mrb[0].mxu0 %v780
      %v1400 = vpop.f32.mrb[0].mxu0
      %v1401 = vadd.f32 0.0, %v1400
      %v1402 = vpop.f32.mrb[0].mxu0
      %v1403 = vpop.f32.mrb[0].mxu0
      %v1404 = vadd.f32 0.0, %v1403
      %v1405 = vpop.f32.mrb[0].mxu0
      %1406 = vmatprep.mubr.bf16.mxu0 0
      %1407 = vmatmul.mubr.bf16.gmra.mrb[0].mxu0 %v1340
      %v1408 = vpop.f32.mrb[0].mxu0
      %v1409 = vadd.f32 0.0, %v1408
      %v1410 = vpop.f32.mrb[0].mxu0
      %v1411 = vpop.f32.mrb[0].mxu0
      %v1412 = vpop.f32.mrb[0].mxu0
      %1413 = vdwg.mxu0
      %v1414 = vadd.f32 %v1308, %v1377
      %v1415 = vadd.f32 %v1309, %v1380
      %v1416 = vadd.f32 %v1310, %v1385
      %v1417 = vadd.f32 %v1311, %v1388
      %v1418 = vadd.f32 %v1312, %v1393
      %v1419 = vadd.f32 %v1313, %v1396
      %v1420 = vadd.f32 %v1314, %v1401
      %v1421 = vadd.f32 %v1315, %v1404
      %v1422 = vadd.f32 %v1316, %v1409
      %s1423 = scalar_lea.vmem %s1, 160
      %v1424 = vld [vmem:[%s1423] sm:$0xf]
      %v1425 = vld [vmem:[%s1423 + $0x4] sm:$0xf]
      %v1426 = vld [vmem:[%s1423 + $0x8] sm:$0xf]
      %v1427 = vld [vmem:[%s1423 + $0xc] sm:$0xf]
      %v1432 = vunpack.c.l.b16 %v1424
      %v1433 = vunpack.c.l.b16 %v1425
      %v1434 = vunpack.c.l.b16 %v1426
      %v1435 = vunpack.c.l.b16 %v1427
      %v1436 = vpack.c.b16 %v1433, %v1432
      %v1437 = vpack.c.b16 %v1435, %v1434
      %1440 = vmatprep.subr.bf16.mxu0 0
      %1441 = vmatpush1.bf16.msra.mxu0 %v1436
      %1442 = vmatprep.subr.bf16.mxu0 0
      %1443 = vmatpush1.bf16.msra.mxu0 %v1437
      %1444 = vmatprep.subr.bf16.mxu0 0
      %1445 = vmatpush1.bf16.msra.mxu0 0
      %1446 = vmatprep.subr.bf16.mxu0 0
      %1447 = vmatpush1.bf16.msra.mxu0 0
      %1448 = vmatprep.subr.bf16.mxu0 0
      %1449 = vmatpush1.bf16.msra.mxu0 0
      %1450 = vmatprep.subr.bf16.mxu0 0
      %1451 = vmatpush1.bf16.msra.mxu0 0
      %1452 = vmatprep.subr.bf16.mxu0 0
      %1453 = vmatpush1.bf16.msra.mxu0 0
      %1454 = vmatprep.subr.bf16.mxu0 0
      %1455 = vmatpush1.bf16.msra.mxu0 0
      %1456 = vmatprep.subr.bf16.mxu0 0
      %1457 = vmatpush1.bf16.msra.mxu0 0
      %1458 = vmatprep.subr.bf16.mxu0 0
      %1459 = vmatpush1.bf16.msra.mxu0 0
      %1460 = vmatprep.subr.bf16.mxu0 0
      %1461 = vmatpush1.bf16.msra.mxu0 0
      %1462 = vmatprep.subr.bf16.mxu0 0
      %1463 = vmatpush1.bf16.msra.mxu0 0
      %1464 = vmatprep.subr.bf16.mxu0 0
      %1465 = vmatpush1.bf16.msra.mxu0 0
      %1466 = vmatprep.subr.bf16.mxu0 0
      %1467 = vmatpush1.bf16.msra.mxu0 0
      %1468 = vmatprep.subr.bf16.mxu0 0
      %1469 = vmatpush1.bf16.msra.mxu0 0
      %1470 = vmatprep.subr.bf16.mxu0 0
      %1471 = vmatpush1.bf16.msra.mxu0 0
      %1472 = vmatprep.mubr.bf16.mxu0 0
      %1473 = vmatmul.mubr.bf16.gmra.mrb[0].mxu0 %v912
      %v1474 = vpop.f32.mrb[0].mxu0
      %v1475 = vadd.f32 0.0, %v1474
      %v1476 = vpop.f32.mrb[0].mxu0
      %v1477 = vpop.f32.mrb[0].mxu0
      %v1478 = vadd.f32 0.0, %v1477
      %v1479 = vpop.f32.mrb[0].mxu0
      %1480 = vmatprep.mubr.bf16.mxu0 0
      %1481 = vmatmul.mubr.bf16.gmra.mrb[0].mxu0 %v915
      %v1482 = vpop.f32.mrb[0].mxu0
      %v1483 = vadd.f32 0.0, %v1482
      %v1484 = vpop.f32.mrb[0].mxu0
      %v1485 = vpop.f32.mrb[0].mxu0
      %v1486 = vadd.f32 0.0, %v1485
      %v1487 = vpop.f32.mrb[0].mxu0
      %1488 = vmatprep.mubr.bf16.mxu0 0
      %1489 = vmatmul.mubr.bf16.gmra.mrb[0].mxu0 %v918
      %v1490 = vpop.f32.mrb[0].mxu0
      %v1491 = vadd.f32 0.0, %v1490
      %v1492 = vpop.f32.mrb[0].mxu0
      %v1493 = vpop.f32.mrb[0].mxu0
      %v1494 = vadd.f32 0.0, %v1493
      %v1495 = vpop.f32.mrb[0].mxu0
      %1496 = vmatprep.mubr.bf16.mxu0 0
      %1497 = vmatmul.mubr.bf16.gmra.mrb[0].mxu0 %v921
      %v1498 = vpop.f32.mrb[0].mxu0
      %v1499 = vadd.f32 0.0, %v1498
      %v1500 = vpop.f32.mrb[0].mxu0
      %v1501 = vpop.f32.mrb[0].mxu0
      %v1502 = vadd.f32 0.0, %v1501
      %v1503 = vpop.f32.mrb[0].mxu0
      %1504 = vmatprep.mubr.bf16.mxu0 0
      %1505 = vmatmul.mubr.bf16.gmra.mrb[0].mxu0 %v924
      %v1506 = vpop.f32.mrb[0].mxu0
      %v1507 = vadd.f32 0.0, %v1506
      %v1508 = vpop.f32.mrb[0].mxu0
      %v1509 = vpop.f32.mrb[0].mxu0
      %v1510 = vpop.f32.mrb[0].mxu0
      %1511 = vdwg.mxu0
      %v1512 = vadd.f32 %v1414, %v1475
      %v1513 = vadd.f32 %v1415, %v1478
      %v1514 = vadd.f32 %v1416, %v1483
      %v1515 = vadd.f32 %v1417, %v1486
      %v1516 = vadd.f32 %v1418, %v1491
      %v1517 = vadd.f32 %v1419, %v1494
      %v1518 = vadd.f32 %v1420, %v1499
      %v1519 = vadd.f32 %v1421, %v1502
      %v1520 = vadd.f32 %v1422, %v1507
      %s1521 = scalar_lea.vmem %s1, 176
      %v1522 = vld [vmem:[%s1521] sm:$0xf]
      %v1523 = vld [vmem:[%s1521 + $0x4] sm:$0xf]
      %v1524 = vld [vmem:[%s1521 + $0x8] sm:$0xf]
      %v1525 = vld [vmem:[%s1521 + $0xc] sm:$0xf]
      %vm1526 = vcmask 1044480
      %v1527 = vrot.slane %v229, 3
      %v1528 = vrot.slane %v230, 3
      %v1529 = vsel %vm1526, %v1527, %v1528
      %v1530 = vrot.slane %v236, 3
      %v1531 = vsel %vm1526, %v1528, %v1530
      %v1532 = vrot.slane %v477, 3
      %v1533 = vsel %vm1526, %v1530, %v1532
      %v1534 = vrot.slane %v744, 3
      %v1535 = vsel %vm1526, %v1532, %v1534
      %v1540 = vunpack.c.l.b16 %v1522
      %v1541 = vunpack.c.l.b16 %v1523
      %v1542 = vunpack.c.l.b16 %v1524
      %v1543 = vunpack.c.l.b16 %v1525
      %v1544 = vpack.c.b16 %v1541, %v1540
      %v1545 = vpack.c.b16 %v1543, %v1542
      %v1549 = vsel %vm294, %v1529, 0
      %v1552 = vsel %vm294, %v1531, 0
      %v1555 = vsel %vm294, %v1533, 0
      %v1558 = vsel %vm294, %v1535, 0
      %v1561 = vsel %vm294, %v1534, 0
      %1563 = vmatprep.subr.bf16.mxu0 0
      %1564 = vmatpush1.bf16.msra.mxu0 %v1544
      %1565 = vmatprep.subr.bf16.mxu0 0
      %1566 = vmatpush1.bf16.msra.mxu0 %v1545
      %1567 = vmatprep.subr.bf16.mxu0 0
      %1568 = vmatpush1.bf16.msra.mxu0 0
      %1569 = vmatprep.subr.bf16.mxu0 0
      %1570 = vmatpush1.bf16.msra.mxu0 0
      %1571 = vmatprep.subr.bf16.mxu0 0
      %1572 = vmatpush1.bf16.msra.mxu0 0
      %1573 = vmatprep.subr.bf16.mxu0 0
      %1574 = vmatpush1.bf16.msra.mxu0 0
      %1575 = vmatprep.subr.bf16.mxu0 0
      %1576 = vmatpush1.bf16.msra.mxu0 0
      %1577 = vmatprep.subr.bf16.mxu0 0
      %1578 = vmatpush1.bf16.msra.mxu0 0
      %1579 = vmatprep.subr.bf16.mxu0 0
      %1580 = vmatpush1.bf16.msra.mxu0 0
      %1581 = vmatprep.subr.bf16.mxu0 0
      %1582 = vmatpush1.bf16.msra.mxu0 0
      %1583 = vmatprep.subr.bf16.mxu0 0
      %1584 = vmatpush1.bf16.msra.mxu0 0
      %1585 = vmatprep.subr.bf16.mxu0 0
      %1586 = vmatpush1.bf16.msra.mxu0 0
      %1587 = vmatprep.subr.bf16.mxu0 0
      %1588 = vmatpush1.bf16.msra.mxu0 0
      %1589 = vmatprep.subr.bf16.mxu0 0
      %1590 = vmatpush1.bf16.msra.mxu0 0
      %1591 = vmatprep.subr.bf16.mxu0 0
      %1592 = vmatpush1.bf16.msra.mxu0 0
      %1593 = vmatprep.subr.bf16.mxu0 0
      %1594 = vmatpush1.bf16.msra.mxu0 0
      %1595 = vmatprep.mubr.bf16.mxu0 0
      %1596 = vmatmul.mubr.bf16.gmra.mrb[0].mxu0 %v1549
      %v1597 = vpop.f32.mrb[0].mxu0
      %v1598 = vadd.f32 0.0, %v1597
      %v1599 = vpop.f32.mrb[0].mxu0
      %v1600 = vpop.f32.mrb[0].mxu0
      %v1601 = vadd.f32 0.0, %v1600
      %v1602 = vpop.f32.mrb[0].mxu0
      %1603 = vmatprep.mubr.bf16.mxu0 0
      %1604 = vmatmul.mubr.bf16.gmra.mrb[0].mxu0 %v1552
      %v1605 = vpop.f32.mrb[0].mxu0
      %v1606 = vadd.f32 0.0, %v1605
      %v1607 = vpop.f32.mrb[0].mxu0
      %v1608 = vpop.f32.mrb[0].mxu0
      %v1609 = vadd.f32 0.0, %v1608
      %v1610 = vpop.f32.mrb[0].mxu0
      %1611 = vmatprep.mubr.bf16.mxu0 0
      %1612 = vmatmul.mubr.bf16.gmra.mrb[0].mxu0 %v1555
      %v1613 = vpop.f32.mrb[0].mxu0
      %v1614 = vadd.f32 0.0, %v1613
      %v1615 = vpop.f32.mrb[0].mxu0
      %v1616 = vpop.f32.mrb[0].mxu0
      %v1617 = vadd.f32 0.0, %v1616
      %v1618 = vpop.f32.mrb[0].mxu0
      %1619 = vmatprep.mubr.bf16.mxu0 0
      %1620 = vmatmul.mubr.bf16.gmra.mrb[0].mxu0 %v1558
      %v1621 = vpop.f32.mrb[0].mxu0
      %v1622 = vadd.f32 0.0, %v1621
      %v1623 = vpop.f32.mrb[0].mxu0
      %v1624 = vpop.f32.mrb[0].mxu0
      %v1625 = vadd.f32 0.0, %v1624
      %v1626 = vpop.f32.mrb[0].mxu0
      %1627 = vmatprep.mubr.bf16.mxu0 0
      %1628 = vmatmul.mubr.bf16.gmra.mrb[0].mxu0 %v1561
      %v1629 = vpop.f32.mrb[0].mxu0
      %v1630 = vadd.f32 0.0, %v1629
      %v1631 = vpop.f32.mrb[0].mxu0
      %v1632 = vpop.f32.mrb[0].mxu0
      %v1633 = vpop.f32.mrb[0].mxu0
      %1634 = vdwg.mxu0
      %v1635 = vadd.f32 %v1512, %v1598
      %v1636 = vadd.f32 %v1513, %v1601
      %v1637 = vadd.f32 %v1514, %v1606
      %v1638 = vadd.f32 %v1515, %v1609
      %v1639 = vadd.f32 %v1516, %v1614
      %v1640 = vadd.f32 %v1517, %v1617
      %v1641 = vadd.f32 %v1518, %v1622
      %v1642 = vadd.f32 %v1519, %v1625
      %v1643 = vadd.f32 %v1520, %v1630
      %v1644 = vadd.f32 %v1635, %v1011
      %v1645 = vadd.f32 %v1636, %v1011
      %v1646 = vadd.f32 %v1637, %v1011
      %v1647 = vadd.f32 %v1638, %v1011
      %v1648 = vadd.f32 %v1639, %v1011
      %v1649 = vadd.f32 %v1640, %v1011
      %v1650 = vadd.f32 %v1641, %v1011
      %v1651 = vadd.f32 %v1642, %v1011
      %v1652 = vadd.f32 %v1643, %v1011
      %1653 = vst.msk [vmem:[%s210] sm:$0xff] %vm1022, %v1644
      %1654 = vst.msk [vmem:[%s210 + $0x8] sm:$0xff] %vm1022, %v1645
      %1655 = vst.msk [vmem:[%s210 + $0x10] sm:$0xff] %vm1022, %v1646
      %1656 = vst.msk [vmem:[%s210 + $0x18] sm:$0xff] %vm1022, %v1647
      %1657 = vst.msk [vmem:[%s210 + $0x20] sm:$0xff] %vm1022, %v1648
      %1658 = vst.msk [vmem:[%s210 + $0x28] sm:$0xff] %vm1022, %v1649
      %1659 = vst.msk [vmem:[%s210 + $0x30] sm:$0xff] %vm1022, %v1650
      %1660 = vst.msk [vmem:[%s210 + $0x38] sm:$0xff] %vm1022, %v1651
      %1661 = vst.msk [vmem:[%s210 + $0x40] sm:$0xff] %vm1022, %v1652
      %p1662 = scmp.lt.s32.totalorder %s16, 1
      %s1663 = scalar_select %p1662, %s16, 1
      %s1664 = smul.addr %s1663, 9
      %s1665 = smul.addr %s1664, 8
      %s1666 = scalar_lea.vmem %s3, %s1665
      %p1667 = scmp.lt.s32.totalorder %s16, 1
      %s1668 = scalar_select %p1667, %s16, 1
      %s1669 = smul.addr %s1668, 9
      %s1670 = smul.addr %s1669, 8
      %s1671 = scalar_lea.vmem %s4, %s1670
      // Predicated region
      $region33: #{vqvae_decoder_forward.9} parent=31 // pred_check
        %p1672 = pneg %p102
      $region34: #{vqvae_decoder_forward.9} parent=31 // pred_check_branch
        %1674 = sbr.rel (%p1672) target = $region36
      $region35: #{vqvae_decoder_forward.9} parent=31 // pred_region
        _
      $region36: #{vqvae_decoder_forward.9} parent=31 // pred_fallthru
        _
      // Predicated region
      $region37: #{vqvae_decoder_forward.9} parent=31 // pred_check
        %p1675 = pneg %p128
      $region38: #{vqvae_decoder_forward.9} parent=31 // pred_check_branch
        %1677 = sbr.rel (%p1675) target = $region40
      $region39: #{vqvae_decoder_forward.9} parent=31 // pred_region
        _
      $region40: #{vqvae_decoder_forward.9} parent=31 // pred_fallthru
        _
    $region32: #{vqvae_decoder_forward.9} parent=5 // pred_fallthru
      _
    %p1678 = scmp.le.s32.totalorder 2, %s11
    // Predicated region
    $region41: #{vqvae_decoder_forward.9} parent=5 // pred_check
      %p1679 = pneg %p1678
    $region42: #{vqvae_decoder_forward.9} parent=5 // pred_check_branch
      %1681 = sbr.rel (%p1679) target = $region44
    $region43: #{vqvae_decoder_forward.9} parent=5 // pred_region
      %s1682 = ssub.s32 %s11, 2
      // Predicated region
      $region45: #{vqvae_decoder_forward.9} parent=43 // pred_check
        %p1683 = pneg %p108
      $region46: #{vqvae_decoder_forward.9} parent=43 // pred_check_branch
        %1685 = sbr.rel (%p1683) target = $region48
      $region47: #{vqvae_decoder_forward.9} parent=43 // pred_region
        %p1686 = scmp.lt.s32.totalorder %s17, 1
        %s1687 = scalar_select %p1686, %s17, 1
        %s1688 = smul.addr %s1687, 9
        %s1689 = smul.addr %s1688, 8
        %s1690 = scalar_lea.vmem %s3, %s1689
      $region48: #{vqvae_decoder_forward.9} parent=43 // pred_fallthru
        _
      // Predicated region
      $region49: #{vqvae_decoder_forward.9} parent=43 // pred_check
        %p1691 = pneg %p134
      $region50: #{vqvae_decoder_forward.9} parent=43 // pred_check_branch
        %1693 = sbr.rel (%p1691) target = $region52
      $region51: #{vqvae_decoder_forward.9} parent=43 // pred_region
        %p1694 = scmp.lt.s32.totalorder %s17, 1
        %s1695 = scalar_select %p1694, %s17, 1
        %s1696 = smul.addr %s1695, 9
        %s1697 = smul.addr %s1696, 8
        %s1698 = scalar_lea.vmem %s4, %s1697
      $region52: #{vqvae_decoder_forward.9} parent=43 // pred_fallthru
        _
    $region44: #{vqvae_decoder_forward.9} parent=5 // pred_fallthru
      _
  $region6: #{vqvae_decoder_forward.9} parent=0 // loop_footer
    %s15 = sadd.s32 1, %s11
  $region7: #{vqvae_decoder_forward.9} parent=0 // loop_footer_branch
    %10 = sbr.rel target = $region3
  $region8: #{vqvae_decoder_forward.9} parent=0 // loop_exit
    _

// kernel: vqvae_decoder_forward.11
$region0: #{vqvae_decoder_forward.11}
  #allocation0 [shape = 'u32[]', space=smem, size = 0x4, offset = 0x4, fixed_abs, tag = 'smem constant byte address 0x4 - core index']
  #allocation1 [shape = 'u32[144,128]{1,0:T(1,128)}', space=vmem, size = 0x12000, scoped, tag = 'internal scratch']
  %s0 = inlined_call_operand.vmem [shape: f32[8,256], index: 0, kind: input, shape index: {}]
  %s1 = inlined_call_operand.vmem [shape: f32[256,288], index: 1, kind: input, shape index: {}]
  %s2 = inlined_call_operand.vmem [shape: f32[8,288], index: 2, kind: output, shape index: {}]
  %s3 = sld [smem:[#allocation0]]
  $region18: #{vqvae_decoder_forward.11} parent=0
    _
  %s5 = ssub.s32 1, %s3
  %s6 = scalar_select 0, %s5, %s3
  // Predicated region
  $region2: #{vqvae_decoder_forward.11} parent=0 // pred_check
    _
  $region3: #{vqvae_decoder_forward.11} parent=0 // pred_check_branch
    %8 = sbr.rel (0) target = $region5
  $region4: #{vqvae_decoder_forward.11} parent=0 // pred_region
    _
  $region5: #{vqvae_decoder_forward.11} parent=0 // pred_fallthru
    _
  // Predicated region
  $region6: #{vqvae_decoder_forward.11} parent=0 // pred_check
    _
  $region7: #{vqvae_decoder_forward.11} parent=0 // pred_check_branch
    %10 = sbr.rel (0) target = $region9
  $region8: #{vqvae_decoder_forward.11} parent=0 // pred_region
    _
  $region9: #{vqvae_decoder_forward.11} parent=0 // pred_fallthru
    _
  %v11 = vld [vmem:[%s0] sm:$0xff]
  %v12 = vld [vmem:[%s0 + $0x8] sm:$0xff]
  %v13 = vld [vmem:[%s1] sm:$0xff]
  %v14 = vld [vmem:[%s1 + $0x8] sm:$0xff]
  %v15 = vld [vmem:[%s1 + $0x10] sm:$0xff]
  %v16 = vld [vmem:[%s1 + $0x18] sm:$0xff]
  %v17 = vld [vmem:[%s1 + $0x20] sm:$0xff]
  %v18 = vld [vmem:[%s1 + $0x28] sm:$0xff]
  %v19 = vld [vmem:[%s1 + $0x30] sm:$0xff]
  %v20 = vld [vmem:[%s1 + $0x38] sm:$0xff]
  %v21 = vld [vmem:[%s1 + $0x40] sm:$0xff]
  %v22 = vld [vmem:[%s1 + $0x48] sm:$0xff]
  %v23 = vld [vmem:[%s1 + $0x50] sm:$0xff]
  %v24 = vld [vmem:[%s1 + $0x58] sm:$0xff]
  %v25 = vld [vmem:[%s1 + $0x60] sm:$0xff]
  %v26 = vld [vmem:[%s1 + $0x68] sm:$0xff]
  %v27 = vld [vmem:[%s1 + $0x70] sm:$0xff]
  %v28 = vld [vmem:[%s1 + $0x78] sm:$0xff]
  %v29 = vld [vmem:[%s1 + $0x80] sm:$0xff]
  %v30 = vld [vmem:[%s1 + $0x88] sm:$0xff]
  %v31 = vld [vmem:[%s1 + $0x90] sm:$0xff]
  %v32 = vld [vmem:[%s1 + $0x98] sm:$0xff]
  %v33 = vld [vmem:[%s1 + $0xa0] sm:$0xff]
  %v34 = vld [vmem:[%s1 + $0xa8] sm:$0xff]
  %v35 = vld [vmem:[%s1 + $0xb0] sm:$0xff]
  %v36 = vld [vmem:[%s1 + $0xb8] sm:$0xff]
  %v37 = vld [vmem:[%s1 + $0xc0] sm:$0xff]
  %v38 = vld [vmem:[%s1 + $0xc8] sm:$0xff]
  %v39 = vld [vmem:[%s1 + $0xd0] sm:$0xff]
  %v40 = vld [vmem:[%s1 + $0xd8] sm:$0xff]
  %v41 = vld [vmem:[%s1 + $0xe0] sm:$0xff]
  %v42 = vld [vmem:[%s1 + $0xe8] sm:$0xff]
  %v43 = vld [vmem:[%s1 + $0xf0] sm:$0xff]
  %v44 = vld [vmem:[%s1 + $0xf8] sm:$0xff]
  %v45 = vld [vmem:[%s1 + $0x100] sm:$0xff]
  %v46 = vld [vmem:[%s1 + $0x108] sm:$0xff]
  %v47 = vld [vmem:[%s1 + $0x110] sm:$0xff]
  %v48 = vld [vmem:[%s1 + $0x118] sm:$0xff]
  %v49 = vld [vmem:[%s1 + $0x120] sm:$0xff]
  %v50 = vld [vmem:[%s1 + $0x128] sm:$0xff]
  %v51 = vld [vmem:[%s1 + $0x130] sm:$0xff]
  %v52 = vld [vmem:[%s1 + $0x138] sm:$0xff]
  %v53 = vld [vmem:[%s1 + $0x140] sm:$0xff]
  %v54 = vld [vmem:[%s1 + $0x148] sm:$0xff]
  %v55 = vld [vmem:[%s1 + $0x150] sm:$0xff]
  %v56 = vld [vmem:[%s1 + $0x158] sm:$0xff]
  %v57 = vld [vmem:[%s1 + $0x160] sm:$0xff]
  %v58 = vld [vmem:[%s1 + $0x168] sm:$0xff]
  %v59 = vld [vmem:[%s1 + $0x170] sm:$0xff]
  %v60 = vld [vmem:[%s1 + $0x178] sm:$0xff]
  %v61 = vld [vmem:[%s1 + $0x180] sm:$0xff]
  %v62 = vld [vmem:[%s1 + $0x188] sm:$0xff]
  %v63 = vld [vmem:[%s1 + $0x190] sm:$0xff]
  %v64 = vld [vmem:[%s1 + $0x198] sm:$0xff]
  %v65 = vld [vmem:[%s1 + $0x1a0] sm:$0xff]
  %v66 = vld [vmem:[%s1 + $0x1a8] sm:$0xff]
  %v67 = vld [vmem:[%s1 + $0x1b0] sm:$0xff]
  %v68 = vld [vmem:[%s1 + $0x1b8] sm:$0xff]
  %v69 = vld [vmem:[%s1 + $0x1c0] sm:$0xff]
  %v70 = vld [vmem:[%s1 + $0x1c8] sm:$0xff]
  %v71 = vld [vmem:[%s1 + $0x1d0] sm:$0xff]
  %v72 = vld [vmem:[%s1 + $0x1d8] sm:$0xff]
  %v73 = vld [vmem:[%s1 + $0x1e0] sm:$0xff]
  %v74 = vld [vmem:[%s1 + $0x1e8] sm:$0xff]
  %v75 = vld [vmem:[%s1 + $0x1f0] sm:$0xff]
  %v76 = vld [vmem:[%s1 + $0x1f8] sm:$0xff]
  %v77 = vld [vmem:[%s1 + $0x200] sm:$0xff]
  %v78 = vld [vmem:[%s1 + $0x208] sm:$0xff]
  %v79 = vld [vmem:[%s1 + $0x210] sm:$0xff]
  %v80 = vld [vmem:[%s1 + $0x218] sm:$0xff]
  %v81 = vld [vmem:[%s1 + $0x220] sm:$0xff]
  %v82 = vld [vmem:[%s1 + $0x228] sm:$0xff]
  %v83 = vld [vmem:[%s1 + $0x230] sm:$0xff]
  %v84 = vld [vmem:[%s1 + $0x238] sm:$0xff]
  %v85 = vld [vmem:[%s1 + $0x240] sm:$0xff]
  %v86 = vld [vmem:[%s1 + $0x248] sm:$0xff]
  %v87 = vld [vmem:[%s1 + $0x250] sm:$0xff]
  %v88 = vld [vmem:[%s1 + $0x258] sm:$0xff]
  %v89 = vld [vmem:[%s1 + $0x260] sm:$0xff]
  %v90 = vld [vmem:[%s1 + $0x268] sm:$0xff]
  %v91 = vld [vmem:[%s1 + $0x270] sm:$0xff]
  %v92 = vld [vmem:[%s1 + $0x278] sm:$0xff]
  %v93 = vld [vmem:[%s1 + $0x280] sm:$0xff]
  %v94 = vld [vmem:[%s1 + $0x288] sm:$0xff]
  %v95 = vld [vmem:[%s1 + $0x290] sm:$0xff]
  %v96 = vld [vmem:[%s1 + $0x298] sm:$0xff]
  %v97 = vld [vmem:[%s1 + $0x2a0] sm:$0xff]
  %v98 = vld [vmem:[%s1 + $0x2a8] sm:$0xff]
  %v99 = vld [vmem:[%s1 + $0x2b0] sm:$0xff]
  %v100 = vld [vmem:[%s1 + $0x2b8] sm:$0xff]
  %v101 = vld [vmem:[%s1 + $0x2c0] sm:$0xff]
  %v102 = vld [vmem:[%s1 + $0x2c8] sm:$0xff]
  %v103 = vld [vmem:[%s1 + $0x2d0] sm:$0xff]
  %v104 = vld [vmem:[%s1 + $0x2d8] sm:$0xff]
  %v105 = vld [vmem:[%s1 + $0x2e0] sm:$0xff]
  %v106 = vld [vmem:[%s1 + $0x2e8] sm:$0xff]
  %v107 = vld [vmem:[%s1 + $0x2f0] sm:$0xff]
  %v108 = vld [vmem:[%s1 + $0x2f8] sm:$0xff]
  %109 = vmatprep.subr.mxu0 %v14
  %110 = vmatpush1.msra.mxu0 %v13
  %111 = vmatprep.subr.mxu0 %v17
  %112 = vmatpush1.msra.mxu0 %v16
  %113 = vmatprep.subr.mxu0 %v20
  %114 = vmatpush1.msra.mxu0 %v19
  %115 = vmatprep.subr.mxu0 %v23
  %116 = vmatpush1.msra.mxu0 %v22
  %117 = vmatprep.subr.mxu0 %v26
  %118 = vmatpush1.msra.mxu0 %v25
  %119 = vmatprep.subr.mxu0 %v29
  %120 = vmatpush1.msra.mxu0 %v28
  %121 = vmatprep.subr.mxu0 %v32
  %122 = vmatpush1.msra.mxu0 %v31
  %123 = vmatprep.subr.mxu0 %v35
  %124 = vmatpush1.msra.mxu0 %v34
  %125 = vmatprep.subr.mxu0 %v38
  %126 = vmatpush1.msra.mxu0 %v37
  %127 = vmatprep.subr.mxu0 %v41
  %128 = vmatpush1.msra.mxu0 %v40
  %129 = vmatprep.subr.mxu0 %v44
  %130 = vmatpush1.msra.mxu0 %v43
  %131 = vmatprep.subr.mxu0 %v47
  %132 = vmatpush1.msra.mxu0 %v46
  %133 = vmatprep.subr.mxu0 %v50
  %134 = vmatpush1.msra.mxu0 %v49
  %135 = vmatprep.subr.mxu0 %v53
  %136 = vmatpush1.msra.mxu0 %v52
  %137 = vmatprep.subr.mxu0 %v56
  %138 = vmatpush1.msra.mxu0 %v55
  %139 = vmatprep.subr.mxu0 %v59
  %140 = vmatpush1.msra.mxu0 %v58
  %141 = vmatprep.subr.mxu0 %v62
  %142 = vmatpush1.msra.mxu0 %v61
  %143 = vmatprep.subr.mxu0 %v65
  %144 = vmatpush1.msra.mxu0 %v64
  %145 = vmatprep.subr.mxu0 %v68
  %146 = vmatpush1.msra.mxu0 %v67
  %147 = vmatprep.subr.mxu0 %v71
  %148 = vmatpush1.msra.mxu0 %v70
  %149 = vmatprep.subr.mxu0 %v74
  %150 = vmatpush1.msra.mxu0 %v73
  %151 = vmatprep.subr.mxu0 %v77
  %152 = vmatpush1.msra.mxu0 %v76
  %153 = vmatprep.subr.mxu0 %v80
  %154 = vmatpush1.msra.mxu0 %v79
  %155 = vmatprep.subr.mxu0 %v83
  %156 = vmatpush1.msra.mxu0 %v82
  %157 = vmatprep.subr.mxu0 %v86
  %158 = vmatpush1.msra.mxu0 %v85
  %159 = vmatprep.subr.mxu0 %v89
  %160 = vmatpush1.msra.mxu0 %v88
  %161 = vmatprep.subr.mxu0 %v92
  %162 = vmatpush1.msra.mxu0 %v91
  %163 = vmatprep.subr.mxu0 %v95
  %164 = vmatpush1.msra.mxu0 %v94
  %165 = vmatprep.subr.mxu0 %v98
  %166 = vmatpush1.msra.mxu0 %v97
  %167 = vmatprep.subr.mxu0 %v101
  %168 = vmatpush1.msra.mxu0 %v100
  %169 = vmatprep.subr.mxu0 %v104
  %170 = vmatpush1.msra.mxu0 %v103
  %171 = vmatprep.subr.mxu0 %v107
  %172 = vmatpush1.msra.mxu0 %v106
  %173 = vmatprep.mubr.f32.mxu0 %v12
  %174 = vmatmul.mubr.f32.gmra.mrb[0].mxu0 %v11
  %v175 = vpop.f32.mrb[0].mxu0
  %v176 = vadd.f32 0.0, %v175
  %v177 = vpop.f32.mrb[0].mxu0
  %v178 = vadd.f32 0.0, %v177
  %179 = vdwg.mxu0
  %180 = vmatprep.subr.mxu0 0.0
  %181 = vmatpush1.msra.mxu0 %v15
  %182 = vmatprep.subr.mxu0 0.0
  %183 = vmatpush1.msra.mxu0 %v18
  %184 = vmatprep.subr.mxu0 0.0
  %185 = vmatpush1.msra.mxu0 %v21
  %186 = vmatprep.subr.mxu0 0.0
  %187 = vmatpush1.msra.mxu0 %v24
  %188 = vmatprep.subr.mxu0 0.0
  %189 = vmatpush1.msra.mxu0 %v27
  %190 = vmatprep.subr.mxu0 0.0
  %191 = vmatpush1.msra.mxu0 %v30
  %192 = vmatprep.subr.mxu0 0.0
  %193 = vmatpush1.msra.mxu0 %v33
  %194 = vmatprep.subr.mxu0 0.0
  %195 = vmatpush1.msra.mxu0 %v36
  %196 = vmatprep.subr.mxu0 0.0
  %197 = vmatpush1.msra.mxu0 %v39
  %198 = vmatprep.subr.mxu0 0.0
  %199 = vmatpush1.msra.mxu0 %v42
  %200 = vmatprep.subr.mxu0 0.0
  %201 = vmatpush1.msra.mxu0 %v45
  %202 = vmatprep.subr.mxu0 0.0
  %203 = vmatpush1.msra.mxu0 %v48
  %204 = vmatprep.subr.mxu0 0.0
  %205 = vmatpush1.msra.mxu0 %v51
  %206 = vmatprep.subr.mxu0 0.0
  %207 = vmatpush1.msra.mxu0 %v54
  %208 = vmatprep.subr.mxu0 0.0
  %209 = vmatpush1.msra.mxu0 %v57
  %210 = vmatprep.subr.mxu0 0.0
  %211 = vmatpush1.msra.mxu0 %v60
  %212 = vmatprep.subr.mxu0 0.0
  %213 = vmatpush1.msra.mxu0 %v63
  %214 = vmatprep.subr.mxu0 0.0
  %215 = vmatpush1.msra.mxu0 %v66
  %216 = vmatprep.subr.mxu0 0.0
  %217 = vmatpush1.msra.mxu0 %v69
  %218 = vmatprep.subr.mxu0 0.0
  %219 = vmatpush1.msra.mxu0 %v72
  %220 = vmatprep.subr.mxu0 0.0
  %221 = vmatpush1.msra.mxu0 %v75
  %222 = vmatprep.subr.mxu0 0.0
  %223 = vmatpush1.msra.mxu0 %v78
  %224 = vmatprep.subr.mxu0 0.0
  %225 = vmatpush1.msra.mxu0 %v81
  %226 = vmatprep.subr.mxu0 0.0
  %227 = vmatpush1.msra.mxu0 %v84
  %228 = vmatprep.subr.mxu0 0.0
  %229 = vmatpush1.msra.mxu0 %v87
  %230 = vmatprep.subr.mxu0 0.0
  %231 = vmatpush1.msra.mxu0 %v90
  %232 = vmatprep.subr.mxu0 0.0
  %233 = vmatpush1.msra.mxu0 %v93
  %234 = vmatprep.subr.mxu0 0.0
  %235 = vmatpush1.msra.mxu0 %v96
  %236 = vmatprep.subr.mxu0 0.0
  %237 = vmatpush1.msra.mxu0 %v99
  %238 = vmatprep.subr.mxu0 0.0
  %239 = vmatpush1.msra.mxu0 %v102
  %240 = vmatprep.subr.mxu0 0.0
  %241 = vmatpush1.msra.mxu0 %v105
  %242 = vmatprep.subr.mxu0 0.0
  %243 = vmatpush1.msra.mxu0 %v108
  %244 = vmatprep.mubr.f32.mxu0 %v12
  %245 = vmatmul.mubr.f32.gmra.mrb[0].mxu0 %v11
  %v246 = vpop.f32.mrb[0].mxu0
  %v247 = vadd.f32 0.0, %v246
  %v248 = vpop.f32.mrb[0].mxu0
  %249 = vdwg.mxu0
  %250 = vst [vmem:[%s2] sm:$0xff] %v176
  %251 = vst [vmem:[%s2 + $0x8] sm:$0xff] %v178
  %vm252 = vcmask 261120
  %253 = vst.msk [vmem:[%s2 + $0x10] sm:$0xff] %vm252, %v247
  // Predicated region
  $region10: #{vqvae_decoder_forward.11} parent=0 // pred_check
    _
  $region11: #{vqvae_decoder_forward.11} parent=0 // pred_check_branch
    %255 = sbr.rel (0) target = $region13
  $region12: #{vqvae_decoder_forward.11} parent=0 // pred_region
    _
  $region13: #{vqvae_decoder_forward.11} parent=0 // pred_fallthru
    _
  // Predicated region
  $region14: #{vqvae_decoder_forward.11} parent=0 // pred_check
    _
  $region15: #{vqvae_decoder_forward.11} parent=0 // pred_check_branch
    %257 = sbr.rel (0) target = $region17
  $region16: #{vqvae_decoder_forward.11} parent=0 // pred_region
    _
  $region17: #{vqvae_decoder_forward.11} parent=0 // pred_fallthru
    _

// kernel: vqvae_decoder_forward.10
$region0: #{vqvae_decoder_forward.10}
  #allocation0 [shape = 'u32[]', space=smem, size = 0x4, offset = 0x4, fixed_abs, tag = 'smem constant byte address 0x4 - core index']
  #allocation1 [shape = 'u32[144,128]{1,0:T(1,128)}', space=vmem, size = 0x12000, scoped, tag = 'internal scratch']
  %s0 = inlined_call_operand.vmem [shape: f32[2,206,4], index: 0, kind: input, shape index: {}]
  %s1 = inlined_call_operand.vmem [shape: bf16[12,4,4], index: 1, kind: input, shape index: {}]
  %s2 = inlined_call_operand.vmem [shape: f32[1,4], index: 2, kind: input, shape index: {}]
  %s3 = inlined_call_operand.vmem [shape: f32[2,136,4], index: 3, kind: output, shape index: {0}]
  %s4 = inlined_call_operand.vmem [shape: f32[2,136,4], index: 4, kind: output, shape index: {1}]
  %5 = xla_tuple %s3, %s4
  %s6 = sld [smem:[#allocation0]]
  $region53: #{vqvae_decoder_forward.10} parent=0
    _
  %s8 = ssub.s32 1, %s6
  %s9 = scalar_select 0, %s8, %s6
  loop: start=0, step=1, limit=4
  $region2: #{vqvae_decoder_forward.10} parent=0 // loop_pre_header
    _
  $region3: #{vqvae_decoder_forward.10} parent=0 // loop_header
    %s11 = sphi 0, %s15
    %p12 = scmp.ge.s32.totalorder %s11, 4
    %s21 = sphi 0, %s23
    %s24 = sphi 0, %s21
    %s25 = sphi 0, %s24
    %s41 = sphi 0, %s25
    %s45 = sphi 0, %s45
    %s47 = sphi 0, %s45
    %s48 = sphi 0, %s47
    %s62 = sphi 0, %s48
    %s66 = sphi 0, %s66
    %s68 = sphi 0, %s66
    %s69 = sphi 0, %s68
    %s83 = sphi 0, %s69
    %s89 = sphi 0, %s91
    %s92 = sphi 0, %s89
    %s93 = sphi 0, %s92
    %s109 = sphi 0, %s93
    %s115 = sphi 0, %s117
    %s118 = sphi 0, %s115
    %s119 = sphi 0, %s118
    %s135 = sphi 0, %s119
  $region4: #{vqvae_decoder_forward.10} parent=0 // loop_header_branch
    %14 = sbr.rel (%p12) target = $region8
  $region5: #{vqvae_decoder_forward.10} parent=0 // loop_body
    %s16 = ssub.s32 %s11, 1
    %s17 = ssub.s32 %s11, 2
    %s18 = sadd.s32 %s11, 1
    %s19 = ssub.s32 %s11, %s18
    %p20 = scmp.eq.s32.totalorder %s19, 0
    %s22 = sadd.s32 %s21, 1
    %s23 = scalar_select %p20, %s21, %s22
    %p26 = pneg %p20
    %p27 = scmp.eq.s32.totalorder %s11, 1
    %p28 = por %p26, %p27
    %p29 = scmp.ne.s32.totalorder %s21, %s24
    %p30 = scmp.eq.s32.totalorder %s11, 0
    %p31 = por %p29, %p30
    %p32 = scmp.ne.s32.totalorder %s21, %s24
    %p33 = scmp.eq.s32.totalorder %s16, 1
    %p34 = por %p32, %p33
    %p35 = scmp.ne.s32.totalorder %s24, %s25
    %p36 = scmp.eq.s32.totalorder %s16, 0
    %p37 = por %p35, %p36
    %p38 = scmp.ne.s32.totalorder %s24, %s25
    %p39 = scmp.eq.s32.totalorder %s17, 1
    %p40 = por %p38, %p39
    %p42 = scmp.ne.s32.totalorder %s25, %s41
    %p43 = scmp.eq.s32.totalorder %s17, 0
    %p44 = por %p42, %p43
    %s46 = sadd.s32 %s45, 1
    %p49 = scmp.eq.s32.totalorder %s11, 1
    %p50 = scmp.ne.s32.totalorder %s45, %s47
    %p51 = scmp.eq.s32.totalorder %s11, 0
    %p52 = por %p50, %p51
    %p53 = scmp.ne.s32.totalorder %s45, %s47
    %p54 = scmp.eq.s32.totalorder %s16, 1
    %p55 = por %p53, %p54
    %p56 = scmp.ne.s32.totalorder %s47, %s48
    %p57 = scmp.eq.s32.totalorder %s16, 0
    %p58 = por %p56, %p57
    %p59 = scmp.ne.s32.totalorder %s47, %s48
    %p60 = scmp.eq.s32.totalorder %s17, 1
    %p61 = por %p59, %p60
    %p63 = scmp.ne.s32.totalorder %s48, %s62
    %p64 = scmp.eq.s32.totalorder %s17, 0
    %p65 = por %p63, %p64
    %s67 = sadd.s32 %s66, 1
    %p70 = scmp.eq.s32.totalorder %s11, 1
    %p71 = scmp.ne.s32.totalorder %s66, %s68
    %p72 = scmp.eq.s32.totalorder %s11, 0
    %p73 = por %p71, %p72
    %p74 = scmp.ne.s32.totalorder %s66, %s68
    %p75 = scmp.eq.s32.totalorder %s16, 1
    %p76 = por %p74, %p75
    %p77 = scmp.ne.s32.totalorder %s68, %s69
    %p78 = scmp.eq.s32.totalorder %s16, 0
    %p79 = por %p77, %p78
    %p80 = scmp.ne.s32.totalorder %s68, %s69
    %p81 = scmp.eq.s32.totalorder %s17, 1
    %p82 = por %p80, %p81
    %p84 = scmp.ne.s32.totalorder %s69, %s83
    %p85 = scmp.eq.s32.totalorder %s17, 0
    %p86 = por %p84, %p85
    %s87 = ssub.s32 %s11, %s18
    %p88 = scmp.eq.s32.totalorder %s87, 0
    %s90 = sadd.s32 %s89, 1
    %s91 = scalar_select %p88, %s89, %s90
    %p94 = pneg %p88
    %p95 = scmp.eq.s32.totalorder %s11, 1
    %p96 = por %p94, %p95
    %p97 = scmp.ne.s32.totalorder %s89, %s92
    %p98 = scmp.eq.s32.totalorder %s11, 0
    %p99 = por %p97, %p98
    %p100 = scmp.ne.s32.totalorder %s89, %s92
    %p101 = scmp.eq.s32.totalorder %s16, 1
    %p102 = por %p100, %p101
    %p103 = scmp.ne.s32.totalorder %s92, %s93
    %p104 = scmp.eq.s32.totalorder %s16, 0
    %p105 = por %p103, %p104
    %p106 = scmp.ne.s32.totalorder %s92, %s93
    %p107 = scmp.eq.s32.totalorder %s17, 1
    %p108 = por %p106, %p107
    %p110 = scmp.ne.s32.totalorder %s93, %s109
    %p111 = scmp.eq.s32.totalorder %s17, 0
    %p112 = por %p110, %p111
    %s113 = ssub.s32 %s11, %s18
    %p114 = scmp.eq.s32.totalorder %s113, 0
    %s116 = sadd.s32 %s115, 1
    %s117 = scalar_select %p114, %s115, %s116
    %p120 = pneg %p114
    %p121 = scmp.eq.s32.totalorder %s11, 1
    %p122 = por %p120, %p121
    %p123 = scmp.ne.s32.totalorder %s115, %s118
    %p124 = scmp.eq.s32.totalorder %s11, 0
    %p125 = por %p123, %p124
    %p126 = scmp.ne.s32.totalorder %s115, %s118
    %p127 = scmp.eq.s32.totalorder %s16, 1
    %p128 = por %p126, %p127
    %p129 = scmp.ne.s32.totalorder %s118, %s119
    %p130 = scmp.eq.s32.totalorder %s16, 0
    %p131 = por %p129, %p130
    %p132 = scmp.ne.s32.totalorder %s118, %s119
    %p133 = scmp.eq.s32.totalorder %s17, 1
    %p134 = por %p132, %p133
    %p136 = scmp.ne.s32.totalorder %s119, %s135
    %p137 = scmp.eq.s32.totalorder %s17, 0
    %p138 = por %p136, %p137
    %p139 = scmp.le.s32.totalorder 1, %s11
    %p140 = scmp.lt.s32.totalorder %s11, 3
    %p141 = pnand %p139, %p140
    %p142 = pneg %p141
    // Predicated region
    $region9: #{vqvae_decoder_forward.10} parent=5 // pred_check
      _
    $region10: #{vqvae_decoder_forward.10} parent=5 // pred_check_branch
      %144 = sbr.rel (%p141) target = $region12
    $region11: #{vqvae_decoder_forward.10} parent=5 // pred_region
      %s145 = ssub.s32 %s11, 1
      // Predicated region
      $region13: #{vqvae_decoder_forward.10} parent=11 // pred_check
        %p146 = pneg %p58
      $region14: #{vqvae_decoder_forward.10} parent=11 // pred_check_branch
        %148 = sbr.rel (%p146) target = $region16
      $region15: #{vqvae_decoder_forward.10} parent=11 // pred_region
        _
      $region16: #{vqvae_decoder_forward.10} parent=11 // pred_fallthru
        _
      // Predicated region
      $region17: #{vqvae_decoder_forward.10} parent=11 // pred_check
        %p149 = pneg %p79
      $region18: #{vqvae_decoder_forward.10} parent=11 // pred_check_branch
        %151 = sbr.rel (%p149) target = $region20
      $region19: #{vqvae_decoder_forward.10} parent=11 // pred_region
        _
      $region20: #{vqvae_decoder_forward.10} parent=11 // pred_fallthru
        _
    $region12: #{vqvae_decoder_forward.10} parent=5 // pred_fallthru
      _
    %p152 = scmp.lt.s32.totalorder %s11, 2
    // Predicated region
    $region21: #{vqvae_decoder_forward.10} parent=5 // pred_check
      %p153 = pneg %p152
    $region22: #{vqvae_decoder_forward.10} parent=5 // pred_check_branch
      %155 = sbr.rel (%p153) target = $region24
    $region23: #{vqvae_decoder_forward.10} parent=5 // pred_region
      // Predicated region
      $region25: #{vqvae_decoder_forward.10} parent=23 // pred_check
        %p156 = pneg %p31
      $region26: #{vqvae_decoder_forward.10} parent=23 // pred_check_branch
        %158 = sbr.rel (%p156) target = $region28
      $region27: #{vqvae_decoder_forward.10} parent=23 // pred_region
        %p159 = scmp.lt.s32.totalorder %s11, 1
        %s160 = scalar_select %p159, %s11, 1
        %s161 = smul.addr %s160, 26
        %s162 = smul.addr %s161, 8
        %s163 = scalar_lea.vmem %s0, %s162
      $region28: #{vqvae_decoder_forward.10} parent=23 // pred_fallthru
        _
    $region24: #{vqvae_decoder_forward.10} parent=5 // pred_fallthru
      _
    %p164 = scmp.le.s32.totalorder 1, %s11
    %p165 = scmp.lt.s32.totalorder %s11, 3
    %p166 = pnand %p164, %p165
    %p167 = pneg %p166
    // Predicated region
    $region29: #{vqvae_decoder_forward.10} parent=5 // pred_check
      _
    $region30: #{vqvae_decoder_forward.10} parent=5 // pred_check_branch
      %169 = sbr.rel (%p166) target = $region32
    $region31: #{vqvae_decoder_forward.10} parent=5 // pred_region
      %s170 = ssub.s32 %s11, 1
      %p171 = scmp.lt.s32.totalorder %s16, 1
      %s172 = scalar_select %p171, %s16, 1
      %s173 = smul.addr %s172, 26
      %s174 = smul.addr %s173, 8
      %s175 = scalar_lea.vmem %s0, %s174
      %p176 = pneg %p37
      %p177 = pneg %p34
      %p178 = pneg %p58
      %p179 = pneg %p55
      %p180 = pneg %p79
      %p181 = pneg %p76
      %p182 = pneg %p105
      %p183 = pneg %p102
      %p184 = scmp.lt.s32.totalorder %s16, 1
      %s185 = scalar_select %p184, %s16, 1
      %s186 = smul.addr %s185, 17
      %s187 = smul.addr %s186, 8
      %s188 = scalar_lea.vmem %s3, %s187
      %p189 = pneg %p131
      %p190 = pneg %p128
      %p191 = scmp.lt.s32.totalorder %s16, 1
      %s192 = scalar_select %p191, %s16, 1
      %s193 = smul.addr %s192, 17
      %s194 = smul.addr %s193, 8
      %s195 = scalar_lea.vmem %s4, %s194
      %p196 = scmp.lt.s32.totalorder %s16, 1
      %s197 = scalar_select %p196, %s16, 1
      %s198 = smul.addr %s197, 26
      %s199 = smul.addr %s198, 8
      %s200 = scalar_lea.vmem %s0, %s199
      %p201 = scmp.lt.s32.totalorder %s16, 1
      %s202 = scalar_select %p201, %s16, 1
      %s203 = smul.addr %s202, 17
      %s204 = smul.addr %s203, 8
      %s205 = scalar_lea.vmem %s3, %s204
      %p206 = scmp.lt.s32.totalorder %s16, 1
      %s207 = scalar_select %p206, %s16, 1
      %s208 = smul.addr %s207, 17
      %s209 = smul.addr %s208, 8
      %s210 = scalar_lea.vmem %s4, %s209
      %v212 = vld [vmem:[%s2] sm:$0x1]
      %v213 = vld [vmem:[%s200] sm:$0xff]
      %v214 = vld [vmem:[%s200 + $0x8] sm:$0xff]
      %v215 = vld [vmem:[%s200 + $0x10] sm:$0xff]
      %v216 = vld [vmem:[%s200 + $0x18] sm:$0xff]
      %v217 = vld [vmem:[%s200 + $0x20] sm:$0xff]
      %v218 = vld [vmem:[%s200 + $0x28] sm:$0xff]
      %v219 = vld [vmem:[%s200 + $0x30] sm:$0xff]
      %v220 = vld [vmem:[%s200 + $0x38] sm:$0xff]
      %v221 = vld [vmem:[%s200 + $0x40] sm:$0xff]
      %v222 = vld [vmem:[%s200 + $0x48] sm:$0xff]
      %v223 = vld [vmem:[%s200 + $0x50] sm:$0xff]
      %v224 = vld [vmem:[%s200 + $0x58] sm:$0xff]
      %v225 = vld [vmem:[%s200 + $0x60] sm:$0xff]
      %v226 = vld [vmem:[%s200 + $0x68] sm:$0xff]
      %v227 = vld [vmem:[%s200 + $0x70] sm:$0xff]
      %v228 = vld [vmem:[%s200 + $0x78] sm:$0xff]
      %v229 = vld [vmem:[%s200 + $0x80] sm:$0xff]
      %v230 = vld [vmem:[%s200 + $0x88] sm:$0xff]
      %v231 = vld [vmem:[%s200 + $0x90] sm:$0xff]
      %v232 = vld [vmem:[%s200 + $0x98] sm:$0xff]
      %v233 = vld [vmem:[%s200 + $0xa0] sm:$0xff]
      %v234 = vld [vmem:[%s200 + $0xa8] sm:$0xff]
      %v235 = vld [vmem:[%s200 + $0xb0] sm:$0xff]
      %v236 = vld [vmem:[%s200 + $0xb8] sm:$0xff]
      %v237 = vld [vmem:[%s200 + $0xc0] sm:$0xff]
      %v238 = vld [vmem:[%s200 + $0xc8] sm:$0x3f]
      %v239 = vpack.c.bf16 %v214, %v213
      %v240 = vpack.c.bf16 %v216, %v215
      %v241 = vpack.c.bf16 %v218, %v217
      %v242 = vpack.c.bf16 %v220, %v219
      %v243 = vpack.c.bf16 %v222, %v221
      %v244 = vpack.c.bf16 %v224, %v223
      %v245 = vpack.c.bf16 %v226, %v225
      %v246 = vpack.c.bf16 %v228, %v227
      %v247 = vpack.c.bf16 %v229, %v229
      %v248 = vld [vmem:[%s1] sm:$0x3]
      %v249 = vpack.c.bf16 %v230, %v229
      %s250 = scalar_lea.vmem %s1, 2
      %v251 = vld [vmem:[%s250] sm:$0x3]
      %vm252 = vsmask.f32 7424
      %v254 = vshrl.u32 %v239, 16
      %v256 = vshll.u32 %v239, 16
      %v258 = vrot.slane %v256, 1
      %v259 = vor.u32 %v254, %v258
      %v261 = vshll.u32 %v240, 16
      %v263 = vrot.slane %v261, 1
      %v264 = vsel %vm252, %v259, %v263
      %v265 = vshrl.u32 %v240, 16
      %v267 = vor.u32 %v265, %v263
      %v269 = vshll.u32 %v241, 16
      %v271 = vrot.slane %v269, 1
      %v272 = vsel %vm252, %v267, %v271
      %v273 = vshrl.u32 %v241, 16
      %v275 = vor.u32 %v273, %v271
      %v277 = vshll.u32 %v242, 16
      %v279 = vrot.slane %v277, 1
      %v280 = vsel %vm252, %v275, %v279
      %v281 = vshrl.u32 %v242, 16
      %v283 = vor.u32 %v281, %v279
      %v285 = vshll.u32 %v243, 16
      %v287 = vrot.slane %v285, 1
      %v288 = vsel %vm252, %v283, %v287
      %v289 = vshrl.u32 %v243, 16
      %v291 = vor.u32 %v289, %v287
      %v293 = vshll.u32 %v244, 16
      %v295 = vrot.slane %v293, 1
      %v296 = vsel %vm252, %v291, %v295
      %v297 = vshrl.u32 %v244, 16
      %v299 = vor.u32 %v297, %v295
      %v301 = vshll.u32 %v245, 16
      %v303 = vrot.slane %v301, 1
      %v304 = vsel %vm252, %v299, %v303
      %v305 = vshrl.u32 %v245, 16
      %v307 = vor.u32 %v305, %v303
      %v309 = vshll.u32 %v246, 16
      %v311 = vrot.slane %v309, 1
      %v312 = vsel %vm252, %v307, %v311
      %v313 = vshrl.u32 %v246, 16
      %v315 = vor.u32 %v313, %v311
      %v317 = vshll.u32 %v249, 16
      %v319 = vrot.slane %v317, 1
      %v320 = vsel %vm252, %v315, %v319
      %v321 = vshrl.u32 %v249, 16
      %v323 = vor.u32 %v321, %v319
      %vm324 = vcmask 31744
      %v326 = vsel %vm324, %v264, 0
      %v329 = vsel %vm324, %v272, 0
      %v332 = vsel %vm324, %v280, 0
      %v335 = vsel %vm324, %v288, 0
      %v338 = vsel %vm324, %v296, 0
      %v341 = vsel %vm324, %v304, 0
      %v344 = vsel %vm324, %v312, 0
      %v347 = vsel %vm324, %v320, 0
      %v350 = vsel %vm324, %v323, 0
      %vm352 = vcmask 1041408
      %v354 = vsel %vm352, %v251, 0
      %356 = vmatprep.subr.bf16.mxu0 0
      %357 = vmatpush1.bf16.msra.mxu0 %v354
      %358 = vmatprep.subr.bf16.mxu0 0
      %359 = vmatpush1.bf16.msra.mxu0 0
      %360 = vmatprep.subr.bf16.mxu0 0
      %361 = vmatpush1.bf16.msra.mxu0 0
      %362 = vmatprep.subr.bf16.mxu0 0
      %363 = vmatpush1.bf16.msra.mxu0 0
      %364 = vmatprep.subr.bf16.mxu0 0
      %365 = vmatpush1.bf16.msra.mxu0 0
      %366 = vmatprep.subr.bf16.mxu0 0
      %367 = vmatpush1.bf16.msra.mxu0 0
      %368 = vmatprep.subr.bf16.mxu0 0
      %369 = vmatpush1.bf16.msra.mxu0 0
      %370 = vmatprep.subr.bf16.mxu0 0
      %371 = vmatpush1.bf16.msra.mxu0 0
      %372 = vmatprep.subr.bf16.mxu0 0
      %373 = vmatpush1.bf16.msra.mxu0 0
      %374 = vmatprep.subr.bf16.mxu0 0
      %375 = vmatpush1.bf16.msra.mxu0 0
      %376 = vmatprep.subr.bf16.mxu0 0
      %377 = vmatpush1.bf16.msra.mxu0 0
      %378 = vmatprep.subr.bf16.mxu0 0
      %379 = vmatpush1.bf16.msra.mxu0 0
      %380 = vmatprep.subr.bf16.mxu0 0
      %381 = vmatpush1.bf16.msra.mxu0 0
      %382 = vmatprep.subr.bf16.mxu0 0
      %383 = vmatpush1.bf16.msra.mxu0 0
      %384 = vmatprep.subr.bf16.mxu0 0
      %385 = vmatpush1.bf16.msra.mxu0 0
      %386 = vmatprep.subr.bf16.mxu0 0
      %387 = vmatpush1.bf16.msra.mxu0 0
      %388 = vmatprep.mubr.bf16.mxu0 0
      %389 = vmatmul.mubr.bf16.gmra.mrb[0].mxu0 %v326
      %v390 = vpop.f32.mrb[0].mxu0
      %v391 = vadd.f32 0.0, %v390
      %v392 = vpop.f32.mrb[0].mxu0
      %v393 = vpop.f32.mrb[0].mxu0
      %v394 = vadd.f32 0.0, %v393
      %v395 = vpop.f32.mrb[0].mxu0
      %396 = vmatprep.mubr.bf16.mxu0 0
      %397 = vmatmul.mubr.bf16.gmra.mrb[0].mxu0 %v329
      %v398 = vpop.f32.mrb[0].mxu0
      %v399 = vadd.f32 0.0, %v398
      %v400 = vpop.f32.mrb[0].mxu0
      %v401 = vpop.f32.mrb[0].mxu0
      %v402 = vadd.f32 0.0, %v401
      %v403 = vpop.f32.mrb[0].mxu0
      %404 = vmatprep.mubr.bf16.mxu0 0
      %405 = vmatmul.mubr.bf16.gmra.mrb[0].mxu0 %v332
      %v406 = vpop.f32.mrb[0].mxu0
      %v407 = vadd.f32 0.0, %v406
      %v408 = vpop.f32.mrb[0].mxu0
      %v409 = vpop.f32.mrb[0].mxu0
      %v410 = vadd.f32 0.0, %v409
      %v411 = vpop.f32.mrb[0].mxu0
      %412 = vmatprep.mubr.bf16.mxu0 0
      %413 = vmatmul.mubr.bf16.gmra.mrb[0].mxu0 %v335
      %v414 = vpop.f32.mrb[0].mxu0
      %v415 = vadd.f32 0.0, %v414
      %v416 = vpop.f32.mrb[0].mxu0
      %v417 = vpop.f32.mrb[0].mxu0
      %v418 = vadd.f32 0.0, %v417
      %v419 = vpop.f32.mrb[0].mxu0
      %420 = vmatprep.mubr.bf16.mxu0 0
      %421 = vmatmul.mubr.bf16.gmra.mrb[0].mxu0 %v338
      %v422 = vpop.f32.mrb[0].mxu0
      %v423 = vadd.f32 0.0, %v422
      %v424 = vpop.f32.mrb[0].mxu0
      %v425 = vpop.f32.mrb[0].mxu0
      %v426 = vadd.f32 0.0, %v425
      %v427 = vpop.f32.mrb[0].mxu0
      %428 = vmatprep.mubr.bf16.mxu0 0
      %429 = vmatmul.mubr.bf16.gmra.mrb[0].mxu0 %v341
      %v430 = vpop.f32.mrb[0].mxu0
      %v431 = vadd.f32 0.0, %v430
      %v432 = vpop.f32.mrb[0].mxu0
      %v433 = vpop.f32.mrb[0].mxu0
      %v434 = vadd.f32 0.0, %v433
      %v435 = vpop.f32.mrb[0].mxu0
      %436 = vmatprep.mubr.bf16.mxu0 0
      %437 = vmatmul.mubr.bf16.gmra.mrb[0].mxu0 %v344
      %v438 = vpop.f32.mrb[0].mxu0
      %v439 = vadd.f32 0.0, %v438
      %v440 = vpop.f32.mrb[0].mxu0
      %v441 = vpop.f32.mrb[0].mxu0
      %v442 = vadd.f32 0.0, %v441
      %v443 = vpop.f32.mrb[0].mxu0
      %444 = vmatprep.mubr.bf16.mxu0 0
      %445 = vmatmul.mubr.bf16.gmra.mrb[0].mxu0 %v347
      %v446 = vpop.f32.mrb[0].mxu0
      %v447 = vadd.f32 0.0, %v446
      %v448 = vpop.f32.mrb[0].mxu0
      %v449 = vpop.f32.mrb[0].mxu0
      %v450 = vadd.f32 0.0, %v449
      %v451 = vpop.f32.mrb[0].mxu0
      %452 = vmatprep.mubr.bf16.mxu0 0
      %453 = vmatmul.mubr.bf16.gmra.mrb[0].mxu0 %v350
      %v454 = vpop.f32.mrb[0].mxu0
      %v455 = vadd.f32 0.0, %v454
      %v456 = vpop.f32.mrb[0].mxu0
      %v457 = vpop.f32.mrb[0].mxu0
      %v458 = vpop.f32.mrb[0].mxu0
      %459 = vdwg.mxu0
      %v460 = vsel %vm324, %v239, 0
      %v462 = vsel %vm324, %v240, 0
      %v464 = vsel %vm324, %v241, 0
      %v466 = vsel %vm324, %v242, 0
      %v468 = vsel %vm324, %v243, 0
      %v470 = vsel %vm324, %v244, 0
      %v472 = vsel %vm324, %v245, 0
      %v474 = vsel %vm324, %v246, 0
      %v477 = vsel %vm324, %v247, 0
      %v480 = vsel %vm352, %v248, 0
      %482 = vmatprep.subr.bf16.mxu0 0
      %483 = vmatpush1.bf16.msra.mxu0 %v480
      %484 = vmatprep.subr.bf16.mxu0 0
      %485 = vmatpush1.bf16.msra.mxu0 0
      %486 = vmatprep.subr.bf16.mxu0 0
      %487 = vmatpush1.bf16.msra.mxu0 0
      %488 = vmatprep.subr.bf16.mxu0 0
      %489 = vmatpush1.bf16.msra.mxu0 0
      %490 = vmatprep.subr.bf16.mxu0 0
      %491 = vmatpush1.bf16.msra.mxu0 0
      %492 = vmatprep.subr.bf16.mxu0 0
      %493 = vmatpush1.bf16.msra.mxu0 0
      %494 = vmatprep.subr.bf16.mxu0 0
      %495 = vmatpush1.bf16.msra.mxu0 0
      %496 = vmatprep.subr.bf16.mxu0 0
      %497 = vmatpush1.bf16.msra.mxu0 0
      %498 = vmatprep.subr.bf16.mxu0 0
      %499 = vmatpush1.bf16.msra.mxu0 0
      %500 = vmatprep.subr.bf16.mxu0 0
      %501 = vmatpush1.bf16.msra.mxu0 0
      %502 = vmatprep.subr.bf16.mxu0 0
      %503 = vmatpush1.bf16.msra.mxu0 0
      %504 = vmatprep.subr.bf16.mxu0 0
      %505 = vmatpush1.bf16.msra.mxu0 0
      %506 = vmatprep.subr.bf16.mxu0 0
      %507 = vmatpush1.bf16.msra.mxu0 0
      %508 = vmatprep.subr.bf16.mxu0 0
      %509 = vmatpush1.bf16.msra.mxu0 0
      %510 = vmatprep.subr.bf16.mxu0 0
      %511 = vmatpush1.bf16.msra.mxu0 0
      %512 = vmatprep.subr.bf16.mxu0 0
      %513 = vmatpush1.bf16.msra.mxu0 0
      %514 = vmatprep.mubr.bf16.mxu0 0
      %515 = vmatmul.mubr.bf16.gmra.mrb[0].mxu0 %v460
      %v516 = vpop.f32.mrb[0].mxu0
      %v517 = vadd.f32 %v391, %v516
      %v518 = vpop.f32.mrb[0].mxu0
      %v519 = vpop.f32.mrb[0].mxu0
      %v520 = vadd.f32 %v394, %v519
      %v521 = vpop.f32.mrb[0].mxu0
      %522 = vmatprep.mubr.bf16.mxu0 0
      %523 = vmatmul.mubr.bf16.gmra.mrb[0].mxu0 %v462
      %v524 = vpop.f32.mrb[0].mxu0
      %v525 = vadd.f32 %v399, %v524
      %v526 = vpop.f32.mrb[0].mxu0
      %v527 = vpop.f32.mrb[0].mxu0
      %v528 = vadd.f32 %v402, %v527
      %v529 = vpop.f32.mrb[0].mxu0
      %530 = vmatprep.mubr.bf16.mxu0 0
      %531 = vmatmul.mubr.bf16.gmra.mrb[0].mxu0 %v464
      %v532 = vpop.f32.mrb[0].mxu0
      %v533 = vadd.f32 %v407, %v532
      %v534 = vpop.f32.mrb[0].mxu0
      %v535 = vpop.f32.mrb[0].mxu0
      %v536 = vadd.f32 %v410, %v535
      %v537 = vpop.f32.mrb[0].mxu0
      %538 = vmatprep.mubr.bf16.mxu0 0
      %539 = vmatmul.mubr.bf16.gmra.mrb[0].mxu0 %v466
      %v540 = vpop.f32.mrb[0].mxu0
      %v541 = vadd.f32 %v415, %v540
      %v542 = vpop.f32.mrb[0].mxu0
      %v543 = vpop.f32.mrb[0].mxu0
      %v544 = vadd.f32 %v418, %v543
      %v545 = vpop.f32.mrb[0].mxu0
      %546 = vmatprep.mubr.bf16.mxu0 0
      %547 = vmatmul.mubr.bf16.gmra.mrb[0].mxu0 %v468
      %v548 = vpop.f32.mrb[0].mxu0
      %v549 = vadd.f32 %v423, %v548
      %v550 = vpop.f32.mrb[0].mxu0
      %v551 = vpop.f32.mrb[0].mxu0
      %v552 = vadd.f32 %v426, %v551
      %v553 = vpop.f32.mrb[0].mxu0
      %554 = vmatprep.mubr.bf16.mxu0 0
      %555 = vmatmul.mubr.bf16.gmra.mrb[0].mxu0 %v470
      %v556 = vpop.f32.mrb[0].mxu0
      %v557 = vadd.f32 %v431, %v556
      %v558 = vpop.f32.mrb[0].mxu0
      %v559 = vpop.f32.mrb[0].mxu0
      %v560 = vadd.f32 %v434, %v559
      %v561 = vpop.f32.mrb[0].mxu0
      %562 = vmatprep.mubr.bf16.mxu0 0
      %563 = vmatmul.mubr.bf16.gmra.mrb[0].mxu0 %v472
      %v564 = vpop.f32.mrb[0].mxu0
      %v565 = vadd.f32 %v439, %v564
      %v566 = vpop.f32.mrb[0].mxu0
      %v567 = vpop.f32.mrb[0].mxu0
      %v568 = vadd.f32 %v442, %v567
      %v569 = vpop.f32.mrb[0].mxu0
      %570 = vmatprep.mubr.bf16.mxu0 0
      %571 = vmatmul.mubr.bf16.gmra.mrb[0].mxu0 %v474
      %v572 = vpop.f32.mrb[0].mxu0
      %v573 = vadd.f32 %v447, %v572
      %v574 = vpop.f32.mrb[0].mxu0
      %v575 = vpop.f32.mrb[0].mxu0
      %v576 = vadd.f32 %v450, %v575
      %v577 = vpop.f32.mrb[0].mxu0
      %578 = vmatprep.mubr.bf16.mxu0 0
      %579 = vmatmul.mubr.bf16.gmra.mrb[0].mxu0 %v477
      %v580 = vpop.f32.mrb[0].mxu0
      %v581 = vadd.f32 %v455, %v580
      %v582 = vpop.f32.mrb[0].mxu0
      %v583 = vpop.f32.mrb[0].mxu0
      %v584 = vpop.f32.mrb[0].mxu0
      %585 = vdwg.mxu0
      %v586 = vpack.c.bf16 %v232, %v231
      %v587 = vpack.c.bf16 %v234, %v233
      %s588 = scalar_lea.vmem %s1, 4
      %v589 = vld [vmem:[%s588] sm:$0x3]
      %vm599 = vcmask 1046528
      %v600 = vrot.slane %v241, 1
      %v601 = vrot.slane %v242, 1
      %v602 = vsel %vm599, %v600, %v601
      %v603 = vrot.slane %v243, 1
      %v604 = vsel %vm599, %v601, %v603
      %v605 = vrot.slane %v244, 1
      %v606 = vsel %vm599, %v603, %v605
      %v607 = vrot.slane %v245, 1
      %v608 = vsel %vm599, %v605, %v607
      %v609 = vrot.slane %v246, 1
      %v610 = vsel %vm599, %v607, %v609
      %v611 = vrot.slane %v249, 1
      %v612 = vsel %vm599, %v609, %v611
      %v613 = vrot.slane %v586, 1
      %v614 = vsel %vm599, %v611, %v613
      %v615 = vrot.slane %v587, 1
      %v616 = vsel %vm599, %v613, %v615
      %v618 = vsel %vm324, %v602, 0
      %v621 = vsel %vm324, %v604, 0
      %v624 = vsel %vm324, %v606, 0
      %v627 = vsel %vm324, %v608, 0
      %v630 = vsel %vm324, %v610, 0
      %v633 = vsel %vm324, %v612, 0
      %v636 = vsel %vm324, %v614, 0
      %v639 = vsel %vm324, %v616, 0
      %v642 = vsel %vm324, %v615, 0
      %v645 = vsel %vm352, %v589, 0
      %647 = vmatprep.subr.bf16.mxu0 0
      %648 = vmatpush1.bf16.msra.mxu0 %v645
      %649 = vmatprep.subr.bf16.mxu0 0
      %650 = vmatpush1.bf16.msra.mxu0 0
      %651 = vmatprep.subr.bf16.mxu0 0
      %652 = vmatpush1.bf16.msra.mxu0 0
      %653 = vmatprep.subr.bf16.mxu0 0
      %654 = vmatpush1.bf16.msra.mxu0 0
      %655 = vmatprep.subr.bf16.mxu0 0
      %656 = vmatpush1.bf16.msra.mxu0 0
      %657 = vmatprep.subr.bf16.mxu0 0
      %658 = vmatpush1.bf16.msra.mxu0 0
      %659 = vmatprep.subr.bf16.mxu0 0
      %660 = vmatpush1.bf16.msra.mxu0 0
      %661 = vmatprep.subr.bf16.mxu0 0
      %662 = vmatpush1.bf16.msra.mxu0 0
      %663 = vmatprep.subr.bf16.mxu0 0
      %664 = vmatpush1.bf16.msra.mxu0 0
      %665 = vmatprep.subr.bf16.mxu0 0
      %666 = vmatpush1.bf16.msra.mxu0 0
      %667 = vmatprep.subr.bf16.mxu0 0
      %668 = vmatpush1.bf16.msra.mxu0 0
      %669 = vmatprep.subr.bf16.mxu0 0
      %670 = vmatpush1.bf16.msra.mxu0 0
      %671 = vmatprep.subr.bf16.mxu0 0
      %672 = vmatpush1.bf16.msra.mxu0 0
      %673 = vmatprep.subr.bf16.mxu0 0
      %674 = vmatpush1.bf16.msra.mxu0 0
      %675 = vmatprep.subr.bf16.mxu0 0
      %676 = vmatpush1.bf16.msra.mxu0 0
      %677 = vmatprep.subr.bf16.mxu0 0
      %678 = vmatpush1.bf16.msra.mxu0 0
      %679 = vmatprep.mubr.bf16.mxu0 0
      %680 = vmatmul.mubr.bf16.gmra.mrb[0].mxu0 %v618
      %v681 = vpop.f32.mrb[0].mxu0
      %v682 = vadd.f32 0.0, %v681
      %v683 = vpop.f32.mrb[0].mxu0
      %v684 = vpop.f32.mrb[0].mxu0
      %v685 = vadd.f32 0.0, %v684
      %v686 = vpop.f32.mrb[0].mxu0
      %687 = vmatprep.mubr.bf16.mxu0 0
      %688 = vmatmul.mubr.bf16.gmra.mrb[0].mxu0 %v621
      %v689 = vpop.f32.mrb[0].mxu0
      %v690 = vadd.f32 0.0, %v689
      %v691 = vpop.f32.mrb[0].mxu0
      %v692 = vpop.f32.mrb[0].mxu0
      %v693 = vadd.f32 0.0, %v692
      %v694 = vpop.f32.mrb[0].mxu0
      %695 = vmatprep.mubr.bf16.mxu0 0
      %696 = vmatmul.mubr.bf16.gmra.mrb[0].mxu0 %v624
      %v697 = vpop.f32.mrb[0].mxu0
      %v698 = vadd.f32 0.0, %v697
      %v699 = vpop.f32.mrb[0].mxu0
      %v700 = vpop.f32.mrb[0].mxu0
      %v701 = vadd.f32 0.0, %v700
      %v702 = vpop.f32.mrb[0].mxu0
      %703 = vmatprep.mubr.bf16.mxu0 0
      %704 = vmatmul.mubr.bf16.gmra.mrb[0].mxu0 %v627
      %v705 = vpop.f32.mrb[0].mxu0
      %v706 = vadd.f32 0.0, %v705
      %v707 = vpop.f32.mrb[0].mxu0
      %v708 = vpop.f32.mrb[0].mxu0
      %v709 = vadd.f32 0.0, %v708
      %v710 = vpop.f32.mrb[0].mxu0
      %711 = vmatprep.mubr.bf16.mxu0 0
      %712 = vmatmul.mubr.bf16.gmra.mrb[0].mxu0 %v630
      %v713 = vpop.f32.mrb[0].mxu0
      %v714 = vadd.f32 0.0, %v713
      %v715 = vpop.f32.mrb[0].mxu0
      %v716 = vpop.f32.mrb[0].mxu0
      %v717 = vadd.f32 0.0, %v716
      %v718 = vpop.f32.mrb[0].mxu0
      %719 = vmatprep.mubr.bf16.mxu0 0
      %720 = vmatmul.mubr.bf16.gmra.mrb[0].mxu0 %v633
      %v721 = vpop.f32.mrb[0].mxu0
      %v722 = vadd.f32 0.0, %v721
      %v723 = vpop.f32.mrb[0].mxu0
      %v724 = vpop.f32.mrb[0].mxu0
      %v725 = vadd.f32 0.0, %v724
      %v726 = vpop.f32.mrb[0].mxu0
      %727 = vmatprep.mubr.bf16.mxu0 0
      %728 = vmatmul.mubr.bf16.gmra.mrb[0].mxu0 %v636
      %v729 = vpop.f32.mrb[0].mxu0
      %v730 = vadd.f32 0.0, %v729
      %v731 = vpop.f32.mrb[0].mxu0
      %v732 = vpop.f32.mrb[0].mxu0
      %v733 = vadd.f32 0.0, %v732
      %v734 = vpop.f32.mrb[0].mxu0
      %735 = vmatprep.mubr.bf16.mxu0 0
      %736 = vmatmul.mubr.bf16.gmra.mrb[0].mxu0 %v639
      %v737 = vpop.f32.mrb[0].mxu0
      %v738 = vadd.f32 0.0, %v737
      %v739 = vpop.f32.mrb[0].mxu0
      %v740 = vpop.f32.mrb[0].mxu0
      %v741 = vadd.f32 0.0, %v740
      %v742 = vpop.f32.mrb[0].mxu0
      %743 = vmatprep.mubr.bf16.mxu0 0
      %744 = vmatmul.mubr.bf16.gmra.mrb[0].mxu0 %v642
      %v745 = vpop.f32.mrb[0].mxu0
      %v746 = vadd.f32 0.0, %v745
      %v747 = vpop.f32.mrb[0].mxu0
      %v748 = vpop.f32.mrb[0].mxu0
      %v749 = vpop.f32.mrb[0].mxu0
      %750 = vdwg.mxu0
      %v751 = vadd.f32 %v517, %v682
      %v752 = vadd.f32 %v520, %v685
      %v753 = vadd.f32 %v525, %v690
      %v754 = vadd.f32 %v528, %v693
      %v755 = vadd.f32 %v533, %v698
      %v756 = vadd.f32 %v536, %v701
      %v757 = vadd.f32 %v541, %v706
      %v758 = vadd.f32 %v544, %v709
      %v759 = vadd.f32 %v549, %v714
      %v760 = vadd.f32 %v552, %v717
      %v761 = vadd.f32 %v557, %v722
      %v762 = vadd.f32 %v560, %v725
      %v763 = vadd.f32 %v565, %v730
      %v764 = vadd.f32 %v568, %v733
      %v765 = vadd.f32 %v573, %v738
      %v766 = vadd.f32 %v576, %v741
      %v767 = vadd.f32 %v581, %v746
      %s768 = scalar_lea.vmem %s1, 6
      %v769 = vld [vmem:[%s768] sm:$0x3]
      %vm770 = vsmask.f32 6400
      %v771 = vrot.slane %v273, 1
      %v772 = vrot.slane %v269, 2
      %v773 = vor.u32 %v771, %v772
      %v774 = vrot.slane %v281, 1
      %v775 = vrot.slane %v277, 2
      %v776 = vor.u32 %v774, %v775
      %v777 = vsel %vm770, %v773, %v776
      %v778 = vrot.slane %v289, 1
      %v779 = vrot.slane %v285, 2
      %v780 = vor.u32 %v778, %v779
      %v781 = vsel %vm770, %v776, %v780
      %v782 = vrot.slane %v297, 1
      %v783 = vrot.slane %v293, 2
      %v784 = vor.u32 %v782, %v783
      %v785 = vsel %vm770, %v780, %v784
      %v786 = vrot.slane %v305, 1
      %v787 = vrot.slane %v301, 2
      %v788 = vor.u32 %v786, %v787
      %v789 = vsel %vm770, %v784, %v788
      %v790 = vrot.slane %v313, 1
      %v791 = vrot.slane %v309, 2
      %v792 = vor.u32 %v790, %v791
      %v793 = vsel %vm770, %v788, %v792
      %v794 = vrot.slane %v321, 1
      %v795 = vrot.slane %v317, 2
      %v796 = vor.u32 %v794, %v795
      %v797 = vsel %vm770, %v792, %v796
      %v799 = vshrl.u32 %v586, 16
      %v801 = vrot.slane %v799, 1
      %v802 = vshll.u32 %v586, 16
      %v804 = vrot.slane %v802, 2
      %v805 = vor.u32 %v801, %v804
      %v806 = vsel %vm770, %v796, %v805
      %v808 = vshrl.u32 %v587, 16
      %v810 = vrot.slane %v808, 1
      %v811 = vshll.u32 %v587, 16
      %v813 = vrot.slane %v811, 2
      %v814 = vor.u32 %v810, %v813
      %v815 = vsel %vm770, %v805, %v814
      %v817 = vsel %vm324, %v777, 0
      %v820 = vsel %vm324, %v781, 0
      %v823 = vsel %vm324, %v785, 0
      %v826 = vsel %vm324, %v789, 0
      %v829 = vsel %vm324, %v793, 0
      %v832 = vsel %vm324, %v797, 0
      %v835 = vsel %vm324, %v806, 0
      %v838 = vsel %vm324, %v815, 0
      %v841 = vsel %vm324, %v814, 0
      %v844 = vsel %vm352, %v769, 0
      %846 = vmatprep.subr.bf16.mxu0 0
      %847 = vmatpush1.bf16.msra.mxu0 %v844
      %848 = vmatprep.subr.bf16.mxu0 0
      %849 = vmatpush1.bf16.msra.mxu0 0
      %850 = vmatprep.subr.bf16.mxu0 0
      %851 = vmatpush1.bf16.msra.mxu0 0
      %852 = vmatprep.subr.bf16.mxu0 0
      %853 = vmatpush1.bf16.msra.mxu0 0
      %854 = vmatprep.subr.bf16.mxu0 0
      %855 = vmatpush1.bf16.msra.mxu0 0
      %856 = vmatprep.subr.bf16.mxu0 0
      %857 = vmatpush1.bf16.msra.mxu0 0
      %858 = vmatprep.subr.bf16.mxu0 0
      %859 = vmatpush1.bf16.msra.mxu0 0
      %860 = vmatprep.subr.bf16.mxu0 0
      %861 = vmatpush1.bf16.msra.mxu0 0
      %862 = vmatprep.subr.bf16.mxu0 0
      %863 = vmatpush1.bf16.msra.mxu0 0
      %864 = vmatprep.subr.bf16.mxu0 0
      %865 = vmatpush1.bf16.msra.mxu0 0
      %866 = vmatprep.subr.bf16.mxu0 0
      %867 = vmatpush1.bf16.msra.mxu0 0
      %868 = vmatprep.subr.bf16.mxu0 0
      %869 = vmatpush1.bf16.msra.mxu0 0
      %870 = vmatprep.subr.bf16.mxu0 0
      %871 = vmatpush1.bf16.msra.mxu0 0
      %872 = vmatprep.subr.bf16.mxu0 0
      %873 = vmatpush1.bf16.msra.mxu0 0
      %874 = vmatprep.subr.bf16.mxu0 0
      %875 = vmatpush1.bf16.msra.mxu0 0
      %876 = vmatprep.subr.bf16.mxu0 0
      %877 = vmatpush1.bf16.msra.mxu0 0
      %878 = vmatprep.mubr.bf16.mxu0 0
      %879 = vmatmul.mubr.bf16.gmra.mrb[0].mxu0 %v817
      %v880 = vpop.f32.mrb[0].mxu0
      %v881 = vadd.f32 0.0, %v880
      %v882 = vpop.f32.mrb[0].mxu0
      %v883 = vpop.f32.mrb[0].mxu0
      %v884 = vadd.f32 0.0, %v883
      %v885 = vpop.f32.mrb[0].mxu0
      %886 = vmatprep.mubr.bf16.mxu0 0
      %887 = vmatmul.mubr.bf16.gmra.mrb[0].mxu0 %v820
      %v888 = vpop.f32.mrb[0].mxu0
      %v889 = vadd.f32 0.0, %v888
      %v890 = vpop.f32.mrb[0].mxu0
      %v891 = vpop.f32.mrb[0].mxu0
      %v892 = vadd.f32 0.0, %v891
      %v893 = vpop.f32.mrb[0].mxu0
      %894 = vmatprep.mubr.bf16.mxu0 0
      %895 = vmatmul.mubr.bf16.gmra.mrb[0].mxu0 %v823
      %v896 = vpop.f32.mrb[0].mxu0
      %v897 = vadd.f32 0.0, %v896
      %v898 = vpop.f32.mrb[0].mxu0
      %v899 = vpop.f32.mrb[0].mxu0
      %v900 = vadd.f32 0.0, %v899
      %v901 = vpop.f32.mrb[0].mxu0
      %902 = vmatprep.mubr.bf16.mxu0 0
      %903 = vmatmul.mubr.bf16.gmra.mrb[0].mxu0 %v826
      %v904 = vpop.f32.mrb[0].mxu0
      %v905 = vadd.f32 0.0, %v904
      %v906 = vpop.f32.mrb[0].mxu0
      %v907 = vpop.f32.mrb[0].mxu0
      %v908 = vadd.f32 0.0, %v907
      %v909 = vpop.f32.mrb[0].mxu0
      %910 = vmatprep.mubr.bf16.mxu0 0
      %911 = vmatmul.mubr.bf16.gmra.mrb[0].mxu0 %v829
      %v912 = vpop.f32.mrb[0].mxu0
      %v913 = vadd.f32 0.0, %v912
      %v914 = vpop.f32.mrb[0].mxu0
      %v915 = vpop.f32.mrb[0].mxu0
      %v916 = vadd.f32 0.0, %v915
      %v917 = vpop.f32.mrb[0].mxu0
      %918 = vmatprep.mubr.bf16.mxu0 0
      %919 = vmatmul.mubr.bf16.gmra.mrb[0].mxu0 %v832
      %v920 = vpop.f32.mrb[0].mxu0
      %v921 = vadd.f32 0.0, %v920
      %v922 = vpop.f32.mrb[0].mxu0
      %v923 = vpop.f32.mrb[0].mxu0
      %v924 = vadd.f32 0.0, %v923
      %v925 = vpop.f32.mrb[0].mxu0
      %926 = vmatprep.mubr.bf16.mxu0 0
      %927 = vmatmul.mubr.bf16.gmra.mrb[0].mxu0 %v835
      %v928 = vpop.f32.mrb[0].mxu0
      %v929 = vadd.f32 0.0, %v928
      %v930 = vpop.f32.mrb[0].mxu0
      %v931 = vpop.f32.mrb[0].mxu0
      %v932 = vadd.f32 0.0, %v931
      %v933 = vpop.f32.mrb[0].mxu0
      %934 = vmatprep.mubr.bf16.mxu0 0
      %935 = vmatmul.mubr.bf16.gmra.mrb[0].mxu0 %v838
      %v936 = vpop.f32.mrb[0].mxu0
      %v937 = vadd.f32 0.0, %v936
      %v938 = vpop.f32.mrb[0].mxu0
      %v939 = vpop.f32.mrb[0].mxu0
      %v940 = vadd.f32 0.0, %v939
      %v941 = vpop.f32.mrb[0].mxu0
      %942 = vmatprep.mubr.bf16.mxu0 0
      %943 = vmatmul.mubr.bf16.gmra.mrb[0].mxu0 %v841
      %v944 = vpop.f32.mrb[0].mxu0
      %v945 = vadd.f32 0.0, %v944
      %v946 = vpop.f32.mrb[0].mxu0
      %v947 = vpop.f32.mrb[0].mxu0
      %v948 = vpop.f32.mrb[0].mxu0
      %949 = vdwg.mxu0
      %v950 = vadd.f32 %v751, %v881
      %v951 = vadd.f32 %v752, %v884
      %v952 = vadd.f32 %v753, %v889
      %v953 = vadd.f32 %v754, %v892
      %v954 = vadd.f32 %v755, %v897
      %v955 = vadd.f32 %v756, %v900
      %v956 = vadd.f32 %v757, %v905
      %v957 = vadd.f32 %v758, %v908
      %v958 = vadd.f32 %v759, %v913
      %v959 = vadd.f32 %v760, %v916
      %v960 = vadd.f32 %v761, %v921
      %v961 = vadd.f32 %v762, %v924
      %v962 = vadd.f32 %v763, %v929
      %v963 = vadd.f32 %v764, %v932
      %v964 = vadd.f32 %v765, %v937
      %v965 = vadd.f32 %v766, %v940
      %v966 = vadd.f32 %v767, %v945
      %v967 = vpack.c.bf16 %v236, %v235
      %v968 = vpack.c.bf16 %v238, %v237
      %s969 = scalar_lea.vmem %s1, 8
      %v970 = vld [vmem:[%s969] sm:$0x3]
      %vm973 = vcmask 1045504
      %v974 = vrot.slane %v243, 2
      %v975 = vrot.slane %v244, 2
      %v976 = vsel %vm973, %v974, %v975
      %v977 = vrot.slane %v245, 2
      %v978 = vsel %vm973, %v975, %v977
      %v979 = vrot.slane %v246, 2
      %v980 = vsel %vm973, %v977, %v979
      %v981 = vrot.slane %v249, 2
      %v982 = vsel %vm973, %v979, %v981
      %v983 = vrot.slane %v586, 2
      %v984 = vsel %vm973, %v981, %v983
      %v985 = vrot.slane %v587, 2
      %v986 = vsel %vm973, %v983, %v985
      %v987 = vrot.slane %v967, 2
      %v988 = vsel %vm973, %v985, %v987
      %v989 = vrot.slane %v968, 2
      %v990 = vsel %vm973, %v987, %v989
      %v992 = vsel %vm324, %v976, 0
      %v995 = vsel %vm324, %v978, 0
      %v998 = vsel %vm324, %v980, 0
      %v1001 = vsel %vm324, %v982, 0
      %v1004 = vsel %vm324, %v984, 0
      %v1007 = vsel %vm324, %v986, 0
      %v1010 = vsel %vm324, %v988, 0
      %v1013 = vsel %vm324, %v990, 0
      %v1016 = vsel %vm324, %v989, 0
      %v1019 = vsel %vm352, %v970, 0
      %1021 = vmatprep.subr.bf16.mxu0 0
      %1022 = vmatpush1.bf16.msra.mxu0 %v1019
      %1023 = vmatprep.subr.bf16.mxu0 0
      %1024 = vmatpush1.bf16.msra.mxu0 0
      %1025 = vmatprep.subr.bf16.mxu0 0
      %1026 = vmatpush1.bf16.msra.mxu0 0
      %1027 = vmatprep.subr.bf16.mxu0 0
      %1028 = vmatpush1.bf16.msra.mxu0 0
      %1029 = vmatprep.subr.bf16.mxu0 0
      %1030 = vmatpush1.bf16.msra.mxu0 0
      %1031 = vmatprep.subr.bf16.mxu0 0
      %1032 = vmatpush1.bf16.msra.mxu0 0
      %1033 = vmatprep.subr.bf16.mxu0 0
      %1034 = vmatpush1.bf16.msra.mxu0 0
      %1035 = vmatprep.subr.bf16.mxu0 0
      %1036 = vmatpush1.bf16.msra.mxu0 0
      %1037 = vmatprep.subr.bf16.mxu0 0
      %1038 = vmatpush1.bf16.msra.mxu0 0
      %1039 = vmatprep.subr.bf16.mxu0 0
      %1040 = vmatpush1.bf16.msra.mxu0 0
      %1041 = vmatprep.subr.bf16.mxu0 0
      %1042 = vmatpush1.bf16.msra.mxu0 0
      %1043 = vmatprep.subr.bf16.mxu0 0
      %1044 = vmatpush1.bf16.msra.mxu0 0
      %1045 = vmatprep.subr.bf16.mxu0 0
      %1046 = vmatpush1.bf16.msra.mxu0 0
      %1047 = vmatprep.subr.bf16.mxu0 0
      %1048 = vmatpush1.bf16.msra.mxu0 0
      %1049 = vmatprep.subr.bf16.mxu0 0
      %1050 = vmatpush1.bf16.msra.mxu0 0
      %1051 = vmatprep.subr.bf16.mxu0 0
      %1052 = vmatpush1.bf16.msra.mxu0 0
      %1053 = vmatprep.mubr.bf16.mxu0 0
      %1054 = vmatmul.mubr.bf16.gmra.mrb[0].mxu0 %v992
      %v1055 = vpop.f32.mrb[0].mxu0
      %v1056 = vadd.f32 0.0, %v1055
      %v1057 = vpop.f32.mrb[0].mxu0
      %v1058 = vpop.f32.mrb[0].mxu0
      %v1059 = vadd.f32 0.0, %v1058
      %v1060 = vpop.f32.mrb[0].mxu0
      %1061 = vmatprep.mubr.bf16.mxu0 0
      %1062 = vmatmul.mubr.bf16.gmra.mrb[0].mxu0 %v995
      %v1063 = vpop.f32.mrb[0].mxu0
      %v1064 = vadd.f32 0.0, %v1063
      %v1065 = vpop.f32.mrb[0].mxu0
      %v1066 = vpop.f32.mrb[0].mxu0
      %v1067 = vadd.f32 0.0, %v1066
      %v1068 = vpop.f32.mrb[0].mxu0
      %1069 = vmatprep.mubr.bf16.mxu0 0
      %1070 = vmatmul.mubr.bf16.gmra.mrb[0].mxu0 %v998
      %v1071 = vpop.f32.mrb[0].mxu0
      %v1072 = vadd.f32 0.0, %v1071
      %v1073 = vpop.f32.mrb[0].mxu0
      %v1074 = vpop.f32.mrb[0].mxu0
      %v1075 = vadd.f32 0.0, %v1074
      %v1076 = vpop.f32.mrb[0].mxu0
      %1077 = vmatprep.mubr.bf16.mxu0 0
      %1078 = vmatmul.mubr.bf16.gmra.mrb[0].mxu0 %v1001
      %v1079 = vpop.f32.mrb[0].mxu0
      %v1080 = vadd.f32 0.0, %v1079
      %v1081 = vpop.f32.mrb[0].mxu0
      %v1082 = vpop.f32.mrb[0].mxu0
      %v1083 = vadd.f32 0.0, %v1082
      %v1084 = vpop.f32.mrb[0].mxu0
      %1085 = vmatprep.mubr.bf16.mxu0 0
      %1086 = vmatmul.mubr.bf16.gmra.mrb[0].mxu0 %v1004
      %v1087 = vpop.f32.mrb[0].mxu0
      %v1088 = vadd.f32 0.0, %v1087
      %v1089 = vpop.f32.mrb[0].mxu0
      %v1090 = vpop.f32.mrb[0].mxu0
      %v1091 = vadd.f32 0.0, %v1090
      %v1092 = vpop.f32.mrb[0].mxu0
      %1093 = vmatprep.mubr.bf16.mxu0 0
      %1094 = vmatmul.mubr.bf16.gmra.mrb[0].mxu0 %v1007
      %v1095 = vpop.f32.mrb[0].mxu0
      %v1096 = vadd.f32 0.0, %v1095
      %v1097 = vpop.f32.mrb[0].mxu0
      %v1098 = vpop.f32.mrb[0].mxu0
      %v1099 = vadd.f32 0.0, %v1098
      %v1100 = vpop.f32.mrb[0].mxu0
      %1101 = vmatprep.mubr.bf16.mxu0 0
      %1102 = vmatmul.mubr.bf16.gmra.mrb[0].mxu0 %v1010
      %v1103 = vpop.f32.mrb[0].mxu0
      %v1104 = vadd.f32 0.0, %v1103
      %v1105 = vpop.f32.mrb[0].mxu0
      %v1106 = vpop.f32.mrb[0].mxu0
      %v1107 = vadd.f32 0.0, %v1106
      %v1108 = vpop.f32.mrb[0].mxu0
      %1109 = vmatprep.mubr.bf16.mxu0 0
      %1110 = vmatmul.mubr.bf16.gmra.mrb[0].mxu0 %v1013
      %v1111 = vpop.f32.mrb[0].mxu0
      %v1112 = vadd.f32 0.0, %v1111
      %v1113 = vpop.f32.mrb[0].mxu0
      %v1114 = vpop.f32.mrb[0].mxu0
      %v1115 = vadd.f32 0.0, %v1114
      %v1116 = vpop.f32.mrb[0].mxu0
      %1117 = vmatprep.mubr.bf16.mxu0 0
      %1118 = vmatmul.mubr.bf16.gmra.mrb[0].mxu0 %v1016
      %v1119 = vpop.f32.mrb[0].mxu0
      %v1120 = vadd.f32 0.0, %v1119
      %v1121 = vpop.f32.mrb[0].mxu0
      %v1122 = vpop.f32.mrb[0].mxu0
      %v1123 = vpop.f32.mrb[0].mxu0
      %1124 = vdwg.mxu0
      %v1125 = vadd.f32 %v950, %v1056
      %v1126 = vadd.f32 %v951, %v1059
      %v1127 = vadd.f32 %v952, %v1064
      %v1128 = vadd.f32 %v953, %v1067
      %v1129 = vadd.f32 %v954, %v1072
      %v1130 = vadd.f32 %v955, %v1075
      %v1131 = vadd.f32 %v956, %v1080
      %v1132 = vadd.f32 %v957, %v1083
      %v1133 = vadd.f32 %v958, %v1088
      %v1134 = vadd.f32 %v959, %v1091
      %v1135 = vadd.f32 %v960, %v1096
      %v1136 = vadd.f32 %v961, %v1099
      %v1137 = vadd.f32 %v962, %v1104
      %v1138 = vadd.f32 %v963, %v1107
      %v1139 = vadd.f32 %v964, %v1112
      %v1140 = vadd.f32 %v965, %v1115
      %v1141 = vadd.f32 %v966, %v1120
      %s1142 = scalar_lea.vmem %s1, 10
      %v1143 = vld [vmem:[%s1142] sm:$0x3]
      %vm1144 = vsmask.f32 5376
      %v1145 = vrot.slane %v289, 2
      %v1146 = vrot.slane %v285, 3
      %v1147 = vor.u32 %v1145, %v1146
      %v1148 = vrot.slane %v297, 2
      %v1149 = vrot.slane %v293, 3
      %v1150 = vor.u32 %v1148, %v1149
      %v1151 = vsel %vm1144, %v1147, %v1150
      %v1152 = vrot.slane %v305, 2
      %v1153 = vrot.slane %v301, 3
      %v1154 = vor.u32 %v1152, %v1153
      %v1155 = vsel %vm1144, %v1150, %v1154
      %v1156 = vrot.slane %v313, 2
      %v1157 = vrot.slane %v309, 3
      %v1158 = vor.u32 %v1156, %v1157
      %v1159 = vsel %vm1144, %v1154, %v1158
      %v1160 = vrot.slane %v321, 2
      %v1161 = vrot.slane %v317, 3
      %v1162 = vor.u32 %v1160, %v1161
      %v1163 = vsel %vm1144, %v1158, %v1162
      %v1164 = vrot.slane %v799, 2
      %v1165 = vrot.slane %v802, 3
      %v1166 = vor.u32 %v1164, %v1165
      %v1167 = vsel %vm1144, %v1162, %v1166
      %v1168 = vrot.slane %v808, 2
      %v1169 = vrot.slane %v811, 3
      %v1170 = vor.u32 %v1168, %v1169
      %v1171 = vsel %vm1144, %v1166, %v1170
      %v1173 = vshrl.u32 %v967, 16
      %v1175 = vrot.slane %v1173, 2
      %v1176 = vshll.u32 %v967, 16
      %v1178 = vrot.slane %v1176, 3
      %v1179 = vor.u32 %v1175, %v1178
      %v1180 = vsel %vm1144, %v1170, %v1179
      %v1182 = vshrl.u32 %v968, 16
      %v1184 = vrot.slane %v1182, 2
      %v1185 = vshll.u32 %v968, 16
      %v1187 = vrot.slane %v1185, 3
      %v1188 = vor.u32 %v1184, %v1187
      %v1189 = vsel %vm1144, %v1179, %v1188
      %v1191 = vsel %vm324, %v1151, 0
      %v1194 = vsel %vm324, %v1155, 0
      %v1197 = vsel %vm324, %v1159, 0
      %v1200 = vsel %vm324, %v1163, 0
      %v1203 = vsel %vm324, %v1167, 0
      %v1206 = vsel %vm324, %v1171, 0
      %v1209 = vsel %vm324, %v1180, 0
      %v1212 = vsel %vm324, %v1189, 0
      %v1215 = vsel %vm324, %v1188, 0
      %v1218 = vsel %vm352, %v1143, 0
      %1220 = vmatprep.subr.bf16.mxu0 0
      %1221 = vmatpush1.bf16.msra.mxu0 %v1218
      %1222 = vmatprep.subr.bf16.mxu0 0
      %1223 = vmatpush1.bf16.msra.mxu0 0
      %1224 = vmatprep.subr.bf16.mxu0 0
      %1225 = vmatpush1.bf16.msra.mxu0 0
      %1226 = vmatprep.subr.bf16.mxu0 0
      %1227 = vmatpush1.bf16.msra.mxu0 0
      %1228 = vmatprep.subr.bf16.mxu0 0
      %1229 = vmatpush1.bf16.msra.mxu0 0
      %1230 = vmatprep.subr.bf16.mxu0 0
      %1231 = vmatpush1.bf16.msra.mxu0 0
      %1232 = vmatprep.subr.bf16.mxu0 0
      %1233 = vmatpush1.bf16.msra.mxu0 0
      %1234 = vmatprep.subr.bf16.mxu0 0
      %1235 = vmatpush1.bf16.msra.mxu0 0
      %1236 = vmatprep.subr.bf16.mxu0 0
      %1237 = vmatpush1.bf16.msra.mxu0 0
      %1238 = vmatprep.subr.bf16.mxu0 0
      %1239 = vmatpush1.bf16.msra.mxu0 0
      %1240 = vmatprep.subr.bf16.mxu0 0
      %1241 = vmatpush1.bf16.msra.mxu0 0
      %1242 = vmatprep.subr.bf16.mxu0 0
      %1243 = vmatpush1.bf16.msra.mxu0 0
      %1244 = vmatprep.subr.bf16.mxu0 0
      %1245 = vmatpush1.bf16.msra.mxu0 0
      %1246 = vmatprep.subr.bf16.mxu0 0
      %1247 = vmatpush1.bf16.msra.mxu0 0
      %1248 = vmatprep.subr.bf16.mxu0 0
      %1249 = vmatpush1.bf16.msra.mxu0 0
      %1250 = vmatprep.subr.bf16.mxu0 0
      %1251 = vmatpush1.bf16.msra.mxu0 0
      %1252 = vmatprep.mubr.bf16.mxu0 0
      %1253 = vmatmul.mubr.bf16.gmra.mrb[0].mxu0 %v1191
      %v1254 = vpop.f32.mrb[0].mxu0
      %v1255 = vadd.f32 0.0, %v1254
      %v1256 = vpop.f32.mrb[0].mxu0
      %v1257 = vpop.f32.mrb[0].mxu0
      %v1258 = vadd.f32 0.0, %v1257
      %v1259 = vpop.f32.mrb[0].mxu0
      %1260 = vmatprep.mubr.bf16.mxu0 0
      %1261 = vmatmul.mubr.bf16.gmra.mrb[0].mxu0 %v1194
      %v1262 = vpop.f32.mrb[0].mxu0
      %v1263 = vadd.f32 0.0, %v1262
      %v1264 = vpop.f32.mrb[0].mxu0
      %v1265 = vpop.f32.mrb[0].mxu0
      %v1266 = vadd.f32 0.0, %v1265
      %v1267 = vpop.f32.mrb[0].mxu0
      %1268 = vmatprep.mubr.bf16.mxu0 0
      %1269 = vmatmul.mubr.bf16.gmra.mrb[0].mxu0 %v1197
      %v1270 = vpop.f32.mrb[0].mxu0
      %v1271 = vadd.f32 0.0, %v1270
      %v1272 = vpop.f32.mrb[0].mxu0
      %v1273 = vpop.f32.mrb[0].mxu0
      %v1274 = vadd.f32 0.0, %v1273
      %v1275 = vpop.f32.mrb[0].mxu0
      %1276 = vmatprep.mubr.bf16.mxu0 0
      %1277 = vmatmul.mubr.bf16.gmra.mrb[0].mxu0 %v1200
      %v1278 = vpop.f32.mrb[0].mxu0
      %v1279 = vadd.f32 0.0, %v1278
      %v1280 = vpop.f32.mrb[0].mxu0
      %v1281 = vpop.f32.mrb[0].mxu0
      %v1282 = vadd.f32 0.0, %v1281
      %v1283 = vpop.f32.mrb[0].mxu0
      %1284 = vmatprep.mubr.bf16.mxu0 0
      %1285 = vmatmul.mubr.bf16.gmra.mrb[0].mxu0 %v1203
      %v1286 = vpop.f32.mrb[0].mxu0
      %v1287 = vadd.f32 0.0, %v1286
      %v1288 = vpop.f32.mrb[0].mxu0
      %v1289 = vpop.f32.mrb[0].mxu0
      %v1290 = vadd.f32 0.0, %v1289
      %v1291 = vpop.f32.mrb[0].mxu0
      %1292 = vmatprep.mubr.bf16.mxu0 0
      %1293 = vmatmul.mubr.bf16.gmra.mrb[0].mxu0 %v1206
      %v1294 = vpop.f32.mrb[0].mxu0
      %v1295 = vadd.f32 0.0, %v1294
      %v1296 = vpop.f32.mrb[0].mxu0
      %v1297 = vpop.f32.mrb[0].mxu0
      %v1298 = vadd.f32 0.0, %v1297
      %v1299 = vpop.f32.mrb[0].mxu0
      %1300 = vmatprep.mubr.bf16.mxu0 0
      %1301 = vmatmul.mubr.bf16.gmra.mrb[0].mxu0 %v1209
      %v1302 = vpop.f32.mrb[0].mxu0
      %v1303 = vadd.f32 0.0, %v1302
      %v1304 = vpop.f32.mrb[0].mxu0
      %v1305 = vpop.f32.mrb[0].mxu0
      %v1306 = vadd.f32 0.0, %v1305
      %v1307 = vpop.f32.mrb[0].mxu0
      %1308 = vmatprep.mubr.bf16.mxu0 0
      %1309 = vmatmul.mubr.bf16.gmra.mrb[0].mxu0 %v1212
      %v1310 = vpop.f32.mrb[0].mxu0
      %v1311 = vadd.f32 0.0, %v1310
      %v1312 = vpop.f32.mrb[0].mxu0
      %v1313 = vpop.f32.mrb[0].mxu0
      %v1314 = vadd.f32 0.0, %v1313
      %v1315 = vpop.f32.mrb[0].mxu0
      %1316 = vmatprep.mubr.bf16.mxu0 0
      %1317 = vmatmul.mubr.bf16.gmra.mrb[0].mxu0 %v1215
      %v1318 = vpop.f32.mrb[0].mxu0
      %v1319 = vadd.f32 0.0, %v1318
      %v1320 = vpop.f32.mrb[0].mxu0
      %v1321 = vpop.f32.mrb[0].mxu0
      %v1322 = vpop.f32.mrb[0].mxu0
      %1323 = vdwg.mxu0
      %v1324 = vadd.f32 %v1125, %v1255
      %v1325 = vadd.f32 %v1126, %v1258
      %v1326 = vadd.f32 %v1127, %v1263
      %v1327 = vadd.f32 %v1128, %v1266
      %v1328 = vadd.f32 %v1129, %v1271
      %v1329 = vadd.f32 %v1130, %v1274
      %v1330 = vadd.f32 %v1131, %v1279
      %v1331 = vadd.f32 %v1132, %v1282
      %v1332 = vadd.f32 %v1133, %v1287
      %v1333 = vadd.f32 %v1134, %v1290
      %v1334 = vadd.f32 %v1135, %v1295
      %v1335 = vadd.f32 %v1136, %v1298
      %v1336 = vadd.f32 %v1137, %v1303
      %v1337 = vadd.f32 %v1138, %v1306
      %v1338 = vadd.f32 %v1139, %v1311
      %v1339 = vadd.f32 %v1140, %v1314
      %v1340 = vadd.f32 %v1141, %v1319
      %v1342 = vlaneseq
      %v1343 = vshrl.u32 %v1342, 7
      %v1344 = vsub.s32 0, %v1343
      %v1345 = vrot.slane %v212, %v1344
      %v1347 = vadd.f32 %v1324, %v1345
      %v1348 = vadd.f32 %v1325, %v1345
      %v1349 = vadd.f32 %v1326, %v1345
      %v1350 = vadd.f32 %v1327, %v1345
      %v1351 = vadd.f32 %v1328, %v1345
      %v1352 = vadd.f32 %v1329, %v1345
      %v1353 = vadd.f32 %v1330, %v1345
      %v1354 = vadd.f32 %v1331, %v1345
      %v1355 = vadd.f32 %v1332, %v1345
      %v1356 = vadd.f32 %v1333, %v1345
      %v1357 = vadd.f32 %v1334, %v1345
      %v1358 = vadd.f32 %v1335, %v1345
      %v1359 = vadd.f32 %v1336, %v1345
      %v1360 = vadd.f32 %v1337, %v1345
      %v1361 = vadd.f32 %v1338, %v1345
      %v1362 = vadd.f32 %v1339, %v1345
      %v1363 = vadd.f32 %v1340, %v1345
      %1364 = vst.msk [vmem:[%s205] sm:$0xff] %vm324, %v1347
      %1365 = vst.msk [vmem:[%s205 + $0x8] sm:$0xff] %vm324, %v1348
      %1366 = vst.msk [vmem:[%s205 + $0x10] sm:$0xff] %vm324, %v1349
      %1367 = vst.msk [vmem:[%s205 + $0x18] sm:$0xff] %vm324, %v1350
      %1368 = vst.msk [vmem:[%s205 + $0x20] sm:$0xff] %vm324, %v1351
      %1369 = vst.msk [vmem:[%s205 + $0x28] sm:$0xff] %vm324, %v1352
      %1370 = vst.msk [vmem:[%s205 + $0x30] sm:$0xff] %vm324, %v1353
      %1371 = vst.msk [vmem:[%s205 + $0x38] sm:$0xff] %vm324, %v1354
      %1372 = vst.msk [vmem:[%s205 + $0x40] sm:$0xff] %vm324, %v1355
      %1373 = vst.msk [vmem:[%s205 + $0x48] sm:$0xff] %vm324, %v1356
      %1374 = vst.msk [vmem:[%s205 + $0x50] sm:$0xff] %vm324, %v1357
      %1375 = vst.msk [vmem:[%s205 + $0x58] sm:$0xff] %vm324, %v1358
      %1376 = vst.msk [vmem:[%s205 + $0x60] sm:$0xff] %vm324, %v1359
      %1377 = vst.msk [vmem:[%s205 + $0x68] sm:$0xff] %vm324, %v1360
      %1378 = vst.msk [vmem:[%s205 + $0x70] sm:$0xff] %vm324, %v1361
      %1379 = vst.msk [vmem:[%s205 + $0x78] sm:$0xff] %vm324, %v1362
      %1380 = vst.msk [vmem:[%s205 + $0x80] sm:$0xff] %vm324, %v1363
      %s1381 = scalar_lea.vmem %s1, 12
      %v1382 = vld [vmem:[%s1381] sm:$0x3]
      %s1383 = scalar_lea.vmem %s1, 14
      %v1384 = vld [vmem:[%s1383] sm:$0x3]
      %v1387 = vrot.slane %v239, 1
      %v1388 = vrot.slane %v240, 1
      %v1389 = vsel %vm599, %v1387, %v1388
      %v1390 = vsel %vm599, %v1388, %v600
      %v1392 = vsel %vm324, %v1389, 0
      %v1395 = vsel %vm324, %v1390, 0
      %v1398 = vsel %vm324, %v611, 0
      %v1401 = vsel %vm352, %v1384, 0
      %1403 = vmatprep.subr.bf16.mxu0 0
      %1404 = vmatpush1.bf16.msra.mxu0 %v1401
      %1405 = vmatprep.subr.bf16.mxu0 0
      %1406 = vmatpush1.bf16.msra.mxu0 0
      %1407 = vmatprep.subr.bf16.mxu0 0
      %1408 = vmatpush1.bf16.msra.mxu0 0
      %1409 = vmatprep.subr.bf16.mxu0 0
      %1410 = vmatpush1.bf16.msra.mxu0 0
      %1411 = vmatprep.subr.bf16.mxu0 0
      %1412 = vmatpush1.bf16.msra.mxu0 0
      %1413 = vmatprep.subr.bf16.mxu0 0
      %1414 = vmatpush1.bf16.msra.mxu0 0
      %1415 = vmatprep.subr.bf16.mxu0 0
      %1416 = vmatpush1.bf16.msra.mxu0 0
      %1417 = vmatprep.subr.bf16.mxu0 0
      %1418 = vmatpush1.bf16.msra.mxu0 0
      %1419 = vmatprep.subr.bf16.mxu0 0
      %1420 = vmatpush1.bf16.msra.mxu0 0
      %1421 = vmatprep.subr.bf16.mxu0 0
      %1422 = vmatpush1.bf16.msra.mxu0 0
      %1423 = vmatprep.subr.bf16.mxu0 0
      %1424 = vmatpush1.bf16.msra.mxu0 0
      %1425 = vmatprep.subr.bf16.mxu0 0
      %1426 = vmatpush1.bf16.msra.mxu0 0
      %1427 = vmatprep.subr.bf16.mxu0 0
      %1428 = vmatpush1.bf16.msra.mxu0 0
      %1429 = vmatprep.subr.bf16.mxu0 0
      %1430 = vmatpush1.bf16.msra.mxu0 0
      %1431 = vmatprep.subr.bf16.mxu0 0
      %1432 = vmatpush1.bf16.msra.mxu0 0
      %1433 = vmatprep.subr.bf16.mxu0 0
      %1434 = vmatpush1.bf16.msra.mxu0 0
      %1435 = vmatprep.mubr.bf16.mxu0 0
      %1436 = vmatmul.mubr.bf16.gmra.mrb[0].mxu0 %v1392
      %v1437 = vpop.f32.mrb[0].mxu0
      %v1438 = vadd.f32 0.0, %v1437
      %v1439 = vpop.f32.mrb[0].mxu0
      %v1440 = vpop.f32.mrb[0].mxu0
      %v1441 = vadd.f32 0.0, %v1440
      %v1442 = vpop.f32.mrb[0].mxu0
      %1443 = vmatprep.mubr.bf16.mxu0 0
      %1444 = vmatmul.mubr.bf16.gmra.mrb[0].mxu0 %v1395
      %v1445 = vpop.f32.mrb[0].mxu0
      %v1446 = vadd.f32 0.0, %v1445
      %v1447 = vpop.f32.mrb[0].mxu0
      %v1448 = vpop.f32.mrb[0].mxu0
      %v1449 = vadd.f32 0.0, %v1448
      %v1450 = vpop.f32.mrb[0].mxu0
      %1451 = vmatprep.mubr.bf16.mxu0 0
      %1452 = vmatmul.mubr.bf16.gmra.mrb[0].mxu0 %v618
      %v1453 = vpop.f32.mrb[0].mxu0
      %v1454 = vadd.f32 0.0, %v1453
      %v1455 = vpop.f32.mrb[0].mxu0
      %v1456 = vpop.f32.mrb[0].mxu0
      %v1457 = vadd.f32 0.0, %v1456
      %v1458 = vpop.f32.mrb[0].mxu0
      %1459 = vmatprep.mubr.bf16.mxu0 0
      %1460 = vmatmul.mubr.bf16.gmra.mrb[0].mxu0 %v621
      %v1461 = vpop.f32.mrb[0].mxu0
      %v1462 = vadd.f32 0.0, %v1461
      %v1463 = vpop.f32.mrb[0].mxu0
      %v1464 = vpop.f32.mrb[0].mxu0
      %v1465 = vadd.f32 0.0, %v1464
      %v1466 = vpop.f32.mrb[0].mxu0
      %1467 = vmatprep.mubr.bf16.mxu0 0
      %1468 = vmatmul.mubr.bf16.gmra.mrb[0].mxu0 %v624
      %v1469 = vpop.f32.mrb[0].mxu0
      %v1470 = vadd.f32 0.0, %v1469
      %v1471 = vpop.f32.mrb[0].mxu0
      %v1472 = vpop.f32.mrb[0].mxu0
      %v1473 = vadd.f32 0.0, %v1472
      %v1474 = vpop.f32.mrb[0].mxu0
      %1475 = vmatprep.mubr.bf16.mxu0 0
      %1476 = vmatmul.mubr.bf16.gmra.mrb[0].mxu0 %v627
      %v1477 = vpop.f32.mrb[0].mxu0
      %v1478 = vadd.f32 0.0, %v1477
      %v1479 = vpop.f32.mrb[0].mxu0
      %v1480 = vpop.f32.mrb[0].mxu0
      %v1481 = vadd.f32 0.0, %v1480
      %v1482 = vpop.f32.mrb[0].mxu0
      %1483 = vmatprep.mubr.bf16.mxu0 0
      %1484 = vmatmul.mubr.bf16.gmra.mrb[0].mxu0 %v630
      %v1485 = vpop.f32.mrb[0].mxu0
      %v1486 = vadd.f32 0.0, %v1485
      %v1487 = vpop.f32.mrb[0].mxu0
      %v1488 = vpop.f32.mrb[0].mxu0
      %v1489 = vadd.f32 0.0, %v1488
      %v1490 = vpop.f32.mrb[0].mxu0
      %1491 = vmatprep.mubr.bf16.mxu0 0
      %1492 = vmatmul.mubr.bf16.gmra.mrb[0].mxu0 %v633
      %v1493 = vpop.f32.mrb[0].mxu0
      %v1494 = vadd.f32 0.0, %v1493
      %v1495 = vpop.f32.mrb[0].mxu0
      %v1496 = vpop.f32.mrb[0].mxu0
      %v1497 = vadd.f32 0.0, %v1496
      %v1498 = vpop.f32.mrb[0].mxu0
      %1499 = vmatprep.mubr.bf16.mxu0 0
      %1500 = vmatmul.mubr.bf16.gmra.mrb[0].mxu0 %v1398
      %v1501 = vpop.f32.mrb[0].mxu0
      %v1502 = vadd.f32 0.0, %v1501
      %v1503 = vpop.f32.mrb[0].mxu0
      %v1504 = vpop.f32.mrb[0].mxu0
      %v1505 = vpop.f32.mrb[0].mxu0
      %1506 = vdwg.mxu0
      %v1508 = vsel %vm352, %v1382, 0
      %1510 = vmatprep.subr.bf16.mxu0 0
      %1511 = vmatpush1.bf16.msra.mxu0 %v1508
      %1512 = vmatprep.subr.bf16.mxu0 0
      %1513 = vmatpush1.bf16.msra.mxu0 0
      %1514 = vmatprep.subr.bf16.mxu0 0
      %1515 = vmatpush1.bf16.msra.mxu0 0
      %1516 = vmatprep.subr.bf16.mxu0 0
      %1517 = vmatpush1.bf16.msra.mxu0 0
      %1518 = vmatprep.subr.bf16.mxu0 0
      %1519 = vmatpush1.bf16.msra.mxu0 0
      %1520 = vmatprep.subr.bf16.mxu0 0
      %1521 = vmatpush1.bf16.msra.mxu0 0
      %1522 = vmatprep.subr.bf16.mxu0 0
      %1523 = vmatpush1.bf16.msra.mxu0 0
      %1524 = vmatprep.subr.bf16.mxu0 0
      %1525 = vmatpush1.bf16.msra.mxu0 0
      %1526 = vmatprep.subr.bf16.mxu0 0
      %1527 = vmatpush1.bf16.msra.mxu0 0
      %1528 = vmatprep.subr.bf16.mxu0 0
      %1529 = vmatpush1.bf16.msra.mxu0 0
      %1530 = vmatprep.subr.bf16.mxu0 0
      %1531 = vmatpush1.bf16.msra.mxu0 0
      %1532 = vmatprep.subr.bf16.mxu0 0
      %1533 = vmatpush1.bf16.msra.mxu0 0
      %1534 = vmatprep.subr.bf16.mxu0 0
      %1535 = vmatpush1.bf16.msra.mxu0 0
      %1536 = vmatprep.subr.bf16.mxu0 0
      %1537 = vmatpush1.bf16.msra.mxu0 0
      %1538 = vmatprep.subr.bf16.mxu0 0
      %1539 = vmatpush1.bf16.msra.mxu0 0
      %1540 = vmatprep.subr.bf16.mxu0 0
      %1541 = vmatpush1.bf16.msra.mxu0 0
      %1542 = vmatprep.mubr.bf16.mxu0 0
      %1543 = vmatmul.mubr.bf16.gmra.mrb[0].mxu0 %v326
      %v1544 = vpop.f32.mrb[0].mxu0
      %v1545 = vadd.f32 %v1438, %v1544
      %v1546 = vpop.f32.mrb[0].mxu0
      %v1547 = vpop.f32.mrb[0].mxu0
      %v1548 = vadd.f32 %v1441, %v1547
      %v1549 = vpop.f32.mrb[0].mxu0
      %1550 = vmatprep.mubr.bf16.mxu0 0
      %1551 = vmatmul.mubr.bf16.gmra.mrb[0].mxu0 %v329
      %v1552 = vpop.f32.mrb[0].mxu0
      %v1553 = vadd.f32 %v1446, %v1552
      %v1554 = vpop.f32.mrb[0].mxu0
      %v1555 = vpop.f32.mrb[0].mxu0
      %v1556 = vadd.f32 %v1449, %v1555
      %v1557 = vpop.f32.mrb[0].mxu0
      %1558 = vmatprep.mubr.bf16.mxu0 0
      %1559 = vmatmul.mubr.bf16.gmra.mrb[0].mxu0 %v332
      %v1560 = vpop.f32.mrb[0].mxu0
      %v1561 = vadd.f32 %v1454, %v1560
      %v1562 = vpop.f32.mrb[0].mxu0
      %v1563 = vpop.f32.mrb[0].mxu0
      %v1564 = vadd.f32 %v1457, %v1563
      %v1565 = vpop.f32.mrb[0].mxu0
      %1566 = vmatprep.mubr.bf16.mxu0 0
      %1567 = vmatmul.mubr.bf16.gmra.mrb[0].mxu0 %v335
      %v1568 = vpop.f32.mrb[0].mxu0
      %v1569 = vadd.f32 %v1462, %v1568
      %v1570 = vpop.f32.mrb[0].mxu0
      %v1571 = vpop.f32.mrb[0].mxu0
      %v1572 = vadd.f32 %v1465, %v1571
      %v1573 = vpop.f32.mrb[0].mxu0
      %1574 = vmatprep.mubr.bf16.mxu0 0
      %1575 = vmatmul.mubr.bf16.gmra.mrb[0].mxu0 %v338
      %v1576 = vpop.f32.mrb[0].mxu0
      %v1577 = vadd.f32 %v1470, %v1576
      %v1578 = vpop.f32.mrb[0].mxu0
      %v1579 = vpop.f32.mrb[0].mxu0
      %v1580 = vadd.f32 %v1473, %v1579
      %v1581 = vpop.f32.mrb[0].mxu0
      %1582 = vmatprep.mubr.bf16.mxu0 0
      %1583 = vmatmul.mubr.bf16.gmra.mrb[0].mxu0 %v341
      %v1584 = vpop.f32.mrb[0].mxu0
      %v1585 = vadd.f32 %v1478, %v1584
      %v1586 = vpop.f32.mrb[0].mxu0
      %v1587 = vpop.f32.mrb[0].mxu0
      %v1588 = vadd.f32 %v1481, %v1587
      %v1589 = vpop.f32.mrb[0].mxu0
      %1590 = vmatprep.mubr.bf16.mxu0 0
      %1591 = vmatmul.mubr.bf16.gmra.mrb[0].mxu0 %v344
      %v1592 = vpop.f32.mrb[0].mxu0
      %v1593 = vadd.f32 %v1486, %v1592
      %v1594 = vpop.f32.mrb[0].mxu0
      %v1595 = vpop.f32.mrb[0].mxu0
      %v1596 = vadd.f32 %v1489, %v1595
      %v1597 = vpop.f32.mrb[0].mxu0
      %1598 = vmatprep.mubr.bf16.mxu0 0
      %1599 = vmatmul.mubr.bf16.gmra.mrb[0].mxu0 %v347
      %v1600 = vpop.f32.mrb[0].mxu0
      %v1601 = vadd.f32 %v1494, %v1600
      %v1602 = vpop.f32.mrb[0].mxu0
      %v1603 = vpop.f32.mrb[0].mxu0
      %v1604 = vadd.f32 %v1497, %v1603
      %v1605 = vpop.f32.mrb[0].mxu0
      %1606 = vmatprep.mubr.bf16.mxu0 0
      %1607 = vmatmul.mubr.bf16.gmra.mrb[0].mxu0 %v350
      %v1608 = vpop.f32.mrb[0].mxu0
      %v1609 = vadd.f32 %v1502, %v1608
      %v1610 = vpop.f32.mrb[0].mxu0
      %v1611 = vpop.f32.mrb[0].mxu0
      %v1612 = vpop.f32.mrb[0].mxu0
      %1613 = vdwg.mxu0
      %s1614 = scalar_lea.vmem %s1, 16
      %v1615 = vld [vmem:[%s1614] sm:$0x3]
      %v1617 = vsel %vm352, %v1615, 0
      %1619 = vmatprep.subr.bf16.mxu0 0
      %1620 = vmatpush1.bf16.msra.mxu0 %v1617
      %1621 = vmatprep.subr.bf16.mxu0 0
      %1622 = vmatpush1.bf16.msra.mxu0 0
      %1623 = vmatprep.subr.bf16.mxu0 0
      %1624 = vmatpush1.bf16.msra.mxu0 0
      %1625 = vmatprep.subr.bf16.mxu0 0
      %1626 = vmatpush1.bf16.msra.mxu0 0
      %1627 = vmatprep.subr.bf16.mxu0 0
      %1628 = vmatpush1.bf16.msra.mxu0 0
      %1629 = vmatprep.subr.bf16.mxu0 0
      %1630 = vmatpush1.bf16.msra.mxu0 0
      %1631 = vmatprep.subr.bf16.mxu0 0
      %1632 = vmatpush1.bf16.msra.mxu0 0
      %1633 = vmatprep.subr.bf16.mxu0 0
      %1634 = vmatpush1.bf16.msra.mxu0 0
      %1635 = vmatprep.subr.bf16.mxu0 0
      %1636 = vmatpush1.bf16.msra.mxu0 0
      %1637 = vmatprep.subr.bf16.mxu0 0
      %1638 = vmatpush1.bf16.msra.mxu0 0
      %1639 = vmatprep.subr.bf16.mxu0 0
      %1640 = vmatpush1.bf16.msra.mxu0 0
      %1641 = vmatprep.subr.bf16.mxu0 0
      %1642 = vmatpush1.bf16.msra.mxu0 0
      %1643 = vmatprep.subr.bf16.mxu0 0
      %1644 = vmatpush1.bf16.msra.mxu0 0
      %1645 = vmatprep.subr.bf16.mxu0 0
      %1646 = vmatpush1.bf16.msra.mxu0 0
      %1647 = vmatprep.subr.bf16.mxu0 0
      %1648 = vmatpush1.bf16.msra.mxu0 0
      %1649 = vmatprep.subr.bf16.mxu0 0
      %1650 = vmatpush1.bf16.msra.mxu0 0
      %1651 = vmatprep.mubr.bf16.mxu0 0
      %1652 = vmatmul.mubr.bf16.gmra.mrb[0].mxu0 %v817
      %v1653 = vpop.f32.mrb[0].mxu0
      %v1654 = vadd.f32 0.0, %v1653
      %v1655 = vpop.f32.mrb[0].mxu0
      %v1656 = vpop.f32.mrb[0].mxu0
      %v1657 = vadd.f32 0.0, %v1656
      %v1658 = vpop.f32.mrb[0].mxu0
      %1659 = vmatprep.mubr.bf16.mxu0 0
      %1660 = vmatmul.mubr.bf16.gmra.mrb[0].mxu0 %v820
      %v1661 = vpop.f32.mrb[0].mxu0
      %v1662 = vadd.f32 0.0, %v1661
      %v1663 = vpop.f32.mrb[0].mxu0
      %v1664 = vpop.f32.mrb[0].mxu0
      %v1665 = vadd.f32 0.0, %v1664
      %v1666 = vpop.f32.mrb[0].mxu0
      %1667 = vmatprep.mubr.bf16.mxu0 0
      %1668 = vmatmul.mubr.bf16.gmra.mrb[0].mxu0 %v823
      %v1669 = vpop.f32.mrb[0].mxu0
      %v1670 = vadd.f32 0.0, %v1669
      %v1671 = vpop.f32.mrb[0].mxu0
      %v1672 = vpop.f32.mrb[0].mxu0
      %v1673 = vadd.f32 0.0, %v1672
      %v1674 = vpop.f32.mrb[0].mxu0
      %1675 = vmatprep.mubr.bf16.mxu0 0
      %1676 = vmatmul.mubr.bf16.gmra.mrb[0].mxu0 %v826
      %v1677 = vpop.f32.mrb[0].mxu0
      %v1678 = vadd.f32 0.0, %v1677
      %v1679 = vpop.f32.mrb[0].mxu0
      %v1680 = vpop.f32.mrb[0].mxu0
      %v1681 = vadd.f32 0.0, %v1680
      %v1682 = vpop.f32.mrb[0].mxu0
      %1683 = vmatprep.mubr.bf16.mxu0 0
      %1684 = vmatmul.mubr.bf16.gmra.mrb[0].mxu0 %v829
      %v1685 = vpop.f32.mrb[0].mxu0
      %v1686 = vadd.f32 0.0, %v1685
      %v1687 = vpop.f32.mrb[0].mxu0
      %v1688 = vpop.f32.mrb[0].mxu0
      %v1689 = vadd.f32 0.0, %v1688
      %v1690 = vpop.f32.mrb[0].mxu0
      %1691 = vmatprep.mubr.bf16.mxu0 0
      %1692 = vmatmul.mubr.bf16.gmra.mrb[0].mxu0 %v832
      %v1693 = vpop.f32.mrb[0].mxu0
      %v1694 = vadd.f32 0.0, %v1693
      %v1695 = vpop.f32.mrb[0].mxu0
      %v1696 = vpop.f32.mrb[0].mxu0
      %v1697 = vadd.f32 0.0, %v1696
      %v1698 = vpop.f32.mrb[0].mxu0
      %1699 = vmatprep.mubr.bf16.mxu0 0
      %1700 = vmatmul.mubr.bf16.gmra.mrb[0].mxu0 %v835
      %v1701 = vpop.f32.mrb[0].mxu0
      %v1702 = vadd.f32 0.0, %v1701
      %v1703 = vpop.f32.mrb[0].mxu0
      %v1704 = vpop.f32.mrb[0].mxu0
      %v1705 = vadd.f32 0.0, %v1704
      %v1706 = vpop.f32.mrb[0].mxu0
      %1707 = vmatprep.mubr.bf16.mxu0 0
      %1708 = vmatmul.mubr.bf16.gmra.mrb[0].mxu0 %v838
      %v1709 = vpop.f32.mrb[0].mxu0
      %v1710 = vadd.f32 0.0, %v1709
      %v1711 = vpop.f32.mrb[0].mxu0
      %v1712 = vpop.f32.mrb[0].mxu0
      %v1713 = vadd.f32 0.0, %v1712
      %v1714 = vpop.f32.mrb[0].mxu0
      %1715 = vmatprep.mubr.bf16.mxu0 0
      %1716 = vmatmul.mubr.bf16.gmra.mrb[0].mxu0 %v841
      %v1717 = vpop.f32.mrb[0].mxu0
      %v1718 = vadd.f32 0.0, %v1717
      %v1719 = vpop.f32.mrb[0].mxu0
      %v1720 = vpop.f32.mrb[0].mxu0
      %v1721 = vpop.f32.mrb[0].mxu0
      %1722 = vdwg.mxu0
      %v1723 = vadd.f32 %v1545, %v1654
      %v1724 = vadd.f32 %v1548, %v1657
      %v1725 = vadd.f32 %v1553, %v1662
      %v1726 = vadd.f32 %v1556, %v1665
      %v1727 = vadd.f32 %v1561, %v1670
      %v1728 = vadd.f32 %v1564, %v1673
      %v1729 = vadd.f32 %v1569, %v1678
      %v1730 = vadd.f32 %v1572, %v1681
      %v1731 = vadd.f32 %v1577, %v1686
      %v1732 = vadd.f32 %v1580, %v1689
      %v1733 = vadd.f32 %v1585, %v1694
      %v1734 = vadd.f32 %v1588, %v1697
      %v1735 = vadd.f32 %v1593, %v1702
      %v1736 = vadd.f32 %v1596, %v1705
      %v1737 = vadd.f32 %v1601, %v1710
      %v1738 = vadd.f32 %v1604, %v1713
      %v1739 = vadd.f32 %v1609, %v1718
      %s1740 = scalar_lea.vmem %s1, 18
      %v1741 = vld [vmem:[%s1740] sm:$0x3]
      %v1742 = vrot.slane %v241, 2
      %v1743 = vrot.slane %v242, 2
      %v1744 = vsel %vm973, %v1742, %v1743
      %v1745 = vsel %vm973, %v1743, %v974
      %v1747 = vsel %vm324, %v1744, 0
      %v1750 = vsel %vm324, %v1745, 0
      %v1753 = vsel %vm324, %v985, 0
      %v1756 = vsel %vm352, %v1741, 0
      %1758 = vmatprep.subr.bf16.mxu0 0
      %1759 = vmatpush1.bf16.msra.mxu0 %v1756
      %1760 = vmatprep.subr.bf16.mxu0 0
      %1761 = vmatpush1.bf16.msra.mxu0 0
      %1762 = vmatprep.subr.bf16.mxu0 0
      %1763 = vmatpush1.bf16.msra.mxu0 0
      %1764 = vmatprep.subr.bf16.mxu0 0
      %1765 = vmatpush1.bf16.msra.mxu0 0
      %1766 = vmatprep.subr.bf16.mxu0 0
      %1767 = vmatpush1.bf16.msra.mxu0 0
      %1768 = vmatprep.subr.bf16.mxu0 0
      %1769 = vmatpush1.bf16.msra.mxu0 0
      %1770 = vmatprep.subr.bf16.mxu0 0
      %1771 = vmatpush1.bf16.msra.mxu0 0
      %1772 = vmatprep.subr.bf16.mxu0 0
      %1773 = vmatpush1.bf16.msra.mxu0 0
      %1774 = vmatprep.subr.bf16.mxu0 0
      %1775 = vmatpush1.bf16.msra.mxu0 0
      %1776 = vmatprep.subr.bf16.mxu0 0
      %1777 = vmatpush1.bf16.msra.mxu0 0
      %1778 = vmatprep.subr.bf16.mxu0 0
      %1779 = vmatpush1.bf16.msra.mxu0 0
      %1780 = vmatprep.subr.bf16.mxu0 0
      %1781 = vmatpush1.bf16.msra.mxu0 0
      %1782 = vmatprep.subr.bf16.mxu0 0
      %1783 = vmatpush1.bf16.msra.mxu0 0
      %1784 = vmatprep.subr.bf16.mxu0 0
      %1785 = vmatpush1.bf16.msra.mxu0 0
      %1786 = vmatprep.subr.bf16.mxu0 0
      %1787 = vmatpush1.bf16.msra.mxu0 0
      %1788 = vmatprep.subr.bf16.mxu0 0
      %1789 = vmatpush1.bf16.msra.mxu0 0
      %1790 = vmatprep.mubr.bf16.mxu0 0
      %1791 = vmatmul.mubr.bf16.gmra.mrb[0].mxu0 %v1747
      %v1792 = vpop.f32.mrb[0].mxu0
      %v1793 = vadd.f32 0.0, %v1792
      %v1794 = vpop.f32.mrb[0].mxu0
      %v1795 = vpop.f32.mrb[0].mxu0
      %v1796 = vadd.f32 0.0, %v1795
      %v1797 = vpop.f32.mrb[0].mxu0
      %1798 = vmatprep.mubr.bf16.mxu0 0
      %1799 = vmatmul.mubr.bf16.gmra.mrb[0].mxu0 %v1750
      %v1800 = vpop.f32.mrb[0].mxu0
      %v1801 = vadd.f32 0.0, %v1800
      %v1802 = vpop.f32.mrb[0].mxu0
      %v1803 = vpop.f32.mrb[0].mxu0
      %v1804 = vadd.f32 0.0, %v1803
      %v1805 = vpop.f32.mrb[0].mxu0
      %1806 = vmatprep.mubr.bf16.mxu0 0
      %1807 = vmatmul.mubr.bf16.gmra.mrb[0].mxu0 %v992
      %v1808 = vpop.f32.mrb[0].mxu0
      %v1809 = vadd.f32 0.0, %v1808
      %v1810 = vpop.f32.mrb[0].mxu0
      %v1811 = vpop.f32.mrb[0].mxu0
      %v1812 = vadd.f32 0.0, %v1811
      %v1813 = vpop.f32.mrb[0].mxu0
      %1814 = vmatprep.mubr.bf16.mxu0 0
      %1815 = vmatmul.mubr.bf16.gmra.mrb[0].mxu0 %v995
      %v1816 = vpop.f32.mrb[0].mxu0
      %v1817 = vadd.f32 0.0, %v1816
      %v1818 = vpop.f32.mrb[0].mxu0
      %v1819 = vpop.f32.mrb[0].mxu0
      %v1820 = vadd.f32 0.0, %v1819
      %v1821 = vpop.f32.mrb[0].mxu0
      %1822 = vmatprep.mubr.bf16.mxu0 0
      %1823 = vmatmul.mubr.bf16.gmra.mrb[0].mxu0 %v998
      %v1824 = vpop.f32.mrb[0].mxu0
      %v1825 = vadd.f32 0.0, %v1824
      %v1826 = vpop.f32.mrb[0].mxu0
      %v1827 = vpop.f32.mrb[0].mxu0
      %v1828 = vadd.f32 0.0, %v1827
      %v1829 = vpop.f32.mrb[0].mxu0
      %1830 = vmatprep.mubr.bf16.mxu0 0
      %1831 = vmatmul.mubr.bf16.gmra.mrb[0].mxu0 %v1001
      %v1832 = vpop.f32.mrb[0].mxu0
      %v1833 = vadd.f32 0.0, %v1832
      %v1834 = vpop.f32.mrb[0].mxu0
      %v1835 = vpop.f32.mrb[0].mxu0
      %v1836 = vadd.f32 0.0, %v1835
      %v1837 = vpop.f32.mrb[0].mxu0
      %1838 = vmatprep.mubr.bf16.mxu0 0
      %1839 = vmatmul.mubr.bf16.gmra.mrb[0].mxu0 %v1004
      %v1840 = vpop.f32.mrb[0].mxu0
      %v1841 = vadd.f32 0.0, %v1840
      %v1842 = vpop.f32.mrb[0].mxu0
      %v1843 = vpop.f32.mrb[0].mxu0
      %v1844 = vadd.f32 0.0, %v1843
      %v1845 = vpop.f32.mrb[0].mxu0
      %1846 = vmatprep.mubr.bf16.mxu0 0
      %1847 = vmatmul.mubr.bf16.gmra.mrb[0].mxu0 %v1007
      %v1848 = vpop.f32.mrb[0].mxu0
      %v1849 = vadd.f32 0.0, %v1848
      %v1850 = vpop.f32.mrb[0].mxu0
      %v1851 = vpop.f32.mrb[0].mxu0
      %v1852 = vadd.f32 0.0, %v1851
      %v1853 = vpop.f32.mrb[0].mxu0
      %1854 = vmatprep.mubr.bf16.mxu0 0
      %1855 = vmatmul.mubr.bf16.gmra.mrb[0].mxu0 %v1753
      %v1856 = vpop.f32.mrb[0].mxu0
      %v1857 = vadd.f32 0.0, %v1856
      %v1858 = vpop.f32.mrb[0].mxu0
      %v1859 = vpop.f32.mrb[0].mxu0
      %v1860 = vpop.f32.mrb[0].mxu0
      %1861 = vdwg.mxu0
      %v1862 = vadd.f32 %v1723, %v1793
      %v1863 = vadd.f32 %v1724, %v1796
      %v1864 = vadd.f32 %v1725, %v1801
      %v1865 = vadd.f32 %v1726, %v1804
      %v1866 = vadd.f32 %v1727, %v1809
      %v1867 = vadd.f32 %v1728, %v1812
      %v1868 = vadd.f32 %v1729, %v1817
      %v1869 = vadd.f32 %v1730, %v1820
      %v1870 = vadd.f32 %v1731, %v1825
      %v1871 = vadd.f32 %v1732, %v1828
      %v1872 = vadd.f32 %v1733, %v1833
      %v1873 = vadd.f32 %v1734, %v1836
      %v1874 = vadd.f32 %v1735, %v1841
      %v1875 = vadd.f32 %v1736, %v1844
      %v1876 = vadd.f32 %v1737, %v1849
      %v1877 = vadd.f32 %v1738, %v1852
      %v1878 = vadd.f32 %v1739, %v1857
      %s1879 = scalar_lea.vmem %s1, 20
      %v1880 = vld [vmem:[%s1879] sm:$0x3]
      %v1882 = vsel %vm352, %v1880, 0
      %1884 = vmatprep.subr.bf16.mxu0 0
      %1885 = vmatpush1.bf16.msra.mxu0 %v1882
      %1886 = vmatprep.subr.bf16.mxu0 0
      %1887 = vmatpush1.bf16.msra.mxu0 0
      %1888 = vmatprep.subr.bf16.mxu0 0
      %1889 = vmatpush1.bf16.msra.mxu0 0
      %1890 = vmatprep.subr.bf16.mxu0 0
      %1891 = vmatpush1.bf16.msra.mxu0 0
      %1892 = vmatprep.subr.bf16.mxu0 0
      %1893 = vmatpush1.bf16.msra.mxu0 0
      %1894 = vmatprep.subr.bf16.mxu0 0
      %1895 = vmatpush1.bf16.msra.mxu0 0
      %1896 = vmatprep.subr.bf16.mxu0 0
      %1897 = vmatpush1.bf16.msra.mxu0 0
      %1898 = vmatprep.subr.bf16.mxu0 0
      %1899 = vmatpush1.bf16.msra.mxu0 0
      %1900 = vmatprep.subr.bf16.mxu0 0
      %1901 = vmatpush1.bf16.msra.mxu0 0
      %1902 = vmatprep.subr.bf16.mxu0 0
      %1903 = vmatpush1.bf16.msra.mxu0 0
      %1904 = vmatprep.subr.bf16.mxu0 0
      %1905 = vmatpush1.bf16.msra.mxu0 0
      %1906 = vmatprep.subr.bf16.mxu0 0
      %1907 = vmatpush1.bf16.msra.mxu0 0
      %1908 = vmatprep.subr.bf16.mxu0 0
      %1909 = vmatpush1.bf16.msra.mxu0 0
      %1910 = vmatprep.subr.bf16.mxu0 0
      %1911 = vmatpush1.bf16.msra.mxu0 0
      %1912 = vmatprep.subr.bf16.mxu0 0
      %1913 = vmatpush1.bf16.msra.mxu0 0
      %1914 = vmatprep.subr.bf16.mxu0 0
      %1915 = vmatpush1.bf16.msra.mxu0 0
      %1916 = vmatprep.mubr.bf16.mxu0 0
      %1917 = vmatmul.mubr.bf16.gmra.mrb[0].mxu0 %v1191
      %v1918 = vpop.f32.mrb[0].mxu0
      %v1919 = vadd.f32 0.0, %v1918
      %v1920 = vpop.f32.mrb[0].mxu0
      %v1921 = vpop.f32.mrb[0].mxu0
      %v1922 = vadd.f32 0.0, %v1921
      %v1923 = vpop.f32.mrb[0].mxu0
      %1924 = vmatprep.mubr.bf16.mxu0 0
      %1925 = vmatmul.mubr.bf16.gmra.mrb[0].mxu0 %v1194
      %v1926 = vpop.f32.mrb[0].mxu0
      %v1927 = vadd.f32 0.0, %v1926
      %v1928 = vpop.f32.mrb[0].mxu0
      %v1929 = vpop.f32.mrb[0].mxu0
      %v1930 = vadd.f32 0.0, %v1929
      %v1931 = vpop.f32.mrb[0].mxu0
      %1932 = vmatprep.mubr.bf16.mxu0 0
      %1933 = vmatmul.mubr.bf16.gmra.mrb[0].mxu0 %v1197
      %v1934 = vpop.f32.mrb[0].mxu0
      %v1935 = vadd.f32 0.0, %v1934
      %v1936 = vpop.f32.mrb[0].mxu0
      %v1937 = vpop.f32.mrb[0].mxu0
      %v1938 = vadd.f32 0.0, %v1937
      %v1939 = vpop.f32.mrb[0].mxu0
      %1940 = vmatprep.mubr.bf16.mxu0 0
      %1941 = vmatmul.mubr.bf16.gmra.mrb[0].mxu0 %v1200
      %v1942 = vpop.f32.mrb[0].mxu0
      %v1943 = vadd.f32 0.0, %v1942
      %v1944 = vpop.f32.mrb[0].mxu0
      %v1945 = vpop.f32.mrb[0].mxu0
      %v1946 = vadd.f32 0.0, %v1945
      %v1947 = vpop.f32.mrb[0].mxu0
      %1948 = vmatprep.mubr.bf16.mxu0 0
      %1949 = vmatmul.mubr.bf16.gmra.mrb[0].mxu0 %v1203
      %v1950 = vpop.f32.mrb[0].mxu0
      %v1951 = vadd.f32 0.0, %v1950
      %v1952 = vpop.f32.mrb[0].mxu0
      %v1953 = vpop.f32.mrb[0].mxu0
      %v1954 = vadd.f32 0.0, %v1953
      %v1955 = vpop.f32.mrb[0].mxu0
      %1956 = vmatprep.mubr.bf16.mxu0 0
      %1957 = vmatmul.mubr.bf16.gmra.mrb[0].mxu0 %v1206
      %v1958 = vpop.f32.mrb[0].mxu0
      %v1959 = vadd.f32 0.0, %v1958
      %v1960 = vpop.f32.mrb[0].mxu0
      %v1961 = vpop.f32.mrb[0].mxu0
      %v1962 = vadd.f32 0.0, %v1961
      %v1963 = vpop.f32.mrb[0].mxu0
      %1964 = vmatprep.mubr.bf16.mxu0 0
      %1965 = vmatmul.mubr.bf16.gmra.mrb[0].mxu0 %v1209
      %v1966 = vpop.f32.mrb[0].mxu0
      %v1967 = vadd.f32 0.0, %v1966
      %v1968 = vpop.f32.mrb[0].mxu0
      %v1969 = vpop.f32.mrb[0].mxu0
      %v1970 = vadd.f32 0.0, %v1969
      %v1971 = vpop.f32.mrb[0].mxu0
      %1972 = vmatprep.mubr.bf16.mxu0 0
      %1973 = vmatmul.mubr.bf16.gmra.mrb[0].mxu0 %v1212
      %v1974 = vpop.f32.mrb[0].mxu0
      %v1975 = vadd.f32 0.0, %v1974
      %v1976 = vpop.f32.mrb[0].mxu0
      %v1977 = vpop.f32.mrb[0].mxu0
      %v1978 = vadd.f32 0.0, %v1977
      %v1979 = vpop.f32.mrb[0].mxu0
      %1980 = vmatprep.mubr.bf16.mxu0 0
      %1981 = vmatmul.mubr.bf16.gmra.mrb[0].mxu0 %v1215
      %v1982 = vpop.f32.mrb[0].mxu0
      %v1983 = vadd.f32 0.0, %v1982
      %v1984 = vpop.f32.mrb[0].mxu0
      %v1985 = vpop.f32.mrb[0].mxu0
      %v1986 = vpop.f32.mrb[0].mxu0
      %1987 = vdwg.mxu0
      %v1988 = vadd.f32 %v1862, %v1919
      %v1989 = vadd.f32 %v1863, %v1922
      %v1990 = vadd.f32 %v1864, %v1927
      %v1991 = vadd.f32 %v1865, %v1930
      %v1992 = vadd.f32 %v1866, %v1935
      %v1993 = vadd.f32 %v1867, %v1938
      %v1994 = vadd.f32 %v1868, %v1943
      %v1995 = vadd.f32 %v1869, %v1946
      %v1996 = vadd.f32 %v1870, %v1951
      %v1997 = vadd.f32 %v1871, %v1954
      %v1998 = vadd.f32 %v1872, %v1959
      %v1999 = vadd.f32 %v1873, %v1962
      %v2000 = vadd.f32 %v1874, %v1967
      %v2001 = vadd.f32 %v1875, %v1970
      %v2002 = vadd.f32 %v1876, %v1975
      %v2003 = vadd.f32 %v1877, %v1978
      %v2004 = vadd.f32 %v1878, %v1983
      %s2005 = scalar_lea.vmem %s1, 22
      %v2006 = vld [vmem:[%s2005] sm:$0x3]
      %vm2007 = vcmask 1044480
      %v2008 = vrot.slane %v243, 3
      %v2009 = vrot.slane %v244, 3
      %v2010 = vsel %vm2007, %v2008, %v2009
      %v2011 = vrot.slane %v245, 3
      %v2012 = vsel %vm2007, %v2009, %v2011
      %v2013 = vrot.slane %v246, 3
      %v2014 = vsel %vm2007, %v2011, %v2013
      %v2015 = vrot.slane %v249, 3
      %v2016 = vsel %vm2007, %v2013, %v2015
      %v2017 = vrot.slane %v586, 3
      %v2018 = vsel %vm2007, %v2015, %v2017
      %v2019 = vrot.slane %v587, 3
      %v2020 = vsel %vm2007, %v2017, %v2019
      %v2021 = vrot.slane %v967, 3
      %v2022 = vsel %vm2007, %v2019, %v2021
      %v2023 = vrot.slane %v968, 3
      %v2024 = vsel %vm2007, %v2021, %v2023
      %v2026 = vsel %vm324, %v2010, 0
      %v2029 = vsel %vm324, %v2012, 0
      %v2032 = vsel %vm324, %v2014, 0
      %v2035 = vsel %vm324, %v2016, 0
      %v2038 = vsel %vm324, %v2018, 0
      %v2041 = vsel %vm324, %v2020, 0
      %v2044 = vsel %vm324, %v2022, 0
      %v2047 = vsel %vm324, %v2024, 0
      %v2050 = vsel %vm324, %v2023, 0
      %v2053 = vsel %vm352, %v2006, 0
      %2055 = vmatprep.subr.bf16.mxu0 0
      %2056 = vmatpush1.bf16.msra.mxu0 %v2053
      %2057 = vmatprep.subr.bf16.mxu0 0
      %2058 = vmatpush1.bf16.msra.mxu0 0
      %2059 = vmatprep.subr.bf16.mxu0 0
      %2060 = vmatpush1.bf16.msra.mxu0 0
      %2061 = vmatprep.subr.bf16.mxu0 0
      %2062 = vmatpush1.bf16.msra.mxu0 0
      %2063 = vmatprep.subr.bf16.mxu0 0
      %2064 = vmatpush1.bf16.msra.mxu0 0
      %2065 = vmatprep.subr.bf16.mxu0 0
      %2066 = vmatpush1.bf16.msra.mxu0 0
      %2067 = vmatprep.subr.bf16.mxu0 0
      %2068 = vmatpush1.bf16.msra.mxu0 0
      %2069 = vmatprep.subr.bf16.mxu0 0
      %2070 = vmatpush1.bf16.msra.mxu0 0
      %2071 = vmatprep.subr.bf16.mxu0 0
      %2072 = vmatpush1.bf16.msra.mxu0 0
      %2073 = vmatprep.subr.bf16.mxu0 0
      %2074 = vmatpush1.bf16.msra.mxu0 0
      %2075 = vmatprep.subr.bf16.mxu0 0
      %2076 = vmatpush1.bf16.msra.mxu0 0
      %2077 = vmatprep.subr.bf16.mxu0 0
      %2078 = vmatpush1.bf16.msra.mxu0 0
      %2079 = vmatprep.subr.bf16.mxu0 0
      %2080 = vmatpush1.bf16.msra.mxu0 0
      %2081 = vmatprep.subr.bf16.mxu0 0
      %2082 = vmatpush1.bf16.msra.mxu0 0
      %2083 = vmatprep.subr.bf16.mxu0 0
      %2084 = vmatpush1.bf16.msra.mxu0 0
      %2085 = vmatprep.subr.bf16.mxu0 0
      %2086 = vmatpush1.bf16.msra.mxu0 0
      %2087 = vmatprep.mubr.bf16.mxu0 0
      %2088 = vmatmul.mubr.bf16.gmra.mrb[0].mxu0 %v2026
      %v2089 = vpop.f32.mrb[0].mxu0
      %v2090 = vadd.f32 0.0, %v2089
      %v2091 = vpop.f32.mrb[0].mxu0
      %v2092 = vpop.f32.mrb[0].mxu0
      %v2093 = vadd.f32 0.0, %v2092
      %v2094 = vpop.f32.mrb[0].mxu0
      %2095 = vmatprep.mubr.bf16.mxu0 0
      %2096 = vmatmul.mubr.bf16.gmra.mrb[0].mxu0 %v2029
      %v2097 = vpop.f32.mrb[0].mxu0
      %v2098 = vadd.f32 0.0, %v2097
      %v2099 = vpop.f32.mrb[0].mxu0
      %v2100 = vpop.f32.mrb[0].mxu0
      %v2101 = vadd.f32 0.0, %v2100
      %v2102 = vpop.f32.mrb[0].mxu0
      %2103 = vmatprep.mubr.bf16.mxu0 0
      %2104 = vmatmul.mubr.bf16.gmra.mrb[0].mxu0 %v2032
      %v2105 = vpop.f32.mrb[0].mxu0
      %v2106 = vadd.f32 0.0, %v2105
      %v2107 = vpop.f32.mrb[0].mxu0
      %v2108 = vpop.f32.mrb[0].mxu0
      %v2109 = vadd.f32 0.0, %v2108
      %v2110 = vpop.f32.mrb[0].mxu0
      %2111 = vmatprep.mubr.bf16.mxu0 0
      %2112 = vmatmul.mubr.bf16.gmra.mrb[0].mxu0 %v2035
      %v2113 = vpop.f32.mrb[0].mxu0
      %v2114 = vadd.f32 0.0, %v2113
      %v2115 = vpop.f32.mrb[0].mxu0
      %v2116 = vpop.f32.mrb[0].mxu0
      %v2117 = vadd.f32 0.0, %v2116
      %v2118 = vpop.f32.mrb[0].mxu0
      %2119 = vmatprep.mubr.bf16.mxu0 0
      %2120 = vmatmul.mubr.bf16.gmra.mrb[0].mxu0 %v2038
      %v2121 = vpop.f32.mrb[0].mxu0
      %v2122 = vadd.f32 0.0, %v2121
      %v2123 = vpop.f32.mrb[0].mxu0
      %v2124 = vpop.f32.mrb[0].mxu0
      %v2125 = vadd.f32 0.0, %v2124
      %v2126 = vpop.f32.mrb[0].mxu0
      %2127 = vmatprep.mubr.bf16.mxu0 0
      %2128 = vmatmul.mubr.bf16.gmra.mrb[0].mxu0 %v2041
      %v2129 = vpop.f32.mrb[0].mxu0
      %v2130 = vadd.f32 0.0, %v2129
      %v2131 = vpop.f32.mrb[0].mxu0
      %v2132 = vpop.f32.mrb[0].mxu0
      %v2133 = vadd.f32 0.0, %v2132
      %v2134 = vpop.f32.mrb[0].mxu0
      %2135 = vmatprep.mubr.bf16.mxu0 0
      %2136 = vmatmul.mubr.bf16.gmra.mrb[0].mxu0 %v2044
      %v2137 = vpop.f32.mrb[0].mxu0
      %v2138 = vadd.f32 0.0, %v2137
      %v2139 = vpop.f32.mrb[0].mxu0
      %v2140 = vpop.f32.mrb[0].mxu0
      %v2141 = vadd.f32 0.0, %v2140
      %v2142 = vpop.f32.mrb[0].mxu0
      %2143 = vmatprep.mubr.bf16.mxu0 0
      %2144 = vmatmul.mubr.bf16.gmra.mrb[0].mxu0 %v2047
      %v2145 = vpop.f32.mrb[0].mxu0
      %v2146 = vadd.f32 0.0, %v2145
      %v2147 = vpop.f32.mrb[0].mxu0
      %v2148 = vpop.f32.mrb[0].mxu0
      %v2149 = vadd.f32 0.0, %v2148
      %v2150 = vpop.f32.mrb[0].mxu0
      %2151 = vmatprep.mubr.bf16.mxu0 0
      %2152 = vmatmul.mubr.bf16.gmra.mrb[0].mxu0 %v2050
      %v2153 = vpop.f32.mrb[0].mxu0
      %v2154 = vadd.f32 0.0, %v2153
      %v2155 = vpop.f32.mrb[0].mxu0
      %v2156 = vpop.f32.mrb[0].mxu0
      %v2157 = vpop.f32.mrb[0].mxu0
      %2158 = vdwg.mxu0
      %v2159 = vadd.f32 %v1988, %v2090
      %v2160 = vadd.f32 %v1989, %v2093
      %v2161 = vadd.f32 %v1990, %v2098
      %v2162 = vadd.f32 %v1991, %v2101
      %v2163 = vadd.f32 %v1992, %v2106
      %v2164 = vadd.f32 %v1993, %v2109
      %v2165 = vadd.f32 %v1994, %v2114
      %v2166 = vadd.f32 %v1995, %v2117
      %v2167 = vadd.f32 %v1996, %v2122
      %v2168 = vadd.f32 %v1997, %v2125
      %v2169 = vadd.f32 %v1998, %v2130
      %v2170 = vadd.f32 %v1999, %v2133
      %v2171 = vadd.f32 %v2000, %v2138
      %v2172 = vadd.f32 %v2001, %v2141
      %v2173 = vadd.f32 %v2002, %v2146
      %v2174 = vadd.f32 %v2003, %v2149
      %v2175 = vadd.f32 %v2004, %v2154
      %v2176 = vadd.f32 %v2159, %v1345
      %v2177 = vadd.f32 %v2160, %v1345
      %v2178 = vadd.f32 %v2161, %v1345
      %v2179 = vadd.f32 %v2162, %v1345
      %v2180 = vadd.f32 %v2163, %v1345
      %v2181 = vadd.f32 %v2164, %v1345
      %v2182 = vadd.f32 %v2165, %v1345
      %v2183 = vadd.f32 %v2166, %v1345
      %v2184 = vadd.f32 %v2167, %v1345
      %v2185 = vadd.f32 %v2168, %v1345
      %v2186 = vadd.f32 %v2169, %v1345
      %v2187 = vadd.f32 %v2170, %v1345
      %v2188 = vadd.f32 %v2171, %v1345
      %v2189 = vadd.f32 %v2172, %v1345
      %v2190 = vadd.f32 %v2173, %v1345
      %v2191 = vadd.f32 %v2174, %v1345
      %v2192 = vadd.f32 %v2175, %v1345
      %2193 = vst.msk [vmem:[%s210] sm:$0xff] %vm324, %v2176
      %2194 = vst.msk [vmem:[%s210 + $0x8] sm:$0xff] %vm324, %v2177
      %2195 = vst.msk [vmem:[%s210 + $0x10] sm:$0xff] %vm324, %v2178
      %2196 = vst.msk [vmem:[%s210 + $0x18] sm:$0xff] %vm324, %v2179
      %2197 = vst.msk [vmem:[%s210 + $0x20] sm:$0xff] %vm324, %v2180
      %2198 = vst.msk [vmem:[%s210 + $0x28] sm:$0xff] %vm324, %v2181
      %2199 = vst.msk [vmem:[%s210 + $0x30] sm:$0xff] %vm324, %v2182
      %2200 = vst.msk [vmem:[%s210 + $0x38] sm:$0xff] %vm324, %v2183
      %2201 = vst.msk [vmem:[%s210 + $0x40] sm:$0xff] %vm324, %v2184
      %2202 = vst.msk [vmem:[%s210 + $0x48] sm:$0xff] %vm324, %v2185
      %2203 = vst.msk [vmem:[%s210 + $0x50] sm:$0xff] %vm324, %v2186
      %2204 = vst.msk [vmem:[%s210 + $0x58] sm:$0xff] %vm324, %v2187
      %2205 = vst.msk [vmem:[%s210 + $0x60] sm:$0xff] %vm324, %v2188
      %2206 = vst.msk [vmem:[%s210 + $0x68] sm:$0xff] %vm324, %v2189
      %2207 = vst.msk [vmem:[%s210 + $0x70] sm:$0xff] %vm324, %v2190
      %2208 = vst.msk [vmem:[%s210 + $0x78] sm:$0xff] %vm324, %v2191
      %2209 = vst.msk [vmem:[%s210 + $0x80] sm:$0xff] %vm324, %v2192
      %p2210 = scmp.lt.s32.totalorder %s16, 1
      %s2211 = scalar_select %p2210, %s16, 1
      %s2212 = smul.addr %s2211, 17
      %s2213 = smul.addr %s2212, 8
      %s2214 = scalar_lea.vmem %s3, %s2213
      %p2215 = scmp.lt.s32.totalorder %s16, 1
      %s2216 = scalar_select %p2215, %s16, 1
      %s2217 = smul.addr %s2216, 17
      %s2218 = smul.addr %s2217, 8
      %s2219 = scalar_lea.vmem %s4, %s2218
      // Predicated region
      $region33: #{vqvae_decoder_forward.10} parent=31 // pred_check
        %p2220 = pneg %p102
      $region34: #{vqvae_decoder_forward.10} parent=31 // pred_check_branch
        %2222 = sbr.rel (%p2220) target = $region36
      $region35: #{vqvae_decoder_forward.10} parent=31 // pred_region
        _
      $region36: #{vqvae_decoder_forward.10} parent=31 // pred_fallthru
        _
      // Predicated region
      $region37: #{vqvae_decoder_forward.10} parent=31 // pred_check
        %p2223 = pneg %p128
      $region38: #{vqvae_decoder_forward.10} parent=31 // pred_check_branch
        %2225 = sbr.rel (%p2223) target = $region40
      $region39: #{vqvae_decoder_forward.10} parent=31 // pred_region
        _
      $region40: #{vqvae_decoder_forward.10} parent=31 // pred_fallthru
        _
    $region32: #{vqvae_decoder_forward.10} parent=5 // pred_fallthru
      _
    %p2226 = scmp.le.s32.totalorder 2, %s11
    // Predicated region
    $region41: #{vqvae_decoder_forward.10} parent=5 // pred_check
      %p2227 = pneg %p2226
    $region42: #{vqvae_decoder_forward.10} parent=5 // pred_check_branch
      %2229 = sbr.rel (%p2227) target = $region44
    $region43: #{vqvae_decoder_forward.10} parent=5 // pred_region
      %s2230 = ssub.s32 %s11, 2
      // Predicated region
      $region45: #{vqvae_decoder_forward.10} parent=43 // pred_check
        %p2231 = pneg %p108
      $region46: #{vqvae_decoder_forward.10} parent=43 // pred_check_branch
        %2233 = sbr.rel (%p2231) target = $region48
      $region47: #{vqvae_decoder_forward.10} parent=43 // pred_region
        %p2234 = scmp.lt.s32.totalorder %s17, 1
        %s2235 = scalar_select %p2234, %s17, 1
        %s2236 = smul.addr %s2235, 17
        %s2237 = smul.addr %s2236, 8
        %s2238 = scalar_lea.vmem %s3, %s2237
      $region48: #{vqvae_decoder_forward.10} parent=43 // pred_fallthru
        _
      // Predicated region
      $region49: #{vqvae_decoder_forward.10} parent=43 // pred_check
        %p2239 = pneg %p134
      $region50: #{vqvae_decoder_forward.10} parent=43 // pred_check_branch
        %2241 = sbr.rel (%p2239) target = $region52
      $region51: #{vqvae_decoder_forward.10} parent=43 // pred_region
        %p2242 = scmp.lt.s32.totalorder %s17, 1
        %s2243 = scalar_select %p2242, %s17, 1
        %s2244 = smul.addr %s2243, 17
        %s2245 = smul.addr %s2244, 8
        %s2246 = scalar_lea.vmem %s4, %s2245
      $region52: #{vqvae_decoder_forward.10} parent=43 // pred_fallthru
        _
    $region44: #{vqvae_decoder_forward.10} parent=5 // pred_fallthru
      _
  $region6: #{vqvae_decoder_forward.10} parent=0 // loop_footer
    %s15 = sadd.s32 1, %s11
  $region7: #{vqvae_decoder_forward.10} parent=0 // loop_footer_branch
    %10 = sbr.rel target = $region3
  $region8: #{vqvae_decoder_forward.10} parent=0 // loop_exit
    _

</llo_original>
